<compile_context>
chip_gen: v5e
topology: v5e:2x2
jax: 0.10.0
libtpu: 0.0.40
codegen_flags: <defaults>
</compile_context>

<pallas_src>
import functools

import numpy as np
import jax
import jax.numpy as jnp
from jax.experimental import pallas as pl
from jax.experimental.pallas import tpu as pltpu


# ---------------------------------------------------------------------------
# layout constants (guard-row layout: 12 rows x 8 pixels per frame)
# ---------------------------------------------------------------------------
_RPF = 96                       # rows per frame (12 * 8), rows 0,1,10,11 zero
_DYS12 = (0, 8, -8, 16, -16)    # row-shift groups for conv1 (d=1) / conv2 (d=2)
_DYS3 = (0, 8, -8)              # row-shift groups for the refine conv (d=1)


# ---------------------------------------------------------------------------
# static helper matrices (numpy) -- also used by the pure-JAX reference
# ---------------------------------------------------------------------------
def shift_matrices(h, w, dil):
    """9 x (HW x HW) 0/1 matrices for a 3x3 conv tap shift with zero padding
    == dilation (PyTorch padding=dil).  Reference path only."""
    hw = h * w
    ts = np.zeros((9, hw, hw), np.float32)
    for ky in range(3):
        for kx in range(3):
            oy, ox = (ky - 1) * dil, (kx - 1) * dil
            k = ky * 3 + kx
            for i in range(h):
                for j in range(w):
                    ii, jj = i + oy, j + ox
                    if 0 <= ii < h and 0 <= jj < w:
                        ts[k, i * w + j, ii * w + jj] = 1.0
    return ts


def bilinear_matrix(out_size, in_size):
    """1-D bilinear resize matrix, PyTorch align_corners=False semantics."""
    m = np.zeros((out_size, in_size), np.float32)
    scale = in_size / out_size
    for o in range(out_size):
        src = (o + 0.5) * scale - 0.5
        if src < 0.0:
            src = 0.0
        i0 = min(int(np.floor(src)), in_size - 1)
        i1 = min(i0 + 1, in_size - 1)
        lam = src - i0
        m[o, i0] += 1.0 - lam
        m[o, i1] += lam
    return m


# ---------------------------------------------------------------------------
# row-roll helper: read_ahead(x, d)[r, :] == x[(r + d) % n, :]
# (prefer pltpu.roll on the XLU; probe its sign once, fall back to slice-concat)
# ---------------------------------------------------------------------------
def _make_row_roller():
    def _concat_roller(v, d):
        n = v.shape[0]
        d = d % n
        if d == 0:
            return v
        return jnp.concatenate([v[d:, :], v[:d, :]], axis=0)

    try:
        probe = np.arange(16 * 128, dtype=np.float32).reshape(16, 128)

        def _k(x_ref, o_ref):
            o_ref[...] = pltpu.roll(x_ref[...], 1, 0)

        got = np.asarray(jax.block_until_ready(
            pl.pallas_call(_k, out_shape=jax.ShapeDtypeStruct((16, 128), jnp.float32)
                           )(jnp.asarray(probe))))
        if np.array_equal(got, np.roll(probe, 1, axis=0)):
            sign = -1          # pltpu.roll matches jnp.roll: read-ahead d -> shift -d
        elif np.array_equal(got, np.roll(probe, -1, axis=0)):
            sign = 1
        else:
            return _concat_roller

        def _xlu_roller(v, d, _sign=sign):
            amt = (_sign * d) % v.shape[0]
            if amt == 0:
                return v
            return pltpu.roll(v, amt, 0)

        return _xlu_roller
    except Exception:          # roll not supported -> correct (slower) fallback
        return _concat_roller


_READ_AHEAD = _make_row_roller()


# ---------------------------------------------------------------------------
# fused Pallas kernel
# ---------------------------------------------------------------------------
def _pnsplus_fused_kernel(low_ref, high_ref, w0_ref, rhg_ref, wd_ref, xm_ref,
                          sh12_ref, pa_ref, w3_ref, xm3_ref, sh3_ref, pa3_ref,
                          wseg_ref, mxb_ref, seo_ref, out_ref, *, read_ahead):
    """Fused: bilinear x2 of the high feature -> conbine_feature -> SegNIN ->
    bilinear up-sample to (64, 64), all frames batched on the row axis.

    Row layout: r = frame*96 + py*8 + x, with py = y + 2 (rows py in {0,1,10,11}
    are zero guard rows so that the dilated 3x3 y-taps read zeros for free).
    low_ref : (F*96, 24)  guard-row low feature
    high_ref: (F*16, 32)  high feature (4x4 pixels per frame)
    out_ref : (F*32, 128) lanes = [even-Y output row | odd-Y output row]
    """
    f32 = jnp.float32
    n_frames = low_ref.shape[0] // _RPF

    def dot(a, b):
        return jnp.dot(a, b, preferred_element_type=f32)

    # ---- up2_high.conv0 (1x1, 32->16) fused with the bilinear x2 up-sample --
    th = dot(high_ref[...], w0_ref[...])                        # (16F, 16)
    rhg = rhg_ref[...]                                          # (96, 16)
    in0 = jnp.concatenate(
        [dot(rhg, th[f * 16:(f + 1) * 16, :]) for f in range(n_frames)],
        axis=0)                                                 # (96F,16), guards = 0

    # ---- conv1 (3x3 d=1) + conv2 (3x3 d=2) + up2_low (1x1) + BN shifts ------
    # One 6-piece lane-cat of the x-shifted taps, one mask multiply, then one
    # matmul per row-shift group; group results are combined with mult-of-8
    # rolls (the y taps).  sh12 = sh1 + sh2 is pre-added on the host.
    xm = jnp.concatenate([xm_ref[...]] * n_frames, axis=0)      # (96F, 104)
    bb = jnp.concatenate(
        [low_ref[...], in0,
         read_ahead(in0, 1), read_ahead(in0, -1),
         read_ahead(in0, 2), read_ahead(in0, -2)], axis=1) * xm  # (96F, 104)
    s = None
    for i, dy in enumerate(_DYS12):
        part = read_ahead(dot(bb, wd_ref[i]), dy)               # (96F, 16)
        s = part if s is None else s + part
    s = s + sh12_ref[...]
    act = jnp.maximum(s, 0.0) + pa_ref[...] * jnp.minimum(s, 0.0)   # up2_act PReLU

    # ---- refine: conv3x3(16->16, pad=1) + BN(16) + PReLU() ------------------
    xm3 = jnp.concatenate([xm3_ref[...]] * n_frames, axis=0)    # (96F, 48)
    cc = jnp.concatenate(
        [act, read_ahead(act, 1), read_ahead(act, -1)], axis=1) * xm3
    r = None
    for i, dy in enumerate(_DYS3):
        part = read_ahead(dot(cc, w3_ref[i]), dy)
        r = part if r is None else r + part
    r = r + sh3_ref[...]
    r = jnp.maximum(r, 0.0) + pa3_ref[...] * jnp.minimum(r, 0.0)

    # ---- SegNIN (1x1, 16->1) fused with the separable bilinear up-sample ----
    # z[r, X] = seg[f,y,x] * B[X, x]; per frame one stacked (even|odd) matmul
    # contracts over the rows, written with two direct ref stores.
    mx = jnp.concatenate([mxb_ref[...]] * n_frames, axis=0)     # (96F, 64)
    z = dot(r, wseg_ref[...]) * mx                              # (96F, 64)
    seo = seo_ref[...]                                          # (64, 96)
    for f in range(n_frames):
        big = dot(seo, z[f * _RPF:(f + 1) * _RPF, :])           # (64, 64)
        out_ref[f * 32:(f + 1) * 32, 0:64] = big[0:32, :]       # even output rows
        out_ref[f * 32:(f + 1) * 32, 64:128] = big[32:64, :]    # odd output rows


def pnsplus_decoder_pallas(low_g, high, p):
    """low_g: (F*96, 24) guard-row layout, high: (F*16, 32) -> (F*32, 128)."""
    n_rows = low_g.shape[0]
    f = n_rows // _RPF
    args = (low_g, high, p['w0'], p['r_hg'], p['WD'], p['XM'], p['sh12'],
            p['pa'], p['W3G'], p['XM3'], p['sh3'], p['pa3'], p['Wseg64'],
            p['Mxb'], p['Seo'])
    vmem = pl.BlockSpec(memory_space=pltpu.MemorySpace.VMEM)
    flops = 2 * f * (16 * 32 * 16 + 96 * 16 * 16 + 5 * 96 * 104 * 16
                     + 3 * 96 * 48 * 16 + 96 * 16 * 64 + 64 * 96 * 64)
    bytes_accessed = 4 * (sum(int(np.prod(a.shape)) for a in args) + f * 32 * 128)
    kernel = functools.partial(_pnsplus_fused_kernel, read_ahead=_READ_AHEAD)
    return pl.pallas_call(
        kernel,
        out_shape=jax.ShapeDtypeStruct((f * 32, 128), jnp.float32),
        in_specs=[vmem] * len(args),
        out_specs=vmem,
        cost_estimate=pl.CostEstimate(flops=flops, transcendentals=0,
                                      bytes_accessed=bytes_accessed),
    )(*args)


# ---------------------------------------------------------------------------
# deterministic parameter initialisation (module __init__ shapes)
# ---------------------------------------------------------------------------
def init_params(key):
    ks = jax.random.split(key, 16)

    def nrm(k, shape, s=0.1):
        return (s * jax.random.normal(k, shape)).astype(jnp.float32)

    def bn(k, c):
        k1, k2, k3, k4 = jax.random.split(k, 4)
        gamma = 1.0 + 0.1 * jax.random.normal(k1, (c,))
        beta = 0.1 * jax.random.normal(k2, (c,))
        mean = 0.1 * jax.random.normal(k3, (c,))
        var = 1.0 + 0.1 * jax.random.uniform(k4, (c,))
        scale = gamma / jnp.sqrt(var + 1e-5)
        shift = beta - mean * scale
        return scale.astype(jnp.float32), shift.astype(jnp.float32)

    p = {}
    # TODO(synk): stand-in channel projections replacing backbone + LightRFB.
    p['proj_low'] = nrm(ks[0], (3, 24), 0.5)
    p['proj_high'] = nrm(ks[1], (3, 32), 0.5)

    # decoder.up2_high = DilatedParallelConvBlockD2(32, 16)
    p['w0'] = nrm(ks[2], (16, 32, 1, 1))[:, :, 0, 0].T                    # (32,16)
    s1, sh1 = bn(ks[3], 16)
    w1 = jnp.transpose(nrm(ks[4], (8, 8, 3, 3)), (2, 3, 1, 0)).reshape(9, 8, 8)
    w2 = jnp.transpose(nrm(ks[5], (8, 8, 3, 3)), (2, 3, 1, 0)).reshape(9, 8, 8)
    p['w1f'] = w1 * s1[:8][None, None, :]          # BN scale folded, out ch 0..7
    p['w2f'] = w2 * s1[8:][None, None, :]          # BN scale folded, out ch 8..15
    p['sh1'] = sh1.reshape(1, 16)

    # decoder.up2_low (24->16, 1x1) + up2_bn2 (scale folded, shift added)
    wl = nrm(ks[6], (16, 24, 1, 1))[:, :, 0, 0].T                          # (24,16)
    s2, sh2 = bn(ks[7], 16)
    p['wl'] = wl * s2[None, :]
    p['sh2'] = sh2.reshape(1, 16)
    p['sh12'] = p['sh1'] + p['sh2']

    # decoder.up2_act = PReLU(16)
    p['pa'] = (0.25 + nrm(ks[8], (16,), 0.05)).reshape(1, 16)

    # decoder.refine = conv3x3(16->16) + BN(16) + PReLU()
    w3 = jnp.transpose(nrm(ks[9], (16, 16, 3, 3)), (2, 3, 1, 0)).reshape(9, 16, 16)
    s3, sh3 = bn(ks[10], 16)
    p['w3f'] = w3 * s3[None, None, :]
    p['sh3'] = sh3.reshape(1, 16)
    p['pa3'] = (0.25 + nrm(ks[11], (1,), 0.05)).reshape(1, 1)

    # SegNIN 1x1 conv 16->1 (bias=False); Dropout2d is identity in eval.
    p['wseg'] = nrm(ks[12], (1, 16, 1, 1))[:, :, 0, 0].T                   # (16,1)
    p['Wseg64'] = jnp.tile(p['wseg'], (1, 64))                             # (16,64)

    # ---- static resize / shift constants (pure-JAX reference path) ---------
    b84 = bilinear_matrix(8, 4)                                            # (8,4)
    b_out = bilinear_matrix(64, 8)                                         # (64,8)
    p['R_high'] = jnp.asarray(np.kron(b84, b84))                           # (64,16)
    p['R_out'] = jnp.asarray(np.kron(b_out, b_out))                        # ref only
    p['t1'] = jnp.asarray(shift_matrices(8, 8, 1))                         # ref only
    p['t2'] = jnp.asarray(shift_matrices(8, 8, 2))                         # ref only

    # ---- kernel constants (guard-row layout, frame independent) ------------
    by_pad = np.concatenate([np.zeros((2, 4), np.float32), b84,
                             np.zeros((2, 4), np.float32)], axis=0)        # (12,4)
    p['r_hg'] = jnp.asarray(np.kron(by_pad, b84))                          # (96,16)

    interior_col = np.zeros((12, 1), np.float32)
    interior_col[2:10] = 1.0
    p['Mxb'] = jnp.asarray(np.kron(interior_col, b_out.T.copy()))          # (96,64)

    b_out_pad = np.concatenate([np.zeros((64, 2), np.float32), b_out,
                                np.zeros((64, 2), np.float32)], axis=1)    # (64,12)
    s_full = np.kron(b_out_pad, np.ones((1, 8), np.float32))               # (64,96)
    p['Seo'] = jnp.asarray(np.concatenate([s_full[0::2], s_full[1::2]], 0))  # (64,96)

    # x-validity / interior masks for the shifted taps (frame periodic)
    xm = np.zeros((96, 104), np.float32)
    xm3 = np.zeros((96, 48), np.float32)
    for py in range(12):
        inter = 1.0 if 2 <= py <= 9 else 0.0
        for x in range(8):
            r = py * 8 + x
            vp1 = inter * (1.0 if x + 1 < 8 else 0.0)
            vm1 = inter * (1.0 if x - 1 >= 0 else 0.0)
            vp2 = inter * (1.0 if x + 2 < 8 else 0.0)
            vm2 = inter * (1.0 if x - 2 >= 0 else 0.0)
            xm[r, 0:40] = inter          # low (24) | in0 (16)
            xm[r, 40:56] = vp1           # x+1 tap
            xm[r, 56:72] = vm1           # x-1 tap
            xm[r, 72:88] = vp2           # x+2 tap (dil=2)
            xm[r, 88:104] = vm2          # x-2 tap (dil=2)
            xm3[r, 0:16] = inter
            xm3[r, 16:32] = vp1
            xm3[r, 32:48] = vm1
    p['XM'] = jnp.asarray(xm)
    p['XM3'] = jnp.asarray(xm3)

    # grouped tap weights: one (104,16) weight per row-shift group dy
    w1f = np.asarray(p['w1f'])
    w2f = np.asarray(p['w2f'])
    wlf = np.asarray(p['wl'])
    lane_p = {0: 24, 1: 40, -1: 56, 2: 72, -2: 88}
    wd = np.zeros((len(_DYS12), 104, 16), np.float32)
    for i, dy in enumerate(_DYS12):
        if dy == 0:
            wd[i, 0:24, :] = wlf                          # fused up2_low path
        if dy in (-8, 0, 8):                              # dilation-1, out ch 0..7
            oy = dy // 8
            for ox in (-1, 0, 1):
                k = (oy + 1) * 3 + (ox + 1)
                r0 = lane_p[ox]
                wd[i, r0:r0 + 8, 0:8] = w1f[k]
        if dy in (-16, 0, 16):                            # dilation-2, out ch 8..15
            oy = dy // 16
            for ox in (-1, 0, 1):
                k = (oy + 1) * 3 + (ox + 1)
                r0 = lane_p[2 * ox] + 8
                wd[i, r0:r0 + 8, 8:16] = w2f[k]
    p['WD'] = jnp.asarray(wd)

    w3f = np.asarray(p['w3f'])
    w3g = np.zeros((len(_DYS3), 48, 16), np.float32)
    for i, dy in enumerate(_DYS3):
        oy = dy // 8
        for ox, r0 in ((0, 0), (1, 16), (-1, 32)):
            k = (oy + 1) * 3 + (ox + 1)
            w3g[i, r0:r0 + 16, :] = w3f[k]
    p['W3G'] = jnp.asarray(w3g)
    return p


# ---------------------------------------------------------------------------
# full forward
# ---------------------------------------------------------------------------
def avg_pool(x, k):
    n, c, h, w = x.shape
    return x.reshape(n, c, h // k, k, w // k, k).mean(axis=(3, 5))


def _frontend(x, p):
    """Stand-in backbone/RFB + NS_Block residual structure (zero stub)."""
    b, t, c, h, w = x.shape
    frames = x.reshape(b * t, c, h, w)
    # TODO(synk): res2net50_v1b + LightRFB replaced by avg-pool + 1x1 projections.
    low = avg_pool(frames, 8)                                    # (B*T, 3, H/8, W/8)
    high = avg_pool(frames, 16)                                  # (B*T, 3, H/16, W/16)
    low = jnp.einsum('nchw,cd->nhwd', low, p['proj_low']).reshape(
        b, t, (h // 8) * (w // 8), 24)
    high = jnp.einsum('nchw,cd->nhwd', high, p['proj_high']).reshape(
        b, t, (h // 16) * (w // 16), 32)
    low_local = low[:, 1:6].reshape(b * 5, (h // 8) * (w // 8), 24)
    high_local = high[:, 1:6].reshape(b * 5, (h // 16) * (w // 16), 32)
    # TODO(synk): NS_Block definition not provided; stubbed as a zero operator,
    # the residual additions of the reference forward are kept verbatim.
    hf1 = jnp.zeros_like(high_local) + high_local                # NSB_global(..) + local
    hf2 = jnp.zeros_like(hf1) + hf1                              # NSB_local(..) + hf1
    high_feat = hf2 + high_local
    return low_local, high_feat


def pnsplus_forward(x, p):
    # x: (B, T, C, H, W) video clip; args['save_attention_maps'] == False
    b = x.shape[0]
    low_local, high_feat = _frontend(x, p)                       # (F,64,24), (F,16,32)
    f = b * 5
    # guard-row layout: 2 zero rows above and below each frame's 8x8 grid
    low_g = jnp.pad(low_local.reshape(f, 8, 8, 24),
                    ((0, 0), (2, 2), (0, 0), (0, 0))).reshape(f * _RPF, 24)
    out = pnsplus_decoder_pallas(low_g, high_feat.reshape(f * 16, 32), p)  # (F*32,128)
    # lanes hold [even-Y row | odd-Y row]: (F*32,128) -> (B, 5, 1, 64, 64)
    out = out.reshape(b, 5, 32, 2, 64).reshape(b, 5, 64, 64)
    return out[:, :, None, :, :]


def reference_forward(x, p):
    """Pure-JAX (XLA) reference with the original per-frame formulation."""
    b = x.shape[0]
    low, high_feat = _frontend(x, p)
    hi_up = jnp.einsum('pq,fqc->fpc', p['R_high'], high_feat)            # (F,64,32)
    in0 = jnp.einsum('fpc,cd->fpd', hi_up, p['w0'])                      # (F,64,16)
    b1 = jnp.einsum('kpq,fqc,kcd->fpd', p['t1'], in0[..., :8], p['w1f'])
    b2 = jnp.einsum('kpq,fqc,kcd->fpd', p['t2'], in0[..., 8:], p['w2f'])
    high16 = jnp.concatenate([b1, b2], axis=-1) + p['sh1']
    low16 = jnp.einsum('fpc,cd->fpd', low, p['wl']) + p['sh2']
    s = high16 + low16
    act = jnp.maximum(s, 0.0) + p['pa'] * jnp.minimum(s, 0.0)
    r = jnp.einsum('kpq,fqc,kcd->fpd', p['t1'], act, p['w3f']) + p['sh3']
    r = jnp.maximum(r, 0.0) + p['pa3'] * jnp.minimum(r, 0.0)
    seg = jnp.einsum('fpc,cd->fpd', r, p['wseg'])                        # (F,64,1)
    out = jnp.einsum('PQ,fQd->fPd', p['R_out'], seg)[..., 0]             # (F,4096)
    return out.reshape(b, 5, 1, 64, 64)


if __name__ == "__main__":
    key = jax.random.PRNGKey(0)
    k_in, k_par = jax.random.split(key)
    # small video clip: batch=1, T=6 frames (forward uses frames 1..5), RGB 64x64
    x = jax.random.normal(k_in, (1, 6, 3, 64, 64), dtype=jnp.float32)
    params = init_params(k_par)

    fwd = jax.jit(lambda v: pnsplus_forward(v, params))
    out = jax.block_until_ready(fwd(x))
    assert out.shape == (1, 5, 1, 64, 64), out.shape
    assert bool(jnp.all(jnp.isfinite(out)))

    ref = jax.block_until_ready(jax.jit(lambda v: reference_forward(v, params))(x))
    err = float(jnp.max(jnp.abs(out - ref)))
    assert err < 5e-4, f"kernel/reference mismatch: max abs err = {err}"
    print("KERNEL_OK")
</pallas_src>

<mosaic_0001>
module attributes {stable_mosaic.version = 11 : i64} {
  func.func @_k(%arg0: memref<16x128xf32, #tpu.memory_space<vmem>>, %arg1: memref<16x128xf32, #tpu.memory_space<vmem>>) attributes {dimension_semantics = [], scalar_prefetch = 0 : i64, scratch_operands = 0 : i64, tpu.core_type = #tpu.core_type<tc>} {
    %c0 = arith.constant 0 : index
    %c0_0 = arith.constant 0 : index
    %0 = vector.load %arg0[%c0, %c0_0] : memref<16x128xf32, #tpu.memory_space<vmem>>, vector<16x128xf32>
    %c1_i32 = arith.constant 1 : i32
    %1 = tpu.dynamic_rotate %0 by %c1_i32 dim 0 : vector<16x128xf32>, i32 -> vector<16x128xf32>
    %c0_1 = arith.constant 0 : index
    %c0_2 = arith.constant 0 : index
    %2 = vector.load %arg1[%c0_1, %c0_2] : memref<16x128xf32, #tpu.memory_space<vmem>>, vector<16x128xf32>
    tpu.vector_store %arg1[%c0_1, %c0_2], %1 {strides = array<i32>} : memref<16x128xf32, #tpu.memory_space<vmem>>, vector<16x128xf32>,
    return
  }
}

module attributes {stable_mosaic.version = 11 : i64} {
  func.func @_pnsplus_fused_kernel(%arg0: memref<480x24xf32, #tpu.memory_space<vmem>>, %arg1: memref<80x32xf32, #tpu.memory_space<vmem>>, %arg2: memref<32x16xf32, #tpu.memory_space<vmem>>, %arg3: memref<96x16xf32, #tpu.memory_space<vmem>>, %arg4: memref<5x104x16xf32, #tpu.memory_space<vmem>>, %arg5: memref<96x104xf32, #tpu.memory_space<vmem>>, %arg6: memref<1x16xf32, #tpu.memory_space<vmem>>, %arg7: memref<1x16xf32, #tpu.memory_space<vmem>>, %arg8: memref<3x48x16xf32, #tpu.memory_space<vmem>>, %arg9: memref<96x48xf32, #tpu.memory_space<vmem>>, %arg10: memref<1x16xf32, #tpu.memory_space<vmem>>, %arg11: memref<1x1xf32, #tpu.memory_space<vmem>>, %arg12: memref<16x64xf32, #tpu.memory_space<vmem>>, %arg13: memref<96x64xf32, #tpu.memory_space<vmem>>, %arg14: memref<64x96xf32, #tpu.memory_space<vmem>>, %arg15: memref<160x128xf32, #tpu.memory_space<vmem>>) attributes {dimension_semantics = [], scalar_prefetch = 0 : i64, scratch_operands = 0 : i64, tpu.core_type = #tpu.core_type<tc>} {
    %c0 = arith.constant 0 : index
    %c0_0 = arith.constant 0 : index
    %0 = vector.load %arg1[%c0, %c0_0] : memref<80x32xf32, #tpu.memory_space<vmem>>, vector<80x32xf32>
    %c0_1 = arith.constant 0 : index
    %c0_2 = arith.constant 0 : index
    %1 = vector.load %arg2[%c0_1, %c0_2] : memref<32x16xf32, #tpu.memory_space<vmem>>, vector<32x16xf32>
    %cst = arith.constant dense<0.000000e+00> : vector<80x16xf32>
    %2 = tpu.matmul %0, %1, %cst {dimension_numbers = #tpu.dot_dimension_numbers<[1], [0], [0], [1], [0, 0, 1, 1], [], []>} : vector<80x32xf32>, vector<32x16xf32>, vector<80x16xf32> -> vector<80x16xf32>
    %c0_3 = arith.constant 0 : index
    %c0_4 = arith.constant 0 : index
    %3 = vector.load %arg3[%c0_3, %c0_4] : memref<96x16xf32, #tpu.memory_space<vmem>>, vector<96x16xf32>
    %4 = vector.extract_strided_slice %2 {offsets = [0, 0], sizes = [16, 16], strides = [1, 1]} : vector<80x16xf32> to vector<16x16xf32>
    %cst_5 = arith.constant dense<0.000000e+00> : vector<96x16xf32>
    %5 = tpu.matmul %3, %4, %cst_5 {dimension_numbers = #tpu.dot_dimension_numbers<[1], [0], [0], [1], [0, 0, 1, 1], [], []>} : vector<96x16xf32>, vector<16x16xf32>, vector<96x16xf32> -> vector<96x16xf32>
    %6 = vector.extract_strided_slice %2 {offsets = [16, 0], sizes = [16, 16], strides = [1, 1]} : vector<80x16xf32> to vector<16x16xf32>
    %cst_6 = arith.constant dense<0.000000e+00> : vector<96x16xf32>
    %7 = tpu.matmul %3, %6, %cst_6 {dimension_numbers = #tpu.dot_dimension_numbers<[1], [0], [0], [1], [0, 0, 1, 1], [], []>} : vector<96x16xf32>, vector<16x16xf32>, vector<96x16xf32> -> vector<96x16xf32>
    %8 = vector.extract_strided_slice %2 {offsets = [32, 0], sizes = [16, 16], strides = [1, 1]} : vector<80x16xf32> to vector<16x16xf32>
    %cst_7 = arith.constant dense<0.000000e+00> : vector<96x16xf32>
    %9 = tpu.matmul %3, %8, %cst_7 {dimension_numbers = #tpu.dot_dimension_numbers<[1], [0], [0], [1], [0, 0, 1, 1], [], []>} : vector<96x16xf32>, vector<16x16xf32>, vector<96x16xf32> -> vector<96x16xf32>
    %10 = vector.extract_strided_slice %2 {offsets = [48, 0], sizes = [16, 16], strides = [1, 1]} : vector<80x16xf32> to vector<16x16xf32>
    %cst_8 = arith.constant dense<0.000000e+00> : vector<96x16xf32>
    %11 = tpu.matmul %3, %10, %cst_8 {dimension_numbers = #tpu.dot_dimension_numbers<[1], [0], [0], [1], [0, 0, 1, 1], [], []>} : vector<96x16xf32>, vector<16x16xf32>, vector<96x16xf32> -> vector<96x16xf32>
    %12 = vector.extract_strided_slice %2 {offsets = [64, 0], sizes = [16, 16], strides = [1, 1]} : vector<80x16xf32> to vector<16x16xf32>
    %cst_9 = arith.constant dense<0.000000e+00> : vector<96x16xf32>
    %13 = tpu.matmul %3, %12, %cst_9 {dimension_numbers = #tpu.dot_dimension_numbers<[1], [0], [0], [1], [0, 0, 1, 1], [], []>} : vector<96x16xf32>, vector<16x16xf32>, vector<96x16xf32> -> vector<96x16xf32>
    %14 = tpu.concatenate %5, %7, %9, %11, %13 in 0 : vector<96x16xf32>, vector<96x16xf32>, vector<96x16xf32>, vector<96x16xf32>, vector<96x16xf32> -> vector<480x16xf32>
    %c0_10 = arith.constant 0 : index
    %c0_11 = arith.constant 0 : index
    %15 = vector.load %arg5[%c0_10, %c0_11] : memref<96x104xf32, #tpu.memory_space<vmem>>, vector<96x104xf32>
    %16 = tpu.concatenate %15, %15, %15, %15, %15 in 0 : vector<96x104xf32>, vector<96x104xf32>, vector<96x104xf32>, vector<96x104xf32>, vector<96x104xf32> -> vector<480x104xf32>
    %c0_12 = arith.constant 0 : index
    %c0_13 = arith.constant 0 : index
    %17 = vector.load %arg0[%c0_12, %c0_13] : memref<480x24xf32, #tpu.memory_space<vmem>>, vector<480x24xf32>
    %18 = vector.extract_strided_slice %14 {offsets = [1, 0], sizes = [479, 16], strides = [1, 1]} : vector<480x16xf32> to vector<479x16xf32>
    %19 = vector.extract_strided_slice %14 {offsets = [0, 0], sizes = [1, 16], strides = [1, 1]} : vector<480x16xf32> to vector<1x16xf32>
    %20 = tpu.concatenate %18, %19 in 0 : vector<479x16xf32>, vector<1x16xf32> -> vector<480x16xf32>
    %21 = vector.extract_strided_slice %14 {offsets = [479, 0], sizes = [1, 16], strides = [1, 1]} : vector<480x16xf32> to vector<1x16xf32>
    %22 = vector.extract_strided_slice %14 {offsets = [0, 0], sizes = [479, 16], strides = [1, 1]} : vector<480x16xf32> to vector<479x16xf32>
    %23 = tpu.concatenate %21, %22 in 0 : vector<1x16xf32>, vector<479x16xf32> -> vector<480x16xf32>
    %24 = vector.extract_strided_slice %14 {offsets = [2, 0], sizes = [478, 16], strides = [1, 1]} : vector<480x16xf32> to vector<478x16xf32>
    %25 = vector.extract_strided_slice %14 {offsets = [0, 0], sizes = [2, 16], strides = [1, 1]} : vector<480x16xf32> to vector<2x16xf32>
    %26 = tpu.concatenate %24, %25 in 0 : vector<478x16xf32>, vector<2x16xf32> -> vector<480x16xf32>
    %27 = vector.extract_strided_slice %14 {offsets = [478, 0], sizes = [2, 16], strides = [1, 1]} : vector<480x16xf32> to vector<2x16xf32>
    %28 = vector.extract_strided_slice %14 {offsets = [0, 0], sizes = [478, 16], strides = [1, 1]} : vector<480x16xf32> to vector<478x16xf32>
    %29 = tpu.concatenate %27, %28 in 0 : vector<2x16xf32>, vector<478x16xf32> -> vector<480x16xf32>
    %30 = tpu.concatenate %17, %14, %20, %23, %26, %29 in 1 : vector<480x24xf32>, vector<480x16xf32>, vector<480x16xf32>, vector<480x16xf32>, vector<480x16xf32>, vector<480x16xf32> -> vector<480x104xf32>
    %31 = arith.mulf %30, %16 : vector<480x104xf32>
    %c0_14 = arith.constant 0 : index
    %c0_15 = arith.constant 0 : index
    %c0_16 = arith.constant 0 : index
    %32 = vector.load %arg4[%c0_14, %c0_15, %c0_16] : memref<5x104x16xf32, #tpu.memory_space<vmem>>, vector<1x104x16xf32>
    %33 = vector.shape_cast %32 : vector<1x104x16xf32> to vector<104x16xf32>
    %cst_17 = arith.constant dense<0.000000e+00> : vector<480x16xf32>
    %34 = tpu.matmul %31, %33, %cst_17 {dimension_numbers = #tpu.dot_dimension_numbers<[1], [0], [0], [1], [0, 0, 1, 1], [], []>} : vector<480x104xf32>, vector<104x16xf32>, vector<480x16xf32> -> vector<480x16xf32>
    %c1 = arith.constant 1 : index
    %c0_18 = arith.constant 0 : index
    %c0_19 = arith.constant 0 : index
    %35 = vector.load %arg4[%c1, %c0_18, %c0_19] : memref<5x104x16xf32, #tpu.memory_space<vmem>>, vector<1x104x16xf32>
    %36 = vector.shape_cast %35 : vector<1x104x16xf32> to vector<104x16xf32>
    %cst_20 = arith.constant dense<0.000000e+00> : vector<480x16xf32>
    %37 = tpu.matmul %31, %36, %cst_20 {dimension_numbers = #tpu.dot_dimension_numbers<[1], [0], [0], [1], [0, 0, 1, 1], [], []>} : vector<480x104xf32>, vector<104x16xf32>, vector<480x16xf32> -> vector<480x16xf32>
    %38 = vector.extract_strided_slice %37 {offsets = [8, 0], sizes = [472, 16], strides = [1, 1]} : vector<480x16xf32> to vector<472x16xf32>
    %39 = vector.extract_strided_slice %37 {offsets = [0, 0], sizes = [8, 16], strides = [1, 1]} : vector<480x16xf32> to vector<8x16xf32>
    %40 = tpu.concatenate %38, %39 in 0 : vector<472x16xf32>, vector<8x16xf32> -> vector<480x16xf32>
    %41 = arith.addf %34, %40 : vector<480x16xf32>
    %c2 = arith.constant 2 : index
    %c0_21 = arith.constant 0 : index
    %c0_22 = arith.constant 0 : index
    %42 = vector.load %arg4[%c2, %c0_21, %c0_22] : memref<5x104x16xf32, #tpu.memory_space<vmem>>, vector<1x104x16xf32>
    %43 = vector.shape_cast %42 : vector<1x104x16xf32> to vector<104x16xf32>
    %cst_23 = arith.constant dense<0.000000e+00> : vector<480x16xf32>
    %44 = tpu.matmul %31, %43, %cst_23 {dimension_numbers = #tpu.dot_dimension_numbers<[1], [0], [0], [1], [0, 0, 1, 1], [], []>} : vector<480x104xf32>, vector<104x16xf32>, vector<480x16xf32> -> vector<480x16xf32>
    %45 = vector.extract_strided_slice %44 {offsets = [472, 0], sizes = [8, 16], strides = [1, 1]} : vector<480x16xf32> to vector<8x16xf32>
    %46 = vector.extract_strided_slice %44 {offsets = [0, 0], sizes = [472, 16], strides = [1, 1]} : vector<480x16xf32> to vector<472x16xf32>
    %47 = tpu.concatenate %45, %46 in 0 : vector<8x16xf32>, vector<472x16xf32> -> vector<480x16xf32>
    %48 = arith.addf %41, %47 : vector<480x16xf32>
    %c3 = arith.constant 3 : index
    %c0_24 = arith.constant 0 : index
    %c0_25 = arith.constant 0 : index
    %49 = vector.load %arg4[%c3, %c0_24, %c0_25] : memref<5x104x16xf32, #tpu.memory_space<vmem>>, vector<1x104x16xf32>
    %50 = vector.shape_cast %49 : vector<1x104x16xf32> to vector<104x16xf32>
    %cst_26 = arith.constant dense<0.000000e+00> : vector<480x16xf32>
    %51 = tpu.matmul %31, %50, %cst_26 {dimension_numbers = #tpu.dot_dimension_numbers<[1], [0], [0], [1], [0, 0, 1, 1], [], []>} : vector<480x104xf32>, vector<104x16xf32>, vector<480x16xf32> -> vector<480x16xf32>
    %52 = vector.extract_strided_slice %51 {offsets = [16, 0], sizes = [464, 16], strides = [1, 1]} : vector<480x16xf32> to vector<464x16xf32>
    %53 = vector.extract_strided_slice %51 {offsets = [0, 0], sizes = [16, 16], strides = [1, 1]} : vector<480x16xf32> to vector<16x16xf32>
    %54 = tpu.concatenate %52, %53 in 0 : vector<464x16xf32>, vector<16x16xf32> -> vector<480x16xf32>
    %55 = arith.addf %48, %54 : vector<480x16xf32>
    %c4 = arith.constant 4 : index
    %c0_27 = arith.constant 0 : index
    %c0_28 = arith.constant 0 : index
    %56 = vector.load %arg4[%c4, %c0_27, %c0_28] : memref<5x104x16xf32, #tpu.memory_space<vmem>>, vector<1x104x16xf32>
    %57 = vector.shape_cast %56 : vector<1x104x16xf32> to vector<104x16xf32>
    %cst_29 = arith.constant dense<0.000000e+00> : vector<480x16xf32>
    %58 = tpu.matmul %31, %57, %cst_29 {dimension_numbers = #tpu.dot_dimension_numbers<[1], [0], [0], [1], [0, 0, 1, 1], [], []>} : vector<480x104xf32>, vector<104x16xf32>, vector<480x16xf32> -> vector<480x16xf32>
    %59 = vector.extract_strided_slice %58 {offsets = [464, 0], sizes = [16, 16], strides = [1, 1]} : vector<480x16xf32> to vector<16x16xf32>
    %60 = vector.extract_strided_slice %58 {offsets = [0, 0], sizes = [464, 16], strides = [1, 1]} : vector<480x16xf32> to vector<464x16xf32>
    %61 = tpu.concatenate %59, %60 in 0 : vector<16x16xf32>, vector<464x16xf32> -> vector<480x16xf32>
    %62 = arith.addf %55, %61 : vector<480x16xf32>
    %c0_30 = arith.constant 0 : index
    %c0_31 = arith.constant 0 : index
    %63 = vector.load %arg6[%c0_30, %c0_31] : memref<1x16xf32, #tpu.memory_space<vmem>>, vector<1x16xf32>
    %64 = vector.broadcast %63 : vector<1x16xf32> to vector<480x16xf32>
    %65 = arith.addf %62, %64 : vector<480x16xf32>
    %cst_32 = arith.constant 0.000000e+00 : f32
    %66 = vector.broadcast %cst_32 : f32 to vector<480x16xf32>
    %67 = arith.maximumf %65, %66 : vector<480x16xf32>
    %c0_33 = arith.constant 0 : index
    %c0_34 = arith.constant 0 : index
    %68 = vector.load %arg7[%c0_33, %c0_34] : memref<1x16xf32, #tpu.memory_space<vmem>>, vector<1x16xf32>
    %cst_35 = arith.constant 0.000000e+00 : f32
    %69 = vector.broadcast %cst_35 : f32 to vector<480x16xf32>
    %70 = arith.minimumf %65, %69 : vector<480x16xf32>
    %71 = vector.broadcast %68 : vector<1x16xf32> to vector<480x16xf32>
    %72 = arith.mulf %71, %70 : vector<480x16xf32>
    %73 = arith.addf %67, %72 : vector<480x16xf32>
    %c0_36 = arith.constant 0 : index
    %c0_37 = arith.constant 0 : index
    %74 = vector.load %arg9[%c0_36, %c0_37] : memref<96x48xf32, #tpu.memory_space<vmem>>, vector<96x48xf32>
    %75 = tpu.concatenate %74, %74, %74, %74, %74 in 0 : vector<96x48xf32>, vector<96x48xf32>, vector<96x48xf32>, vector<96x48xf32>, vector<96x48xf32> -> vector<480x48xf32>
    %76 = vector.extract_strided_slice %73 {offsets = [1, 0], sizes = [479, 16], strides = [1, 1]} : vector<480x16xf32> to vector<479x16xf32>
    %77 = vector.extract_strided_slice %73 {offsets = [0, 0], sizes = [1, 16], strides = [1, 1]} : vector<480x16xf32> to vector<1x16xf32>
    %78 = tpu.concatenate %76, %77 in 0 : vector<479x16xf32>, vector<1x16xf32> -> vector<480x16xf32>
    %79 = vector.extract_strided_slice %73 {offsets = [479, 0], sizes = [1, 16], strides = [1, 1]} : vector<480x16xf32> to vector<1x16xf32>
    %80 = vector.extract_strided_slice %73 {offsets = [0, 0], sizes = [479, 16], strides = [1, 1]} : vector<480x16xf32> to vector<479x16xf32>
    %81 = tpu.concatenate %79, %80 in 0 : vector<1x16xf32>, vector<479x16xf32> -> vector<480x16xf32>
    %82 = tpu.concatenate %73, %78, %81 in 1 : vector<480x16xf32>, vector<480x16xf32>, vector<480x16xf32> -> vector<480x48xf32>
    %83 = arith.mulf %82, %75 : vector<480x48xf32>
    %c0_38 = arith.constant 0 : index
    %c0_39 = arith.constant 0 : index
    %c0_40 = arith.constant 0 : index
    %84 = vector.load %arg8[%c0_38, %c0_39, %c0_40] : memref<3x48x16xf32, #tpu.memory_space<vmem>>, vector<1x48x16xf32>
    %85 = vector.shape_cast %84 : vector<1x48x16xf32> to vector<48x16xf32>
    %cst_41 = arith.constant dense<0.000000e+00> : vector<480x16xf32>
    %86 = tpu.matmul %83, %85, %cst_41 {dimension_numbers = #tpu.dot_dimension_numbers<[1], [0], [0], [1], [0, 0, 1, 1], [], []>} : vector<480x48xf32>, vector<48x16xf32>, vector<480x16xf32> -> vector<480x16xf32>
    %c1_42 = arith.constant 1 : index
    %c0_43 = arith.constant 0 : index
    %c0_44 = arith.constant 0 : index
    %87 = vector.load %arg8[%c1_42, %c0_43, %c0_44] : memref<3x48x16xf32, #tpu.memory_space<vmem>>, vector<1x48x16xf32>
    %88 = vector.shape_cast %87 : vector<1x48x16xf32> to vector<48x16xf32>
    %cst_45 = arith.constant dense<0.000000e+00> : vector<480x16xf32>
    %89 = tpu.matmul %83, %88, %cst_45 {dimension_numbers = #tpu.dot_dimension_numbers<[1], [0], [0], [1], [0, 0, 1, 1], [], []>} : vector<480x48xf32>, vector<48x16xf32>, vector<480x16xf32> -> vector<480x16xf32>
    %90 = vector.extract_strided_slice %89 {offsets = [8, 0], sizes = [472, 16], strides = [1, 1]} : vector<480x16xf32> to vector<472x16xf32>
    %91 = vector.extract_strided_slice %89 {offsets = [0, 0], sizes = [8, 16], strides = [1, 1]} : vector<480x16xf32> to vector<8x16xf32>
    %92 = tpu.concatenate %90, %91 in 0 : vector<472x16xf32>, vector<8x16xf32> -> vector<480x16xf32>
    %93 = arith.addf %86, %92 : vector<480x16xf32>
    %c2_46 = arith.constant 2 : index
    %c0_47 = arith.constant 0 : index
    %c0_48 = arith.constant 0 : index
    %94 = vector.load %arg8[%c2_46, %c0_47, %c0_48] : memref<3x48x16xf32, #tpu.memory_space<vmem>>, vector<1x48x16xf32>
    %95 = vector.shape_cast %94 : vector<1x48x16xf32> to vector<48x16xf32>
    %cst_49 = arith.constant dense<0.000000e+00> : vector<480x16xf32>
    %96 = tpu.matmul %83, %95, %cst_49 {dimension_numbers = #tpu.dot_dimension_numbers<[1], [0], [0], [1], [0, 0, 1, 1], [], []>} : vector<480x48xf32>, vector<48x16xf32>, vector<480x16xf32> -> vector<480x16xf32>
    %97 = vector.extract_strided_slice %96 {offsets = [472, 0], sizes = [8, 16], strides = [1, 1]} : vector<480x16xf32> to vector<8x16xf32>
    %98 = vector.extract_strided_slice %96 {offsets = [0, 0], sizes = [472, 16], strides = [1, 1]} : vector<480x16xf32> to vector<472x16xf32>
    %99 = tpu.concatenate %97, %98 in 0 : vector<8x16xf32>, vector<472x16xf32> -> vector<480x16xf32>
    %100 = arith.addf %93, %99 : vector<480x16xf32>
    %c0_50 = arith.constant 0 : index
    %c0_51 = arith.constant 0 : index
    %101 = vector.load %arg10[%c0_50, %c0_51] : memref<1x16xf32, #tpu.memory_space<vmem>>, vector<1x16xf32>
    %102 = vector.broadcast %101 : vector<1x16xf32> to vector<480x16xf32>
    %103 = arith.addf %100, %102 : vector<480x16xf32>
    %cst_52 = arith.constant 0.000000e+00 : f32
    %104 = vector.broadcast %cst_52 : f32 to vector<480x16xf32>
    %105 = arith.maximumf %103, %104 : vector<480x16xf32>
    %c0_53 = arith.constant 0 : index
    %c0_54 = arith.constant 0 : index
    %106 = vector.load %arg11[%c0_53, %c0_54] : memref<1x1xf32, #tpu.memory_space<vmem>>, vector<1x1xf32>
    %cst_55 = arith.constant 0.000000e+00 : f32
    %107 = vector.broadcast %cst_55 : f32 to vector<480x16xf32>
    %108 = arith.minimumf %103, %107 : vector<480x16xf32>
    %109 = vector.broadcast %106 : vector<1x1xf32> to vector<480x16xf32>
    %110 = arith.mulf %109, %108 : vector<480x16xf32>
    %111 = arith.addf %105, %110 : vector<480x16xf32>
    %c0_56 = arith.constant 0 : index
    %c0_57 = arith.constant 0 : index
    %112 = vector.load %arg13[%c0_56, %c0_57] : memref<96x64xf32, #tpu.memory_space<vmem>>, vector<96x64xf32>
    %113 = tpu.concatenate %112, %112, %112, %112, %112 in 0 : vector<96x64xf32>, vector<96x64xf32>, vector<96x64xf32>, vector<96x64xf32>, vector<96x64xf32> -> vector<480x64xf32>
    %c0_58 = arith.constant 0 : index
    %c0_59 = arith.constant 0 : index
    %114 = vector.load %arg12[%c0_58, %c0_59] : memref<16x64xf32, #tpu.memory_space<vmem>>, vector<16x64xf32>
    %cst_60 = arith.constant dense<0.000000e+00> : vector<480x64xf32>
    %115 = tpu.matmul %111, %114, %cst_60 {dimension_numbers = #tpu.dot_dimension_numbers<[1], [0], [0], [1], [0, 0, 1, 1], [], []>} : vector<480x16xf32>, vector<16x64xf32>, vector<480x64xf32> -> vector<480x64xf32>
    %116 = arith.mulf %115, %113 : vector<480x64xf32>
    %c0_61 = arith.constant 0 : index
    %c0_62 = arith.constant 0 : index
    %117 = vector.load %arg14[%c0_61, %c0_62] : memref<64x96xf32, #tpu.memory_space<vmem>>, vector<64x96xf32>
    %118 = vector.extract_strided_slice %116 {offsets = [0, 0], sizes = [96, 64], strides = [1, 1]} : vector<480x64xf32> to vector<96x64xf32>
    %cst_63 = arith.constant dense<0.000000e+00> : vector<64x64xf32>
    %119 = tpu.matmul %117, %118, %cst_63 {dimension_numbers = #tpu.dot_dimension_numbers<[1], [0], [0], [1], [0, 0, 1, 1], [], []>} : vector<64x96xf32>, vector<96x64xf32>, vector<64x64xf32> -> vector<64x64xf32>
    %120 = vector.extract_strided_slice %119 {offsets = [0, 0], sizes = [32, 64], strides = [1, 1]} : vector<64x64xf32> to vector<32x64xf32>
    %c0_64 = arith.constant 0 : index
    %c0_65 = arith.constant 0 : index
    %121 = vector.load %arg15[%c0_64, %c0_65] : memref<160x128xf32, #tpu.memory_space<vmem>>, vector<32x64xf32>
    tpu.vector_store %arg15[%c0_64, %c0_65], %120 {strides = array<i32>} : memref<160x128xf32, #tpu.memory_space<vmem>>, vector<32x64xf32>,
    %122 = vector.extract_strided_slice %119 {offsets = [32, 0], sizes = [32, 64], strides = [1, 1]} : vector<64x64xf32> to vector<32x64xf32>
    %c0_66 = arith.constant 0 : index
    %c64 = arith.constant 64 : index
    %123 = vector.load %arg15[%c0_66, %c64] : memref<160x128xf32, #tpu.memory_space<vmem>>, vector<32x64xf32>
    tpu.vector_store %arg15[%c0_66, %c64], %122 {strides = array<i32>} : memref<160x128xf32, #tpu.memory_space<vmem>>, vector<32x64xf32>,
    %124 = vector.extract_strided_slice %116 {offsets = [96, 0], sizes = [96, 64], strides = [1, 1]} : vector<480x64xf32> to vector<96x64xf32>
    %cst_67 = arith.constant dense<0.000000e+00> : vector<64x64xf32>
    %125 = tpu.matmul %117, %124, %cst_67 {dimension_numbers = #tpu.dot_dimension_numbers<[1], [0], [0], [1], [0, 0, 1, 1], [], []>} : vector<64x96xf32>, vector<96x64xf32>, vector<64x64xf32> -> vector<64x64xf32>
    %126 = vector.extract_strided_slice %125 {offsets = [0, 0], sizes = [32, 64], strides = [1, 1]} : vector<64x64xf32> to vector<32x64xf32>
    %c32 = arith.constant 32 : index
    %c0_68 = arith.constant 0 : index
    %127 = vector.load %arg15[%c32, %c0_68] : memref<160x128xf32, #tpu.memory_space<vmem>>, vector<32x64xf32>
    tpu.vector_store %arg15[%c32, %c0_68], %126 {strides = array<i32>} : memref<160x128xf32, #tpu.memory_space<vmem>>, vector<32x64xf32>,
    %128 = vector.extract_strided_slice %125 {offsets = [32, 0], sizes = [32, 64], strides = [1, 1]} : vector<64x64xf32> to vector<32x64xf32>
    %c32_69 = arith.constant 32 : index
    %c64_70 = arith.constant 64 : index
    %129 = vector.load %arg15[%c32_69, %c64_70] : memref<160x128xf32, #tpu.memory_space<vmem>>, vector<32x64xf32>
    tpu.vector_store %arg15[%c32_69, %c64_70], %128 {strides = array<i32>} : memref<160x128xf32, #tpu.memory_space<vmem>>, vector<32x64xf32>,
    %130 = vector.extract_strided_slice %116 {offsets = [192, 0], sizes = [96, 64], strides = [1, 1]} : vector<480x64xf32> to vector<96x64xf32>
    %cst_71 = arith.constant dense<0.000000e+00> : vector<64x64xf32>
    %131 = tpu.matmul %117, %130, %cst_71 {dimension_numbers = #tpu.dot_dimension_numbers<[1], [0], [0], [1], [0, 0, 1, 1], [], []>} : vector<64x96xf32>, vector<96x64xf32>, vector<64x64xf32> -> vector<64x64xf32>
    %132 = vector.extract_strided_slice %131 {offsets = [0, 0], sizes = [32, 64], strides = [1, 1]} : vector<64x64xf32> to vector<32x64xf32>
    %c64_72 = arith.constant 64 : index
    %c0_73 = arith.constant 0 : index
    %133 = vector.load %arg15[%c64_72, %c0_73] : memref<160x128xf32, #tpu.memory_space<vmem>>, vector<32x64xf32>
    tpu.vector_store %arg15[%c64_72, %c0_73], %132 {strides = array<i32>} : memref<160x128xf32, #tpu.memory_space<vmem>>, vector<32x64xf32>,
    %134 = vector.extract_strided_slice %131 {offsets = [32, 0], sizes = [32, 64], strides = [1, 1]} : vector<64x64xf32> to vector<32x64xf32>
    %c64_74 = arith.constant 64 : index
    %c64_75 = arith.constant 64 : index
    %135 = vector.load %arg15[%c64_74, %c64_75] : memref<160x128xf32, #tpu.memory_space<vmem>>, vector<32x64xf32>
    tpu.vector_store %arg15[%c64_74, %c64_75], %134 {strides = array<i32>} : memref<160x128xf32, #tpu.memory_space<vmem>>, vector<32x64xf32>,
    %136 = vector.extract_strided_slice %116 {offsets = [288, 0], sizes = [96, 64], strides = [1, 1]} : vector<480x64xf32> to vector<96x64xf32>
    %cst_76 = arith.constant dense<0.000000e+00> : vector<64x64xf32>
    %137 = tpu.matmul %117, %136, %cst_76 {dimension_numbers = #tpu.dot_dimension_numbers<[1], [0], [0], [1], [0, 0, 1, 1], [], []>} : vector<64x96xf32>, vector<96x64xf32>, vector<64x64xf32> -> vector<64x64xf32>
    %138 = vector.extract_strided_slice %137 {offsets = [0, 0], sizes = [32, 64], strides = [1, 1]} : vector<64x64xf32> to vector<32x64xf32>
    %c96 = arith.constant 96 : index
    %c0_77 = arith.constant 0 : index
    %139 = vector.load %arg15[%c96, %c0_77] : memref<160x128xf32, #tpu.memory_space<vmem>>, vector<32x64xf32>
    tpu.vector_store %arg15[%c96, %c0_77], %138 {strides = array<i32>} : memref<160x128xf32, #tpu.memory_space<vmem>>, vector<32x64xf32>,
    %140 = vector.extract_strided_slice %137 {offsets = [32, 0], sizes = [32, 64], strides = [1, 1]} : vector<64x64xf32> to vector<32x64xf32>
    %c96_78 = arith.constant 96 : index
    %c64_79 = arith.constant 64 : index
    %141 = vector.load %arg15[%c96_78, %c64_79] : memref<160x128xf32, #tpu.memory_space<vmem>>, vector<32x64xf32>
    tpu.vector_store %arg15[%c96_78, %c64_79], %140 {strides = array<i32>} : memref<160x128xf32, #tpu.memory_space<vmem>>, vector<32x64xf32>,
    %142 = vector.extract_strided_slice %116 {offsets = [384, 0], sizes = [96, 64], strides = [1, 1]} : vector<480x64xf32> to vector<96x64xf32>
    %cst_80 = arith.constant dense<0.000000e+00> : vector<64x64xf32>
    %143 = tpu.matmul %117, %142, %cst_80 {dimension_numbers = #tpu.dot_dimension_numbers<[1], [0], [0], [1], [0, 0, 1, 1], [], []>} : vector<64x96xf32>, vector<96x64xf32>, vector<64x64xf32> -> vector<64x64xf32>
    %144 = vector.extract_strided_slice %143 {offsets = [0, 0], sizes = [32, 64], strides = [1, 1]} : vector<64x64xf32> to vector<32x64xf32>
    %c128 = arith.constant 128 : index
    %c0_81 = arith.constant 0 : index
    %145 = vector.load %arg15[%c128, %c0_81] : memref<160x128xf32, #tpu.memory_space<vmem>>, vector<32x64xf32>
    tpu.vector_store %arg15[%c128, %c0_81], %144 {strides = array<i32>} : memref<160x128xf32, #tpu.memory_space<vmem>>, vector<32x64xf32>,
    %146 = vector.extract_strided_slice %143 {offsets = [32, 0], sizes = [32, 64], strides = [1, 1]} : vector<64x64xf32> to vector<32x64xf32>
    %c128_82 = arith.constant 128 : index
    %c64_83 = arith.constant 64 : index
    %147 = vector.load %arg15[%c128_82, %c64_83] : memref<160x128xf32, #tpu.memory_space<vmem>>, vector<32x64xf32>
    tpu.vector_store %arg15[%c128_82, %c64_83], %146 {strides = array<i32>} : memref<160x128xf32, #tpu.memory_space<vmem>>, vector<32x64xf32>,
    return
  }
}

</mosaic_0001>

<llo_original>
// kernel: tpu_custom_call.1
$region0: #{tpu_custom_call.1}
  #allocation0 [shape = 'u32[]', space=smem, size = 0x4, offset = 0x4, fixed_abs, tag = 'smem constant byte address 0x4 - core index']
  #allocation1 [shape = 'u32[72,128]{1,0:T(1,128)}', space=vmem, size = 0x9000, scoped, tag = 'internal scratch']
  %s0 = inlined_call_operand.hbm [shape: f32[16,128], index: 0, kind: input, shape index: {}]
  %s1 = inlined_call_operand.hbm [shape: f32[16,128], index: 1, kind: output, shape index: {}]
  %s2 = sld [smem:[#allocation0]]
  $region18: #{tpu_custom_call.1} parent=0
    _
  %s4 = ssub.s32 1, %s2
  %s5 = scalar_select 0, %s4, %s2
  $region1: #{tpu_custom_call.1} parent=0
    #allocation2 [shape = 'u8[8192]{0}', space=vmem, size = 0x2000, scoped, tag = 'input window, operand 0, single buffered']
    #allocation3 [shape = 's32[1]{0}', space=sflag, size = 0x4, scoped, tag = 'scoped memory for tpu_custom_call.1']
    #allocation4 [shape = 's32[1]{0}', space=sflag, size = 0x4, scoped, tag = 'scoped memory for tpu_custom_call.1']
    #allocation5 [shape = 'u8[8192]{0}', space=vmem, size = 0x2000, scoped, tag = 'output window, operand 0, single buffered']
    %6 = vsyncpa [#allocation3], 0
    %7 = vsyncpa [#allocation4], 0
    // Predicated region
    $region2: #{tpu_custom_call.1} parent=1 // pred_check
      _
    $region3: #{tpu_custom_call.1} parent=1 // pred_check_branch
      %9 = sbr.rel (0) target = $region5
    $region4: #{tpu_custom_call.1} parent=1 // pred_region
      %11 = vsyncadd [#allocation3], 0
      %s12 = sshll.u32 %s0, 4
      %s13 = int_to_ptr.hbm [resolvable:$true] %s12
      %s14 = sshll.u32 [#allocation2], 4
      %s15 = int_to_ptr.vmem [resolvable:$true] %s14
      %20 = dma.hbm_to_vmem [thread:$0]  %s13, 256, %s15, [#allocation3], 128, 128, 8
    $region5: #{tpu_custom_call.1} parent=1 // pred_fallthru
      _
    // Predicated region
    $region6: #{tpu_custom_call.1} parent=1 // pred_check
      _
    $region7: #{tpu_custom_call.1} parent=1 // pred_check_branch
      %22 = sbr.rel (0) target = $region9
    $region8: #{tpu_custom_call.1} parent=1 // pred_region
      %24 = dma.done [#allocation3], 256
    $region9: #{tpu_custom_call.1} parent=1 // pred_fallthru
      _
    %v25 = vld [vmem:[#allocation2] sm:$0xff]
    %v26 = vld [vmem:[#allocation2 + $0x8] sm:$0xff]
    %v27 = vrot.slane %v25, 7
    %v28 = vrot.slane %v26, 7
    %v29 = vlaneseq
    %v30 = vshrl.u32 %v29, 7
    %vm31 = vcmp.lt.s32.totalorder %v30, 1
    %v32 = vsel %vm31, %v27, %v28
    %v33 = vsel %vm31, %v28, %v27
    %34 = vst [vmem:[#allocation5] sm:$0xff] %v33
    %35 = vst [vmem:[#allocation5 + $0x8] sm:$0xff] %v32
    // Predicated region
    $region10: #{tpu_custom_call.1} parent=1 // pred_check
      _
    $region11: #{tpu_custom_call.1} parent=1 // pred_check_branch
      %37 = sbr.rel (0) target = $region13
    $region12: #{tpu_custom_call.1} parent=1 // pred_region
      %39 = vsyncadd [#allocation4], 0
      %s40 = sshll.u32 [#allocation5], 4
      %s41 = int_to_ptr.vmem [resolvable:$true] %s40
      %s42 = sshll.u32 %s1, 4
      %s43 = int_to_ptr.hbm [resolvable:$true] %s42
      %48 = dma.vmem_to_hbm [thread:$0]  %s41, 256, %s43, [#allocation4], 128, 128, 8
    $region13: #{tpu_custom_call.1} parent=1 // pred_fallthru
      _
    // Predicated region
    $region14: #{tpu_custom_call.1} parent=1 // pred_check
      _
    $region15: #{tpu_custom_call.1} parent=1 // pred_check_branch
      %50 = sbr.rel (0) target = $region17
    $region16: #{tpu_custom_call.1} parent=1 // pred_region
      %52 = dma.done [#allocation4], 256
    $region17: #{tpu_custom_call.1} parent=1 // pred_fallthru
      _
    %53 = vsyncpa [#allocation3], 1
    %54 = vsyncpa [#allocation4], 1

// kernel: _lambda_.1
$region0: #{_lambda_.1}
  #allocation0 [shape = 'u32[]', space=smem, size = 0x4, offset = 0x4, fixed_abs, tag = 'smem constant byte address 0x4 - core index']
  #allocation1 [shape = 'u32[72,128]{1,0:T(1,128)}', space=vmem, size = 0x9000, scoped, tag = 'internal scratch']
  #allocation2 [shape = 'f32[1,1]{1,0:T(1,128)S(1)}', space=vmem, size = 0x200, scoped, tag = 'scoped memory for _lambda_.1']
  %s0 = inlined_call_operand.vmem [shape: f32[480,24], index: 0, kind: input, shape index: {}]
  %s1 = inlined_call_operand.vmem [shape: f32[80,32], index: 1, kind: input, shape index: {}]
  %s2 = inlined_call_operand.vmem [shape: f32[32,16], index: 2, kind: input, shape index: {}]
  %s3 = inlined_call_operand.vmem [shape: f32[96,16], index: 3, kind: input, shape index: {}]
  %s4 = inlined_call_operand.vmem [shape: f32[5,104,16], index: 4, kind: input, shape index: {}]
  %s5 = inlined_call_operand.vmem [shape: f32[96,104], index: 5, kind: input, shape index: {}]
  %s6 = inlined_call_operand.vmem [shape: f32[1,16], index: 6, kind: input, shape index: {}]
  %s7 = inlined_call_operand.vmem [shape: f32[1,16], index: 7, kind: input, shape index: {}]
  %s8 = inlined_call_operand.vmem [shape: f32[3,48,16], index: 8, kind: input, shape index: {}]
  %s9 = inlined_call_operand.vmem [shape: f32[96,48], index: 9, kind: input, shape index: {}]
  %s10 = inlined_call_operand.vmem [shape: f32[1,16], index: 10, kind: input, shape index: {}]
  %s11 = inlined_call_operand.<no memory space> [shape: f32[1,1], index: 11, kind: input, shape index: {}]
  %s12 = inlined_call_operand.vmem [shape: f32[16,64], index: 12, kind: input, shape index: {}]
  %s13 = inlined_call_operand.vmem [shape: f32[96,64], index: 13, kind: input, shape index: {}]
  %s14 = inlined_call_operand.vmem [shape: f32[64,96], index: 14, kind: input, shape index: {}]
  %s15 = inlined_call_operand.vmem [shape: f32[160,128], index: 15, kind: output, shape index: {}]
  %s16 = sld [smem:[#allocation0]]
  $region70: #{_lambda_.1} parent=0
    _
  %s18 = ssub.s32 1, %s16
  %s19 = scalar_select 0, %s18, %s16
  %v20 = vstv %s11
  %21 = vst [vmem:[#allocation2] sm:$0x1] %v20
  // Predicated region
  $region2: #{_lambda_.1} parent=0 // pred_check
    _
  $region3: #{_lambda_.1} parent=0 // pred_check_branch
    %23 = sbr.rel (0) target = $region5
  $region4: #{_lambda_.1} parent=0 // pred_region
    _
  $region5: #{_lambda_.1} parent=0 // pred_fallthru
    _
  // Predicated region
  $region6: #{_lambda_.1} parent=0 // pred_check
    _
  $region7: #{_lambda_.1} parent=0 // pred_check_branch
    %25 = sbr.rel (0) target = $region9
  $region8: #{_lambda_.1} parent=0 // pred_region
    _
  $region9: #{_lambda_.1} parent=0 // pred_fallthru
    _
  // Predicated region
  $region10: #{_lambda_.1} parent=0 // pred_check
    _
  $region11: #{_lambda_.1} parent=0 // pred_check_branch
    %27 = sbr.rel (0) target = $region13
  $region12: #{_lambda_.1} parent=0 // pred_region
    _
  $region13: #{_lambda_.1} parent=0 // pred_fallthru
    _
  // Predicated region
  $region14: #{_lambda_.1} parent=0 // pred_check
    _
  $region15: #{_lambda_.1} parent=0 // pred_check_branch
    %29 = sbr.rel (0) target = $region17
  $region16: #{_lambda_.1} parent=0 // pred_region
    _
  $region17: #{_lambda_.1} parent=0 // pred_fallthru
    _
  // Predicated region
  $region18: #{_lambda_.1} parent=0 // pred_check
    _
  $region19: #{_lambda_.1} parent=0 // pred_check_branch
    %31 = sbr.rel (0) target = $region21
  $region20: #{_lambda_.1} parent=0 // pred_region
    _
  $region21: #{_lambda_.1} parent=0 // pred_fallthru
    _
  // Predicated region
  $region22: #{_lambda_.1} parent=0 // pred_check
    _
  $region23: #{_lambda_.1} parent=0 // pred_check_branch
    %33 = sbr.rel (0) target = $region25
  $region24: #{_lambda_.1} parent=0 // pred_region
    _
  $region25: #{_lambda_.1} parent=0 // pred_fallthru
    _
  // Predicated region
  $region26: #{_lambda_.1} parent=0 // pred_check
    _
  $region27: #{_lambda_.1} parent=0 // pred_check_branch
    %35 = sbr.rel (0) target = $region29
  $region28: #{_lambda_.1} parent=0 // pred_region
    _
  $region29: #{_lambda_.1} parent=0 // pred_fallthru
    _
  // Predicated region
  $region30: #{_lambda_.1} parent=0 // pred_check
    _
  $region31: #{_lambda_.1} parent=0 // pred_check_branch
    %37 = sbr.rel (0) target = $region33
  $region32: #{_lambda_.1} parent=0 // pred_region
    _
  $region33: #{_lambda_.1} parent=0 // pred_fallthru
    _
  // Predicated region
  $region34: #{_lambda_.1} parent=0 // pred_check
    _
  $region35: #{_lambda_.1} parent=0 // pred_check_branch
    %39 = sbr.rel (0) target = $region37
  $region36: #{_lambda_.1} parent=0 // pred_region
    _
  $region37: #{_lambda_.1} parent=0 // pred_fallthru
    _
  // Predicated region
  $region38: #{_lambda_.1} parent=0 // pred_check
    _
  $region39: #{_lambda_.1} parent=0 // pred_check_branch
    %41 = sbr.rel (0) target = $region41
  $region40: #{_lambda_.1} parent=0 // pred_region
    _
  $region41: #{_lambda_.1} parent=0 // pred_fallthru
    _
  // Predicated region
  $region42: #{_lambda_.1} parent=0 // pred_check
    _
  $region43: #{_lambda_.1} parent=0 // pred_check_branch
    %43 = sbr.rel (0) target = $region45
  $region44: #{_lambda_.1} parent=0 // pred_region
    _
  $region45: #{_lambda_.1} parent=0 // pred_fallthru
    _
  // Predicated region
  $region46: #{_lambda_.1} parent=0 // pred_check
    _
  $region47: #{_lambda_.1} parent=0 // pred_check_branch
    %45 = sbr.rel (0) target = $region49
  $region48: #{_lambda_.1} parent=0 // pred_region
    _
  $region49: #{_lambda_.1} parent=0 // pred_fallthru
    _
  // Predicated region
  $region50: #{_lambda_.1} parent=0 // pred_check
    _
  $region51: #{_lambda_.1} parent=0 // pred_check_branch
    %47 = sbr.rel (0) target = $region53
  $region52: #{_lambda_.1} parent=0 // pred_region
    _
  $region53: #{_lambda_.1} parent=0 // pred_fallthru
    _
  // Predicated region
  $region54: #{_lambda_.1} parent=0 // pred_check
    _
  $region55: #{_lambda_.1} parent=0 // pred_check_branch
    %49 = sbr.rel (0) target = $region57
  $region56: #{_lambda_.1} parent=0 // pred_region
    _
  $region57: #{_lambda_.1} parent=0 // pred_fallthru
    _
  // Predicated region
  $region58: #{_lambda_.1} parent=0 // pred_check
    _
  $region59: #{_lambda_.1} parent=0 // pred_check_branch
    %51 = sbr.rel (0) target = $region61
  $region60: #{_lambda_.1} parent=0 // pred_region
    _
  $region61: #{_lambda_.1} parent=0 // pred_fallthru
    _
  %v52 = vld [vmem:[%s1] sm:$0xff]
  %v53 = vld [vmem:[%s1 + $0x8] sm:$0xff]
  %v54 = vld [vmem:[%s1 + $0x10] sm:$0xff]
  %v55 = vld [vmem:[%s1 + $0x18] sm:$0xff]
  %v56 = vld [vmem:[%s1 + $0x20] sm:$0xff]
  %v57 = vld [vmem:[%s1 + $0x28] sm:$0xff]
  %v58 = vld [vmem:[%s1 + $0x30] sm:$0xff]
  %v59 = vld [vmem:[%s1 + $0x38] sm:$0xff]
  %v60 = vld [vmem:[%s1 + $0x40] sm:$0xff]
  %v61 = vld [vmem:[%s1 + $0x48] sm:$0xff]
  %v62 = vld [vmem:[%s2] sm:$0xff]
  %v63 = vld [vmem:[%s2 + $0x8] sm:$0xff]
  %v64 = vld [vmem:[%s2 + $0x10] sm:$0xff]
  %v65 = vld [vmem:[%s2 + $0x18] sm:$0xff]
  %vm66 = vcmask 261120
  %v68 = vsel %vm66, %v52, 0
  %v71 = vsel %vm66, %v53, 0
  %v74 = vsel %vm66, %v54, 0
  %v77 = vsel %vm66, %v55, 0
  %v80 = vsel %vm66, %v56, 0
  %v83 = vsel %vm66, %v57, 0
  %v86 = vsel %vm66, %v58, 0
  %v89 = vsel %vm66, %v59, 0
  %v92 = vsel %vm66, %v60, 0
  %v95 = vsel %vm66, %v61, 0
  %97 = vmatpush.msra.mxu0 0.0
  %98 = vmatpush.msra.mxu0 0.0
  %99 = vmatpush.msra.mxu0 0.0
  %100 = vmatpush.msra.mxu0 0.0
  %101 = vmatpush.msra.mxu0 0.0
  %102 = vmatpush.msra.mxu0 0.0
  %103 = vmatpush.msra.mxu0 0.0
  %104 = vmatpush.msra.mxu0 0.0
  %105 = vmatpush.msra.mxu0 0.0
  %106 = vmatpush.msra.mxu0 0.0
  %107 = vmatpush.msra.mxu0 0.0
  %108 = vmatpush.msra.mxu0 0.0
  %109 = vmatpush.msra.mxu0 %v65
  %110 = vmatpush.msra.mxu0 %v64
  %111 = vmatpush.msra.mxu0 %v63
  %112 = vmatpush.msra.mxu0 %v62
  %113 = vmatmul.f32.gmra.mxu0 %v68
  %v114 = vpop.f32.mrf.mxu0
  %v115 = vadd.f32 0.0, %v114
  %116 = vmatmul.f32.gmra.mxu0 %v71
  %v117 = vpop.f32.mrf.mxu0
  %v118 = vadd.f32 0.0, %v117
  %119 = vmatmul.f32.gmra.mxu0 %v74
  %v120 = vpop.f32.mrf.mxu0
  %v121 = vadd.f32 0.0, %v120
  %122 = vmatmul.f32.gmra.mxu0 %v77
  %v123 = vpop.f32.mrf.mxu0
  %v124 = vadd.f32 0.0, %v123
  %125 = vmatmul.f32.gmra.mxu0 %v80
  %v126 = vpop.f32.mrf.mxu0
  %v127 = vadd.f32 0.0, %v126
  %128 = vmatmul.f32.gmra.mxu0 %v83
  %v129 = vpop.f32.mrf.mxu0
  %v130 = vadd.f32 0.0, %v129
  %131 = vmatmul.f32.gmra.mxu0 %v86
  %v132 = vpop.f32.mrf.mxu0
  %v133 = vadd.f32 0.0, %v132
  %134 = vmatmul.f32.gmra.mxu0 %v89
  %v135 = vpop.f32.mrf.mxu0
  %v136 = vadd.f32 0.0, %v135
  %137 = vmatmul.f32.gmra.mxu0 %v92
  %v138 = vpop.f32.mrf.mxu0
  %v139 = vadd.f32 0.0, %v138
  %140 = vmatmul.f32.gmra.mxu0 %v95
  %v141 = vpop.f32.mrf.mxu0
  %v142 = vadd.f32 0.0, %v141
  %143 = vdwg.mxu0
  %v144 = vld [vmem:[%s3] sm:$0xff]
  %v145 = vld [vmem:[%s3 + $0x8] sm:$0xff]
  %v146 = vld [vmem:[%s3 + $0x10] sm:$0xff]
  %v147 = vld [vmem:[%s3 + $0x18] sm:$0xff]
  %v148 = vld [vmem:[%s3 + $0x20] sm:$0xff]
  %v149 = vld [vmem:[%s3 + $0x28] sm:$0xff]
  %v150 = vld [vmem:[%s3 + $0x30] sm:$0xff]
  %v151 = vld [vmem:[%s3 + $0x38] sm:$0xff]
  %v152 = vld [vmem:[%s3 + $0x40] sm:$0xff]
  %v153 = vld [vmem:[%s3 + $0x48] sm:$0xff]
  %v154 = vld [vmem:[%s3 + $0x50] sm:$0xff]
  %v155 = vld [vmem:[%s3 + $0x58] sm:$0xff]
  %vm156 = vcmask 130048
  %v158 = vsel %vm156, %v144, 0
  %v161 = vsel %vm156, %v145, 0
  %v164 = vsel %vm156, %v146, 0
  %v167 = vsel %vm156, %v147, 0
  %v170 = vsel %vm156, %v148, 0
  %v173 = vsel %vm156, %v149, 0
  %v176 = vsel %vm156, %v150, 0
  %v179 = vsel %vm156, %v151, 0
  %v182 = vsel %vm156, %v152, 0
  %v185 = vsel %vm156, %v153, 0
  %v188 = vsel %vm156, %v154, 0
  %v191 = vsel %vm156, %v155, 0
  %193 = vmatpush.msra.mxu0 0.0
  %194 = vmatpush.msra.mxu0 0.0
  %195 = vmatpush.msra.mxu0 0.0
  %196 = vmatpush.msra.mxu0 0.0
  %197 = vmatpush.msra.mxu0 0.0
  %198 = vmatpush.msra.mxu0 0.0
  %199 = vmatpush.msra.mxu0 0.0
  %200 = vmatpush.msra.mxu0 0.0
  %201 = vmatpush.msra.mxu0 0.0
  %202 = vmatpush.msra.mxu0 0.0
  %203 = vmatpush.msra.mxu0 0.0
  %204 = vmatpush.msra.mxu0 0.0
  %205 = vmatpush.msra.mxu0 0.0
  %206 = vmatpush.msra.mxu0 0.0
  %207 = vmatpush.msra.mxu0 %v118
  %208 = vmatpush.msra.mxu0 %v115
  %209 = vmatmul.f32.gmra.mxu0 %v158
  %v210 = vpop.f32.mrf.mxu0
  %v211 = vadd.f32 0.0, %v210
  %212 = vmatmul.f32.gmra.mxu0 %v161
  %v213 = vpop.f32.mrf.mxu0
  %v214 = vadd.f32 0.0, %v213
  %215 = vmatmul.f32.gmra.mxu0 %v164
  %v216 = vpop.f32.mrf.mxu0
  %v217 = vadd.f32 0.0, %v216
  %218 = vmatmul.f32.gmra.mxu0 %v167
  %v219 = vpop.f32.mrf.mxu0
  %v220 = vadd.f32 0.0, %v219
  %221 = vmatmul.f32.gmra.mxu0 %v170
  %v222 = vpop.f32.mrf.mxu0
  %v223 = vadd.f32 0.0, %v222
  %224 = vmatmul.f32.gmra.mxu0 %v173
  %v225 = vpop.f32.mrf.mxu0
  %v226 = vadd.f32 0.0, %v225
  %227 = vmatmul.f32.gmra.mxu0 %v176
  %v228 = vpop.f32.mrf.mxu0
  %v229 = vadd.f32 0.0, %v228
  %230 = vmatmul.f32.gmra.mxu0 %v179
  %v231 = vpop.f32.mrf.mxu0
  %v232 = vadd.f32 0.0, %v231
  %233 = vmatmul.f32.gmra.mxu0 %v182
  %v234 = vpop.f32.mrf.mxu0
  %v235 = vadd.f32 0.0, %v234
  %236 = vmatmul.f32.gmra.mxu0 %v185
  %v237 = vpop.f32.mrf.mxu0
  %v238 = vadd.f32 0.0, %v237
  %239 = vmatmul.f32.gmra.mxu0 %v188
  %v240 = vpop.f32.mrf.mxu0
  %v241 = vadd.f32 0.0, %v240
  %242 = vmatmul.f32.gmra.mxu0 %v191
  %v243 = vpop.f32.mrf.mxu0
  %v244 = vadd.f32 0.0, %v243
  %245 = vdwg.mxu0
  %246 = vmatpush.msra.mxu0 0.0
  %247 = vmatpush.msra.mxu0 0.0
  %248 = vmatpush.msra.mxu0 0.0
  %249 = vmatpush.msra.mxu0 0.0
  %250 = vmatpush.msra.mxu0 0.0
  %251 = vmatpush.msra.mxu0 0.0
  %252 = vmatpush.msra.mxu0 0.0
  %253 = vmatpush.msra.mxu0 0.0
  %254 = vmatpush.msra.mxu0 0.0
  %255 = vmatpush.msra.mxu0 0.0
  %256 = vmatpush.msra.mxu0 0.0
  %257 = vmatpush.msra.mxu0 0.0
  %258 = vmatpush.msra.mxu0 0.0
  %259 = vmatpush.msra.mxu0 0.0
  %260 = vmatpush.msra.mxu0 %v124
  %261 = vmatpush.msra.mxu0 %v121
  %262 = vmatmul.f32.gmra.mxu0 %v158
  %v263 = vpop.f32.mrf.mxu0
  %v264 = vadd.f32 0.0, %v263
  %265 = vmatmul.f32.gmra.mxu0 %v161
  %v266 = vpop.f32.mrf.mxu0
  %v267 = vadd.f32 0.0, %v266
  %268 = vmatmul.f32.gmra.mxu0 %v164
  %v269 = vpop.f32.mrf.mxu0
  %v270 = vadd.f32 0.0, %v269
  %271 = vmatmul.f32.gmra.mxu0 %v167
  %v272 = vpop.f32.mrf.mxu0
  %v273 = vadd.f32 0.0, %v272
  %274 = vmatmul.f32.gmra.mxu0 %v170
  %v275 = vpop.f32.mrf.mxu0
  %v276 = vadd.f32 0.0, %v275
  %277 = vmatmul.f32.gmra.mxu0 %v173
  %v278 = vpop.f32.mrf.mxu0
  %v279 = vadd.f32 0.0, %v278
  %280 = vmatmul.f32.gmra.mxu0 %v176
  %v281 = vpop.f32.mrf.mxu0
  %v282 = vadd.f32 0.0, %v281
  %283 = vmatmul.f32.gmra.mxu0 %v179
  %v284 = vpop.f32.mrf.mxu0
  %v285 = vadd.f32 0.0, %v284
  %286 = vmatmul.f32.gmra.mxu0 %v182
  %v287 = vpop.f32.mrf.mxu0
  %v288 = vadd.f32 0.0, %v287
  %289 = vmatmul.f32.gmra.mxu0 %v185
  %v290 = vpop.f32.mrf.mxu0
  %v291 = vadd.f32 0.0, %v290
  %292 = vmatmul.f32.gmra.mxu0 %v188
  %v293 = vpop.f32.mrf.mxu0
  %v294 = vadd.f32 0.0, %v293
  %295 = vmatmul.f32.gmra.mxu0 %v191
  %v296 = vpop.f32.mrf.mxu0
  %v297 = vadd.f32 0.0, %v296
  %298 = vdwg.mxu0
  %299 = vmatpush.msra.mxu0 0.0
  %300 = vmatpush.msra.mxu0 0.0
  %301 = vmatpush.msra.mxu0 0.0
  %302 = vmatpush.msra.mxu0 0.0
  %303 = vmatpush.msra.mxu0 0.0
  %304 = vmatpush.msra.mxu0 0.0
  %305 = vmatpush.msra.mxu0 0.0
  %306 = vmatpush.msra.mxu0 0.0
  %307 = vmatpush.msra.mxu0 0.0
  %308 = vmatpush.msra.mxu0 0.0
  %309 = vmatpush.msra.mxu0 0.0
  %310 = vmatpush.msra.mxu0 0.0
  %311 = vmatpush.msra.mxu0 0.0
  %312 = vmatpush.msra.mxu0 0.0
  %313 = vmatpush.msra.mxu0 %v130
  %314 = vmatpush.msra.mxu0 %v127
  %315 = vmatmul.f32.gmra.mxu0 %v158
  %v316 = vpop.f32.mrf.mxu0
  %v317 = vadd.f32 0.0, %v316
  %318 = vmatmul.f32.gmra.mxu0 %v161
  %v319 = vpop.f32.mrf.mxu0
  %v320 = vadd.f32 0.0, %v319
  %321 = vmatmul.f32.gmra.mxu0 %v164
  %v322 = vpop.f32.mrf.mxu0
  %v323 = vadd.f32 0.0, %v322
  %324 = vmatmul.f32.gmra.mxu0 %v167
  %v325 = vpop.f32.mrf.mxu0
  %v326 = vadd.f32 0.0, %v325
  %327 = vmatmul.f32.gmra.mxu0 %v170
  %v328 = vpop.f32.mrf.mxu0
  %v329 = vadd.f32 0.0, %v328
  %330 = vmatmul.f32.gmra.mxu0 %v173
  %v331 = vpop.f32.mrf.mxu0
  %v332 = vadd.f32 0.0, %v331
  %333 = vmatmul.f32.gmra.mxu0 %v176
  %v334 = vpop.f32.mrf.mxu0
  %v335 = vadd.f32 0.0, %v334
  %336 = vmatmul.f32.gmra.mxu0 %v179
  %v337 = vpop.f32.mrf.mxu0
  %v338 = vadd.f32 0.0, %v337
  %339 = vmatmul.f32.gmra.mxu0 %v182
  %v340 = vpop.f32.mrf.mxu0
  %v341 = vadd.f32 0.0, %v340
  %342 = vmatmul.f32.gmra.mxu0 %v185
  %v343 = vpop.f32.mrf.mxu0
  %v344 = vadd.f32 0.0, %v343
  %345 = vmatmul.f32.gmra.mxu0 %v188
  %v346 = vpop.f32.mrf.mxu0
  %v347 = vadd.f32 0.0, %v346
  %348 = vmatmul.f32.gmra.mxu0 %v191
  %v349 = vpop.f32.mrf.mxu0
  %v350 = vadd.f32 0.0, %v349
  %351 = vdwg.mxu0
  %352 = vmatpush.msra.mxu0 0.0
  %353 = vmatpush.msra.mxu0 0.0
  %354 = vmatpush.msra.mxu0 0.0
  %355 = vmatpush.msra.mxu0 0.0
  %356 = vmatpush.msra.mxu0 0.0
  %357 = vmatpush.msra.mxu0 0.0
  %358 = vmatpush.msra.mxu0 0.0
  %359 = vmatpush.msra.mxu0 0.0
  %360 = vmatpush.msra.mxu0 0.0
  %361 = vmatpush.msra.mxu0 0.0
  %362 = vmatpush.msra.mxu0 0.0
  %363 = vmatpush.msra.mxu0 0.0
  %364 = vmatpush.msra.mxu0 0.0
  %365 = vmatpush.msra.mxu0 0.0
  %366 = vmatpush.msra.mxu0 %v136
  %367 = vmatpush.msra.mxu0 %v133
  %368 = vmatmul.f32.gmra.mxu0 %v158
  %v369 = vpop.f32.mrf.mxu0
  %v370 = vadd.f32 0.0, %v369
  %371 = vmatmul.f32.gmra.mxu0 %v161
  %v372 = vpop.f32.mrf.mxu0
  %v373 = vadd.f32 0.0, %v372
  %374 = vmatmul.f32.gmra.mxu0 %v164
  %v375 = vpop.f32.mrf.mxu0
  %v376 = vadd.f32 0.0, %v375
  %377 = vmatmul.f32.gmra.mxu0 %v167
  %v378 = vpop.f32.mrf.mxu0
  %v379 = vadd.f32 0.0, %v378
  %380 = vmatmul.f32.gmra.mxu0 %v170
  %v381 = vpop.f32.mrf.mxu0
  %v382 = vadd.f32 0.0, %v381
  %383 = vmatmul.f32.gmra.mxu0 %v173
  %v384 = vpop.f32.mrf.mxu0
  %v385 = vadd.f32 0.0, %v384
  %386 = vmatmul.f32.gmra.mxu0 %v176
  %v387 = vpop.f32.mrf.mxu0
  %v388 = vadd.f32 0.0, %v387
  %389 = vmatmul.f32.gmra.mxu0 %v179
  %v390 = vpop.f32.mrf.mxu0
  %v391 = vadd.f32 0.0, %v390
  %392 = vmatmul.f32.gmra.mxu0 %v182
  %v393 = vpop.f32.mrf.mxu0
  %v394 = vadd.f32 0.0, %v393
  %395 = vmatmul.f32.gmra.mxu0 %v185
  %v396 = vpop.f32.mrf.mxu0
  %v397 = vadd.f32 0.0, %v396
  %398 = vmatmul.f32.gmra.mxu0 %v188
  %v399 = vpop.f32.mrf.mxu0
  %v400 = vadd.f32 0.0, %v399
  %401 = vmatmul.f32.gmra.mxu0 %v191
  %v402 = vpop.f32.mrf.mxu0
  %v403 = vadd.f32 0.0, %v402
  %404 = vdwg.mxu0
  %405 = vmatpush.msra.mxu0 0.0
  %406 = vmatpush.msra.mxu0 0.0
  %407 = vmatpush.msra.mxu0 0.0
  %408 = vmatpush.msra.mxu0 0.0
  %409 = vmatpush.msra.mxu0 0.0
  %410 = vmatpush.msra.mxu0 0.0
  %411 = vmatpush.msra.mxu0 0.0
  %412 = vmatpush.msra.mxu0 0.0
  %413 = vmatpush.msra.mxu0 0.0
  %414 = vmatpush.msra.mxu0 0.0
  %415 = vmatpush.msra.mxu0 0.0
  %416 = vmatpush.msra.mxu0 0.0
  %417 = vmatpush.msra.mxu0 0.0
  %418 = vmatpush.msra.mxu0 0.0
  %419 = vmatpush.msra.mxu0 %v142
  %420 = vmatpush.msra.mxu0 %v139
  %421 = vmatmul.f32.gmra.mxu0 %v158
  %v422 = vpop.f32.mrf.mxu0
  %v423 = vadd.f32 0.0, %v422
  %424 = vmatmul.f32.gmra.mxu0 %v161
  %v425 = vpop.f32.mrf.mxu0
  %v426 = vadd.f32 0.0, %v425
  %427 = vmatmul.f32.gmra.mxu0 %v164
  %v428 = vpop.f32.mrf.mxu0
  %v429 = vadd.f32 0.0, %v428
  %430 = vmatmul.f32.gmra.mxu0 %v167
  %v431 = vpop.f32.mrf.mxu0
  %v432 = vadd.f32 0.0, %v431
  %433 = vmatmul.f32.gmra.mxu0 %v170
  %v434 = vpop.f32.mrf.mxu0
  %v435 = vadd.f32 0.0, %v434
  %436 = vmatmul.f32.gmra.mxu0 %v173
  %v437 = vpop.f32.mrf.mxu0
  %v438 = vadd.f32 0.0, %v437
  %439 = vmatmul.f32.gmra.mxu0 %v176
  %v440 = vpop.f32.mrf.mxu0
  %v441 = vadd.f32 0.0, %v440
  %442 = vmatmul.f32.gmra.mxu0 %v179
  %v443 = vpop.f32.mrf.mxu0
  %v444 = vadd.f32 0.0, %v443
  %445 = vmatmul.f32.gmra.mxu0 %v182
  %v446 = vpop.f32.mrf.mxu0
  %v447 = vadd.f32 0.0, %v446
  %448 = vmatmul.f32.gmra.mxu0 %v185
  %v449 = vpop.f32.mrf.mxu0
  %v450 = vadd.f32 0.0, %v449
  %451 = vmatmul.f32.gmra.mxu0 %v188
  %v452 = vpop.f32.mrf.mxu0
  %v453 = vadd.f32 0.0, %v452
  %454 = vmatmul.f32.gmra.mxu0 %v191
  %v455 = vpop.f32.mrf.mxu0
  %v456 = vadd.f32 0.0, %v455
  %457 = vdwg.mxu0
  %v458 = vld [vmem:[%s5] sm:$0xff]
  %v459 = vld [vmem:[%s5 + $0x8] sm:$0xff]
  %v460 = vld [vmem:[%s5 + $0x10] sm:$0xff]
  %v461 = vld [vmem:[%s5 + $0x18] sm:$0xff]
  %v462 = vld [vmem:[%s5 + $0x20] sm:$0xff]
  %v463 = vld [vmem:[%s5 + $0x28] sm:$0xff]
  %v464 = vld [vmem:[%s5 + $0x30] sm:$0xff]
  %v465 = vld [vmem:[%s5 + $0x38] sm:$0xff]
  %v466 = vld [vmem:[%s5 + $0x40] sm:$0xff]
  %v467 = vld [vmem:[%s5 + $0x48] sm:$0xff]
  %v468 = vld [vmem:[%s5 + $0x50] sm:$0xff]
  %v469 = vld [vmem:[%s5 + $0x58] sm:$0xff]
  %v470 = vld [vmem:[%s0] sm:$0xff]
  %v471 = vld [vmem:[%s0 + $0x8] sm:$0xff]
  %v472 = vld [vmem:[%s0 + $0x10] sm:$0xff]
  %v473 = vld [vmem:[%s0 + $0x18] sm:$0xff]
  %v474 = vld [vmem:[%s0 + $0x20] sm:$0xff]
  %v475 = vld [vmem:[%s0 + $0x28] sm:$0xff]
  %v476 = vld [vmem:[%s0 + $0x30] sm:$0xff]
  %v477 = vld [vmem:[%s0 + $0x38] sm:$0xff]
  %v478 = vld [vmem:[%s0 + $0x40] sm:$0xff]
  %v479 = vld [vmem:[%s0 + $0x48] sm:$0xff]
  %v480 = vld [vmem:[%s0 + $0x50] sm:$0xff]
  %v481 = vld [vmem:[%s0 + $0x58] sm:$0xff]
  %v482 = vld [vmem:[%s0 + $0x60] sm:$0xff]
  %v483 = vld [vmem:[%s0 + $0x68] sm:$0xff]
  %v484 = vld [vmem:[%s0 + $0x70] sm:$0xff]
  %v485 = vld [vmem:[%s0 + $0x78] sm:$0xff]
  %v486 = vld [vmem:[%s0 + $0x80] sm:$0xff]
  %v487 = vld [vmem:[%s0 + $0x88] sm:$0xff]
  %v488 = vld [vmem:[%s0 + $0x90] sm:$0xff]
  %v489 = vld [vmem:[%s0 + $0x98] sm:$0xff]
  %v490 = vld [vmem:[%s0 + $0xa0] sm:$0xff]
  %v491 = vld [vmem:[%s0 + $0xa8] sm:$0xff]
  %v492 = vld [vmem:[%s0 + $0xb0] sm:$0xff]
  %v493 = vld [vmem:[%s0 + $0xb8] sm:$0xff]
  %v494 = vld [vmem:[%s0 + $0xc0] sm:$0xff]
  %v495 = vld [vmem:[%s0 + $0xc8] sm:$0xff]
  %v496 = vld [vmem:[%s0 + $0xd0] sm:$0xff]
  %v497 = vld [vmem:[%s0 + $0xd8] sm:$0xff]
  %v498 = vld [vmem:[%s0 + $0xe0] sm:$0xff]
  %v499 = vld [vmem:[%s0 + $0xe8] sm:$0xff]
  %v500 = vld [vmem:[%s0 + $0xf0] sm:$0xff]
  %v501 = vld [vmem:[%s0 + $0xf8] sm:$0xff]
  %v502 = vld [vmem:[%s0 + $0x100] sm:$0xff]
  %v503 = vld [vmem:[%s0 + $0x108] sm:$0xff]
  %v504 = vld [vmem:[%s0 + $0x110] sm:$0xff]
  %v505 = vld [vmem:[%s0 + $0x118] sm:$0xff]
  %v506 = vld [vmem:[%s0 + $0x120] sm:$0xff]
  %v507 = vld [vmem:[%s0 + $0x128] sm:$0xff]
  %v508 = vld [vmem:[%s0 + $0x130] sm:$0xff]
  %v509 = vld [vmem:[%s0 + $0x138] sm:$0xff]
  %v510 = vld [vmem:[%s0 + $0x140] sm:$0xff]
  %v511 = vld [vmem:[%s0 + $0x148] sm:$0xff]
  %v512 = vld [vmem:[%s0 + $0x150] sm:$0xff]
  %v513 = vld [vmem:[%s0 + $0x158] sm:$0xff]
  %v514 = vld [vmem:[%s0 + $0x160] sm:$0xff]
  %v515 = vld [vmem:[%s0 + $0x168] sm:$0xff]
  %v516 = vld [vmem:[%s0 + $0x170] sm:$0xff]
  %v517 = vld [vmem:[%s0 + $0x178] sm:$0xff]
  %v518 = vld [vmem:[%s0 + $0x180] sm:$0xff]
  %v519 = vld [vmem:[%s0 + $0x188] sm:$0xff]
  %v520 = vld [vmem:[%s0 + $0x190] sm:$0xff]
  %v521 = vld [vmem:[%s0 + $0x198] sm:$0xff]
  %v522 = vld [vmem:[%s0 + $0x1a0] sm:$0xff]
  %v523 = vld [vmem:[%s0 + $0x1a8] sm:$0xff]
  %v524 = vld [vmem:[%s0 + $0x1b0] sm:$0xff]
  %v525 = vld [vmem:[%s0 + $0x1b8] sm:$0xff]
  %v526 = vld [vmem:[%s0 + $0x1c0] sm:$0xff]
  %v527 = vld [vmem:[%s0 + $0x1c8] sm:$0xff]
  %v528 = vld [vmem:[%s0 + $0x1d0] sm:$0xff]
  %v529 = vld [vmem:[%s0 + $0x1d8] sm:$0xff]
  %vm590 = vcmask 1046528
  %v591 = vrot.slane %v211, 1
  %v592 = vrot.slane %v214, 1
  %v593 = vsel %vm590, %v591, %v592
  %v594 = vrot.slane %v217, 1
  %v595 = vsel %vm590, %v592, %v594
  %v596 = vrot.slane %v220, 1
  %v597 = vsel %vm590, %v594, %v596
  %v598 = vrot.slane %v223, 1
  %v599 = vsel %vm590, %v596, %v598
  %v600 = vrot.slane %v226, 1
  %v601 = vsel %vm590, %v598, %v600
  %v602 = vrot.slane %v229, 1
  %v603 = vsel %vm590, %v600, %v602
  %v604 = vrot.slane %v232, 1
  %v605 = vsel %vm590, %v602, %v604
  %v606 = vrot.slane %v235, 1
  %v607 = vsel %vm590, %v604, %v606
  %v608 = vrot.slane %v238, 1
  %v609 = vsel %vm590, %v606, %v608
  %v610 = vrot.slane %v241, 1
  %v611 = vsel %vm590, %v608, %v610
  %v612 = vrot.slane %v244, 1
  %v613 = vsel %vm590, %v610, %v612
  %v614 = vrot.slane %v264, 1
  %v615 = vsel %vm590, %v612, %v614
  %v616 = vrot.slane %v267, 1
  %v617 = vsel %vm590, %v614, %v616
  %v618 = vrot.slane %v270, 1
  %v619 = vsel %vm590, %v616, %v618
  %v620 = vrot.slane %v273, 1
  %v621 = vsel %vm590, %v618, %v620
  %v622 = vrot.slane %v276, 1
  %v623 = vsel %vm590, %v620, %v622
  %v624 = vrot.slane %v279, 1
  %v625 = vsel %vm590, %v622, %v624
  %v626 = vrot.slane %v282, 1
  %v627 = vsel %vm590, %v624, %v626
  %v628 = vrot.slane %v285, 1
  %v629 = vsel %vm590, %v626, %v628
  %v630 = vrot.slane %v288, 1
  %v631 = vsel %vm590, %v628, %v630
  %v632 = vrot.slane %v291, 1
  %v633 = vsel %vm590, %v630, %v632
  %v634 = vrot.slane %v294, 1
  %v635 = vsel %vm590, %v632, %v634
  %v636 = vrot.slane %v297, 1
  %v637 = vsel %vm590, %v634, %v636
  %v638 = vrot.slane %v317, 1
  %v639 = vsel %vm590, %v636, %v638
  %v640 = vrot.slane %v320, 1
  %v641 = vsel %vm590, %v638, %v640
  %v642 = vrot.slane %v323, 1
  %v643 = vsel %vm590, %v640, %v642
  %v644 = vrot.slane %v326, 1
  %v645 = vsel %vm590, %v642, %v644
  %v646 = vrot.slane %v329, 1
  %v647 = vsel %vm590, %v644, %v646
  %v648 = vrot.slane %v332, 1
  %v649 = vsel %vm590, %v646, %v648
  %v650 = vrot.slane %v335, 1
  %v651 = vsel %vm590, %v648, %v650
  %v652 = vrot.slane %v338, 1
  %v653 = vsel %vm590, %v650, %v652
  %v654 = vrot.slane %v341, 1
  %v655 = vsel %vm590, %v652, %v654
  %v656 = vrot.slane %v344, 1
  %v657 = vsel %vm590, %v654, %v656
  %v658 = vrot.slane %v347, 1
  %v659 = vsel %vm590, %v656, %v658
  %v660 = vrot.slane %v350, 1
  %v661 = vsel %vm590, %v658, %v660
  %v662 = vrot.slane %v370, 1
  %v663 = vsel %vm590, %v660, %v662
  %v664 = vrot.slane %v373, 1
  %v665 = vsel %vm590, %v662, %v664
  %v666 = vrot.slane %v376, 1
  %v667 = vsel %vm590, %v664, %v666
  %v668 = vrot.slane %v379, 1
  %v669 = vsel %vm590, %v666, %v668
  %v670 = vrot.slane %v382, 1
  %v671 = vsel %vm590, %v668, %v670
  %v672 = vrot.slane %v385, 1
  %v673 = vsel %vm590, %v670, %v672
  %v674 = vrot.slane %v388, 1
  %v675 = vsel %vm590, %v672, %v674
  %v676 = vrot.slane %v391, 1
  %v677 = vsel %vm590, %v674, %v676
  %v678 = vrot.slane %v394, 1
  %v679 = vsel %vm590, %v676, %v678
  %v680 = vrot.slane %v397, 1
  %v681 = vsel %vm590, %v678, %v680
  %v682 = vrot.slane %v400, 1
  %v683 = vsel %vm590, %v680, %v682
  %v684 = vrot.slane %v403, 1
  %v685 = vsel %vm590, %v682, %v684
  %v686 = vrot.slane %v423, 1
  %v687 = vsel %vm590, %v684, %v686
  %v688 = vrot.slane %v426, 1
  %v689 = vsel %vm590, %v686, %v688
  %v690 = vrot.slane %v429, 1
  %v691 = vsel %vm590, %v688, %v690
  %v692 = vrot.slane %v432, 1
  %v693 = vsel %vm590, %v690, %v692
  %v694 = vrot.slane %v435, 1
  %v695 = vsel %vm590, %v692, %v694
  %v696 = vrot.slane %v438, 1
  %v697 = vsel %vm590, %v694, %v696
  %v698 = vrot.slane %v441, 1
  %v699 = vsel %vm590, %v696, %v698
  %v700 = vrot.slane %v444, 1
  %v701 = vsel %vm590, %v698, %v700
  %v702 = vrot.slane %v447, 1
  %v703 = vsel %vm590, %v700, %v702
  %v704 = vrot.slane %v450, 1
  %v705 = vsel %vm590, %v702, %v704
  %v706 = vrot.slane %v453, 1
  %v707 = vsel %vm590, %v704, %v706
  %v708 = vrot.slane %v456, 1
  %v709 = vsel %vm590, %v706, %v708
  %v712 = vsel %vm590, %v708, %v591
  %v713 = vrot.slane %v456, 7
  %vm715 = vcmask 1040384
  %v716 = vrot.slane %v211, 7
  %v717 = vrot.slane %v214, 7
  %v718 = vsel %vm715, %v716, %v717
  %v719 = vrot.slane %v217, 7
  %v720 = vsel %vm715, %v717, %v719
  %v721 = vrot.slane %v220, 7
  %v722 = vsel %vm715, %v719, %v721
  %v723 = vrot.slane %v223, 7
  %v724 = vsel %vm715, %v721, %v723
  %v725 = vrot.slane %v226, 7
  %v726 = vsel %vm715, %v723, %v725
  %v727 = vrot.slane %v229, 7
  %v728 = vsel %vm715, %v725, %v727
  %v729 = vrot.slane %v232, 7
  %v730 = vsel %vm715, %v727, %v729
  %v731 = vrot.slane %v235, 7
  %v732 = vsel %vm715, %v729, %v731
  %v733 = vrot.slane %v238, 7
  %v734 = vsel %vm715, %v731, %v733
  %v735 = vrot.slane %v241, 7
  %v736 = vsel %vm715, %v733, %v735
  %v737 = vrot.slane %v244, 7
  %v738 = vsel %vm715, %v735, %v737
  %v739 = vrot.slane %v264, 7
  %v740 = vsel %vm715, %v737, %v739
  %v741 = vrot.slane %v267, 7
  %v742 = vsel %vm715, %v739, %v741
  %v743 = vrot.slane %v270, 7
  %v744 = vsel %vm715, %v741, %v743
  %v745 = vrot.slane %v273, 7
  %v746 = vsel %vm715, %v743, %v745
  %v747 = vrot.slane %v276, 7
  %v748 = vsel %vm715, %v745, %v747
  %v749 = vrot.slane %v279, 7
  %v750 = vsel %vm715, %v747, %v749
  %v751 = vrot.slane %v282, 7
  %v752 = vsel %vm715, %v749, %v751
  %v753 = vrot.slane %v285, 7
  %v754 = vsel %vm715, %v751, %v753
  %v755 = vrot.slane %v288, 7
  %v756 = vsel %vm715, %v753, %v755
  %v757 = vrot.slane %v291, 7
  %v758 = vsel %vm715, %v755, %v757
  %v759 = vrot.slane %v294, 7
  %v760 = vsel %vm715, %v757, %v759
  %v761 = vrot.slane %v297, 7
  %v762 = vsel %vm715, %v759, %v761
  %v763 = vrot.slane %v317, 7
  %v764 = vsel %vm715, %v761, %v763
  %v765 = vrot.slane %v320, 7
  %v766 = vsel %vm715, %v763, %v765
  %v767 = vrot.slane %v323, 7
  %v768 = vsel %vm715, %v765, %v767
  %v769 = vrot.slane %v326, 7
  %v770 = vsel %vm715, %v767, %v769
  %v771 = vrot.slane %v329, 7
  %v772 = vsel %vm715, %v769, %v771
  %v773 = vrot.slane %v332, 7
  %v774 = vsel %vm715, %v771, %v773
  %v775 = vrot.slane %v335, 7
  %v776 = vsel %vm715, %v773, %v775
  %v777 = vrot.slane %v338, 7
  %v778 = vsel %vm715, %v775, %v777
  %v779 = vrot.slane %v341, 7
  %v780 = vsel %vm715, %v777, %v779
  %v781 = vrot.slane %v344, 7
  %v782 = vsel %vm715, %v779, %v781
  %v783 = vrot.slane %v347, 7
  %v784 = vsel %vm715, %v781, %v783
  %v785 = vrot.slane %v350, 7
  %v786 = vsel %vm715, %v783, %v785
  %v787 = vrot.slane %v370, 7
  %v788 = vsel %vm715, %v785, %v787
  %v789 = vrot.slane %v373, 7
  %v790 = vsel %vm715, %v787, %v789
  %v791 = vrot.slane %v376, 7
  %v792 = vsel %vm715, %v789, %v791
  %v793 = vrot.slane %v379, 7
  %v794 = vsel %vm715, %v791, %v793
  %v795 = vrot.slane %v382, 7
  %v796 = vsel %vm715, %v793, %v795
  %v797 = vrot.slane %v385, 7
  %v798 = vsel %vm715, %v795, %v797
  %v799 = vrot.slane %v388, 7
  %v800 = vsel %vm715, %v797, %v799
  %v801 = vrot.slane %v391, 7
  %v802 = vsel %vm715, %v799, %v801
  %v803 = vrot.slane %v394, 7
  %v804 = vsel %vm715, %v801, %v803
  %v805 = vrot.slane %v397, 7
  %v806 = vsel %vm715, %v803, %v805
  %v807 = vrot.slane %v400, 7
  %v808 = vsel %vm715, %v805, %v807
  %v809 = vrot.slane %v403, 7
  %v810 = vsel %vm715, %v807, %v809
  %v811 = vrot.slane %v423, 7
  %v812 = vsel %vm715, %v809, %v811
  %v813 = vrot.slane %v426, 7
  %v814 = vsel %vm715, %v811, %v813
  %v815 = vrot.slane %v429, 7
  %v816 = vsel %vm715, %v813, %v815
  %v817 = vrot.slane %v432, 7
  %v818 = vsel %vm715, %v815, %v817
  %v819 = vrot.slane %v435, 7
  %v820 = vsel %vm715, %v817, %v819
  %v821 = vrot.slane %v438, 7
  %v822 = vsel %vm715, %v819, %v821
  %v823 = vrot.slane %v441, 7
  %v824 = vsel %vm715, %v821, %v823
  %v825 = vrot.slane %v444, 7
  %v826 = vsel %vm715, %v823, %v825
  %v827 = vrot.slane %v447, 7
  %v828 = vsel %vm715, %v825, %v827
  %v829 = vrot.slane %v450, 7
  %v830 = vsel %vm715, %v827, %v829
  %v831 = vrot.slane %v453, 7
  %v832 = vsel %vm715, %v829, %v831
  %v833 = vsel %vm715, %v831, %v713
  %v835 = vsel %vm715, %v713, %v716
  %vm836 = vcmask 1045504
  %v837 = vrot.slane %v211, 2
  %v838 = vrot.slane %v214, 2
  %v839 = vsel %vm836, %v837, %v838
  %v840 = vrot.slane %v217, 2
  %v841 = vsel %vm836, %v838, %v840
  %v842 = vrot.slane %v220, 2
  %v843 = vsel %vm836, %v840, %v842
  %v844 = vrot.slane %v223, 2
  %v845 = vsel %vm836, %v842, %v844
  %v846 = vrot.slane %v226, 2
  %v847 = vsel %vm836, %v844, %v846
  %v848 = vrot.slane %v229, 2
  %v849 = vsel %vm836, %v846, %v848
  %v850 = vrot.slane %v232, 2
  %v851 = vsel %vm836, %v848, %v850
  %v852 = vrot.slane %v235, 2
  %v853 = vsel %vm836, %v850, %v852
  %v854 = vrot.slane %v238, 2
  %v855 = vsel %vm836, %v852, %v854
  %v856 = vrot.slane %v241, 2
  %v857 = vsel %vm836, %v854, %v856
  %v858 = vrot.slane %v244, 2
  %v859 = vsel %vm836, %v856, %v858
  %v860 = vrot.slane %v264, 2
  %v861 = vsel %vm836, %v858, %v860
  %v862 = vrot.slane %v267, 2
  %v863 = vsel %vm836, %v860, %v862
  %v864 = vrot.slane %v270, 2
  %v865 = vsel %vm836, %v862, %v864
  %v866 = vrot.slane %v273, 2
  %v867 = vsel %vm836, %v864, %v866
  %v868 = vrot.slane %v276, 2
  %v869 = vsel %vm836, %v866, %v868
  %v870 = vrot.slane %v279, 2
  %v871 = vsel %vm836, %v868, %v870
  %v872 = vrot.slane %v282, 2
  %v873 = vsel %vm836, %v870, %v872
  %v874 = vrot.slane %v285, 2
  %v875 = vsel %vm836, %v872, %v874
  %v876 = vrot.slane %v288, 2
  %v877 = vsel %vm836, %v874, %v876
  %v878 = vrot.slane %v291, 2
  %v879 = vsel %vm836, %v876, %v878
  %v880 = vrot.slane %v294, 2
  %v881 = vsel %vm836, %v878, %v880
  %v882 = vrot.slane %v297, 2
  %v883 = vsel %vm836, %v880, %v882
  %v884 = vrot.slane %v317, 2
  %v885 = vsel %vm836, %v882, %v884
  %v886 = vrot.slane %v320, 2
  %v887 = vsel %vm836, %v884, %v886
  %v888 = vrot.slane %v323, 2
  %v889 = vsel %vm836, %v886, %v888
  %v890 = vrot.slane %v326, 2
  %v891 = vsel %vm836, %v888, %v890
  %v892 = vrot.slane %v329, 2
  %v893 = vsel %vm836, %v890, %v892
  %v894 = vrot.slane %v332, 2
  %v895 = vsel %vm836, %v892, %v894
  %v896 = vrot.slane %v335, 2
  %v897 = vsel %vm836, %v894, %v896
  %v898 = vrot.slane %v338, 2
  %v899 = vsel %vm836, %v896, %v898
  %v900 = vrot.slane %v341, 2
  %v901 = vsel %vm836, %v898, %v900
  %v902 = vrot.slane %v344, 2
  %v903 = vsel %vm836, %v900, %v902
  %v904 = vrot.slane %v347, 2
  %v905 = vsel %vm836, %v902, %v904
  %v906 = vrot.slane %v350, 2
  %v907 = vsel %vm836, %v904, %v906
  %v908 = vrot.slane %v370, 2
  %v909 = vsel %vm836, %v906, %v908
  %v910 = vrot.slane %v373, 2
  %v911 = vsel %vm836, %v908, %v910
  %v912 = vrot.slane %v376, 2
  %v913 = vsel %vm836, %v910, %v912
  %v914 = vrot.slane %v379, 2
  %v915 = vsel %vm836, %v912, %v914
  %v916 = vrot.slane %v382, 2
  %v917 = vsel %vm836, %v914, %v916
  %v918 = vrot.slane %v385, 2
  %v919 = vsel %vm836, %v916, %v918
  %v920 = vrot.slane %v388, 2
  %v921 = vsel %vm836, %v918, %v920
  %v922 = vrot.slane %v391, 2
  %v923 = vsel %vm836, %v920, %v922
  %v924 = vrot.slane %v394, 2
  %v925 = vsel %vm836, %v922, %v924
  %v926 = vrot.slane %v397, 2
  %v927 = vsel %vm836, %v924, %v926
  %v928 = vrot.slane %v400, 2
  %v929 = vsel %vm836, %v926, %v928
  %v930 = vrot.slane %v403, 2
  %v931 = vsel %vm836, %v928, %v930
  %v932 = vrot.slane %v423, 2
  %v933 = vsel %vm836, %v930, %v932
  %v934 = vrot.slane %v426, 2
  %v935 = vsel %vm836, %v932, %v934
  %v936 = vrot.slane %v429, 2
  %v937 = vsel %vm836, %v934, %v936
  %v938 = vrot.slane %v432, 2
  %v939 = vsel %vm836, %v936, %v938
  %v940 = vrot.slane %v435, 2
  %v941 = vsel %vm836, %v938, %v940
  %v942 = vrot.slane %v438, 2
  %v943 = vsel %vm836, %v940, %v942
  %v944 = vrot.slane %v441, 2
  %v945 = vsel %vm836, %v942, %v944
  %v946 = vrot.slane %v444, 2
  %v947 = vsel %vm836, %v944, %v946
  %v948 = vrot.slane %v447, 2
  %v949 = vsel %vm836, %v946, %v948
  %v950 = vrot.slane %v450, 2
  %v951 = vsel %vm836, %v948, %v950
  %v952 = vrot.slane %v453, 2
  %v953 = vsel %vm836, %v950, %v952
  %v954 = vrot.slane %v456, 2
  %v955 = vsel %vm836, %v952, %v954
  %v958 = vsel %vm836, %v954, %v837
  %v959 = vrot.slane %v456, 6
  %vm961 = vcmask 1041408
  %v962 = vrot.slane %v211, 6
  %v963 = vrot.slane %v214, 6
  %v964 = vsel %vm961, %v962, %v963
  %v965 = vrot.slane %v217, 6
  %v966 = vsel %vm961, %v963, %v965
  %v967 = vrot.slane %v220, 6
  %v968 = vsel %vm961, %v965, %v967
  %v969 = vrot.slane %v223, 6
  %v970 = vsel %vm961, %v967, %v969
  %v971 = vrot.slane %v226, 6
  %v972 = vsel %vm961, %v969, %v971
  %v973 = vrot.slane %v229, 6
  %v974 = vsel %vm961, %v971, %v973
  %v975 = vrot.slane %v232, 6
  %v976 = vsel %vm961, %v973, %v975
  %v977 = vrot.slane %v235, 6
  %v978 = vsel %vm961, %v975, %v977
  %v979 = vrot.slane %v238, 6
  %v980 = vsel %vm961, %v977, %v979
  %v981 = vrot.slane %v241, 6
  %v982 = vsel %vm961, %v979, %v981
  %v983 = vrot.slane %v244, 6
  %v984 = vsel %vm961, %v981, %v983
  %v985 = vrot.slane %v264, 6
  %v986 = vsel %vm961, %v983, %v985
  %v987 = vrot.slane %v267, 6
  %v988 = vsel %vm961, %v985, %v987
  %v989 = vrot.slane %v270, 6
  %v990 = vsel %vm961, %v987, %v989
  %v991 = vrot.slane %v273, 6
  %v992 = vsel %vm961, %v989, %v991
  %v993 = vrot.slane %v276, 6
  %v994 = vsel %vm961, %v991, %v993
  %v995 = vrot.slane %v279, 6
  %v996 = vsel %vm961, %v993, %v995
  %v997 = vrot.slane %v282, 6
  %v998 = vsel %vm961, %v995, %v997
  %v999 = vrot.slane %v285, 6
  %v1000 = vsel %vm961, %v997, %v999
  %v1001 = vrot.slane %v288, 6
  %v1002 = vsel %vm961, %v999, %v1001
  %v1003 = vrot.slane %v291, 6
  %v1004 = vsel %vm961, %v1001, %v1003
  %v1005 = vrot.slane %v294, 6
  %v1006 = vsel %vm961, %v1003, %v1005
  %v1007 = vrot.slane %v297, 6
  %v1008 = vsel %vm961, %v1005, %v1007
  %v1009 = vrot.slane %v317, 6
  %v1010 = vsel %vm961, %v1007, %v1009
  %v1011 = vrot.slane %v320, 6
  %v1012 = vsel %vm961, %v1009, %v1011
  %v1013 = vrot.slane %v323, 6
  %v1014 = vsel %vm961, %v1011, %v1013
  %v1015 = vrot.slane %v326, 6
  %v1016 = vsel %vm961, %v1013, %v1015
  %v1017 = vrot.slane %v329, 6
  %v1018 = vsel %vm961, %v1015, %v1017
  %v1019 = vrot.slane %v332, 6
  %v1020 = vsel %vm961, %v1017, %v1019
  %v1021 = vrot.slane %v335, 6
  %v1022 = vsel %vm961, %v1019, %v1021
  %v1023 = vrot.slane %v338, 6
  %v1024 = vsel %vm961, %v1021, %v1023
  %v1025 = vrot.slane %v341, 6
  %v1026 = vsel %vm961, %v1023, %v1025
  %v1027 = vrot.slane %v344, 6
  %v1028 = vsel %vm961, %v1025, %v1027
  %v1029 = vrot.slane %v347, 6
  %v1030 = vsel %vm961, %v1027, %v1029
  %v1031 = vrot.slane %v350, 6
  %v1032 = vsel %vm961, %v1029, %v1031
  %v1033 = vrot.slane %v370, 6
  %v1034 = vsel %vm961, %v1031, %v1033
  %v1035 = vrot.slane %v373, 6
  %v1036 = vsel %vm961, %v1033, %v1035
  %v1037 = vrot.slane %v376, 6
  %v1038 = vsel %vm961, %v1035, %v1037
  %v1039 = vrot.slane %v379, 6
  %v1040 = vsel %vm961, %v1037, %v1039
  %v1041 = vrot.slane %v382, 6
  %v1042 = vsel %vm961, %v1039, %v1041
  %v1043 = vrot.slane %v385, 6
  %v1044 = vsel %vm961, %v1041, %v1043
  %v1045 = vrot.slane %v388, 6
  %v1046 = vsel %vm961, %v1043, %v1045
  %v1047 = vrot.slane %v391, 6
  %v1048 = vsel %vm961, %v1045, %v1047
  %v1049 = vrot.slane %v394, 6
  %v1050 = vsel %vm961, %v1047, %v1049
  %v1051 = vrot.slane %v397, 6
  %v1052 = vsel %vm961, %v1049, %v1051
  %v1053 = vrot.slane %v400, 6
  %v1054 = vsel %vm961, %v1051, %v1053
  %v1055 = vrot.slane %v403, 6
  %v1056 = vsel %vm961, %v1053, %v1055
  %v1057 = vrot.slane %v423, 6
  %v1058 = vsel %vm961, %v1055, %v1057
  %v1059 = vrot.slane %v426, 6
  %v1060 = vsel %vm961, %v1057, %v1059
  %v1061 = vrot.slane %v429, 6
  %v1062 = vsel %vm961, %v1059, %v1061
  %v1063 = vrot.slane %v432, 6
  %v1064 = vsel %vm961, %v1061, %v1063
  %v1065 = vrot.slane %v435, 6
  %v1066 = vsel %vm961, %v1063, %v1065
  %v1067 = vrot.slane %v438, 6
  %v1068 = vsel %vm961, %v1065, %v1067
  %v1069 = vrot.slane %v441, 6
  %v1070 = vsel %vm961, %v1067, %v1069
  %v1071 = vrot.slane %v444, 6
  %v1072 = vsel %vm961, %v1069, %v1071
  %v1073 = vrot.slane %v447, 6
  %v1074 = vsel %vm961, %v1071, %v1073
  %v1075 = vrot.slane %v450, 6
  %v1076 = vsel %vm961, %v1073, %v1075
  %v1077 = vrot.slane %v453, 6
  %v1078 = vsel %vm961, %v1075, %v1077
  %v1079 = vsel %vm961, %v1077, %v959
  %v1081 = vsel %vm961, %v959, %v962
  %1082 = vrot.lane.b32.xlu0 %v211, 24
  %v1083 = vpop.permute.xlu0 %1082
  %1084 = vrot.lane.b32.xlu0 %v214, 24
  %v1085 = vpop.permute.xlu0 %1084
  %1086 = vrot.lane.b32.xlu0 %v217, 24
  %v1087 = vpop.permute.xlu0 %1086
  %1088 = vrot.lane.b32.xlu0 %v220, 24
  %v1089 = vpop.permute.xlu0 %1088
  %1090 = vrot.lane.b32.xlu0 %v223, 24
  %v1091 = vpop.permute.xlu0 %1090
  %1092 = vrot.lane.b32.xlu0 %v226, 24
  %v1093 = vpop.permute.xlu0 %1092
  %1094 = vrot.lane.b32.xlu0 %v229, 24
  %v1095 = vpop.permute.xlu0 %1094
  %1096 = vrot.lane.b32.xlu0 %v232, 24
  %v1097 = vpop.permute.xlu0 %1096
  %1098 = vrot.lane.b32.xlu0 %v235, 24
  %v1099 = vpop.permute.xlu0 %1098
  %1100 = vrot.lane.b32.xlu0 %v238, 24
  %v1101 = vpop.permute.xlu0 %1100
  %1102 = vrot.lane.b32.xlu0 %v241, 24
  %v1103 = vpop.permute.xlu0 %1102
  %1104 = vrot.lane.b32.xlu0 %v244, 24
  %v1105 = vpop.permute.xlu0 %1104
  %1106 = vrot.lane.b32.xlu0 %v264, 24
  %v1107 = vpop.permute.xlu0 %1106
  %1108 = vrot.lane.b32.xlu0 %v267, 24
  %v1109 = vpop.permute.xlu0 %1108
  %1110 = vrot.lane.b32.xlu0 %v270, 24
  %v1111 = vpop.permute.xlu0 %1110
  %1112 = vrot.lane.b32.xlu0 %v273, 24
  %v1113 = vpop.permute.xlu0 %1112
  %1114 = vrot.lane.b32.xlu0 %v276, 24
  %v1115 = vpop.permute.xlu0 %1114
  %1116 = vrot.lane.b32.xlu0 %v279, 24
  %v1117 = vpop.permute.xlu0 %1116
  %1118 = vrot.lane.b32.xlu0 %v282, 24
  %v1119 = vpop.permute.xlu0 %1118
  %1120 = vrot.lane.b32.xlu0 %v285, 24
  %v1121 = vpop.permute.xlu0 %1120
  %1122 = vrot.lane.b32.xlu0 %v288, 24
  %v1123 = vpop.permute.xlu0 %1122
  %1124 = vrot.lane.b32.xlu0 %v291, 24
  %v1125 = vpop.permute.xlu0 %1124
  %1126 = vrot.lane.b32.xlu0 %v294, 24
  %v1127 = vpop.permute.xlu0 %1126
  %1128 = vrot.lane.b32.xlu0 %v297, 24
  %v1129 = vpop.permute.xlu0 %1128
  %1130 = vrot.lane.b32.xlu0 %v317, 24
  %v1131 = vpop.permute.xlu0 %1130
  %1132 = vrot.lane.b32.xlu0 %v320, 24
  %v1133 = vpop.permute.xlu0 %1132
  %1134 = vrot.lane.b32.xlu0 %v323, 24
  %v1135 = vpop.permute.xlu0 %1134
  %1136 = vrot.lane.b32.xlu0 %v326, 24
  %v1137 = vpop.permute.xlu0 %1136
  %1138 = vrot.lane.b32.xlu0 %v329, 24
  %v1139 = vpop.permute.xlu0 %1138
  %1140 = vrot.lane.b32.xlu0 %v332, 24
  %v1141 = vpop.permute.xlu0 %1140
  %1142 = vrot.lane.b32.xlu0 %v335, 24
  %v1143 = vpop.permute.xlu0 %1142
  %1144 = vrot.lane.b32.xlu0 %v338, 24
  %v1145 = vpop.permute.xlu0 %1144
  %1146 = vrot.lane.b32.xlu0 %v341, 24
  %v1147 = vpop.permute.xlu0 %1146
  %1148 = vrot.lane.b32.xlu0 %v344, 24
  %v1149 = vpop.permute.xlu0 %1148
  %1150 = vrot.lane.b32.xlu0 %v347, 24
  %v1151 = vpop.permute.xlu0 %1150
  %1152 = vrot.lane.b32.xlu0 %v350, 24
  %v1153 = vpop.permute.xlu0 %1152
  %1154 = vrot.lane.b32.xlu0 %v370, 24
  %v1155 = vpop.permute.xlu0 %1154
  %1156 = vrot.lane.b32.xlu0 %v373, 24
  %v1157 = vpop.permute.xlu0 %1156
  %1158 = vrot.lane.b32.xlu0 %v376, 24
  %v1159 = vpop.permute.xlu0 %1158
  %1160 = vrot.lane.b32.xlu0 %v379, 24
  %v1161 = vpop.permute.xlu0 %1160
  %1162 = vrot.lane.b32.xlu0 %v382, 24
  %v1163 = vpop.permute.xlu0 %1162
  %1164 = vrot.lane.b32.xlu0 %v385, 24
  %v1165 = vpop.permute.xlu0 %1164
  %1166 = vrot.lane.b32.xlu0 %v388, 24
  %v1167 = vpop.permute.xlu0 %1166
  %1168 = vrot.lane.b32.xlu0 %v391, 24
  %v1169 = vpop.permute.xlu0 %1168
  %1170 = vrot.lane.b32.xlu0 %v394, 24
  %v1171 = vpop.permute.xlu0 %1170
  %1172 = vrot.lane.b32.xlu0 %v397, 24
  %v1173 = vpop.permute.xlu0 %1172
  %1174 = vrot.lane.b32.xlu0 %v400, 24
  %v1175 = vpop.permute.xlu0 %1174
  %1176 = vrot.lane.b32.xlu0 %v403, 24
  %v1177 = vpop.permute.xlu0 %1176
  %1178 = vrot.lane.b32.xlu0 %v423, 24
  %v1179 = vpop.permute.xlu0 %1178
  %1180 = vrot.lane.b32.xlu0 %v426, 24
  %v1181 = vpop.permute.xlu0 %1180
  %1182 = vrot.lane.b32.xlu0 %v429, 24
  %v1183 = vpop.permute.xlu0 %1182
  %1184 = vrot.lane.b32.xlu0 %v432, 24
  %v1185 = vpop.permute.xlu0 %1184
  %1186 = vrot.lane.b32.xlu0 %v435, 24
  %v1187 = vpop.permute.xlu0 %1186
  %1188 = vrot.lane.b32.xlu0 %v438, 24
  %v1189 = vpop.permute.xlu0 %1188
  %1190 = vrot.lane.b32.xlu0 %v441, 24
  %v1191 = vpop.permute.xlu0 %1190
  %1192 = vrot.lane.b32.xlu0 %v444, 24
  %v1193 = vpop.permute.xlu0 %1192
  %1194 = vrot.lane.b32.xlu0 %v447, 24
  %v1195 = vpop.permute.xlu0 %1194
  %1196 = vrot.lane.b32.xlu0 %v450, 24
  %v1197 = vpop.permute.xlu0 %1196
  %1198 = vrot.lane.b32.xlu0 %v453, 24
  %v1199 = vpop.permute.xlu0 %1198
  %1200 = vrot.lane.b32.xlu0 %v456, 24
  %v1201 = vpop.permute.xlu0 %1200
  %1263 = vrot.lane.b32.xlu0 %v593, 40
  %v1264 = vpop.permute.xlu0 %1263
  %1265 = vrot.lane.b32.xlu0 %v595, 40
  %v1266 = vpop.permute.xlu0 %1265
  %1267 = vrot.lane.b32.xlu0 %v597, 40
  %v1268 = vpop.permute.xlu0 %1267
  %1269 = vrot.lane.b32.xlu0 %v599, 40
  %v1270 = vpop.permute.xlu0 %1269
  %1271 = vrot.lane.b32.xlu0 %v601, 40
  %v1272 = vpop.permute.xlu0 %1271
  %1273 = vrot.lane.b32.xlu0 %v603, 40
  %v1274 = vpop.permute.xlu0 %1273
  %1275 = vrot.lane.b32.xlu0 %v605, 40
  %v1276 = vpop.permute.xlu0 %1275
  %1277 = vrot.lane.b32.xlu0 %v607, 40
  %v1278 = vpop.permute.xlu0 %1277
  %1279 = vrot.lane.b32.xlu0 %v609, 40
  %v1280 = vpop.permute.xlu0 %1279
  %1281 = vrot.lane.b32.xlu0 %v611, 40
  %v1282 = vpop.permute.xlu0 %1281
  %1283 = vrot.lane.b32.xlu0 %v613, 40
  %v1284 = vpop.permute.xlu0 %1283
  %1285 = vrot.lane.b32.xlu0 %v615, 40
  %v1286 = vpop.permute.xlu0 %1285
  %1287 = vrot.lane.b32.xlu0 %v617, 40
  %v1288 = vpop.permute.xlu0 %1287
  %1289 = vrot.lane.b32.xlu0 %v619, 40
  %v1290 = vpop.permute.xlu0 %1289
  %1291 = vrot.lane.b32.xlu0 %v621, 40
  %v1292 = vpop.permute.xlu0 %1291
  %1293 = vrot.lane.b32.xlu0 %v623, 40
  %v1294 = vpop.permute.xlu0 %1293
  %1295 = vrot.lane.b32.xlu0 %v625, 40
  %v1296 = vpop.permute.xlu0 %1295
  %1297 = vrot.lane.b32.xlu0 %v627, 40
  %v1298 = vpop.permute.xlu0 %1297
  %1299 = vrot.lane.b32.xlu0 %v629, 40
  %v1300 = vpop.permute.xlu0 %1299
  %1301 = vrot.lane.b32.xlu0 %v631, 40
  %v1302 = vpop.permute.xlu0 %1301
  %1303 = vrot.lane.b32.xlu0 %v633, 40
  %v1304 = vpop.permute.xlu0 %1303
  %1305 = vrot.lane.b32.xlu0 %v635, 40
  %v1306 = vpop.permute.xlu0 %1305
  %1307 = vrot.lane.b32.xlu0 %v637, 40
  %v1308 = vpop.permute.xlu0 %1307
  %1309 = vrot.lane.b32.xlu0 %v639, 40
  %v1310 = vpop.permute.xlu0 %1309
  %1311 = vrot.lane.b32.xlu0 %v641, 40
  %v1312 = vpop.permute.xlu0 %1311
  %1313 = vrot.lane.b32.xlu0 %v643, 40
  %v1314 = vpop.permute.xlu0 %1313
  %1315 = vrot.lane.b32.xlu0 %v645, 40
  %v1316 = vpop.permute.xlu0 %1315
  %1317 = vrot.lane.b32.xlu0 %v647, 40
  %v1318 = vpop.permute.xlu0 %1317
  %1319 = vrot.lane.b32.xlu0 %v649, 40
  %v1320 = vpop.permute.xlu0 %1319
  %1321 = vrot.lane.b32.xlu0 %v651, 40
  %v1322 = vpop.permute.xlu0 %1321
  %1323 = vrot.lane.b32.xlu0 %v653, 40
  %v1324 = vpop.permute.xlu0 %1323
  %1325 = vrot.lane.b32.xlu0 %v655, 40
  %v1326 = vpop.permute.xlu0 %1325
  %1327 = vrot.lane.b32.xlu0 %v657, 40
  %v1328 = vpop.permute.xlu0 %1327
  %1329 = vrot.lane.b32.xlu0 %v659, 40
  %v1330 = vpop.permute.xlu0 %1329
  %1331 = vrot.lane.b32.xlu0 %v661, 40
  %v1332 = vpop.permute.xlu0 %1331
  %1333 = vrot.lane.b32.xlu0 %v663, 40
  %v1334 = vpop.permute.xlu0 %1333
  %1335 = vrot.lane.b32.xlu0 %v665, 40
  %v1336 = vpop.permute.xlu0 %1335
  %1337 = vrot.lane.b32.xlu0 %v667, 40
  %v1338 = vpop.permute.xlu0 %1337
  %1339 = vrot.lane.b32.xlu0 %v669, 40
  %v1340 = vpop.permute.xlu0 %1339
  %1341 = vrot.lane.b32.xlu0 %v671, 40
  %v1342 = vpop.permute.xlu0 %1341
  %1343 = vrot.lane.b32.xlu0 %v673, 40
  %v1344 = vpop.permute.xlu0 %1343
  %1345 = vrot.lane.b32.xlu0 %v675, 40
  %v1346 = vpop.permute.xlu0 %1345
  %1347 = vrot.lane.b32.xlu0 %v677, 40
  %v1348 = vpop.permute.xlu0 %1347
  %1349 = vrot.lane.b32.xlu0 %v679, 40
  %v1350 = vpop.permute.xlu0 %1349
  %1351 = vrot.lane.b32.xlu0 %v681, 40
  %v1352 = vpop.permute.xlu0 %1351
  %1353 = vrot.lane.b32.xlu0 %v683, 40
  %v1354 = vpop.permute.xlu0 %1353
  %1355 = vrot.lane.b32.xlu0 %v685, 40
  %v1356 = vpop.permute.xlu0 %1355
  %1357 = vrot.lane.b32.xlu0 %v687, 40
  %v1358 = vpop.permute.xlu0 %1357
  %1359 = vrot.lane.b32.xlu0 %v689, 40
  %v1360 = vpop.permute.xlu0 %1359
  %1361 = vrot.lane.b32.xlu0 %v691, 40
  %v1362 = vpop.permute.xlu0 %1361
  %1363 = vrot.lane.b32.xlu0 %v693, 40
  %v1364 = vpop.permute.xlu0 %1363
  %1365 = vrot.lane.b32.xlu0 %v695, 40
  %v1366 = vpop.permute.xlu0 %1365
  %1367 = vrot.lane.b32.xlu0 %v697, 40
  %v1368 = vpop.permute.xlu0 %1367
  %1369 = vrot.lane.b32.xlu0 %v699, 40
  %v1370 = vpop.permute.xlu0 %1369
  %1371 = vrot.lane.b32.xlu0 %v701, 40
  %v1372 = vpop.permute.xlu0 %1371
  %1373 = vrot.lane.b32.xlu0 %v703, 40
  %v1374 = vpop.permute.xlu0 %1373
  %1375 = vrot.lane.b32.xlu0 %v705, 40
  %v1376 = vpop.permute.xlu0 %1375
  %1377 = vrot.lane.b32.xlu0 %v707, 40
  %v1378 = vpop.permute.xlu0 %1377
  %1379 = vrot.lane.b32.xlu0 %v709, 40
  %v1380 = vpop.permute.xlu0 %1379
  %1381 = vrot.lane.b32.xlu0 %v712, 40
  %v1382 = vpop.permute.xlu0 %1381
  %1444 = vrot.lane.b32.xlu0 %v835, 56
  %v1445 = vpop.permute.xlu0 %1444
  %1446 = vrot.lane.b32.xlu0 %v718, 56
  %v1447 = vpop.permute.xlu0 %1446
  %1448 = vrot.lane.b32.xlu0 %v720, 56
  %v1449 = vpop.permute.xlu0 %1448
  %1450 = vrot.lane.b32.xlu0 %v722, 56
  %v1451 = vpop.permute.xlu0 %1450
  %1452 = vrot.lane.b32.xlu0 %v724, 56
  %v1453 = vpop.permute.xlu0 %1452
  %1454 = vrot.lane.b32.xlu0 %v726, 56
  %v1455 = vpop.permute.xlu0 %1454
  %1456 = vrot.lane.b32.xlu0 %v728, 56
  %v1457 = vpop.permute.xlu0 %1456
  %1458 = vrot.lane.b32.xlu0 %v730, 56
  %v1459 = vpop.permute.xlu0 %1458
  %1460 = vrot.lane.b32.xlu0 %v732, 56
  %v1461 = vpop.permute.xlu0 %1460
  %1462 = vrot.lane.b32.xlu0 %v734, 56
  %v1463 = vpop.permute.xlu0 %1462
  %1464 = vrot.lane.b32.xlu0 %v736, 56
  %v1465 = vpop.permute.xlu0 %1464
  %1466 = vrot.lane.b32.xlu0 %v738, 56
  %v1467 = vpop.permute.xlu0 %1466
  %1468 = vrot.lane.b32.xlu0 %v740, 56
  %v1469 = vpop.permute.xlu0 %1468
  %1470 = vrot.lane.b32.xlu0 %v742, 56
  %v1471 = vpop.permute.xlu0 %1470
  %1472 = vrot.lane.b32.xlu0 %v744, 56
  %v1473 = vpop.permute.xlu0 %1472
  %1474 = vrot.lane.b32.xlu0 %v746, 56
  %v1475 = vpop.permute.xlu0 %1474
  %1476 = vrot.lane.b32.xlu0 %v748, 56
  %v1477 = vpop.permute.xlu0 %1476
  %1478 = vrot.lane.b32.xlu0 %v750, 56
  %v1479 = vpop.permute.xlu0 %1478
  %1480 = vrot.lane.b32.xlu0 %v752, 56
  %v1481 = vpop.permute.xlu0 %1480
  %1482 = vrot.lane.b32.xlu0 %v754, 56
  %v1483 = vpop.permute.xlu0 %1482
  %1484 = vrot.lane.b32.xlu0 %v756, 56
  %v1485 = vpop.permute.xlu0 %1484
  %1486 = vrot.lane.b32.xlu0 %v758, 56
  %v1487 = vpop.permute.xlu0 %1486
  %1488 = vrot.lane.b32.xlu0 %v760, 56
  %v1489 = vpop.permute.xlu0 %1488
  %1490 = vrot.lane.b32.xlu0 %v762, 56
  %v1491 = vpop.permute.xlu0 %1490
  %1492 = vrot.lane.b32.xlu0 %v764, 56
  %v1493 = vpop.permute.xlu0 %1492
  %1494 = vrot.lane.b32.xlu0 %v766, 56
  %v1495 = vpop.permute.xlu0 %1494
  %1496 = vrot.lane.b32.xlu0 %v768, 56
  %v1497 = vpop.permute.xlu0 %1496
  %1498 = vrot.lane.b32.xlu0 %v770, 56
  %v1499 = vpop.permute.xlu0 %1498
  %1500 = vrot.lane.b32.xlu0 %v772, 56
  %v1501 = vpop.permute.xlu0 %1500
  %1502 = vrot.lane.b32.xlu0 %v774, 56
  %v1503 = vpop.permute.xlu0 %1502
  %1504 = vrot.lane.b32.xlu0 %v776, 56
  %v1505 = vpop.permute.xlu0 %1504
  %1506 = vrot.lane.b32.xlu0 %v778, 56
  %v1507 = vpop.permute.xlu0 %1506
  %1508 = vrot.lane.b32.xlu0 %v780, 56
  %v1509 = vpop.permute.xlu0 %1508
  %1510 = vrot.lane.b32.xlu0 %v782, 56
  %v1511 = vpop.permute.xlu0 %1510
  %1512 = vrot.lane.b32.xlu0 %v784, 56
  %v1513 = vpop.permute.xlu0 %1512
  %1514 = vrot.lane.b32.xlu0 %v786, 56
  %v1515 = vpop.permute.xlu0 %1514
  %1516 = vrot.lane.b32.xlu0 %v788, 56
  %v1517 = vpop.permute.xlu0 %1516
  %1518 = vrot.lane.b32.xlu0 %v790, 56
  %v1519 = vpop.permute.xlu0 %1518
  %1520 = vrot.lane.b32.xlu0 %v792, 56
  %v1521 = vpop.permute.xlu0 %1520
  %1522 = vrot.lane.b32.xlu0 %v794, 56
  %v1523 = vpop.permute.xlu0 %1522
  %1524 = vrot.lane.b32.xlu0 %v796, 56
  %v1525 = vpop.permute.xlu0 %1524
  %1526 = vrot.lane.b32.xlu0 %v798, 56
  %v1527 = vpop.permute.xlu0 %1526
  %1528 = vrot.lane.b32.xlu0 %v800, 56
  %v1529 = vpop.permute.xlu0 %1528
  %1530 = vrot.lane.b32.xlu0 %v802, 56
  %v1531 = vpop.permute.xlu0 %1530
  %1532 = vrot.lane.b32.xlu0 %v804, 56
  %v1533 = vpop.permute.xlu0 %1532
  %1534 = vrot.lane.b32.xlu0 %v806, 56
  %v1535 = vpop.permute.xlu0 %1534
  %1536 = vrot.lane.b32.xlu0 %v808, 56
  %v1537 = vpop.permute.xlu0 %1536
  %1538 = vrot.lane.b32.xlu0 %v810, 56
  %v1539 = vpop.permute.xlu0 %1538
  %1540 = vrot.lane.b32.xlu0 %v812, 56
  %v1541 = vpop.permute.xlu0 %1540
  %1542 = vrot.lane.b32.xlu0 %v814, 56
  %v1543 = vpop.permute.xlu0 %1542
  %1544 = vrot.lane.b32.xlu0 %v816, 56
  %v1545 = vpop.permute.xlu0 %1544
  %1546 = vrot.lane.b32.xlu0 %v818, 56
  %v1547 = vpop.permute.xlu0 %1546
  %1548 = vrot.lane.b32.xlu0 %v820, 56
  %v1549 = vpop.permute.xlu0 %1548
  %1550 = vrot.lane.b32.xlu0 %v822, 56
  %v1551 = vpop.permute.xlu0 %1550
  %1552 = vrot.lane.b32.xlu0 %v824, 56
  %v1553 = vpop.permute.xlu0 %1552
  %1554 = vrot.lane.b32.xlu0 %v826, 56
  %v1555 = vpop.permute.xlu0 %1554
  %1556 = vrot.lane.b32.xlu0 %v828, 56
  %v1557 = vpop.permute.xlu0 %1556
  %1558 = vrot.lane.b32.xlu0 %v830, 56
  %v1559 = vpop.permute.xlu0 %1558
  %1560 = vrot.lane.b32.xlu0 %v832, 56
  %v1561 = vpop.permute.xlu0 %1560
  %1562 = vrot.lane.b32.xlu0 %v833, 56
  %v1563 = vpop.permute.xlu0 %1562
  %1625 = vrot.lane.b32.xlu0 %v839, 72
  %v1626 = vpop.permute.xlu0 %1625
  %1627 = vrot.lane.b32.xlu0 %v841, 72
  %v1628 = vpop.permute.xlu0 %1627
  %1629 = vrot.lane.b32.xlu0 %v843, 72
  %v1630 = vpop.permute.xlu0 %1629
  %1631 = vrot.lane.b32.xlu0 %v845, 72
  %v1632 = vpop.permute.xlu0 %1631
  %1633 = vrot.lane.b32.xlu0 %v847, 72
  %v1634 = vpop.permute.xlu0 %1633
  %1635 = vrot.lane.b32.xlu0 %v849, 72
  %v1636 = vpop.permute.xlu0 %1635
  %1637 = vrot.lane.b32.xlu0 %v851, 72
  %v1638 = vpop.permute.xlu0 %1637
  %1639 = vrot.lane.b32.xlu0 %v853, 72
  %v1640 = vpop.permute.xlu0 %1639
  %1641 = vrot.lane.b32.xlu0 %v855, 72
  %v1642 = vpop.permute.xlu0 %1641
  %1643 = vrot.lane.b32.xlu0 %v857, 72
  %v1644 = vpop.permute.xlu0 %1643
  %1645 = vrot.lane.b32.xlu0 %v859, 72
  %v1646 = vpop.permute.xlu0 %1645
  %1647 = vrot.lane.b32.xlu0 %v861, 72
  %v1648 = vpop.permute.xlu0 %1647
  %1649 = vrot.lane.b32.xlu0 %v863, 72
  %v1650 = vpop.permute.xlu0 %1649
  %1651 = vrot.lane.b32.xlu0 %v865, 72
  %v1652 = vpop.permute.xlu0 %1651
  %1653 = vrot.lane.b32.xlu0 %v867, 72
  %v1654 = vpop.permute.xlu0 %1653
  %1655 = vrot.lane.b32.xlu0 %v869, 72
  %v1656 = vpop.permute.xlu0 %1655
  %1657 = vrot.lane.b32.xlu0 %v871, 72
  %v1658 = vpop.permute.xlu0 %1657
  %1659 = vrot.lane.b32.xlu0 %v873, 72
  %v1660 = vpop.permute.xlu0 %1659
  %1661 = vrot.lane.b32.xlu0 %v875, 72
  %v1662 = vpop.permute.xlu0 %1661
  %1663 = vrot.lane.b32.xlu0 %v877, 72
  %v1664 = vpop.permute.xlu0 %1663
  %1665 = vrot.lane.b32.xlu0 %v879, 72
  %v1666 = vpop.permute.xlu0 %1665
  %1667 = vrot.lane.b32.xlu0 %v881, 72
  %v1668 = vpop.permute.xlu0 %1667
  %1669 = vrot.lane.b32.xlu0 %v883, 72
  %v1670 = vpop.permute.xlu0 %1669
  %1671 = vrot.lane.b32.xlu0 %v885, 72
  %v1672 = vpop.permute.xlu0 %1671
  %1673 = vrot.lane.b32.xlu0 %v887, 72
  %v1674 = vpop.permute.xlu0 %1673
  %1675 = vrot.lane.b32.xlu0 %v889, 72
  %v1676 = vpop.permute.xlu0 %1675
  %1677 = vrot.lane.b32.xlu0 %v891, 72
  %v1678 = vpop.permute.xlu0 %1677
  %1679 = vrot.lane.b32.xlu0 %v893, 72
  %v1680 = vpop.permute.xlu0 %1679
  %1681 = vrot.lane.b32.xlu0 %v895, 72
  %v1682 = vpop.permute.xlu0 %1681
  %1683 = vrot.lane.b32.xlu0 %v897, 72
  %v1684 = vpop.permute.xlu0 %1683
  %1685 = vrot.lane.b32.xlu0 %v899, 72
  %v1686 = vpop.permute.xlu0 %1685
  %1687 = vrot.lane.b32.xlu0 %v901, 72
  %v1688 = vpop.permute.xlu0 %1687
  %1689 = vrot.lane.b32.xlu0 %v903, 72
  %v1690 = vpop.permute.xlu0 %1689
  %1691 = vrot.lane.b32.xlu0 %v905, 72
  %v1692 = vpop.permute.xlu0 %1691
  %1693 = vrot.lane.b32.xlu0 %v907, 72
  %v1694 = vpop.permute.xlu0 %1693
  %1695 = vrot.lane.b32.xlu0 %v909, 72
  %v1696 = vpop.permute.xlu0 %1695
  %1697 = vrot.lane.b32.xlu0 %v911, 72
  %v1698 = vpop.permute.xlu0 %1697
  %1699 = vrot.lane.b32.xlu0 %v913, 72
  %v1700 = vpop.permute.xlu0 %1699
  %1701 = vrot.lane.b32.xlu0 %v915, 72
  %v1702 = vpop.permute.xlu0 %1701
  %1703 = vrot.lane.b32.xlu0 %v917, 72
  %v1704 = vpop.permute.xlu0 %1703
  %1705 = vrot.lane.b32.xlu0 %v919, 72
  %v1706 = vpop.permute.xlu0 %1705
  %1707 = vrot.lane.b32.xlu0 %v921, 72
  %v1708 = vpop.permute.xlu0 %1707
  %1709 = vrot.lane.b32.xlu0 %v923, 72
  %v1710 = vpop.permute.xlu0 %1709
  %1711 = vrot.lane.b32.xlu0 %v925, 72
  %v1712 = vpop.permute.xlu0 %1711
  %1713 = vrot.lane.b32.xlu0 %v927, 72
  %v1714 = vpop.permute.xlu0 %1713
  %1715 = vrot.lane.b32.xlu0 %v929, 72
  %v1716 = vpop.permute.xlu0 %1715
  %1717 = vrot.lane.b32.xlu0 %v931, 72
  %v1718 = vpop.permute.xlu0 %1717
  %1719 = vrot.lane.b32.xlu0 %v933, 72
  %v1720 = vpop.permute.xlu0 %1719
  %1721 = vrot.lane.b32.xlu0 %v935, 72
  %v1722 = vpop.permute.xlu0 %1721
  %1723 = vrot.lane.b32.xlu0 %v937, 72
  %v1724 = vpop.permute.xlu0 %1723
  %1725 = vrot.lane.b32.xlu0 %v939, 72
  %v1726 = vpop.permute.xlu0 %1725
  %1727 = vrot.lane.b32.xlu0 %v941, 72
  %v1728 = vpop.permute.xlu0 %1727
  %1729 = vrot.lane.b32.xlu0 %v943, 72
  %v1730 = vpop.permute.xlu0 %1729
  %1731 = vrot.lane.b32.xlu0 %v945, 72
  %v1732 = vpop.permute.xlu0 %1731
  %1733 = vrot.lane.b32.xlu0 %v947, 72
  %v1734 = vpop.permute.xlu0 %1733
  %1735 = vrot.lane.b32.xlu0 %v949, 72
  %v1736 = vpop.permute.xlu0 %1735
  %1737 = vrot.lane.b32.xlu0 %v951, 72
  %v1738 = vpop.permute.xlu0 %1737
  %1739 = vrot.lane.b32.xlu0 %v953, 72
  %v1740 = vpop.permute.xlu0 %1739
  %1741 = vrot.lane.b32.xlu0 %v955, 72
  %v1742 = vpop.permute.xlu0 %1741
  %1743 = vrot.lane.b32.xlu0 %v958, 72
  %v1744 = vpop.permute.xlu0 %1743
  %1806 = vrot.lane.b32.xlu0 %v1081, 88
  %v1807 = vpop.permute.xlu0 %1806
  %1808 = vrot.lane.b32.xlu0 %v964, 88
  %v1809 = vpop.permute.xlu0 %1808
  %1810 = vrot.lane.b32.xlu0 %v966, 88
  %v1811 = vpop.permute.xlu0 %1810
  %1812 = vrot.lane.b32.xlu0 %v968, 88
  %v1813 = vpop.permute.xlu0 %1812
  %1814 = vrot.lane.b32.xlu0 %v970, 88
  %v1815 = vpop.permute.xlu0 %1814
  %1816 = vrot.lane.b32.xlu0 %v972, 88
  %v1817 = vpop.permute.xlu0 %1816
  %1818 = vrot.lane.b32.xlu0 %v974, 88
  %v1819 = vpop.permute.xlu0 %1818
  %1820 = vrot.lane.b32.xlu0 %v976, 88
  %v1821 = vpop.permute.xlu0 %1820
  %1822 = vrot.lane.b32.xlu0 %v978, 88
  %v1823 = vpop.permute.xlu0 %1822
  %1824 = vrot.lane.b32.xlu0 %v980, 88
  %v1825 = vpop.permute.xlu0 %1824
  %1826 = vrot.lane.b32.xlu0 %v982, 88
  %v1827 = vpop.permute.xlu0 %1826
  %1828 = vrot.lane.b32.xlu0 %v984, 88
  %v1829 = vpop.permute.xlu0 %1828
  %1830 = vrot.lane.b32.xlu0 %v986, 88
  %v1831 = vpop.permute.xlu0 %1830
  %1832 = vrot.lane.b32.xlu0 %v988, 88
  %v1833 = vpop.permute.xlu0 %1832
  %1834 = vrot.lane.b32.xlu0 %v990, 88
  %v1835 = vpop.permute.xlu0 %1834
  %1836 = vrot.lane.b32.xlu0 %v992, 88
  %v1837 = vpop.permute.xlu0 %1836
  %1838 = vrot.lane.b32.xlu0 %v994, 88
  %v1839 = vpop.permute.xlu0 %1838
  %1840 = vrot.lane.b32.xlu0 %v996, 88
  %v1841 = vpop.permute.xlu0 %1840
  %1842 = vrot.lane.b32.xlu0 %v998, 88
  %v1843 = vpop.permute.xlu0 %1842
  %1844 = vrot.lane.b32.xlu0 %v1000, 88
  %v1845 = vpop.permute.xlu0 %1844
  %1846 = vrot.lane.b32.xlu0 %v1002, 88
  %v1847 = vpop.permute.xlu0 %1846
  %1848 = vrot.lane.b32.xlu0 %v1004, 88
  %v1849 = vpop.permute.xlu0 %1848
  %1850 = vrot.lane.b32.xlu0 %v1006, 88
  %v1851 = vpop.permute.xlu0 %1850
  %1852 = vrot.lane.b32.xlu0 %v1008, 88
  %v1853 = vpop.permute.xlu0 %1852
  %1854 = vrot.lane.b32.xlu0 %v1010, 88
  %v1855 = vpop.permute.xlu0 %1854
  %1856 = vrot.lane.b32.xlu0 %v1012, 88
  %v1857 = vpop.permute.xlu0 %1856
  %1858 = vrot.lane.b32.xlu0 %v1014, 88
  %v1859 = vpop.permute.xlu0 %1858
  %1860 = vrot.lane.b32.xlu0 %v1016, 88
  %v1861 = vpop.permute.xlu0 %1860
  %1862 = vrot.lane.b32.xlu0 %v1018, 88
  %v1863 = vpop.permute.xlu0 %1862
  %1864 = vrot.lane.b32.xlu0 %v1020, 88
  %v1865 = vpop.permute.xlu0 %1864
  %1866 = vrot.lane.b32.xlu0 %v1022, 88
  %v1867 = vpop.permute.xlu0 %1866
  %1868 = vrot.lane.b32.xlu0 %v1024, 88
  %v1869 = vpop.permute.xlu0 %1868
  %1870 = vrot.lane.b32.xlu0 %v1026, 88
  %v1871 = vpop.permute.xlu0 %1870
  %1872 = vrot.lane.b32.xlu0 %v1028, 88
  %v1873 = vpop.permute.xlu0 %1872
  %1874 = vrot.lane.b32.xlu0 %v1030, 88
  %v1875 = vpop.permute.xlu0 %1874
  %1876 = vrot.lane.b32.xlu0 %v1032, 88
  %v1877 = vpop.permute.xlu0 %1876
  %1878 = vrot.lane.b32.xlu0 %v1034, 88
  %v1879 = vpop.permute.xlu0 %1878
  %1880 = vrot.lane.b32.xlu0 %v1036, 88
  %v1881 = vpop.permute.xlu0 %1880
  %1882 = vrot.lane.b32.xlu0 %v1038, 88
  %v1883 = vpop.permute.xlu0 %1882
  %1884 = vrot.lane.b32.xlu0 %v1040, 88
  %v1885 = vpop.permute.xlu0 %1884
  %1886 = vrot.lane.b32.xlu0 %v1042, 88
  %v1887 = vpop.permute.xlu0 %1886
  %1888 = vrot.lane.b32.xlu0 %v1044, 88
  %v1889 = vpop.permute.xlu0 %1888
  %1890 = vrot.lane.b32.xlu0 %v1046, 88
  %v1891 = vpop.permute.xlu0 %1890
  %1892 = vrot.lane.b32.xlu0 %v1048, 88
  %v1893 = vpop.permute.xlu0 %1892
  %1894 = vrot.lane.b32.xlu0 %v1050, 88
  %v1895 = vpop.permute.xlu0 %1894
  %1896 = vrot.lane.b32.xlu0 %v1052, 88
  %v1897 = vpop.permute.xlu0 %1896
  %1898 = vrot.lane.b32.xlu0 %v1054, 88
  %v1899 = vpop.permute.xlu0 %1898
  %1900 = vrot.lane.b32.xlu0 %v1056, 88
  %v1901 = vpop.permute.xlu0 %1900
  %1902 = vrot.lane.b32.xlu0 %v1058, 88
  %v1903 = vpop.permute.xlu0 %1902
  %1904 = vrot.lane.b32.xlu0 %v1060, 88
  %v1905 = vpop.permute.xlu0 %1904
  %1906 = vrot.lane.b32.xlu0 %v1062, 88
  %v1907 = vpop.permute.xlu0 %1906
  %1908 = vrot.lane.b32.xlu0 %v1064, 88
  %v1909 = vpop.permute.xlu0 %1908
  %1910 = vrot.lane.b32.xlu0 %v1066, 88
  %v1911 = vpop.permute.xlu0 %1910
  %1912 = vrot.lane.b32.xlu0 %v1068, 88
  %v1913 = vpop.permute.xlu0 %1912
  %1914 = vrot.lane.b32.xlu0 %v1070, 88
  %v1915 = vpop.permute.xlu0 %1914
  %1916 = vrot.lane.b32.xlu0 %v1072, 88
  %v1917 = vpop.permute.xlu0 %1916
  %1918 = vrot.lane.b32.xlu0 %v1074, 88
  %v1919 = vpop.permute.xlu0 %1918
  %1920 = vrot.lane.b32.xlu0 %v1076, 88
  %v1921 = vpop.permute.xlu0 %1920
  %1922 = vrot.lane.b32.xlu0 %v1078, 88
  %v1923 = vpop.permute.xlu0 %1922
  %1924 = vrot.lane.b32.xlu0 %v1079, 88
  %v1925 = vpop.permute.xlu0 %1924
  %vm1986 = vcmask 195584
  %v1987 = vsel %vm1986, %v470, %v1083
  %v1988 = vsel %vm1986, %v471, %v1085
  %v1989 = vsel %vm1986, %v472, %v1087
  %v1990 = vsel %vm1986, %v473, %v1089
  %v1991 = vsel %vm1986, %v474, %v1091
  %v1992 = vsel %vm1986, %v475, %v1093
  %v1993 = vsel %vm1986, %v476, %v1095
  %v1994 = vsel %vm1986, %v477, %v1097
  %v1995 = vsel %vm1986, %v478, %v1099
  %v1996 = vsel %vm1986, %v479, %v1101
  %v1997 = vsel %vm1986, %v480, %v1103
  %v1998 = vsel %vm1986, %v481, %v1105
  %v1999 = vsel %vm1986, %v482, %v1107
  %v2000 = vsel %vm1986, %v483, %v1109
  %v2001 = vsel %vm1986, %v484, %v1111
  %v2002 = vsel %vm1986, %v485, %v1113
  %v2003 = vsel %vm1986, %v486, %v1115
  %v2004 = vsel %vm1986, %v487, %v1117
  %v2005 = vsel %vm1986, %v488, %v1119
  %v2006 = vsel %vm1986, %v489, %v1121
  %v2007 = vsel %vm1986, %v490, %v1123
  %v2008 = vsel %vm1986, %v491, %v1125
  %v2009 = vsel %vm1986, %v492, %v1127
  %v2010 = vsel %vm1986, %v493, %v1129
  %v2011 = vsel %vm1986, %v494, %v1131
  %v2012 = vsel %vm1986, %v495, %v1133
  %v2013 = vsel %vm1986, %v496, %v1135
  %v2014 = vsel %vm1986, %v497, %v1137
  %v2015 = vsel %vm1986, %v498, %v1139
  %v2016 = vsel %vm1986, %v499, %v1141
  %v2017 = vsel %vm1986, %v500, %v1143
  %v2018 = vsel %vm1986, %v501, %v1145
  %v2019 = vsel %vm1986, %v502, %v1147
  %v2020 = vsel %vm1986, %v503, %v1149
  %v2021 = vsel %vm1986, %v504, %v1151
  %v2022 = vsel %vm1986, %v505, %v1153
  %v2023 = vsel %vm1986, %v506, %v1155
  %v2024 = vsel %vm1986, %v507, %v1157
  %v2025 = vsel %vm1986, %v508, %v1159
  %v2026 = vsel %vm1986, %v509, %v1161
  %v2027 = vsel %vm1986, %v510, %v1163
  %v2028 = vsel %vm1986, %v511, %v1165
  %v2029 = vsel %vm1986, %v512, %v1167
  %v2030 = vsel %vm1986, %v513, %v1169
  %v2031 = vsel %vm1986, %v514, %v1171
  %v2032 = vsel %vm1986, %v515, %v1173
  %v2033 = vsel %vm1986, %v516, %v1175
  %v2034 = vsel %vm1986, %v517, %v1177
  %v2035 = vsel %vm1986, %v518, %v1179
  %v2036 = vsel %vm1986, %v519, %v1181
  %v2037 = vsel %vm1986, %v520, %v1183
  %v2038 = vsel %vm1986, %v521, %v1185
  %v2039 = vsel %vm1986, %v522, %v1187
  %v2040 = vsel %vm1986, %v523, %v1189
  %v2041 = vsel %vm1986, %v524, %v1191
  %v2042 = vsel %vm1986, %v525, %v1193
  %v2043 = vsel %vm1986, %v526, %v1195
  %v2044 = vsel %vm1986, %v527, %v1197
  %v2045 = vsel %vm1986, %v528, %v1199
  %v2046 = vsel %vm1986, %v529, %v1201
  %vm2047 = vcmask 326656
  %v2048 = vsel %vm2047, %v1987, %v1264
  %v2049 = vsel %vm2047, %v1988, %v1266
  %v2050 = vsel %vm2047, %v1989, %v1268
  %v2051 = vsel %vm2047, %v1990, %v1270
  %v2052 = vsel %vm2047, %v1991, %v1272
  %v2053 = vsel %vm2047, %v1992, %v1274
  %v2054 = vsel %vm2047, %v1993, %v1276
  %v2055 = vsel %vm2047, %v1994, %v1278
  %v2056 = vsel %vm2047, %v1995, %v1280
  %v2057 = vsel %vm2047, %v1996, %v1282
  %v2058 = vsel %vm2047, %v1997, %v1284
  %v2059 = vsel %vm2047, %v1998, %v1286
  %v2060 = vsel %vm2047, %v1999, %v1288
  %v2061 = vsel %vm2047, %v2000, %v1290
  %v2062 = vsel %vm2047, %v2001, %v1292
  %v2063 = vsel %vm2047, %v2002, %v1294
  %v2064 = vsel %vm2047, %v2003, %v1296
  %v2065 = vsel %vm2047, %v2004, %v1298
  %v2066 = vsel %vm2047, %v2005, %v1300
  %v2067 = vsel %vm2047, %v2006, %v1302
  %v2068 = vsel %vm2047, %v2007, %v1304
  %v2069 = vsel %vm2047, %v2008, %v1306
  %v2070 = vsel %vm2047, %v2009, %v1308
  %v2071 = vsel %vm2047, %v2010, %v1310
  %v2072 = vsel %vm2047, %v2011, %v1312
  %v2073 = vsel %vm2047, %v2012, %v1314
  %v2074 = vsel %vm2047, %v2013, %v1316
  %v2075 = vsel %vm2047, %v2014, %v1318
  %v2076 = vsel %vm2047, %v2015, %v1320
  %v2077 = vsel %vm2047, %v2016, %v1322
  %v2078 = vsel %vm2047, %v2017, %v1324
  %v2079 = vsel %vm2047, %v2018, %v1326
  %v2080 = vsel %vm2047, %v2019, %v1328
  %v2081 = vsel %vm2047, %v2020, %v1330
  %v2082 = vsel %vm2047, %v2021, %v1332
  %v2083 = vsel %vm2047, %v2022, %v1334
  %v2084 = vsel %vm2047, %v2023, %v1336
  %v2085 = vsel %vm2047, %v2024, %v1338
  %v2086 = vsel %vm2047, %v2025, %v1340
  %v2087 = vsel %vm2047, %v2026, %v1342
  %v2088 = vsel %vm2047, %v2027, %v1344
  %v2089 = vsel %vm2047, %v2028, %v1346
  %v2090 = vsel %vm2047, %v2029, %v1348
  %v2091 = vsel %vm2047, %v2030, %v1350
  %v2092 = vsel %vm2047, %v2031, %v1352
  %v2093 = vsel %vm2047, %v2032, %v1354
  %v2094 = vsel %vm2047, %v2033, %v1356
  %v2095 = vsel %vm2047, %v2034, %v1358
  %v2096 = vsel %vm2047, %v2035, %v1360
  %v2097 = vsel %vm2047, %v2036, %v1362
  %v2098 = vsel %vm2047, %v2037, %v1364
  %v2099 = vsel %vm2047, %v2038, %v1366
  %v2100 = vsel %vm2047, %v2039, %v1368
  %v2101 = vsel %vm2047, %v2040, %v1370
  %v2102 = vsel %vm2047, %v2041, %v1372
  %v2103 = vsel %vm2047, %v2042, %v1374
  %v2104 = vsel %vm2047, %v2043, %v1376
  %v2105 = vsel %vm2047, %v2044, %v1378
  %v2106 = vsel %vm2047, %v2045, %v1380
  %v2107 = vsel %vm2047, %v2046, %v1382
  %vm2108 = vcmask 457728
  %v2109 = vsel %vm2108, %v2048, %v1445
  %v2110 = vsel %vm2108, %v2049, %v1447
  %v2111 = vsel %vm2108, %v2050, %v1449
  %v2112 = vsel %vm2108, %v2051, %v1451
  %v2113 = vsel %vm2108, %v2052, %v1453
  %v2114 = vsel %vm2108, %v2053, %v1455
  %v2115 = vsel %vm2108, %v2054, %v1457
  %v2116 = vsel %vm2108, %v2055, %v1459
  %v2117 = vsel %vm2108, %v2056, %v1461
  %v2118 = vsel %vm2108, %v2057, %v1463
  %v2119 = vsel %vm2108, %v2058, %v1465
  %v2120 = vsel %vm2108, %v2059, %v1467
  %v2121 = vsel %vm2108, %v2060, %v1469
  %v2122 = vsel %vm2108, %v2061, %v1471
  %v2123 = vsel %vm2108, %v2062, %v1473
  %v2124 = vsel %vm2108, %v2063, %v1475
  %v2125 = vsel %vm2108, %v2064, %v1477
  %v2126 = vsel %vm2108, %v2065, %v1479
  %v2127 = vsel %vm2108, %v2066, %v1481
  %v2128 = vsel %vm2108, %v2067, %v1483
  %v2129 = vsel %vm2108, %v2068, %v1485
  %v2130 = vsel %vm2108, %v2069, %v1487
  %v2131 = vsel %vm2108, %v2070, %v1489
  %v2132 = vsel %vm2108, %v2071, %v1491
  %v2133 = vsel %vm2108, %v2072, %v1493
  %v2134 = vsel %vm2108, %v2073, %v1495
  %v2135 = vsel %vm2108, %v2074, %v1497
  %v2136 = vsel %vm2108, %v2075, %v1499
  %v2137 = vsel %vm2108, %v2076, %v1501
  %v2138 = vsel %vm2108, %v2077, %v1503
  %v2139 = vsel %vm2108, %v2078, %v1505
  %v2140 = vsel %vm2108, %v2079, %v1507
  %v2141 = vsel %vm2108, %v2080, %v1509
  %v2142 = vsel %vm2108, %v2081, %v1511
  %v2143 = vsel %vm2108, %v2082, %v1513
  %v2144 = vsel %vm2108, %v2083, %v1515
  %v2145 = vsel %vm2108, %v2084, %v1517
  %v2146 = vsel %vm2108, %v2085, %v1519
  %v2147 = vsel %vm2108, %v2086, %v1521
  %v2148 = vsel %vm2108, %v2087, %v1523
  %v2149 = vsel %vm2108, %v2088, %v1525
  %v2150 = vsel %vm2108, %v2089, %v1527
  %v2151 = vsel %vm2108, %v2090, %v1529
  %v2152 = vsel %vm2108, %v2091, %v1531
  %v2153 = vsel %vm2108, %v2092, %v1533
  %v2154 = vsel %vm2108, %v2093, %v1535
  %v2155 = vsel %vm2108, %v2094, %v1537
  %v2156 = vsel %vm2108, %v2095, %v1539
  %v2157 = vsel %vm2108, %v2096, %v1541
  %v2158 = vsel %vm2108, %v2097, %v1543
  %v2159 = vsel %vm2108, %v2098, %v1545
  %v2160 = vsel %vm2108, %v2099, %v1547
  %v2161 = vsel %vm2108, %v2100, %v1549
  %v2162 = vsel %vm2108, %v2101, %v1551
  %v2163 = vsel %vm2108, %v2102, %v1553
  %v2164 = vsel %vm2108, %v2103, %v1555
  %v2165 = vsel %vm2108, %v2104, %v1557
  %v2166 = vsel %vm2108, %v2105, %v1559
  %v2167 = vsel %vm2108, %v2106, %v1561
  %v2168 = vsel %vm2108, %v2107, %v1563
  %vm2169 = vcmask 588800
  %v2170 = vsel %vm2169, %v2109, %v1626
  %v2171 = vsel %vm2169, %v2110, %v1628
  %v2172 = vsel %vm2169, %v2111, %v1630
  %v2173 = vsel %vm2169, %v2112, %v1632
  %v2174 = vsel %vm2169, %v2113, %v1634
  %v2175 = vsel %vm2169, %v2114, %v1636
  %v2176 = vsel %vm2169, %v2115, %v1638
  %v2177 = vsel %vm2169, %v2116, %v1640
  %v2178 = vsel %vm2169, %v2117, %v1642
  %v2179 = vsel %vm2169, %v2118, %v1644
  %v2180 = vsel %vm2169, %v2119, %v1646
  %v2181 = vsel %vm2169, %v2120, %v1648
  %v2182 = vsel %vm2169, %v2121, %v1650
  %v2183 = vsel %vm2169, %v2122, %v1652
  %v2184 = vsel %vm2169, %v2123, %v1654
  %v2185 = vsel %vm2169, %v2124, %v1656
  %v2186 = vsel %vm2169, %v2125, %v1658
  %v2187 = vsel %vm2169, %v2126, %v1660
  %v2188 = vsel %vm2169, %v2127, %v1662
  %v2189 = vsel %vm2169, %v2128, %v1664
  %v2190 = vsel %vm2169, %v2129, %v1666
  %v2191 = vsel %vm2169, %v2130, %v1668
  %v2192 = vsel %vm2169, %v2131, %v1670
  %v2193 = vsel %vm2169, %v2132, %v1672
  %v2194 = vsel %vm2169, %v2133, %v1674
  %v2195 = vsel %vm2169, %v2134, %v1676
  %v2196 = vsel %vm2169, %v2135, %v1678
  %v2197 = vsel %vm2169, %v2136, %v1680
  %v2198 = vsel %vm2169, %v2137, %v1682
  %v2199 = vsel %vm2169, %v2138, %v1684
  %v2200 = vsel %vm2169, %v2139, %v1686
  %v2201 = vsel %vm2169, %v2140, %v1688
  %v2202 = vsel %vm2169, %v2141, %v1690
  %v2203 = vsel %vm2169, %v2142, %v1692
  %v2204 = vsel %vm2169, %v2143, %v1694
  %v2205 = vsel %vm2169, %v2144, %v1696
  %v2206 = vsel %vm2169, %v2145, %v1698
  %v2207 = vsel %vm2169, %v2146, %v1700
  %v2208 = vsel %vm2169, %v2147, %v1702
  %v2209 = vsel %vm2169, %v2148, %v1704
  %v2210 = vsel %vm2169, %v2149, %v1706
  %v2211 = vsel %vm2169, %v2150, %v1708
  %v2212 = vsel %vm2169, %v2151, %v1710
  %v2213 = vsel %vm2169, %v2152, %v1712
  %v2214 = vsel %vm2169, %v2153, %v1714
  %v2215 = vsel %vm2169, %v2154, %v1716
  %v2216 = vsel %vm2169, %v2155, %v1718
  %v2217 = vsel %vm2169, %v2156, %v1720
  %v2218 = vsel %vm2169, %v2157, %v1722
  %v2219 = vsel %vm2169, %v2158, %v1724
  %v2220 = vsel %vm2169, %v2159, %v1726
  %v2221 = vsel %vm2169, %v2160, %v1728
  %v2222 = vsel %vm2169, %v2161, %v1730
  %v2223 = vsel %vm2169, %v2162, %v1732
  %v2224 = vsel %vm2169, %v2163, %v1734
  %v2225 = vsel %vm2169, %v2164, %v1736
  %v2226 = vsel %vm2169, %v2165, %v1738
  %v2227 = vsel %vm2169, %v2166, %v1740
  %v2228 = vsel %vm2169, %v2167, %v1742
  %v2229 = vsel %vm2169, %v2168, %v1744
  %vm2230 = vcmask 719872
  %v2231 = vsel %vm2230, %v2170, %v1807
  %v2232 = vsel %vm2230, %v2171, %v1809
  %v2233 = vsel %vm2230, %v2172, %v1811
  %v2234 = vsel %vm2230, %v2173, %v1813
  %v2235 = vsel %vm2230, %v2174, %v1815
  %v2236 = vsel %vm2230, %v2175, %v1817
  %v2237 = vsel %vm2230, %v2176, %v1819
  %v2238 = vsel %vm2230, %v2177, %v1821
  %v2239 = vsel %vm2230, %v2178, %v1823
  %v2240 = vsel %vm2230, %v2179, %v1825
  %v2241 = vsel %vm2230, %v2180, %v1827
  %v2242 = vsel %vm2230, %v2181, %v1829
  %v2243 = vsel %vm2230, %v2182, %v1831
  %v2244 = vsel %vm2230, %v2183, %v1833
  %v2245 = vsel %vm2230, %v2184, %v1835
  %v2246 = vsel %vm2230, %v2185, %v1837
  %v2247 = vsel %vm2230, %v2186, %v1839
  %v2248 = vsel %vm2230, %v2187, %v1841
  %v2249 = vsel %vm2230, %v2188, %v1843
  %v2250 = vsel %vm2230, %v2189, %v1845
  %v2251 = vsel %vm2230, %v2190, %v1847
  %v2252 = vsel %vm2230, %v2191, %v1849
  %v2253 = vsel %vm2230, %v2192, %v1851
  %v2254 = vsel %vm2230, %v2193, %v1853
  %v2255 = vsel %vm2230, %v2194, %v1855
  %v2256 = vsel %vm2230, %v2195, %v1857
  %v2257 = vsel %vm2230, %v2196, %v1859
  %v2258 = vsel %vm2230, %v2197, %v1861
  %v2259 = vsel %vm2230, %v2198, %v1863
  %v2260 = vsel %vm2230, %v2199, %v1865
  %v2261 = vsel %vm2230, %v2200, %v1867
  %v2262 = vsel %vm2230, %v2201, %v1869
  %v2263 = vsel %vm2230, %v2202, %v1871
  %v2264 = vsel %vm2230, %v2203, %v1873
  %v2265 = vsel %vm2230, %v2204, %v1875
  %v2266 = vsel %vm2230, %v2205, %v1877
  %v2267 = vsel %vm2230, %v2206, %v1879
  %v2268 = vsel %vm2230, %v2207, %v1881
  %v2269 = vsel %vm2230, %v2208, %v1883
  %v2270 = vsel %vm2230, %v2209, %v1885
  %v2271 = vsel %vm2230, %v2210, %v1887
  %v2272 = vsel %vm2230, %v2211, %v1889
  %v2273 = vsel %vm2230, %v2212, %v1891
  %v2274 = vsel %vm2230, %v2213, %v1893
  %v2275 = vsel %vm2230, %v2214, %v1895
  %v2276 = vsel %vm2230, %v2215, %v1897
  %v2277 = vsel %vm2230, %v2216, %v1899
  %v2278 = vsel %vm2230, %v2217, %v1901
  %v2279 = vsel %vm2230, %v2218, %v1903
  %v2280 = vsel %vm2230, %v2219, %v1905
  %v2281 = vsel %vm2230, %v2220, %v1907
  %v2282 = vsel %vm2230, %v2221, %v1909
  %v2283 = vsel %vm2230, %v2222, %v1911
  %v2284 = vsel %vm2230, %v2223, %v1913
  %v2285 = vsel %vm2230, %v2224, %v1915
  %v2286 = vsel %vm2230, %v2225, %v1917
  %v2287 = vsel %vm2230, %v2226, %v1919
  %v2288 = vsel %vm2230, %v2227, %v1921
  %v2289 = vsel %vm2230, %v2228, %v1923
  %v2290 = vsel %vm2230, %v2229, %v1925
  %v2291 = vmul.f32 %v2231, %v458
  %v2292 = vmul.f32 %v2232, %v459
  %v2293 = vmul.f32 %v2233, %v460
  %v2294 = vmul.f32 %v2234, %v461
  %v2295 = vmul.f32 %v2235, %v462
  %v2296 = vmul.f32 %v2236, %v463
  %v2297 = vmul.f32 %v2237, %v464
  %v2298 = vmul.f32 %v2238, %v465
  %v2299 = vmul.f32 %v2239, %v466
  %v2300 = vmul.f32 %v2240, %v467
  %v2301 = vmul.f32 %v2241, %v468
  %v2302 = vmul.f32 %v2242, %v469
  %v2303 = vmul.f32 %v2243, %v458
  %v2304 = vmul.f32 %v2244, %v459
  %v2305 = vmul.f32 %v2245, %v460
  %v2306 = vmul.f32 %v2246, %v461
  %v2307 = vmul.f32 %v2247, %v462
  %v2308 = vmul.f32 %v2248, %v463
  %v2309 = vmul.f32 %v2249, %v464
  %v2310 = vmul.f32 %v2250, %v465
  %v2311 = vmul.f32 %v2251, %v466
  %v2312 = vmul.f32 %v2252, %v467
  %v2313 = vmul.f32 %v2253, %v468
  %v2314 = vmul.f32 %v2254, %v469
  %v2315 = vmul.f32 %v2255, %v458
  %v2316 = vmul.f32 %v2256, %v459
  %v2317 = vmul.f32 %v2257, %v460
  %v2318 = vmul.f32 %v2258, %v461
  %v2319 = vmul.f32 %v2259, %v462
  %v2320 = vmul.f32 %v2260, %v463
  %v2321 = vmul.f32 %v2261, %v464
  %v2322 = vmul.f32 %v2262, %v465
  %v2323 = vmul.f32 %v2263, %v466
  %v2324 = vmul.f32 %v2264, %v467
  %v2325 = vmul.f32 %v2265, %v468
  %v2326 = vmul.f32 %v2266, %v469
  %v2327 = vmul.f32 %v2267, %v458
  %v2328 = vmul.f32 %v2268, %v459
  %v2329 = vmul.f32 %v2269, %v460
  %v2330 = vmul.f32 %v2270, %v461
  %v2331 = vmul.f32 %v2271, %v462
  %v2332 = vmul.f32 %v2272, %v463
  %v2333 = vmul.f32 %v2273, %v464
  %v2334 = vmul.f32 %v2274, %v465
  %v2335 = vmul.f32 %v2275, %v466
  %v2336 = vmul.f32 %v2276, %v467
  %v2337 = vmul.f32 %v2277, %v468
  %v2338 = vmul.f32 %v2278, %v469
  %v2339 = vmul.f32 %v2279, %v458
  %v2340 = vmul.f32 %v2280, %v459
  %v2341 = vmul.f32 %v2281, %v460
  %v2342 = vmul.f32 %v2282, %v461
  %v2343 = vmul.f32 %v2283, %v462
  %v2344 = vmul.f32 %v2284, %v463
  %v2345 = vmul.f32 %v2285, %v464
  %v2346 = vmul.f32 %v2286, %v465
  %v2347 = vmul.f32 %v2287, %v466
  %v2348 = vmul.f32 %v2288, %v467
  %v2349 = vmul.f32 %v2289, %v468
  %v2350 = vmul.f32 %v2290, %v469
  %v2351 = vld [vmem:[%s4] sm:$0xff]
  %v2352 = vld [vmem:[%s4 + $0x8] sm:$0xff]
  %v2353 = vld [vmem:[%s4 + $0x10] sm:$0xff]
  %v2354 = vld [vmem:[%s4 + $0x18] sm:$0xff]
  %v2355 = vld [vmem:[%s4 + $0x20] sm:$0xff]
  %v2356 = vld [vmem:[%s4 + $0x28] sm:$0xff]
  %v2357 = vld [vmem:[%s4 + $0x30] sm:$0xff]
  %v2358 = vld [vmem:[%s4 + $0x38] sm:$0xff]
  %v2359 = vld [vmem:[%s4 + $0x40] sm:$0xff]
  %v2360 = vld [vmem:[%s4 + $0x48] sm:$0xff]
  %v2361 = vld [vmem:[%s4 + $0x50] sm:$0xff]
  %v2362 = vld [vmem:[%s4 + $0x58] sm:$0xff]
  %v2363 = vld [vmem:[%s4 + $0x60] sm:$0xff]
  %s2364 = scalar_lea.vmem %s4, 104
  %v2365 = vld [vmem:[%s2364] sm:$0xff]
  %v2366 = vld [vmem:[%s2364 + $0x8] sm:$0xff]
  %v2367 = vld [vmem:[%s2364 + $0x10] sm:$0xff]
  %v2368 = vld [vmem:[%s2364 + $0x18] sm:$0xff]
  %v2369 = vld [vmem:[%s2364 + $0x20] sm:$0xff]
  %v2370 = vld [vmem:[%s2364 + $0x28] sm:$0xff]
  %v2371 = vld [vmem:[%s2364 + $0x30] sm:$0xff]
  %v2372 = vld [vmem:[%s2364 + $0x38] sm:$0xff]
  %v2373 = vld [vmem:[%s2364 + $0x40] sm:$0xff]
  %v2374 = vld [vmem:[%s2364 + $0x48] sm:$0xff]
  %v2375 = vld [vmem:[%s2364 + $0x50] sm:$0xff]
  %v2376 = vld [vmem:[%s2364 + $0x58] sm:$0xff]
  %v2377 = vld [vmem:[%s2364 + $0x60] sm:$0xff]
  %vm2378 = vcmask 850944
  %v2380 = vsel %vm2378, %v2291, 0
  %v2383 = vsel %vm2378, %v2292, 0
  %v2386 = vsel %vm2378, %v2293, 0
  %v2389 = vsel %vm2378, %v2294, 0
  %v2392 = vsel %vm2378, %v2295, 0
  %v2395 = vsel %vm2378, %v2296, 0
  %v2398 = vsel %vm2378, %v2297, 0
  %v2401 = vsel %vm2378, %v2298, 0
  %v2404 = vsel %vm2378, %v2299, 0
  %v2407 = vsel %vm2378, %v2300, 0
  %v2410 = vsel %vm2378, %v2301, 0
  %v2413 = vsel %vm2378, %v2302, 0
  %v2416 = vsel %vm2378, %v2303, 0
  %v2419 = vsel %vm2378, %v2304, 0
  %v2422 = vsel %vm2378, %v2305, 0
  %v2425 = vsel %vm2378, %v2306, 0
  %v2428 = vsel %vm2378, %v2307, 0
  %v2431 = vsel %vm2378, %v2308, 0
  %v2434 = vsel %vm2378, %v2309, 0
  %v2437 = vsel %vm2378, %v2310, 0
  %v2440 = vsel %vm2378, %v2311, 0
  %v2443 = vsel %vm2378, %v2312, 0
  %v2446 = vsel %vm2378, %v2313, 0
  %v2449 = vsel %vm2378, %v2314, 0
  %v2452 = vsel %vm2378, %v2315, 0
  %v2455 = vsel %vm2378, %v2316, 0
  %v2458 = vsel %vm2378, %v2317, 0
  %v2461 = vsel %vm2378, %v2318, 0
  %v2464 = vsel %vm2378, %v2319, 0
  %v2467 = vsel %vm2378, %v2320, 0
  %v2470 = vsel %vm2378, %v2321, 0
  %v2473 = vsel %vm2378, %v2322, 0
  %v2476 = vsel %vm2378, %v2323, 0
  %v2479 = vsel %vm2378, %v2324, 0
  %v2482 = vsel %vm2378, %v2325, 0
  %v2485 = vsel %vm2378, %v2326, 0
  %v2488 = vsel %vm2378, %v2327, 0
  %v2491 = vsel %vm2378, %v2328, 0
  %v2494 = vsel %vm2378, %v2329, 0
  %v2497 = vsel %vm2378, %v2330, 0
  %v2500 = vsel %vm2378, %v2331, 0
  %v2503 = vsel %vm2378, %v2332, 0
  %v2506 = vsel %vm2378, %v2333, 0
  %v2509 = vsel %vm2378, %v2334, 0
  %v2512 = vsel %vm2378, %v2335, 0
  %v2515 = vsel %vm2378, %v2336, 0
  %v2518 = vsel %vm2378, %v2337, 0
  %v2521 = vsel %vm2378, %v2338, 0
  %v2524 = vsel %vm2378, %v2339, 0
  %v2527 = vsel %vm2378, %v2340, 0
  %v2530 = vsel %vm2378, %v2341, 0
  %v2533 = vsel %vm2378, %v2342, 0
  %v2536 = vsel %vm2378, %v2343, 0
  %v2539 = vsel %vm2378, %v2344, 0
  %v2542 = vsel %vm2378, %v2345, 0
  %v2545 = vsel %vm2378, %v2346, 0
  %v2548 = vsel %vm2378, %v2347, 0
  %v2551 = vsel %vm2378, %v2348, 0
  %v2554 = vsel %vm2378, %v2349, 0
  %v2557 = vsel %vm2378, %v2350, 0
  %2559 = vmatpush.msra.mxu0 0.0
  %2560 = vmatpush.msra.mxu0 0.0
  %2561 = vmatpush.msra.mxu0 0.0
  %2562 = vmatpush.msra.mxu0 %v2377
  %2563 = vmatpush.msra.mxu0 %v2376
  %2564 = vmatpush.msra.mxu0 %v2375
  %2565 = vmatpush.msra.mxu0 %v2374
  %2566 = vmatpush.msra.mxu0 %v2373
  %2567 = vmatpush.msra.mxu0 %v2372
  %2568 = vmatpush.msra.mxu0 %v2371
  %2569 = vmatpush.msra.mxu0 %v2370
  %2570 = vmatpush.msra.mxu0 %v2369
  %2571 = vmatpush.msra.mxu0 %v2368
  %2572 = vmatpush.msra.mxu0 %v2367
  %2573 = vmatpush.msra.mxu0 %v2366
  %2574 = vmatpush.msra.mxu0 %v2365
  %2575 = vmatmul.f32.gmra.mxu0 %v2380
  %v2576 = vpop.f32.mrf.mxu0
  %v2577 = vadd.f32 0.0, %v2576
  %2578 = vmatmul.f32.gmra.mxu0 %v2383
  %v2579 = vpop.f32.mrf.mxu0
  %v2580 = vadd.f32 0.0, %v2579
  %2581 = vmatmul.f32.gmra.mxu0 %v2386
  %v2582 = vpop.f32.mrf.mxu0
  %v2583 = vadd.f32 0.0, %v2582
  %2584 = vmatmul.f32.gmra.mxu0 %v2389
  %v2585 = vpop.f32.mrf.mxu0
  %v2586 = vadd.f32 0.0, %v2585
  %2587 = vmatmul.f32.gmra.mxu0 %v2392
  %v2588 = vpop.f32.mrf.mxu0
  %v2589 = vadd.f32 0.0, %v2588
  %2590 = vmatmul.f32.gmra.mxu0 %v2395
  %v2591 = vpop.f32.mrf.mxu0
  %v2592 = vadd.f32 0.0, %v2591
  %2593 = vmatmul.f32.gmra.mxu0 %v2398
  %v2594 = vpop.f32.mrf.mxu0
  %v2595 = vadd.f32 0.0, %v2594
  %2596 = vmatmul.f32.gmra.mxu0 %v2401
  %v2597 = vpop.f32.mrf.mxu0
  %v2598 = vadd.f32 0.0, %v2597
  %2599 = vmatmul.f32.gmra.mxu0 %v2404
  %v2600 = vpop.f32.mrf.mxu0
  %v2601 = vadd.f32 0.0, %v2600
  %2602 = vmatmul.f32.gmra.mxu0 %v2407
  %v2603 = vpop.f32.mrf.mxu0
  %v2604 = vadd.f32 0.0, %v2603
  %2605 = vmatmul.f32.gmra.mxu0 %v2410
  %v2606 = vpop.f32.mrf.mxu0
  %v2607 = vadd.f32 0.0, %v2606
  %2608 = vmatmul.f32.gmra.mxu0 %v2413
  %v2609 = vpop.f32.mrf.mxu0
  %v2610 = vadd.f32 0.0, %v2609
  %2611 = vmatmul.f32.gmra.mxu0 %v2416
  %v2612 = vpop.f32.mrf.mxu0
  %v2613 = vadd.f32 0.0, %v2612
  %2614 = vmatmul.f32.gmra.mxu0 %v2419
  %v2615 = vpop.f32.mrf.mxu0
  %v2616 = vadd.f32 0.0, %v2615
  %2617 = vmatmul.f32.gmra.mxu0 %v2422
  %v2618 = vpop.f32.mrf.mxu0
  %v2619 = vadd.f32 0.0, %v2618
  %2620 = vmatmul.f32.gmra.mxu0 %v2425
  %v2621 = vpop.f32.mrf.mxu0
  %v2622 = vadd.f32 0.0, %v2621
  %2623 = vmatmul.f32.gmra.mxu0 %v2428
  %v2624 = vpop.f32.mrf.mxu0
  %v2625 = vadd.f32 0.0, %v2624
  %2626 = vmatmul.f32.gmra.mxu0 %v2431
  %v2627 = vpop.f32.mrf.mxu0
  %v2628 = vadd.f32 0.0, %v2627
  %2629 = vmatmul.f32.gmra.mxu0 %v2434
  %v2630 = vpop.f32.mrf.mxu0
  %v2631 = vadd.f32 0.0, %v2630
  %2632 = vmatmul.f32.gmra.mxu0 %v2437
  %v2633 = vpop.f32.mrf.mxu0
  %v2634 = vadd.f32 0.0, %v2633
  %2635 = vmatmul.f32.gmra.mxu0 %v2440
  %v2636 = vpop.f32.mrf.mxu0
  %v2637 = vadd.f32 0.0, %v2636
  %2638 = vmatmul.f32.gmra.mxu0 %v2443
  %v2639 = vpop.f32.mrf.mxu0
  %v2640 = vadd.f32 0.0, %v2639
  %2641 = vmatmul.f32.gmra.mxu0 %v2446
  %v2642 = vpop.f32.mrf.mxu0
  %v2643 = vadd.f32 0.0, %v2642
  %2644 = vmatmul.f32.gmra.mxu0 %v2449
  %v2645 = vpop.f32.mrf.mxu0
  %v2646 = vadd.f32 0.0, %v2645
  %2647 = vmatmul.f32.gmra.mxu0 %v2452
  %v2648 = vpop.f32.mrf.mxu0
  %v2649 = vadd.f32 0.0, %v2648
  %2650 = vmatmul.f32.gmra.mxu0 %v2455
  %v2651 = vpop.f32.mrf.mxu0
  %v2652 = vadd.f32 0.0, %v2651
  %2653 = vmatmul.f32.gmra.mxu0 %v2458
  %v2654 = vpop.f32.mrf.mxu0
  %v2655 = vadd.f32 0.0, %v2654
  %2656 = vmatmul.f32.gmra.mxu0 %v2461
  %v2657 = vpop.f32.mrf.mxu0
  %v2658 = vadd.f32 0.0, %v2657
  %2659 = vmatmul.f32.gmra.mxu0 %v2464
  %v2660 = vpop.f32.mrf.mxu0
  %v2661 = vadd.f32 0.0, %v2660
  %2662 = vmatmul.f32.gmra.mxu0 %v2467
  %v2663 = vpop.f32.mrf.mxu0
  %v2664 = vadd.f32 0.0, %v2663
  %2665 = vmatmul.f32.gmra.mxu0 %v2470
  %v2666 = vpop.f32.mrf.mxu0
  %v2667 = vadd.f32 0.0, %v2666
  %2668 = vmatmul.f32.gmra.mxu0 %v2473
  %v2669 = vpop.f32.mrf.mxu0
  %v2670 = vadd.f32 0.0, %v2669
  %2671 = vmatmul.f32.gmra.mxu0 %v2476
  %v2672 = vpop.f32.mrf.mxu0
  %v2673 = vadd.f32 0.0, %v2672
  %2674 = vmatmul.f32.gmra.mxu0 %v2479
  %v2675 = vpop.f32.mrf.mxu0
  %v2676 = vadd.f32 0.0, %v2675
  %2677 = vmatmul.f32.gmra.mxu0 %v2482
  %v2678 = vpop.f32.mrf.mxu0
  %v2679 = vadd.f32 0.0, %v2678
  %2680 = vmatmul.f32.gmra.mxu0 %v2485
  %v2681 = vpop.f32.mrf.mxu0
  %v2682 = vadd.f32 0.0, %v2681
  %2683 = vmatmul.f32.gmra.mxu0 %v2488
  %v2684 = vpop.f32.mrf.mxu0
  %v2685 = vadd.f32 0.0, %v2684
  %2686 = vmatmul.f32.gmra.mxu0 %v2491
  %v2687 = vpop.f32.mrf.mxu0
  %v2688 = vadd.f32 0.0, %v2687
  %2689 = vmatmul.f32.gmra.mxu0 %v2494
  %v2690 = vpop.f32.mrf.mxu0
  %v2691 = vadd.f32 0.0, %v2690
  %2692 = vmatmul.f32.gmra.mxu0 %v2497
  %v2693 = vpop.f32.mrf.mxu0
  %v2694 = vadd.f32 0.0, %v2693
  %2695 = vmatmul.f32.gmra.mxu0 %v2500
  %v2696 = vpop.f32.mrf.mxu0
  %v2697 = vadd.f32 0.0, %v2696
  %2698 = vmatmul.f32.gmra.mxu0 %v2503
  %v2699 = vpop.f32.mrf.mxu0
  %v2700 = vadd.f32 0.0, %v2699
  %2701 = vmatmul.f32.gmra.mxu0 %v2506
  %v2702 = vpop.f32.mrf.mxu0
  %v2703 = vadd.f32 0.0, %v2702
  %2704 = vmatmul.f32.gmra.mxu0 %v2509
  %v2705 = vpop.f32.mrf.mxu0
  %v2706 = vadd.f32 0.0, %v2705
  %2707 = vmatmul.f32.gmra.mxu0 %v2512
  %v2708 = vpop.f32.mrf.mxu0
  %v2709 = vadd.f32 0.0, %v2708
  %2710 = vmatmul.f32.gmra.mxu0 %v2515
  %v2711 = vpop.f32.mrf.mxu0
  %v2712 = vadd.f32 0.0, %v2711
  %2713 = vmatmul.f32.gmra.mxu0 %v2518
  %v2714 = vpop.f32.mrf.mxu0
  %v2715 = vadd.f32 0.0, %v2714
  %2716 = vmatmul.f32.gmra.mxu0 %v2521
  %v2717 = vpop.f32.mrf.mxu0
  %v2718 = vadd.f32 0.0, %v2717
  %2719 = vmatmul.f32.gmra.mxu0 %v2524
  %v2720 = vpop.f32.mrf.mxu0
  %v2721 = vadd.f32 0.0, %v2720
  %2722 = vmatmul.f32.gmra.mxu0 %v2527
  %v2723 = vpop.f32.mrf.mxu0
  %v2724 = vadd.f32 0.0, %v2723
  %2725 = vmatmul.f32.gmra.mxu0 %v2530
  %v2726 = vpop.f32.mrf.mxu0
  %v2727 = vadd.f32 0.0, %v2726
  %2728 = vmatmul.f32.gmra.mxu0 %v2533
  %v2729 = vpop.f32.mrf.mxu0
  %v2730 = vadd.f32 0.0, %v2729
  %2731 = vmatmul.f32.gmra.mxu0 %v2536
  %v2732 = vpop.f32.mrf.mxu0
  %v2733 = vadd.f32 0.0, %v2732
  %2734 = vmatmul.f32.gmra.mxu0 %v2539
  %v2735 = vpop.f32.mrf.mxu0
  %v2736 = vadd.f32 0.0, %v2735
  %2737 = vmatmul.f32.gmra.mxu0 %v2542
  %v2738 = vpop.f32.mrf.mxu0
  %v2739 = vadd.f32 0.0, %v2738
  %2740 = vmatmul.f32.gmra.mxu0 %v2545
  %v2741 = vpop.f32.mrf.mxu0
  %v2742 = vadd.f32 0.0, %v2741
  %2743 = vmatmul.f32.gmra.mxu0 %v2548
  %v2744 = vpop.f32.mrf.mxu0
  %v2745 = vadd.f32 0.0, %v2744
  %2746 = vmatmul.f32.gmra.mxu0 %v2551
  %v2747 = vpop.f32.mrf.mxu0
  %v2748 = vadd.f32 0.0, %v2747
  %2749 = vmatmul.f32.gmra.mxu0 %v2554
  %v2750 = vpop.f32.mrf.mxu0
  %v2751 = vadd.f32 0.0, %v2750
  %2752 = vmatmul.f32.gmra.mxu0 %v2557
  %v2753 = vpop.f32.mrf.mxu0
  %v2754 = vadd.f32 0.0, %v2753
  %2755 = vdwg.mxu0
  %2756 = vmatpush.msra.mxu0 0.0
  %2757 = vmatpush.msra.mxu0 0.0
  %2758 = vmatpush.msra.mxu0 0.0
  %2759 = vmatpush.msra.mxu0 %v2363
  %2760 = vmatpush.msra.mxu0 %v2362
  %2761 = vmatpush.msra.mxu0 %v2361
  %2762 = vmatpush.msra.mxu0 %v2360
  %2763 = vmatpush.msra.mxu0 %v2359
  %2764 = vmatpush.msra.mxu0 %v2358
  %2765 = vmatpush.msra.mxu0 %v2357
  %2766 = vmatpush.msra.mxu0 %v2356
  %2767 = vmatpush.msra.mxu0 %v2355
  %2768 = vmatpush.msra.mxu0 %v2354
  %2769 = vmatpush.msra.mxu0 %v2353
  %2770 = vmatpush.msra.mxu0 %v2352
  %2771 = vmatpush.msra.mxu0 %v2351
  %2772 = vmatmul.f32.gmra.mxu0 %v2380
  %v2773 = vpop.f32.mrf.mxu0
  %v2774 = vadd.f32 %v2580, %v2773
  %2775 = vmatmul.f32.gmra.mxu0 %v2383
  %v2776 = vpop.f32.mrf.mxu0
  %v2777 = vadd.f32 %v2583, %v2776
  %2778 = vmatmul.f32.gmra.mxu0 %v2386
  %v2779 = vpop.f32.mrf.mxu0
  %v2780 = vadd.f32 %v2586, %v2779
  %2781 = vmatmul.f32.gmra.mxu0 %v2389
  %v2782 = vpop.f32.mrf.mxu0
  %v2783 = vadd.f32 %v2589, %v2782
  %2784 = vmatmul.f32.gmra.mxu0 %v2392
  %v2785 = vpop.f32.mrf.mxu0
  %v2786 = vadd.f32 %v2592, %v2785
  %2787 = vmatmul.f32.gmra.mxu0 %v2395
  %v2788 = vpop.f32.mrf.mxu0
  %v2789 = vadd.f32 %v2595, %v2788
  %2790 = vmatmul.f32.gmra.mxu0 %v2398
  %v2791 = vpop.f32.mrf.mxu0
  %v2792 = vadd.f32 %v2598, %v2791
  %2793 = vmatmul.f32.gmra.mxu0 %v2401
  %v2794 = vpop.f32.mrf.mxu0
  %v2795 = vadd.f32 %v2601, %v2794
  %2796 = vmatmul.f32.gmra.mxu0 %v2404
  %v2797 = vpop.f32.mrf.mxu0
  %v2798 = vadd.f32 %v2604, %v2797
  %2799 = vmatmul.f32.gmra.mxu0 %v2407
  %v2800 = vpop.f32.mrf.mxu0
  %v2801 = vadd.f32 %v2607, %v2800
  %2802 = vmatmul.f32.gmra.mxu0 %v2410
  %v2803 = vpop.f32.mrf.mxu0
  %v2804 = vadd.f32 %v2610, %v2803
  %2805 = vmatmul.f32.gmra.mxu0 %v2413
  %v2806 = vpop.f32.mrf.mxu0
  %v2807 = vadd.f32 %v2613, %v2806
  %2808 = vmatmul.f32.gmra.mxu0 %v2416
  %v2809 = vpop.f32.mrf.mxu0
  %v2810 = vadd.f32 %v2616, %v2809
  %2811 = vmatmul.f32.gmra.mxu0 %v2419
  %v2812 = vpop.f32.mrf.mxu0
  %v2813 = vadd.f32 %v2619, %v2812
  %2814 = vmatmul.f32.gmra.mxu0 %v2422
  %v2815 = vpop.f32.mrf.mxu0
  %v2816 = vadd.f32 %v2622, %v2815
  %2817 = vmatmul.f32.gmra.mxu0 %v2425
  %v2818 = vpop.f32.mrf.mxu0
  %v2819 = vadd.f32 %v2625, %v2818
  %2820 = vmatmul.f32.gmra.mxu0 %v2428
  %v2821 = vpop.f32.mrf.mxu0
  %v2822 = vadd.f32 %v2628, %v2821
  %2823 = vmatmul.f32.gmra.mxu0 %v2431
  %v2824 = vpop.f32.mrf.mxu0
  %v2825 = vadd.f32 %v2631, %v2824
  %2826 = vmatmul.f32.gmra.mxu0 %v2434
  %v2827 = vpop.f32.mrf.mxu0
  %v2828 = vadd.f32 %v2634, %v2827
  %2829 = vmatmul.f32.gmra.mxu0 %v2437
  %v2830 = vpop.f32.mrf.mxu0
  %v2831 = vadd.f32 %v2637, %v2830
  %2832 = vmatmul.f32.gmra.mxu0 %v2440
  %v2833 = vpop.f32.mrf.mxu0
  %v2834 = vadd.f32 %v2640, %v2833
  %2835 = vmatmul.f32.gmra.mxu0 %v2443
  %v2836 = vpop.f32.mrf.mxu0
  %v2837 = vadd.f32 %v2643, %v2836
  %2838 = vmatmul.f32.gmra.mxu0 %v2446
  %v2839 = vpop.f32.mrf.mxu0
  %v2840 = vadd.f32 %v2646, %v2839
  %2841 = vmatmul.f32.gmra.mxu0 %v2449
  %v2842 = vpop.f32.mrf.mxu0
  %v2843 = vadd.f32 %v2649, %v2842
  %2844 = vmatmul.f32.gmra.mxu0 %v2452
  %v2845 = vpop.f32.mrf.mxu0
  %v2846 = vadd.f32 %v2652, %v2845
  %2847 = vmatmul.f32.gmra.mxu0 %v2455
  %v2848 = vpop.f32.mrf.mxu0
  %v2849 = vadd.f32 %v2655, %v2848
  %2850 = vmatmul.f32.gmra.mxu0 %v2458
  %v2851 = vpop.f32.mrf.mxu0
  %v2852 = vadd.f32 %v2658, %v2851
  %2853 = vmatmul.f32.gmra.mxu0 %v2461
  %v2854 = vpop.f32.mrf.mxu0
  %v2855 = vadd.f32 %v2661, %v2854
  %2856 = vmatmul.f32.gmra.mxu0 %v2464
  %v2857 = vpop.f32.mrf.mxu0
  %v2858 = vadd.f32 %v2664, %v2857
  %2859 = vmatmul.f32.gmra.mxu0 %v2467
  %v2860 = vpop.f32.mrf.mxu0
  %v2861 = vadd.f32 %v2667, %v2860
  %2862 = vmatmul.f32.gmra.mxu0 %v2470
  %v2863 = vpop.f32.mrf.mxu0
  %v2864 = vadd.f32 %v2670, %v2863
  %2865 = vmatmul.f32.gmra.mxu0 %v2473
  %v2866 = vpop.f32.mrf.mxu0
  %v2867 = vadd.f32 %v2673, %v2866
  %2868 = vmatmul.f32.gmra.mxu0 %v2476
  %v2869 = vpop.f32.mrf.mxu0
  %v2870 = vadd.f32 %v2676, %v2869
  %2871 = vmatmul.f32.gmra.mxu0 %v2479
  %v2872 = vpop.f32.mrf.mxu0
  %v2873 = vadd.f32 %v2679, %v2872
  %2874 = vmatmul.f32.gmra.mxu0 %v2482
  %v2875 = vpop.f32.mrf.mxu0
  %v2876 = vadd.f32 %v2682, %v2875
  %2877 = vmatmul.f32.gmra.mxu0 %v2485
  %v2878 = vpop.f32.mrf.mxu0
  %v2879 = vadd.f32 %v2685, %v2878
  %2880 = vmatmul.f32.gmra.mxu0 %v2488
  %v2881 = vpop.f32.mrf.mxu0
  %v2882 = vadd.f32 %v2688, %v2881
  %2883 = vmatmul.f32.gmra.mxu0 %v2491
  %v2884 = vpop.f32.mrf.mxu0
  %v2885 = vadd.f32 %v2691, %v2884
  %2886 = vmatmul.f32.gmra.mxu0 %v2494
  %v2887 = vpop.f32.mrf.mxu0
  %v2888 = vadd.f32 %v2694, %v2887
  %2889 = vmatmul.f32.gmra.mxu0 %v2497
  %v2890 = vpop.f32.mrf.mxu0
  %v2891 = vadd.f32 %v2697, %v2890
  %2892 = vmatmul.f32.gmra.mxu0 %v2500
  %v2893 = vpop.f32.mrf.mxu0
  %v2894 = vadd.f32 %v2700, %v2893
  %2895 = vmatmul.f32.gmra.mxu0 %v2503
  %v2896 = vpop.f32.mrf.mxu0
  %v2897 = vadd.f32 %v2703, %v2896
  %2898 = vmatmul.f32.gmra.mxu0 %v2506
  %v2899 = vpop.f32.mrf.mxu0
  %v2900 = vadd.f32 %v2706, %v2899
  %2901 = vmatmul.f32.gmra.mxu0 %v2509
  %v2902 = vpop.f32.mrf.mxu0
  %v2903 = vadd.f32 %v2709, %v2902
  %2904 = vmatmul.f32.gmra.mxu0 %v2512
  %v2905 = vpop.f32.mrf.mxu0
  %v2906 = vadd.f32 %v2712, %v2905
  %2907 = vmatmul.f32.gmra.mxu0 %v2515
  %v2908 = vpop.f32.mrf.mxu0
  %v2909 = vadd.f32 %v2715, %v2908
  %2910 = vmatmul.f32.gmra.mxu0 %v2518
  %v2911 = vpop.f32.mrf.mxu0
  %v2912 = vadd.f32 %v2718, %v2911
  %2913 = vmatmul.f32.gmra.mxu0 %v2521
  %v2914 = vpop.f32.mrf.mxu0
  %v2915 = vadd.f32 %v2721, %v2914
  %2916 = vmatmul.f32.gmra.mxu0 %v2524
  %v2917 = vpop.f32.mrf.mxu0
  %v2918 = vadd.f32 %v2724, %v2917
  %2919 = vmatmul.f32.gmra.mxu0 %v2527
  %v2920 = vpop.f32.mrf.mxu0
  %v2921 = vadd.f32 %v2727, %v2920
  %2922 = vmatmul.f32.gmra.mxu0 %v2530
  %v2923 = vpop.f32.mrf.mxu0
  %v2924 = vadd.f32 %v2730, %v2923
  %2925 = vmatmul.f32.gmra.mxu0 %v2533
  %v2926 = vpop.f32.mrf.mxu0
  %v2927 = vadd.f32 %v2733, %v2926
  %2928 = vmatmul.f32.gmra.mxu0 %v2536
  %v2929 = vpop.f32.mrf.mxu0
  %v2930 = vadd.f32 %v2736, %v2929
  %2931 = vmatmul.f32.gmra.mxu0 %v2539
  %v2932 = vpop.f32.mrf.mxu0
  %v2933 = vadd.f32 %v2739, %v2932
  %2934 = vmatmul.f32.gmra.mxu0 %v2542
  %v2935 = vpop.f32.mrf.mxu0
  %v2936 = vadd.f32 %v2742, %v2935
  %2937 = vmatmul.f32.gmra.mxu0 %v2545
  %v2938 = vpop.f32.mrf.mxu0
  %v2939 = vadd.f32 %v2745, %v2938
  %2940 = vmatmul.f32.gmra.mxu0 %v2548
  %v2941 = vpop.f32.mrf.mxu0
  %v2942 = vadd.f32 %v2748, %v2941
  %2943 = vmatmul.f32.gmra.mxu0 %v2551
  %v2944 = vpop.f32.mrf.mxu0
  %v2945 = vadd.f32 %v2751, %v2944
  %2946 = vmatmul.f32.gmra.mxu0 %v2554
  %v2947 = vpop.f32.mrf.mxu0
  %v2948 = vadd.f32 %v2754, %v2947
  %2949 = vmatmul.f32.gmra.mxu0 %v2557
  %v2950 = vpop.f32.mrf.mxu0
  %v2951 = vadd.f32 %v2577, %v2950
  %2952 = vdwg.mxu0
  %s2953 = scalar_lea.vmem %s4, 208
  %v2954 = vld [vmem:[%s2953] sm:$0xff]
  %v2955 = vld [vmem:[%s2953 + $0x8] sm:$0xff]
  %v2956 = vld [vmem:[%s2953 + $0x10] sm:$0xff]
  %v2957 = vld [vmem:[%s2953 + $0x18] sm:$0xff]
  %v2958 = vld [vmem:[%s2953 + $0x20] sm:$0xff]
  %v2959 = vld [vmem:[%s2953 + $0x28] sm:$0xff]
  %v2960 = vld [vmem:[%s2953 + $0x30] sm:$0xff]
  %v2961 = vld [vmem:[%s2953 + $0x38] sm:$0xff]
  %v2962 = vld [vmem:[%s2953 + $0x40] sm:$0xff]
  %v2963 = vld [vmem:[%s2953 + $0x48] sm:$0xff]
  %v2964 = vld [vmem:[%s2953 + $0x50] sm:$0xff]
  %v2965 = vld [vmem:[%s2953 + $0x58] sm:$0xff]
  %v2966 = vld [vmem:[%s2953 + $0x60] sm:$0xff]
  %2967 = vmatpush.msra.mxu0 0.0
  %2968 = vmatpush.msra.mxu0 0.0
  %2969 = vmatpush.msra.mxu0 0.0
  %2970 = vmatpush.msra.mxu0 %v2966
  %2971 = vmatpush.msra.mxu0 %v2965
  %2972 = vmatpush.msra.mxu0 %v2964
  %2973 = vmatpush.msra.mxu0 %v2963
  %2974 = vmatpush.msra.mxu0 %v2962
  %2975 = vmatpush.msra.mxu0 %v2961
  %2976 = vmatpush.msra.mxu0 %v2960
  %2977 = vmatpush.msra.mxu0 %v2959
  %2978 = vmatpush.msra.mxu0 %v2958
  %2979 = vmatpush.msra.mxu0 %v2957
  %2980 = vmatpush.msra.mxu0 %v2956
  %2981 = vmatpush.msra.mxu0 %v2955
  %2982 = vmatpush.msra.mxu0 %v2954
  %2983 = vmatmul.f32.gmra.mxu0 %v2380
  %v2984 = vpop.f32.mrf.mxu0
  %v2985 = vadd.f32 0.0, %v2984
  %2986 = vmatmul.f32.gmra.mxu0 %v2383
  %v2987 = vpop.f32.mrf.mxu0
  %v2988 = vadd.f32 0.0, %v2987
  %2989 = vmatmul.f32.gmra.mxu0 %v2386
  %v2990 = vpop.f32.mrf.mxu0
  %v2991 = vadd.f32 0.0, %v2990
  %2992 = vmatmul.f32.gmra.mxu0 %v2389
  %v2993 = vpop.f32.mrf.mxu0
  %v2994 = vadd.f32 0.0, %v2993
  %2995 = vmatmul.f32.gmra.mxu0 %v2392
  %v2996 = vpop.f32.mrf.mxu0
  %v2997 = vadd.f32 0.0, %v2996
  %2998 = vmatmul.f32.gmra.mxu0 %v2395
  %v2999 = vpop.f32.mrf.mxu0
  %v3000 = vadd.f32 0.0, %v2999
  %3001 = vmatmul.f32.gmra.mxu0 %v2398
  %v3002 = vpop.f32.mrf.mxu0
  %v3003 = vadd.f32 0.0, %v3002
  %3004 = vmatmul.f32.gmra.mxu0 %v2401
  %v3005 = vpop.f32.mrf.mxu0
  %v3006 = vadd.f32 0.0, %v3005
  %3007 = vmatmul.f32.gmra.mxu0 %v2404
  %v3008 = vpop.f32.mrf.mxu0
  %v3009 = vadd.f32 0.0, %v3008
  %3010 = vmatmul.f32.gmra.mxu0 %v2407
  %v3011 = vpop.f32.mrf.mxu0
  %v3012 = vadd.f32 0.0, %v3011
  %3013 = vmatmul.f32.gmra.mxu0 %v2410
  %v3014 = vpop.f32.mrf.mxu0
  %v3015 = vadd.f32 0.0, %v3014
  %3016 = vmatmul.f32.gmra.mxu0 %v2413
  %v3017 = vpop.f32.mrf.mxu0
  %v3018 = vadd.f32 0.0, %v3017
  %3019 = vmatmul.f32.gmra.mxu0 %v2416
  %v3020 = vpop.f32.mrf.mxu0
  %v3021 = vadd.f32 0.0, %v3020
  %3022 = vmatmul.f32.gmra.mxu0 %v2419
  %v3023 = vpop.f32.mrf.mxu0
  %v3024 = vadd.f32 0.0, %v3023
  %3025 = vmatmul.f32.gmra.mxu0 %v2422
  %v3026 = vpop.f32.mrf.mxu0
  %v3027 = vadd.f32 0.0, %v3026
  %3028 = vmatmul.f32.gmra.mxu0 %v2425
  %v3029 = vpop.f32.mrf.mxu0
  %v3030 = vadd.f32 0.0, %v3029
  %3031 = vmatmul.f32.gmra.mxu0 %v2428
  %v3032 = vpop.f32.mrf.mxu0
  %v3033 = vadd.f32 0.0, %v3032
  %3034 = vmatmul.f32.gmra.mxu0 %v2431
  %v3035 = vpop.f32.mrf.mxu0
  %v3036 = vadd.f32 0.0, %v3035
  %3037 = vmatmul.f32.gmra.mxu0 %v2434
  %v3038 = vpop.f32.mrf.mxu0
  %v3039 = vadd.f32 0.0, %v3038
  %3040 = vmatmul.f32.gmra.mxu0 %v2437
  %v3041 = vpop.f32.mrf.mxu0
  %v3042 = vadd.f32 0.0, %v3041
  %3043 = vmatmul.f32.gmra.mxu0 %v2440
  %v3044 = vpop.f32.mrf.mxu0
  %v3045 = vadd.f32 0.0, %v3044
  %3046 = vmatmul.f32.gmra.mxu0 %v2443
  %v3047 = vpop.f32.mrf.mxu0
  %v3048 = vadd.f32 0.0, %v3047
  %3049 = vmatmul.f32.gmra.mxu0 %v2446
  %v3050 = vpop.f32.mrf.mxu0
  %v3051 = vadd.f32 0.0, %v3050
  %3052 = vmatmul.f32.gmra.mxu0 %v2449
  %v3053 = vpop.f32.mrf.mxu0
  %v3054 = vadd.f32 0.0, %v3053
  %3055 = vmatmul.f32.gmra.mxu0 %v2452
  %v3056 = vpop.f32.mrf.mxu0
  %v3057 = vadd.f32 0.0, %v3056
  %3058 = vmatmul.f32.gmra.mxu0 %v2455
  %v3059 = vpop.f32.mrf.mxu0
  %v3060 = vadd.f32 0.0, %v3059
  %3061 = vmatmul.f32.gmra.mxu0 %v2458
  %v3062 = vpop.f32.mrf.mxu0
  %v3063 = vadd.f32 0.0, %v3062
  %3064 = vmatmul.f32.gmra.mxu0 %v2461
  %v3065 = vpop.f32.mrf.mxu0
  %v3066 = vadd.f32 0.0, %v3065
  %3067 = vmatmul.f32.gmra.mxu0 %v2464
  %v3068 = vpop.f32.mrf.mxu0
  %v3069 = vadd.f32 0.0, %v3068
  %3070 = vmatmul.f32.gmra.mxu0 %v2467
  %v3071 = vpop.f32.mrf.mxu0
  %v3072 = vadd.f32 0.0, %v3071
  %3073 = vmatmul.f32.gmra.mxu0 %v2470
  %v3074 = vpop.f32.mrf.mxu0
  %v3075 = vadd.f32 0.0, %v3074
  %3076 = vmatmul.f32.gmra.mxu0 %v2473
  %v3077 = vpop.f32.mrf.mxu0
  %v3078 = vadd.f32 0.0, %v3077
  %3079 = vmatmul.f32.gmra.mxu0 %v2476
  %v3080 = vpop.f32.mrf.mxu0
  %v3081 = vadd.f32 0.0, %v3080
  %3082 = vmatmul.f32.gmra.mxu0 %v2479
  %v3083 = vpop.f32.mrf.mxu0
  %v3084 = vadd.f32 0.0, %v3083
  %3085 = vmatmul.f32.gmra.mxu0 %v2482
  %v3086 = vpop.f32.mrf.mxu0
  %v3087 = vadd.f32 0.0, %v3086
  %3088 = vmatmul.f32.gmra.mxu0 %v2485
  %v3089 = vpop.f32.mrf.mxu0
  %v3090 = vadd.f32 0.0, %v3089
  %3091 = vmatmul.f32.gmra.mxu0 %v2488
  %v3092 = vpop.f32.mrf.mxu0
  %v3093 = vadd.f32 0.0, %v3092
  %3094 = vmatmul.f32.gmra.mxu0 %v2491
  %v3095 = vpop.f32.mrf.mxu0
  %v3096 = vadd.f32 0.0, %v3095
  %3097 = vmatmul.f32.gmra.mxu0 %v2494
  %v3098 = vpop.f32.mrf.mxu0
  %v3099 = vadd.f32 0.0, %v3098
  %3100 = vmatmul.f32.gmra.mxu0 %v2497
  %v3101 = vpop.f32.mrf.mxu0
  %v3102 = vadd.f32 0.0, %v3101
  %3103 = vmatmul.f32.gmra.mxu0 %v2500
  %v3104 = vpop.f32.mrf.mxu0
  %v3105 = vadd.f32 0.0, %v3104
  %3106 = vmatmul.f32.gmra.mxu0 %v2503
  %v3107 = vpop.f32.mrf.mxu0
  %v3108 = vadd.f32 0.0, %v3107
  %3109 = vmatmul.f32.gmra.mxu0 %v2506
  %v3110 = vpop.f32.mrf.mxu0
  %v3111 = vadd.f32 0.0, %v3110
  %3112 = vmatmul.f32.gmra.mxu0 %v2509
  %v3113 = vpop.f32.mrf.mxu0
  %v3114 = vadd.f32 0.0, %v3113
  %3115 = vmatmul.f32.gmra.mxu0 %v2512
  %v3116 = vpop.f32.mrf.mxu0
  %v3117 = vadd.f32 0.0, %v3116
  %3118 = vmatmul.f32.gmra.mxu0 %v2515
  %v3119 = vpop.f32.mrf.mxu0
  %v3120 = vadd.f32 0.0, %v3119
  %3121 = vmatmul.f32.gmra.mxu0 %v2518
  %v3122 = vpop.f32.mrf.mxu0
  %v3123 = vadd.f32 0.0, %v3122
  %3124 = vmatmul.f32.gmra.mxu0 %v2521
  %v3125 = vpop.f32.mrf.mxu0
  %v3126 = vadd.f32 0.0, %v3125
  %3127 = vmatmul.f32.gmra.mxu0 %v2524
  %v3128 = vpop.f32.mrf.mxu0
  %v3129 = vadd.f32 0.0, %v3128
  %3130 = vmatmul.f32.gmra.mxu0 %v2527
  %v3131 = vpop.f32.mrf.mxu0
  %v3132 = vadd.f32 0.0, %v3131
  %3133 = vmatmul.f32.gmra.mxu0 %v2530
  %v3134 = vpop.f32.mrf.mxu0
  %v3135 = vadd.f32 0.0, %v3134
  %3136 = vmatmul.f32.gmra.mxu0 %v2533
  %v3137 = vpop.f32.mrf.mxu0
  %v3138 = vadd.f32 0.0, %v3137
  %3139 = vmatmul.f32.gmra.mxu0 %v2536
  %v3140 = vpop.f32.mrf.mxu0
  %v3141 = vadd.f32 0.0, %v3140
  %3142 = vmatmul.f32.gmra.mxu0 %v2539
  %v3143 = vpop.f32.mrf.mxu0
  %v3144 = vadd.f32 0.0, %v3143
  %3145 = vmatmul.f32.gmra.mxu0 %v2542
  %v3146 = vpop.f32.mrf.mxu0
  %v3147 = vadd.f32 0.0, %v3146
  %3148 = vmatmul.f32.gmra.mxu0 %v2545
  %v3149 = vpop.f32.mrf.mxu0
  %v3150 = vadd.f32 0.0, %v3149
  %3151 = vmatmul.f32.gmra.mxu0 %v2548
  %v3152 = vpop.f32.mrf.mxu0
  %v3153 = vadd.f32 0.0, %v3152
  %3154 = vmatmul.f32.gmra.mxu0 %v2551
  %v3155 = vpop.f32.mrf.mxu0
  %v3156 = vadd.f32 0.0, %v3155
  %3157 = vmatmul.f32.gmra.mxu0 %v2554
  %v3158 = vpop.f32.mrf.mxu0
  %v3159 = vadd.f32 0.0, %v3158
  %3160 = vmatmul.f32.gmra.mxu0 %v2557
  %v3161 = vpop.f32.mrf.mxu0
  %v3162 = vadd.f32 0.0, %v3161
  %3163 = vdwg.mxu0
  %v3164 = vadd.f32 %v2774, %v3162
  %v3165 = vadd.f32 %v2777, %v2985
  %v3166 = vadd.f32 %v2780, %v2988
  %v3167 = vadd.f32 %v2783, %v2991
  %v3168 = vadd.f32 %v2786, %v2994
  %v3169 = vadd.f32 %v2789, %v2997
  %v3170 = vadd.f32 %v2792, %v3000
  %v3171 = vadd.f32 %v2795, %v3003
  %v3172 = vadd.f32 %v2798, %v3006
  %v3173 = vadd.f32 %v2801, %v3009
  %v3174 = vadd.f32 %v2804, %v3012
  %v3175 = vadd.f32 %v2807, %v3015
  %v3176 = vadd.f32 %v2810, %v3018
  %v3177 = vadd.f32 %v2813, %v3021
  %v3178 = vadd.f32 %v2816, %v3024
  %v3179 = vadd.f32 %v2819, %v3027
  %v3180 = vadd.f32 %v2822, %v3030
  %v3181 = vadd.f32 %v2825, %v3033
  %v3182 = vadd.f32 %v2828, %v3036
  %v3183 = vadd.f32 %v2831, %v3039
  %v3184 = vadd.f32 %v2834, %v3042
  %v3185 = vadd.f32 %v2837, %v3045
  %v3186 = vadd.f32 %v2840, %v3048
  %v3187 = vadd.f32 %v2843, %v3051
  %v3188 = vadd.f32 %v2846, %v3054
  %v3189 = vadd.f32 %v2849, %v3057
  %v3190 = vadd.f32 %v2852, %v3060
  %v3191 = vadd.f32 %v2855, %v3063
  %v3192 = vadd.f32 %v2858, %v3066
  %v3193 = vadd.f32 %v2861, %v3069
  %v3194 = vadd.f32 %v2864, %v3072
  %v3195 = vadd.f32 %v2867, %v3075
  %v3196 = vadd.f32 %v2870, %v3078
  %v3197 = vadd.f32 %v2873, %v3081
  %v3198 = vadd.f32 %v2876, %v3084
  %v3199 = vadd.f32 %v2879, %v3087
  %v3200 = vadd.f32 %v2882, %v3090
  %v3201 = vadd.f32 %v2885, %v3093
  %v3202 = vadd.f32 %v2888, %v3096
  %v3203 = vadd.f32 %v2891, %v3099
  %v3204 = vadd.f32 %v2894, %v3102
  %v3205 = vadd.f32 %v2897, %v3105
  %v3206 = vadd.f32 %v2900, %v3108
  %v3207 = vadd.f32 %v2903, %v3111
  %v3208 = vadd.f32 %v2906, %v3114
  %v3209 = vadd.f32 %v2909, %v3117
  %v3210 = vadd.f32 %v2912, %v3120
  %v3211 = vadd.f32 %v2915, %v3123
  %v3212 = vadd.f32 %v2918, %v3126
  %v3213 = vadd.f32 %v2921, %v3129
  %v3214 = vadd.f32 %v2924, %v3132
  %v3215 = vadd.f32 %v2927, %v3135
  %v3216 = vadd.f32 %v2930, %v3138
  %v3217 = vadd.f32 %v2933, %v3141
  %v3218 = vadd.f32 %v2936, %v3144
  %v3219 = vadd.f32 %v2939, %v3147
  %v3220 = vadd.f32 %v2942, %v3150
  %v3221 = vadd.f32 %v2945, %v3153
  %v3222 = vadd.f32 %v2948, %v3156
  %v3223 = vadd.f32 %v2951, %v3159
  %s3224 = scalar_lea.vmem %s4, 312
  %v3225 = vld [vmem:[%s3224] sm:$0xff]
  %v3226 = vld [vmem:[%s3224 + $0x8] sm:$0xff]
  %v3227 = vld [vmem:[%s3224 + $0x10] sm:$0xff]
  %v3228 = vld [vmem:[%s3224 + $0x18] sm:$0xff]
  %v3229 = vld [vmem:[%s3224 + $0x20] sm:$0xff]
  %v3230 = vld [vmem:[%s3224 + $0x28] sm:$0xff]
  %v3231 = vld [vmem:[%s3224 + $0x30] sm:$0xff]
  %v3232 = vld [vmem:[%s3224 + $0x38] sm:$0xff]
  %v3233 = vld [vmem:[%s3224 + $0x40] sm:$0xff]
  %v3234 = vld [vmem:[%s3224 + $0x48] sm:$0xff]
  %v3235 = vld [vmem:[%s3224 + $0x50] sm:$0xff]
  %v3236 = vld [vmem:[%s3224 + $0x58] sm:$0xff]
  %v3237 = vld [vmem:[%s3224 + $0x60] sm:$0xff]
  %3238 = vmatpush.msra.mxu0 0.0
  %3239 = vmatpush.msra.mxu0 0.0
  %3240 = vmatpush.msra.mxu0 0.0
  %3241 = vmatpush.msra.mxu0 %v3237
  %3242 = vmatpush.msra.mxu0 %v3236
  %3243 = vmatpush.msra.mxu0 %v3235
  %3244 = vmatpush.msra.mxu0 %v3234
  %3245 = vmatpush.msra.mxu0 %v3233
  %3246 = vmatpush.msra.mxu0 %v3232
  %3247 = vmatpush.msra.mxu0 %v3231
  %3248 = vmatpush.msra.mxu0 %v3230
  %3249 = vmatpush.msra.mxu0 %v3229
  %3250 = vmatpush.msra.mxu0 %v3228
  %3251 = vmatpush.msra.mxu0 %v3227
  %3252 = vmatpush.msra.mxu0 %v3226
  %3253 = vmatpush.msra.mxu0 %v3225
  %3254 = vmatmul.f32.gmra.mxu0 %v2380
  %v3255 = vpop.f32.mrf.mxu0
  %v3256 = vadd.f32 0.0, %v3255
  %3257 = vmatmul.f32.gmra.mxu0 %v2383
  %v3258 = vpop.f32.mrf.mxu0
  %v3259 = vadd.f32 0.0, %v3258
  %3260 = vmatmul.f32.gmra.mxu0 %v2386
  %v3261 = vpop.f32.mrf.mxu0
  %v3262 = vadd.f32 0.0, %v3261
  %3263 = vmatmul.f32.gmra.mxu0 %v2389
  %v3264 = vpop.f32.mrf.mxu0
  %v3265 = vadd.f32 0.0, %v3264
  %3266 = vmatmul.f32.gmra.mxu0 %v2392
  %v3267 = vpop.f32.mrf.mxu0
  %v3268 = vadd.f32 0.0, %v3267
  %3269 = vmatmul.f32.gmra.mxu0 %v2395
  %v3270 = vpop.f32.mrf.mxu0
  %v3271 = vadd.f32 0.0, %v3270
  %3272 = vmatmul.f32.gmra.mxu0 %v2398
  %v3273 = vpop.f32.mrf.mxu0
  %v3274 = vadd.f32 0.0, %v3273
  %3275 = vmatmul.f32.gmra.mxu0 %v2401
  %v3276 = vpop.f32.mrf.mxu0
  %v3277 = vadd.f32 0.0, %v3276
  %3278 = vmatmul.f32.gmra.mxu0 %v2404
  %v3279 = vpop.f32.mrf.mxu0
  %v3280 = vadd.f32 0.0, %v3279
  %3281 = vmatmul.f32.gmra.mxu0 %v2407
  %v3282 = vpop.f32.mrf.mxu0
  %v3283 = vadd.f32 0.0, %v3282
  %3284 = vmatmul.f32.gmra.mxu0 %v2410
  %v3285 = vpop.f32.mrf.mxu0
  %v3286 = vadd.f32 0.0, %v3285
  %3287 = vmatmul.f32.gmra.mxu0 %v2413
  %v3288 = vpop.f32.mrf.mxu0
  %v3289 = vadd.f32 0.0, %v3288
  %3290 = vmatmul.f32.gmra.mxu0 %v2416
  %v3291 = vpop.f32.mrf.mxu0
  %v3292 = vadd.f32 0.0, %v3291
  %3293 = vmatmul.f32.gmra.mxu0 %v2419
  %v3294 = vpop.f32.mrf.mxu0
  %v3295 = vadd.f32 0.0, %v3294
  %3296 = vmatmul.f32.gmra.mxu0 %v2422
  %v3297 = vpop.f32.mrf.mxu0
  %v3298 = vadd.f32 0.0, %v3297
  %3299 = vmatmul.f32.gmra.mxu0 %v2425
  %v3300 = vpop.f32.mrf.mxu0
  %v3301 = vadd.f32 0.0, %v3300
  %3302 = vmatmul.f32.gmra.mxu0 %v2428
  %v3303 = vpop.f32.mrf.mxu0
  %v3304 = vadd.f32 0.0, %v3303
  %3305 = vmatmul.f32.gmra.mxu0 %v2431
  %v3306 = vpop.f32.mrf.mxu0
  %v3307 = vadd.f32 0.0, %v3306
  %3308 = vmatmul.f32.gmra.mxu0 %v2434
  %v3309 = vpop.f32.mrf.mxu0
  %v3310 = vadd.f32 0.0, %v3309
  %3311 = vmatmul.f32.gmra.mxu0 %v2437
  %v3312 = vpop.f32.mrf.mxu0
  %v3313 = vadd.f32 0.0, %v3312
  %3314 = vmatmul.f32.gmra.mxu0 %v2440
  %v3315 = vpop.f32.mrf.mxu0
  %v3316 = vadd.f32 0.0, %v3315
  %3317 = vmatmul.f32.gmra.mxu0 %v2443
  %v3318 = vpop.f32.mrf.mxu0
  %v3319 = vadd.f32 0.0, %v3318
  %3320 = vmatmul.f32.gmra.mxu0 %v2446
  %v3321 = vpop.f32.mrf.mxu0
  %v3322 = vadd.f32 0.0, %v3321
  %3323 = vmatmul.f32.gmra.mxu0 %v2449
  %v3324 = vpop.f32.mrf.mxu0
  %v3325 = vadd.f32 0.0, %v3324
  %3326 = vmatmul.f32.gmra.mxu0 %v2452
  %v3327 = vpop.f32.mrf.mxu0
  %v3328 = vadd.f32 0.0, %v3327
  %3329 = vmatmul.f32.gmra.mxu0 %v2455
  %v3330 = vpop.f32.mrf.mxu0
  %v3331 = vadd.f32 0.0, %v3330
  %3332 = vmatmul.f32.gmra.mxu0 %v2458
  %v3333 = vpop.f32.mrf.mxu0
  %v3334 = vadd.f32 0.0, %v3333
  %3335 = vmatmul.f32.gmra.mxu0 %v2461
  %v3336 = vpop.f32.mrf.mxu0
  %v3337 = vadd.f32 0.0, %v3336
  %3338 = vmatmul.f32.gmra.mxu0 %v2464
  %v3339 = vpop.f32.mrf.mxu0
  %v3340 = vadd.f32 0.0, %v3339
  %3341 = vmatmul.f32.gmra.mxu0 %v2467
  %v3342 = vpop.f32.mrf.mxu0
  %v3343 = vadd.f32 0.0, %v3342
  %3344 = vmatmul.f32.gmra.mxu0 %v2470
  %v3345 = vpop.f32.mrf.mxu0
  %v3346 = vadd.f32 0.0, %v3345
  %3347 = vmatmul.f32.gmra.mxu0 %v2473
  %v3348 = vpop.f32.mrf.mxu0
  %v3349 = vadd.f32 0.0, %v3348
  %3350 = vmatmul.f32.gmra.mxu0 %v2476
  %v3351 = vpop.f32.mrf.mxu0
  %v3352 = vadd.f32 0.0, %v3351
  %3353 = vmatmul.f32.gmra.mxu0 %v2479
  %v3354 = vpop.f32.mrf.mxu0
  %v3355 = vadd.f32 0.0, %v3354
  %3356 = vmatmul.f32.gmra.mxu0 %v2482
  %v3357 = vpop.f32.mrf.mxu0
  %v3358 = vadd.f32 0.0, %v3357
  %3359 = vmatmul.f32.gmra.mxu0 %v2485
  %v3360 = vpop.f32.mrf.mxu0
  %v3361 = vadd.f32 0.0, %v3360
  %3362 = vmatmul.f32.gmra.mxu0 %v2488
  %v3363 = vpop.f32.mrf.mxu0
  %v3364 = vadd.f32 0.0, %v3363
  %3365 = vmatmul.f32.gmra.mxu0 %v2491
  %v3366 = vpop.f32.mrf.mxu0
  %v3367 = vadd.f32 0.0, %v3366
  %3368 = vmatmul.f32.gmra.mxu0 %v2494
  %v3369 = vpop.f32.mrf.mxu0
  %v3370 = vadd.f32 0.0, %v3369
  %3371 = vmatmul.f32.gmra.mxu0 %v2497
  %v3372 = vpop.f32.mrf.mxu0
  %v3373 = vadd.f32 0.0, %v3372
  %3374 = vmatmul.f32.gmra.mxu0 %v2500
  %v3375 = vpop.f32.mrf.mxu0
  %v3376 = vadd.f32 0.0, %v3375
  %3377 = vmatmul.f32.gmra.mxu0 %v2503
  %v3378 = vpop.f32.mrf.mxu0
  %v3379 = vadd.f32 0.0, %v3378
  %3380 = vmatmul.f32.gmra.mxu0 %v2506
  %v3381 = vpop.f32.mrf.mxu0
  %v3382 = vadd.f32 0.0, %v3381
  %3383 = vmatmul.f32.gmra.mxu0 %v2509
  %v3384 = vpop.f32.mrf.mxu0
  %v3385 = vadd.f32 0.0, %v3384
  %3386 = vmatmul.f32.gmra.mxu0 %v2512
  %v3387 = vpop.f32.mrf.mxu0
  %v3388 = vadd.f32 0.0, %v3387
  %3389 = vmatmul.f32.gmra.mxu0 %v2515
  %v3390 = vpop.f32.mrf.mxu0
  %v3391 = vadd.f32 0.0, %v3390
  %3392 = vmatmul.f32.gmra.mxu0 %v2518
  %v3393 = vpop.f32.mrf.mxu0
  %v3394 = vadd.f32 0.0, %v3393
  %3395 = vmatmul.f32.gmra.mxu0 %v2521
  %v3396 = vpop.f32.mrf.mxu0
  %v3397 = vadd.f32 0.0, %v3396
  %3398 = vmatmul.f32.gmra.mxu0 %v2524
  %v3399 = vpop.f32.mrf.mxu0
  %v3400 = vadd.f32 0.0, %v3399
  %3401 = vmatmul.f32.gmra.mxu0 %v2527
  %v3402 = vpop.f32.mrf.mxu0
  %v3403 = vadd.f32 0.0, %v3402
  %3404 = vmatmul.f32.gmra.mxu0 %v2530
  %v3405 = vpop.f32.mrf.mxu0
  %v3406 = vadd.f32 0.0, %v3405
  %3407 = vmatmul.f32.gmra.mxu0 %v2533
  %v3408 = vpop.f32.mrf.mxu0
  %v3409 = vadd.f32 0.0, %v3408
  %3410 = vmatmul.f32.gmra.mxu0 %v2536
  %v3411 = vpop.f32.mrf.mxu0
  %v3412 = vadd.f32 0.0, %v3411
  %3413 = vmatmul.f32.gmra.mxu0 %v2539
  %v3414 = vpop.f32.mrf.mxu0
  %v3415 = vadd.f32 0.0, %v3414
  %3416 = vmatmul.f32.gmra.mxu0 %v2542
  %v3417 = vpop.f32.mrf.mxu0
  %v3418 = vadd.f32 0.0, %v3417
  %3419 = vmatmul.f32.gmra.mxu0 %v2545
  %v3420 = vpop.f32.mrf.mxu0
  %v3421 = vadd.f32 0.0, %v3420
  %3422 = vmatmul.f32.gmra.mxu0 %v2548
  %v3423 = vpop.f32.mrf.mxu0
  %v3424 = vadd.f32 0.0, %v3423
  %3425 = vmatmul.f32.gmra.mxu0 %v2551
  %v3426 = vpop.f32.mrf.mxu0
  %v3427 = vadd.f32 0.0, %v3426
  %3428 = vmatmul.f32.gmra.mxu0 %v2554
  %v3429 = vpop.f32.mrf.mxu0
  %v3430 = vadd.f32 0.0, %v3429
  %3431 = vmatmul.f32.gmra.mxu0 %v2557
  %v3432 = vpop.f32.mrf.mxu0
  %v3433 = vadd.f32 0.0, %v3432
  %3434 = vdwg.mxu0
  %v3435 = vadd.f32 %v3164, %v3262
  %v3436 = vadd.f32 %v3165, %v3265
  %v3437 = vadd.f32 %v3166, %v3268
  %v3438 = vadd.f32 %v3167, %v3271
  %v3439 = vadd.f32 %v3168, %v3274
  %v3440 = vadd.f32 %v3169, %v3277
  %v3441 = vadd.f32 %v3170, %v3280
  %v3442 = vadd.f32 %v3171, %v3283
  %v3443 = vadd.f32 %v3172, %v3286
  %v3444 = vadd.f32 %v3173, %v3289
  %v3445 = vadd.f32 %v3174, %v3292
  %v3446 = vadd.f32 %v3175, %v3295
  %v3447 = vadd.f32 %v3176, %v3298
  %v3448 = vadd.f32 %v3177, %v3301
  %v3449 = vadd.f32 %v3178, %v3304
  %v3450 = vadd.f32 %v3179, %v3307
  %v3451 = vadd.f32 %v3180, %v3310
  %v3452 = vadd.f32 %v3181, %v3313
  %v3453 = vadd.f32 %v3182, %v3316
  %v3454 = vadd.f32 %v3183, %v3319
  %v3455 = vadd.f32 %v3184, %v3322
  %v3456 = vadd.f32 %v3185, %v3325
  %v3457 = vadd.f32 %v3186, %v3328
  %v3458 = vadd.f32 %v3187, %v3331
  %v3459 = vadd.f32 %v3188, %v3334
  %v3460 = vadd.f32 %v3189, %v3337
  %v3461 = vadd.f32 %v3190, %v3340
  %v3462 = vadd.f32 %v3191, %v3343
  %v3463 = vadd.f32 %v3192, %v3346
  %v3464 = vadd.f32 %v3193, %v3349
  %v3465 = vadd.f32 %v3194, %v3352
  %v3466 = vadd.f32 %v3195, %v3355
  %v3467 = vadd.f32 %v3196, %v3358
  %v3468 = vadd.f32 %v3197, %v3361
  %v3469 = vadd.f32 %v3198, %v3364
  %v3470 = vadd.f32 %v3199, %v3367
  %v3471 = vadd.f32 %v3200, %v3370
  %v3472 = vadd.f32 %v3201, %v3373
  %v3473 = vadd.f32 %v3202, %v3376
  %v3474 = vadd.f32 %v3203, %v3379
  %v3475 = vadd.f32 %v3204, %v3382
  %v3476 = vadd.f32 %v3205, %v3385
  %v3477 = vadd.f32 %v3206, %v3388
  %v3478 = vadd.f32 %v3207, %v3391
  %v3479 = vadd.f32 %v3208, %v3394
  %v3480 = vadd.f32 %v3209, %v3397
  %v3481 = vadd.f32 %v3210, %v3400
  %v3482 = vadd.f32 %v3211, %v3403
  %v3483 = vadd.f32 %v3212, %v3406
  %v3484 = vadd.f32 %v3213, %v3409
  %v3485 = vadd.f32 %v3214, %v3412
  %v3486 = vadd.f32 %v3215, %v3415
  %v3487 = vadd.f32 %v3216, %v3418
  %v3488 = vadd.f32 %v3217, %v3421
  %v3489 = vadd.f32 %v3218, %v3424
  %v3490 = vadd.f32 %v3219, %v3427
  %v3491 = vadd.f32 %v3220, %v3430
  %v3492 = vadd.f32 %v3221, %v3433
  %v3493 = vadd.f32 %v3222, %v3256
  %v3494 = vadd.f32 %v3223, %v3259
  %s3495 = scalar_lea.vmem %s4, 416
  %v3496 = vld [vmem:[%s3495] sm:$0xff]
  %v3497 = vld [vmem:[%s3495 + $0x8] sm:$0xff]
  %v3498 = vld [vmem:[%s3495 + $0x10] sm:$0xff]
  %v3499 = vld [vmem:[%s3495 + $0x18] sm:$0xff]
  %v3500 = vld [vmem:[%s3495 + $0x20] sm:$0xff]
  %v3501 = vld [vmem:[%s3495 + $0x28] sm:$0xff]
  %v3502 = vld [vmem:[%s3495 + $0x30] sm:$0xff]
  %v3503 = vld [vmem:[%s3495 + $0x38] sm:$0xff]
  %v3504 = vld [vmem:[%s3495 + $0x40] sm:$0xff]
  %v3505 = vld [vmem:[%s3495 + $0x48] sm:$0xff]
  %v3506 = vld [vmem:[%s3495 + $0x50] sm:$0xff]
  %v3507 = vld [vmem:[%s3495 + $0x58] sm:$0xff]
  %v3508 = vld [vmem:[%s3495 + $0x60] sm:$0xff]
  %3509 = vmatpush.msra.mxu0 0.0
  %3510 = vmatpush.msra.mxu0 0.0
  %3511 = vmatpush.msra.mxu0 0.0
  %3512 = vmatpush.msra.mxu0 %v3508
  %3513 = vmatpush.msra.mxu0 %v3507
  %3514 = vmatpush.msra.mxu0 %v3506
  %3515 = vmatpush.msra.mxu0 %v3505
  %3516 = vmatpush.msra.mxu0 %v3504
  %3517 = vmatpush.msra.mxu0 %v3503
  %3518 = vmatpush.msra.mxu0 %v3502
  %3519 = vmatpush.msra.mxu0 %v3501
  %3520 = vmatpush.msra.mxu0 %v3500
  %3521 = vmatpush.msra.mxu0 %v3499
  %3522 = vmatpush.msra.mxu0 %v3498
  %3523 = vmatpush.msra.mxu0 %v3497
  %3524 = vmatpush.msra.mxu0 %v3496
  %3525 = vmatmul.f32.gmra.mxu0 %v2380
  %v3526 = vpop.f32.mrf.mxu0
  %v3527 = vadd.f32 0.0, %v3526
  %3528 = vmatmul.f32.gmra.mxu0 %v2383
  %v3529 = vpop.f32.mrf.mxu0
  %v3530 = vadd.f32 0.0, %v3529
  %3531 = vmatmul.f32.gmra.mxu0 %v2386
  %v3532 = vpop.f32.mrf.mxu0
  %v3533 = vadd.f32 0.0, %v3532
  %3534 = vmatmul.f32.gmra.mxu0 %v2389
  %v3535 = vpop.f32.mrf.mxu0
  %v3536 = vadd.f32 0.0, %v3535
  %3537 = vmatmul.f32.gmra.mxu0 %v2392
  %v3538 = vpop.f32.mrf.mxu0
  %v3539 = vadd.f32 0.0, %v3538
  %3540 = vmatmul.f32.gmra.mxu0 %v2395
  %v3541 = vpop.f32.mrf.mxu0
  %v3542 = vadd.f32 0.0, %v3541
  %3543 = vmatmul.f32.gmra.mxu0 %v2398
  %v3544 = vpop.f32.mrf.mxu0
  %v3545 = vadd.f32 0.0, %v3544
  %3546 = vmatmul.f32.gmra.mxu0 %v2401
  %v3547 = vpop.f32.mrf.mxu0
  %v3548 = vadd.f32 0.0, %v3547
  %3549 = vmatmul.f32.gmra.mxu0 %v2404
  %v3550 = vpop.f32.mrf.mxu0
  %v3551 = vadd.f32 0.0, %v3550
  %3552 = vmatmul.f32.gmra.mxu0 %v2407
  %v3553 = vpop.f32.mrf.mxu0
  %v3554 = vadd.f32 0.0, %v3553
  %3555 = vmatmul.f32.gmra.mxu0 %v2410
  %v3556 = vpop.f32.mrf.mxu0
  %v3557 = vadd.f32 0.0, %v3556
  %3558 = vmatmul.f32.gmra.mxu0 %v2413
  %v3559 = vpop.f32.mrf.mxu0
  %v3560 = vadd.f32 0.0, %v3559
  %3561 = vmatmul.f32.gmra.mxu0 %v2416
  %v3562 = vpop.f32.mrf.mxu0
  %v3563 = vadd.f32 0.0, %v3562
  %3564 = vmatmul.f32.gmra.mxu0 %v2419
  %v3565 = vpop.f32.mrf.mxu0
  %v3566 = vadd.f32 0.0, %v3565
  %3567 = vmatmul.f32.gmra.mxu0 %v2422
  %v3568 = vpop.f32.mrf.mxu0
  %v3569 = vadd.f32 0.0, %v3568
  %3570 = vmatmul.f32.gmra.mxu0 %v2425
  %v3571 = vpop.f32.mrf.mxu0
  %v3572 = vadd.f32 0.0, %v3571
  %3573 = vmatmul.f32.gmra.mxu0 %v2428
  %v3574 = vpop.f32.mrf.mxu0
  %v3575 = vadd.f32 0.0, %v3574
  %3576 = vmatmul.f32.gmra.mxu0 %v2431
  %v3577 = vpop.f32.mrf.mxu0
  %v3578 = vadd.f32 0.0, %v3577
  %3579 = vmatmul.f32.gmra.mxu0 %v2434
  %v3580 = vpop.f32.mrf.mxu0
  %v3581 = vadd.f32 0.0, %v3580
  %3582 = vmatmul.f32.gmra.mxu0 %v2437
  %v3583 = vpop.f32.mrf.mxu0
  %v3584 = vadd.f32 0.0, %v3583
  %3585 = vmatmul.f32.gmra.mxu0 %v2440
  %v3586 = vpop.f32.mrf.mxu0
  %v3587 = vadd.f32 0.0, %v3586
  %3588 = vmatmul.f32.gmra.mxu0 %v2443
  %v3589 = vpop.f32.mrf.mxu0
  %v3590 = vadd.f32 0.0, %v3589
  %3591 = vmatmul.f32.gmra.mxu0 %v2446
  %v3592 = vpop.f32.mrf.mxu0
  %v3593 = vadd.f32 0.0, %v3592
  %3594 = vmatmul.f32.gmra.mxu0 %v2449
  %v3595 = vpop.f32.mrf.mxu0
  %v3596 = vadd.f32 0.0, %v3595
  %3597 = vmatmul.f32.gmra.mxu0 %v2452
  %v3598 = vpop.f32.mrf.mxu0
  %v3599 = vadd.f32 0.0, %v3598
  %3600 = vmatmul.f32.gmra.mxu0 %v2455
  %v3601 = vpop.f32.mrf.mxu0
  %v3602 = vadd.f32 0.0, %v3601
  %3603 = vmatmul.f32.gmra.mxu0 %v2458
  %v3604 = vpop.f32.mrf.mxu0
  %v3605 = vadd.f32 0.0, %v3604
  %3606 = vmatmul.f32.gmra.mxu0 %v2461
  %v3607 = vpop.f32.mrf.mxu0
  %v3608 = vadd.f32 0.0, %v3607
  %3609 = vmatmul.f32.gmra.mxu0 %v2464
  %v3610 = vpop.f32.mrf.mxu0
  %v3611 = vadd.f32 0.0, %v3610
  %3612 = vmatmul.f32.gmra.mxu0 %v2467
  %v3613 = vpop.f32.mrf.mxu0
  %v3614 = vadd.f32 0.0, %v3613
  %3615 = vmatmul.f32.gmra.mxu0 %v2470
  %v3616 = vpop.f32.mrf.mxu0
  %v3617 = vadd.f32 0.0, %v3616
  %3618 = vmatmul.f32.gmra.mxu0 %v2473
  %v3619 = vpop.f32.mrf.mxu0
  %v3620 = vadd.f32 0.0, %v3619
  %3621 = vmatmul.f32.gmra.mxu0 %v2476
  %v3622 = vpop.f32.mrf.mxu0
  %v3623 = vadd.f32 0.0, %v3622
  %3624 = vmatmul.f32.gmra.mxu0 %v2479
  %v3625 = vpop.f32.mrf.mxu0
  %v3626 = vadd.f32 0.0, %v3625
  %3627 = vmatmul.f32.gmra.mxu0 %v2482
  %v3628 = vpop.f32.mrf.mxu0
  %v3629 = vadd.f32 0.0, %v3628
  %3630 = vmatmul.f32.gmra.mxu0 %v2485
  %v3631 = vpop.f32.mrf.mxu0
  %v3632 = vadd.f32 0.0, %v3631
  %3633 = vmatmul.f32.gmra.mxu0 %v2488
  %v3634 = vpop.f32.mrf.mxu0
  %v3635 = vadd.f32 0.0, %v3634
  %3636 = vmatmul.f32.gmra.mxu0 %v2491
  %v3637 = vpop.f32.mrf.mxu0
  %v3638 = vadd.f32 0.0, %v3637
  %3639 = vmatmul.f32.gmra.mxu0 %v2494
  %v3640 = vpop.f32.mrf.mxu0
  %v3641 = vadd.f32 0.0, %v3640
  %3642 = vmatmul.f32.gmra.mxu0 %v2497
  %v3643 = vpop.f32.mrf.mxu0
  %v3644 = vadd.f32 0.0, %v3643
  %3645 = vmatmul.f32.gmra.mxu0 %v2500
  %v3646 = vpop.f32.mrf.mxu0
  %v3647 = vadd.f32 0.0, %v3646
  %3648 = vmatmul.f32.gmra.mxu0 %v2503
  %v3649 = vpop.f32.mrf.mxu0
  %v3650 = vadd.f32 0.0, %v3649
  %3651 = vmatmul.f32.gmra.mxu0 %v2506
  %v3652 = vpop.f32.mrf.mxu0
  %v3653 = vadd.f32 0.0, %v3652
  %3654 = vmatmul.f32.gmra.mxu0 %v2509
  %v3655 = vpop.f32.mrf.mxu0
  %v3656 = vadd.f32 0.0, %v3655
  %3657 = vmatmul.f32.gmra.mxu0 %v2512
  %v3658 = vpop.f32.mrf.mxu0
  %v3659 = vadd.f32 0.0, %v3658
  %3660 = vmatmul.f32.gmra.mxu0 %v2515
  %v3661 = vpop.f32.mrf.mxu0
  %v3662 = vadd.f32 0.0, %v3661
  %3663 = vmatmul.f32.gmra.mxu0 %v2518
  %v3664 = vpop.f32.mrf.mxu0
  %v3665 = vadd.f32 0.0, %v3664
  %3666 = vmatmul.f32.gmra.mxu0 %v2521
  %v3667 = vpop.f32.mrf.mxu0
  %v3668 = vadd.f32 0.0, %v3667
  %3669 = vmatmul.f32.gmra.mxu0 %v2524
  %v3670 = vpop.f32.mrf.mxu0
  %v3671 = vadd.f32 0.0, %v3670
  %3672 = vmatmul.f32.gmra.mxu0 %v2527
  %v3673 = vpop.f32.mrf.mxu0
  %v3674 = vadd.f32 0.0, %v3673
  %3675 = vmatmul.f32.gmra.mxu0 %v2530
  %v3676 = vpop.f32.mrf.mxu0
  %v3677 = vadd.f32 0.0, %v3676
  %3678 = vmatmul.f32.gmra.mxu0 %v2533
  %v3679 = vpop.f32.mrf.mxu0
  %v3680 = vadd.f32 0.0, %v3679
  %3681 = vmatmul.f32.gmra.mxu0 %v2536
  %v3682 = vpop.f32.mrf.mxu0
  %v3683 = vadd.f32 0.0, %v3682
  %3684 = vmatmul.f32.gmra.mxu0 %v2539
  %v3685 = vpop.f32.mrf.mxu0
  %v3686 = vadd.f32 0.0, %v3685
  %3687 = vmatmul.f32.gmra.mxu0 %v2542
  %v3688 = vpop.f32.mrf.mxu0
  %v3689 = vadd.f32 0.0, %v3688
  %3690 = vmatmul.f32.gmra.mxu0 %v2545
  %v3691 = vpop.f32.mrf.mxu0
  %v3692 = vadd.f32 0.0, %v3691
  %3693 = vmatmul.f32.gmra.mxu0 %v2548
  %v3694 = vpop.f32.mrf.mxu0
  %v3695 = vadd.f32 0.0, %v3694
  %3696 = vmatmul.f32.gmra.mxu0 %v2551
  %v3697 = vpop.f32.mrf.mxu0
  %v3698 = vadd.f32 0.0, %v3697
  %3699 = vmatmul.f32.gmra.mxu0 %v2554
  %v3700 = vpop.f32.mrf.mxu0
  %v3701 = vadd.f32 0.0, %v3700
  %3702 = vmatmul.f32.gmra.mxu0 %v2557
  %v3703 = vpop.f32.mrf.mxu0
  %v3704 = vadd.f32 0.0, %v3703
  %3705 = vdwg.mxu0
  %v3706 = vadd.f32 %v3435, %v3701
  %v3707 = vadd.f32 %v3436, %v3704
  %v3708 = vadd.f32 %v3437, %v3527
  %v3709 = vadd.f32 %v3438, %v3530
  %v3710 = vadd.f32 %v3439, %v3533
  %v3711 = vadd.f32 %v3440, %v3536
  %v3712 = vadd.f32 %v3441, %v3539
  %v3713 = vadd.f32 %v3442, %v3542
  %v3714 = vadd.f32 %v3443, %v3545
  %v3715 = vadd.f32 %v3444, %v3548
  %v3716 = vadd.f32 %v3445, %v3551
  %v3717 = vadd.f32 %v3446, %v3554
  %v3718 = vadd.f32 %v3447, %v3557
  %v3719 = vadd.f32 %v3448, %v3560
  %v3720 = vadd.f32 %v3449, %v3563
  %v3721 = vadd.f32 %v3450, %v3566
  %v3722 = vadd.f32 %v3451, %v3569
  %v3723 = vadd.f32 %v3452, %v3572
  %v3724 = vadd.f32 %v3453, %v3575
  %v3725 = vadd.f32 %v3454, %v3578
  %v3726 = vadd.f32 %v3455, %v3581
  %v3727 = vadd.f32 %v3456, %v3584
  %v3728 = vadd.f32 %v3457, %v3587
  %v3729 = vadd.f32 %v3458, %v3590
  %v3730 = vadd.f32 %v3459, %v3593
  %v3731 = vadd.f32 %v3460, %v3596
  %v3732 = vadd.f32 %v3461, %v3599
  %v3733 = vadd.f32 %v3462, %v3602
  %v3734 = vadd.f32 %v3463, %v3605
  %v3735 = vadd.f32 %v3464, %v3608
  %v3736 = vadd.f32 %v3465, %v3611
  %v3737 = vadd.f32 %v3466, %v3614
  %v3738 = vadd.f32 %v3467, %v3617
  %v3739 = vadd.f32 %v3468, %v3620
  %v3740 = vadd.f32 %v3469, %v3623
  %v3741 = vadd.f32 %v3470, %v3626
  %v3742 = vadd.f32 %v3471, %v3629
  %v3743 = vadd.f32 %v3472, %v3632
  %v3744 = vadd.f32 %v3473, %v3635
  %v3745 = vadd.f32 %v3474, %v3638
  %v3746 = vadd.f32 %v3475, %v3641
  %v3747 = vadd.f32 %v3476, %v3644
  %v3748 = vadd.f32 %v3477, %v3647
  %v3749 = vadd.f32 %v3478, %v3650
  %v3750 = vadd.f32 %v3479, %v3653
  %v3751 = vadd.f32 %v3480, %v3656
  %v3752 = vadd.f32 %v3481, %v3659
  %v3753 = vadd.f32 %v3482, %v3662
  %v3754 = vadd.f32 %v3483, %v3665
  %v3755 = vadd.f32 %v3484, %v3668
  %v3756 = vadd.f32 %v3485, %v3671
  %v3757 = vadd.f32 %v3486, %v3674
  %v3758 = vadd.f32 %v3487, %v3677
  %v3759 = vadd.f32 %v3488, %v3680
  %v3760 = vadd.f32 %v3489, %v3683
  %v3761 = vadd.f32 %v3490, %v3686
  %v3762 = vadd.f32 %v3491, %v3689
  %v3763 = vadd.f32 %v3492, %v3692
  %v3764 = vadd.f32 %v3493, %v3695
  %v3765 = vadd.f32 %v3494, %v3698
  %v3766 = vld [vmem:[%s6] sm:$0x1]
  %v3768 = vperm.slane %v3766, 0
  %v3770 = vadd.f32 %v3706, %v3768
  %v3771 = vadd.f32 %v3707, %v3768
  %v3772 = vadd.f32 %v3708, %v3768
  %v3773 = vadd.f32 %v3709, %v3768
  %v3774 = vadd.f32 %v3710, %v3768
  %v3775 = vadd.f32 %v3711, %v3768
  %v3776 = vadd.f32 %v3712, %v3768
  %v3777 = vadd.f32 %v3713, %v3768
  %v3778 = vadd.f32 %v3714, %v3768
  %v3779 = vadd.f32 %v3715, %v3768
  %v3780 = vadd.f32 %v3716, %v3768
  %v3781 = vadd.f32 %v3717, %v3768
  %v3782 = vadd.f32 %v3718, %v3768
  %v3783 = vadd.f32 %v3719, %v3768
  %v3784 = vadd.f32 %v3720, %v3768
  %v3785 = vadd.f32 %v3721, %v3768
  %v3786 = vadd.f32 %v3722, %v3768
  %v3787 = vadd.f32 %v3723, %v3768
  %v3788 = vadd.f32 %v3724, %v3768
  %v3789 = vadd.f32 %v3725, %v3768
  %v3790 = vadd.f32 %v3726, %v3768
  %v3791 = vadd.f32 %v3727, %v3768
  %v3792 = vadd.f32 %v3728, %v3768
  %v3793 = vadd.f32 %v3729, %v3768
  %v3794 = vadd.f32 %v3730, %v3768
  %v3795 = vadd.f32 %v3731, %v3768
  %v3796 = vadd.f32 %v3732, %v3768
  %v3797 = vadd.f32 %v3733, %v3768
  %v3798 = vadd.f32 %v3734, %v3768
  %v3799 = vadd.f32 %v3735, %v3768
  %v3800 = vadd.f32 %v3736, %v3768
  %v3801 = vadd.f32 %v3737, %v3768
  %v3802 = vadd.f32 %v3738, %v3768
  %v3803 = vadd.f32 %v3739, %v3768
  %v3804 = vadd.f32 %v3740, %v3768
  %v3805 = vadd.f32 %v3741, %v3768
  %v3806 = vadd.f32 %v3742, %v3768
  %v3807 = vadd.f32 %v3743, %v3768
  %v3808 = vadd.f32 %v3744, %v3768
  %v3809 = vadd.f32 %v3745, %v3768
  %v3810 = vadd.f32 %v3746, %v3768
  %v3811 = vadd.f32 %v3747, %v3768
  %v3812 = vadd.f32 %v3748, %v3768
  %v3813 = vadd.f32 %v3749, %v3768
  %v3814 = vadd.f32 %v3750, %v3768
  %v3815 = vadd.f32 %v3751, %v3768
  %v3816 = vadd.f32 %v3752, %v3768
  %v3817 = vadd.f32 %v3753, %v3768
  %v3818 = vadd.f32 %v3754, %v3768
  %v3819 = vadd.f32 %v3755, %v3768
  %v3820 = vadd.f32 %v3756, %v3768
  %v3821 = vadd.f32 %v3757, %v3768
  %v3822 = vadd.f32 %v3758, %v3768
  %v3823 = vadd.f32 %v3759, %v3768
  %v3824 = vadd.f32 %v3760, %v3768
  %v3825 = vadd.f32 %v3761, %v3768
  %v3826 = vadd.f32 %v3762, %v3768
  %v3827 = vadd.f32 %v3763, %v3768
  %v3828 = vadd.f32 %v3764, %v3768
  %v3829 = vadd.f32 %v3765, %v3768
  %v3830 = vmax.f32 %v3770, 0.0
  %v3831 = vmax.f32 %v3771, 0.0
  %v3832 = vmax.f32 %v3772, 0.0
  %v3833 = vmax.f32 %v3773, 0.0
  %v3834 = vmax.f32 %v3774, 0.0
  %v3835 = vmax.f32 %v3775, 0.0
  %v3836 = vmax.f32 %v3776, 0.0
  %v3837 = vmax.f32 %v3777, 0.0
  %v3838 = vmax.f32 %v3778, 0.0
  %v3839 = vmax.f32 %v3779, 0.0
  %v3840 = vmax.f32 %v3780, 0.0
  %v3841 = vmax.f32 %v3781, 0.0
  %v3842 = vmax.f32 %v3782, 0.0
  %v3843 = vmax.f32 %v3783, 0.0
  %v3844 = vmax.f32 %v3784, 0.0
  %v3845 = vmax.f32 %v3785, 0.0
  %v3846 = vmax.f32 %v3786, 0.0
  %v3847 = vmax.f32 %v3787, 0.0
  %v3848 = vmax.f32 %v3788, 0.0
  %v3849 = vmax.f32 %v3789, 0.0
  %v3850 = vmax.f32 %v3790, 0.0
  %v3851 = vmax.f32 %v3791, 0.0
  %v3852 = vmax.f32 %v3792, 0.0
  %v3853 = vmax.f32 %v3793, 0.0
  %v3854 = vmax.f32 %v3794, 0.0
  %v3855 = vmax.f32 %v3795, 0.0
  %v3856 = vmax.f32 %v3796, 0.0
  %v3857 = vmax.f32 %v3797, 0.0
  %v3858 = vmax.f32 %v3798, 0.0
  %v3859 = vmax.f32 %v3799, 0.0
  %v3860 = vmax.f32 %v3800, 0.0
  %v3861 = vmax.f32 %v3801, 0.0
  %v3862 = vmax.f32 %v3802, 0.0
  %v3863 = vmax.f32 %v3803, 0.0
  %v3864 = vmax.f32 %v3804, 0.0
  %v3865 = vmax.f32 %v3805, 0.0
  %v3866 = vmax.f32 %v3806, 0.0
  %v3867 = vmax.f32 %v3807, 0.0
  %v3868 = vmax.f32 %v3808, 0.0
  %v3869 = vmax.f32 %v3809, 0.0
  %v3870 = vmax.f32 %v3810, 0.0
  %v3871 = vmax.f32 %v3811, 0.0
  %v3872 = vmax.f32 %v3812, 0.0
  %v3873 = vmax.f32 %v3813, 0.0
  %v3874 = vmax.f32 %v3814, 0.0
  %v3875 = vmax.f32 %v3815, 0.0
  %v3876 = vmax.f32 %v3816, 0.0
  %v3877 = vmax.f32 %v3817, 0.0
  %v3878 = vmax.f32 %v3818, 0.0
  %v3879 = vmax.f32 %v3819, 0.0
  %v3880 = vmax.f32 %v3820, 0.0
  %v3881 = vmax.f32 %v3821, 0.0
  %v3882 = vmax.f32 %v3822, 0.0
  %v3883 = vmax.f32 %v3823, 0.0
  %v3884 = vmax.f32 %v3824, 0.0
  %v3885 = vmax.f32 %v3825, 0.0
  %v3886 = vmax.f32 %v3826, 0.0
  %v3887 = vmax.f32 %v3827, 0.0
  %v3888 = vmax.f32 %v3828, 0.0
  %v3889 = vmax.f32 %v3829, 0.0
  %v3890 = vld [vmem:[%s7] sm:$0x1]
  %v3891 = vmin.f32 %v3770, 0.0
  %v3892 = vmin.f32 %v3771, 0.0
  %v3893 = vmin.f32 %v3772, 0.0
  %v3894 = vmin.f32 %v3773, 0.0
  %v3895 = vmin.f32 %v3774, 0.0
  %v3896 = vmin.f32 %v3775, 0.0
  %v3897 = vmin.f32 %v3776, 0.0
  %v3898 = vmin.f32 %v3777, 0.0
  %v3899 = vmin.f32 %v3778, 0.0
  %v3900 = vmin.f32 %v3779, 0.0
  %v3901 = vmin.f32 %v3780, 0.0
  %v3902 = vmin.f32 %v3781, 0.0
  %v3903 = vmin.f32 %v3782, 0.0
  %v3904 = vmin.f32 %v3783, 0.0
  %v3905 = vmin.f32 %v3784, 0.0
  %v3906 = vmin.f32 %v3785, 0.0
  %v3907 = vmin.f32 %v3786, 0.0
  %v3908 = vmin.f32 %v3787, 0.0
  %v3909 = vmin.f32 %v3788, 0.0
  %v3910 = vmin.f32 %v3789, 0.0
  %v3911 = vmin.f32 %v3790, 0.0
  %v3912 = vmin.f32 %v3791, 0.0
  %v3913 = vmin.f32 %v3792, 0.0
  %v3914 = vmin.f32 %v3793, 0.0
  %v3915 = vmin.f32 %v3794, 0.0
  %v3916 = vmin.f32 %v3795, 0.0
  %v3917 = vmin.f32 %v3796, 0.0
  %v3918 = vmin.f32 %v3797, 0.0
  %v3919 = vmin.f32 %v3798, 0.0
  %v3920 = vmin.f32 %v3799, 0.0
  %v3921 = vmin.f32 %v3800, 0.0
  %v3922 = vmin.f32 %v3801, 0.0
  %v3923 = vmin.f32 %v3802, 0.0
  %v3924 = vmin.f32 %v3803, 0.0
  %v3925 = vmin.f32 %v3804, 0.0
  %v3926 = vmin.f32 %v3805, 0.0
  %v3927 = vmin.f32 %v3806, 0.0
  %v3928 = vmin.f32 %v3807, 0.0
  %v3929 = vmin.f32 %v3808, 0.0
  %v3930 = vmin.f32 %v3809, 0.0
  %v3931 = vmin.f32 %v3810, 0.0
  %v3932 = vmin.f32 %v3811, 0.0
  %v3933 = vmin.f32 %v3812, 0.0
  %v3934 = vmin.f32 %v3813, 0.0
  %v3935 = vmin.f32 %v3814, 0.0
  %v3936 = vmin.f32 %v3815, 0.0
  %v3937 = vmin.f32 %v3816, 0.0
  %v3938 = vmin.f32 %v3817, 0.0
  %v3939 = vmin.f32 %v3818, 0.0
  %v3940 = vmin.f32 %v3819, 0.0
  %v3941 = vmin.f32 %v3820, 0.0
  %v3942 = vmin.f32 %v3821, 0.0
  %v3943 = vmin.f32 %v3822, 0.0
  %v3944 = vmin.f32 %v3823, 0.0
  %v3945 = vmin.f32 %v3824, 0.0
  %v3946 = vmin.f32 %v3825, 0.0
  %v3947 = vmin.f32 %v3826, 0.0
  %v3948 = vmin.f32 %v3827, 0.0
  %v3949 = vmin.f32 %v3828, 0.0
  %v3950 = vmin.f32 %v3829, 0.0
  %v3952 = vperm.slane %v3890, 0
  %v3954 = vmul.f32 %v3952, %v3891
  %v3955 = vmul.f32 %v3952, %v3892
  %v3956 = vmul.f32 %v3952, %v3893
  %v3957 = vmul.f32 %v3952, %v3894
  %v3958 = vmul.f32 %v3952, %v3895
  %v3959 = vmul.f32 %v3952, %v3896
  %v3960 = vmul.f32 %v3952, %v3897
  %v3961 = vmul.f32 %v3952, %v3898
  %v3962 = vmul.f32 %v3952, %v3899
  %v3963 = vmul.f32 %v3952, %v3900
  %v3964 = vmul.f32 %v3952, %v3901
  %v3965 = vmul.f32 %v3952, %v3902
  %v3966 = vmul.f32 %v3952, %v3903
  %v3967 = vmul.f32 %v3952, %v3904
  %v3968 = vmul.f32 %v3952, %v3905
  %v3969 = vmul.f32 %v3952, %v3906
  %v3970 = vmul.f32 %v3952, %v3907
  %v3971 = vmul.f32 %v3952, %v3908
  %v3972 = vmul.f32 %v3952, %v3909
  %v3973 = vmul.f32 %v3952, %v3910
  %v3974 = vmul.f32 %v3952, %v3911
  %v3975 = vmul.f32 %v3952, %v3912
  %v3976 = vmul.f32 %v3952, %v3913
  %v3977 = vmul.f32 %v3952, %v3914
  %v3978 = vmul.f32 %v3952, %v3915
  %v3979 = vmul.f32 %v3952, %v3916
  %v3980 = vmul.f32 %v3952, %v3917
  %v3981 = vmul.f32 %v3952, %v3918
  %v3982 = vmul.f32 %v3952, %v3919
  %v3983 = vmul.f32 %v3952, %v3920
  %v3984 = vmul.f32 %v3952, %v3921
  %v3985 = vmul.f32 %v3952, %v3922
  %v3986 = vmul.f32 %v3952, %v3923
  %v3987 = vmul.f32 %v3952, %v3924
  %v3988 = vmul.f32 %v3952, %v3925
  %v3989 = vmul.f32 %v3952, %v3926
  %v3990 = vmul.f32 %v3952, %v3927
  %v3991 = vmul.f32 %v3952, %v3928
  %v3992 = vmul.f32 %v3952, %v3929
  %v3993 = vmul.f32 %v3952, %v3930
  %v3994 = vmul.f32 %v3952, %v3931
  %v3995 = vmul.f32 %v3952, %v3932
  %v3996 = vmul.f32 %v3952, %v3933
  %v3997 = vmul.f32 %v3952, %v3934
  %v3998 = vmul.f32 %v3952, %v3935
  %v3999 = vmul.f32 %v3952, %v3936
  %v4000 = vmul.f32 %v3952, %v3937
  %v4001 = vmul.f32 %v3952, %v3938
  %v4002 = vmul.f32 %v3952, %v3939
  %v4003 = vmul.f32 %v3952, %v3940
  %v4004 = vmul.f32 %v3952, %v3941
  %v4005 = vmul.f32 %v3952, %v3942
  %v4006 = vmul.f32 %v3952, %v3943
  %v4007 = vmul.f32 %v3952, %v3944
  %v4008 = vmul.f32 %v3952, %v3945
  %v4009 = vmul.f32 %v3952, %v3946
  %v4010 = vmul.f32 %v3952, %v3947
  %v4011 = vmul.f32 %v3952, %v3948
  %v4012 = vmul.f32 %v3952, %v3949
  %v4013 = vmul.f32 %v3952, %v3950
  %v4014 = vadd.f32 %v3830, %v3954
  %v4015 = vadd.f32 %v3831, %v3955
  %v4016 = vadd.f32 %v3832, %v3956
  %v4017 = vadd.f32 %v3833, %v3957
  %v4018 = vadd.f32 %v3834, %v3958
  %v4019 = vadd.f32 %v3835, %v3959
  %v4020 = vadd.f32 %v3836, %v3960
  %v4021 = vadd.f32 %v3837, %v3961
  %v4022 = vadd.f32 %v3838, %v3962
  %v4023 = vadd.f32 %v3839, %v3963
  %v4024 = vadd.f32 %v3840, %v3964
  %v4025 = vadd.f32 %v3841, %v3965
  %v4026 = vadd.f32 %v3842, %v3966
  %v4027 = vadd.f32 %v3843, %v3967
  %v4028 = vadd.f32 %v3844, %v3968
  %v4029 = vadd.f32 %v3845, %v3969
  %v4030 = vadd.f32 %v3846, %v3970
  %v4031 = vadd.f32 %v3847, %v3971
  %v4032 = vadd.f32 %v3848, %v3972
  %v4033 = vadd.f32 %v3849, %v3973
  %v4034 = vadd.f32 %v3850, %v3974
  %v4035 = vadd.f32 %v3851, %v3975
  %v4036 = vadd.f32 %v3852, %v3976
  %v4037 = vadd.f32 %v3853, %v3977
  %v4038 = vadd.f32 %v3854, %v3978
  %v4039 = vadd.f32 %v3855, %v3979
  %v4040 = vadd.f32 %v3856, %v3980
  %v4041 = vadd.f32 %v3857, %v3981
  %v4042 = vadd.f32 %v3858, %v3982
  %v4043 = vadd.f32 %v3859, %v3983
  %v4044 = vadd.f32 %v3860, %v3984
  %v4045 = vadd.f32 %v3861, %v3985
  %v4046 = vadd.f32 %v3862, %v3986
  %v4047 = vadd.f32 %v3863, %v3987
  %v4048 = vadd.f32 %v3864, %v3988
  %v4049 = vadd.f32 %v3865, %v3989
  %v4050 = vadd.f32 %v3866, %v3990
  %v4051 = vadd.f32 %v3867, %v3991
  %v4052 = vadd.f32 %v3868, %v3992
  %v4053 = vadd.f32 %v3869, %v3993
  %v4054 = vadd.f32 %v3870, %v3994
  %v4055 = vadd.f32 %v3871, %v3995
  %v4056 = vadd.f32 %v3872, %v3996
  %v4057 = vadd.f32 %v3873, %v3997
  %v4058 = vadd.f32 %v3874, %v3998
  %v4059 = vadd.f32 %v3875, %v3999
  %v4060 = vadd.f32 %v3876, %v4000
  %v4061 = vadd.f32 %v3877, %v4001
  %v4062 = vadd.f32 %v3878, %v4002
  %v4063 = vadd.f32 %v3879, %v4003
  %v4064 = vadd.f32 %v3880, %v4004
  %v4065 = vadd.f32 %v3881, %v4005
  %v4066 = vadd.f32 %v3882, %v4006
  %v4067 = vadd.f32 %v3883, %v4007
  %v4068 = vadd.f32 %v3884, %v4008
  %v4069 = vadd.f32 %v3885, %v4009
  %v4070 = vadd.f32 %v3886, %v4010
  %v4071 = vadd.f32 %v3887, %v4011
  %v4072 = vadd.f32 %v3888, %v4012
  %v4073 = vadd.f32 %v3889, %v4013
  %v4074 = vld [vmem:[%s9] sm:$0xff]
  %v4075 = vld [vmem:[%s9 + $0x8] sm:$0xff]
  %v4076 = vld [vmem:[%s9 + $0x10] sm:$0xff]
  %v4077 = vld [vmem:[%s9 + $0x18] sm:$0xff]
  %v4078 = vld [vmem:[%s9 + $0x20] sm:$0xff]
  %v4079 = vld [vmem:[%s9 + $0x28] sm:$0xff]
  %v4080 = vld [vmem:[%s9 + $0x30] sm:$0xff]
  %v4081 = vld [vmem:[%s9 + $0x38] sm:$0xff]
  %v4082 = vld [vmem:[%s9 + $0x40] sm:$0xff]
  %v4083 = vld [vmem:[%s9 + $0x48] sm:$0xff]
  %v4084 = vld [vmem:[%s9 + $0x50] sm:$0xff]
  %v4085 = vld [vmem:[%s9 + $0x58] sm:$0xff]
  %v4146 = vrot.slane %v4014, 1
  %v4147 = vrot.slane %v4015, 1
  %v4148 = vsel %vm590, %v4146, %v4147
  %v4149 = vrot.slane %v4016, 1
  %v4150 = vsel %vm590, %v4147, %v4149
  %v4151 = vrot.slane %v4017, 1
  %v4152 = vsel %vm590, %v4149, %v4151
  %v4153 = vrot.slane %v4018, 1
  %v4154 = vsel %vm590, %v4151, %v4153
  %v4155 = vrot.slane %v4019, 1
  %v4156 = vsel %vm590, %v4153, %v4155
  %v4157 = vrot.slane %v4020, 1
  %v4158 = vsel %vm590, %v4155, %v4157
  %v4159 = vrot.slane %v4021, 1
  %v4160 = vsel %vm590, %v4157, %v4159
  %v4161 = vrot.slane %v4022, 1
  %v4162 = vsel %vm590, %v4159, %v4161
  %v4163 = vrot.slane %v4023, 1
  %v4164 = vsel %vm590, %v4161, %v4163
  %v4165 = vrot.slane %v4024, 1
  %v4166 = vsel %vm590, %v4163, %v4165
  %v4167 = vrot.slane %v4025, 1
  %v4168 = vsel %vm590, %v4165, %v4167
  %v4169 = vrot.slane %v4026, 1
  %v4170 = vsel %vm590, %v4167, %v4169
  %v4171 = vrot.slane %v4027, 1
  %v4172 = vsel %vm590, %v4169, %v4171
  %v4173 = vrot.slane %v4028, 1
  %v4174 = vsel %vm590, %v4171, %v4173
  %v4175 = vrot.slane %v4029, 1
  %v4176 = vsel %vm590, %v4173, %v4175
  %v4177 = vrot.slane %v4030, 1
  %v4178 = vsel %vm590, %v4175, %v4177
  %v4179 = vrot.slane %v4031, 1
  %v4180 = vsel %vm590, %v4177, %v4179
  %v4181 = vrot.slane %v4032, 1
  %v4182 = vsel %vm590, %v4179, %v4181
  %v4183 = vrot.slane %v4033, 1
  %v4184 = vsel %vm590, %v4181, %v4183
  %v4185 = vrot.slane %v4034, 1
  %v4186 = vsel %vm590, %v4183, %v4185
  %v4187 = vrot.slane %v4035, 1
  %v4188 = vsel %vm590, %v4185, %v4187
  %v4189 = vrot.slane %v4036, 1
  %v4190 = vsel %vm590, %v4187, %v4189
  %v4191 = vrot.slane %v4037, 1
  %v4192 = vsel %vm590, %v4189, %v4191
  %v4193 = vrot.slane %v4038, 1
  %v4194 = vsel %vm590, %v4191, %v4193
  %v4195 = vrot.slane %v4039, 1
  %v4196 = vsel %vm590, %v4193, %v4195
  %v4197 = vrot.slane %v4040, 1
  %v4198 = vsel %vm590, %v4195, %v4197
  %v4199 = vrot.slane %v4041, 1
  %v4200 = vsel %vm590, %v4197, %v4199
  %v4201 = vrot.slane %v4042, 1
  %v4202 = vsel %vm590, %v4199, %v4201
  %v4203 = vrot.slane %v4043, 1
  %v4204 = vsel %vm590, %v4201, %v4203
  %v4205 = vrot.slane %v4044, 1
  %v4206 = vsel %vm590, %v4203, %v4205
  %v4207 = vrot.slane %v4045, 1
  %v4208 = vsel %vm590, %v4205, %v4207
  %v4209 = vrot.slane %v4046, 1
  %v4210 = vsel %vm590, %v4207, %v4209
  %v4211 = vrot.slane %v4047, 1
  %v4212 = vsel %vm590, %v4209, %v4211
  %v4213 = vrot.slane %v4048, 1
  %v4214 = vsel %vm590, %v4211, %v4213
  %v4215 = vrot.slane %v4049, 1
  %v4216 = vsel %vm590, %v4213, %v4215
  %v4217 = vrot.slane %v4050, 1
  %v4218 = vsel %vm590, %v4215, %v4217
  %v4219 = vrot.slane %v4051, 1
  %v4220 = vsel %vm590, %v4217, %v4219
  %v4221 = vrot.slane %v4052, 1
  %v4222 = vsel %vm590, %v4219, %v4221
  %v4223 = vrot.slane %v4053, 1
  %v4224 = vsel %vm590, %v4221, %v4223
  %v4225 = vrot.slane %v4054, 1
  %v4226 = vsel %vm590, %v4223, %v4225
  %v4227 = vrot.slane %v4055, 1
  %v4228 = vsel %vm590, %v4225, %v4227
  %v4229 = vrot.slane %v4056, 1
  %v4230 = vsel %vm590, %v4227, %v4229
  %v4231 = vrot.slane %v4057, 1
  %v4232 = vsel %vm590, %v4229, %v4231
  %v4233 = vrot.slane %v4058, 1
  %v4234 = vsel %vm590, %v4231, %v4233
  %v4235 = vrot.slane %v4059, 1
  %v4236 = vsel %vm590, %v4233, %v4235
  %v4237 = vrot.slane %v4060, 1
  %v4238 = vsel %vm590, %v4235, %v4237
  %v4239 = vrot.slane %v4061, 1
  %v4240 = vsel %vm590, %v4237, %v4239
  %v4241 = vrot.slane %v4062, 1
  %v4242 = vsel %vm590, %v4239, %v4241
  %v4243 = vrot.slane %v4063, 1
  %v4244 = vsel %vm590, %v4241, %v4243
  %v4245 = vrot.slane %v4064, 1
  %v4246 = vsel %vm590, %v4243, %v4245
  %v4247 = vrot.slane %v4065, 1
  %v4248 = vsel %vm590, %v4245, %v4247
  %v4249 = vrot.slane %v4066, 1
  %v4250 = vsel %vm590, %v4247, %v4249
  %v4251 = vrot.slane %v4067, 1
  %v4252 = vsel %vm590, %v4249, %v4251
  %v4253 = vrot.slane %v4068, 1
  %v4254 = vsel %vm590, %v4251, %v4253
  %v4255 = vrot.slane %v4069, 1
  %v4256 = vsel %vm590, %v4253, %v4255
  %v4257 = vrot.slane %v4070, 1
  %v4258 = vsel %vm590, %v4255, %v4257
  %v4259 = vrot.slane %v4071, 1
  %v4260 = vsel %vm590, %v4257, %v4259
  %v4261 = vrot.slane %v4072, 1
  %v4262 = vsel %vm590, %v4259, %v4261
  %v4263 = vrot.slane %v4073, 1
  %v4264 = vsel %vm590, %v4261, %v4263
  %v4267 = vsel %vm590, %v4263, %v4146
  %v4268 = vrot.slane %v4073, 7
  %v4270 = vrot.slane %v4014, 7
  %v4271 = vrot.slane %v4015, 7
  %v4272 = vsel %vm715, %v4270, %v4271
  %v4273 = vrot.slane %v4016, 7
  %v4274 = vsel %vm715, %v4271, %v4273
  %v4275 = vrot.slane %v4017, 7
  %v4276 = vsel %vm715, %v4273, %v4275
  %v4277 = vrot.slane %v4018, 7
  %v4278 = vsel %vm715, %v4275, %v4277
  %v4279 = vrot.slane %v4019, 7
  %v4280 = vsel %vm715, %v4277, %v4279
  %v4281 = vrot.slane %v4020, 7
  %v4282 = vsel %vm715, %v4279, %v4281
  %v4283 = vrot.slane %v4021, 7
  %v4284 = vsel %vm715, %v4281, %v4283
  %v4285 = vrot.slane %v4022, 7
  %v4286 = vsel %vm715, %v4283, %v4285
  %v4287 = vrot.slane %v4023, 7
  %v4288 = vsel %vm715, %v4285, %v4287
  %v4289 = vrot.slane %v4024, 7
  %v4290 = vsel %vm715, %v4287, %v4289
  %v4291 = vrot.slane %v4025, 7
  %v4292 = vsel %vm715, %v4289, %v4291
  %v4293 = vrot.slane %v4026, 7
  %v4294 = vsel %vm715, %v4291, %v4293
  %v4295 = vrot.slane %v4027, 7
  %v4296 = vsel %vm715, %v4293, %v4295
  %v4297 = vrot.slane %v4028, 7
  %v4298 = vsel %vm715, %v4295, %v4297
  %v4299 = vrot.slane %v4029, 7
  %v4300 = vsel %vm715, %v4297, %v4299
  %v4301 = vrot.slane %v4030, 7
  %v4302 = vsel %vm715, %v4299, %v4301
  %v4303 = vrot.slane %v4031, 7
  %v4304 = vsel %vm715, %v4301, %v4303
  %v4305 = vrot.slane %v4032, 7
  %v4306 = vsel %vm715, %v4303, %v4305
  %v4307 = vrot.slane %v4033, 7
  %v4308 = vsel %vm715, %v4305, %v4307
  %v4309 = vrot.slane %v4034, 7
  %v4310 = vsel %vm715, %v4307, %v4309
  %v4311 = vrot.slane %v4035, 7
  %v4312 = vsel %vm715, %v4309, %v4311
  %v4313 = vrot.slane %v4036, 7
  %v4314 = vsel %vm715, %v4311, %v4313
  %v4315 = vrot.slane %v4037, 7
  %v4316 = vsel %vm715, %v4313, %v4315
  %v4317 = vrot.slane %v4038, 7
  %v4318 = vsel %vm715, %v4315, %v4317
  %v4319 = vrot.slane %v4039, 7
  %v4320 = vsel %vm715, %v4317, %v4319
  %v4321 = vrot.slane %v4040, 7
  %v4322 = vsel %vm715, %v4319, %v4321
  %v4323 = vrot.slane %v4041, 7
  %v4324 = vsel %vm715, %v4321, %v4323
  %v4325 = vrot.slane %v4042, 7
  %v4326 = vsel %vm715, %v4323, %v4325
  %v4327 = vrot.slane %v4043, 7
  %v4328 = vsel %vm715, %v4325, %v4327
  %v4329 = vrot.slane %v4044, 7
  %v4330 = vsel %vm715, %v4327, %v4329
  %v4331 = vrot.slane %v4045, 7
  %v4332 = vsel %vm715, %v4329, %v4331
  %v4333 = vrot.slane %v4046, 7
  %v4334 = vsel %vm715, %v4331, %v4333
  %v4335 = vrot.slane %v4047, 7
  %v4336 = vsel %vm715, %v4333, %v4335
  %v4337 = vrot.slane %v4048, 7
  %v4338 = vsel %vm715, %v4335, %v4337
  %v4339 = vrot.slane %v4049, 7
  %v4340 = vsel %vm715, %v4337, %v4339
  %v4341 = vrot.slane %v4050, 7
  %v4342 = vsel %vm715, %v4339, %v4341
  %v4343 = vrot.slane %v4051, 7
  %v4344 = vsel %vm715, %v4341, %v4343
  %v4345 = vrot.slane %v4052, 7
  %v4346 = vsel %vm715, %v4343, %v4345
  %v4347 = vrot.slane %v4053, 7
  %v4348 = vsel %vm715, %v4345, %v4347
  %v4349 = vrot.slane %v4054, 7
  %v4350 = vsel %vm715, %v4347, %v4349
  %v4351 = vrot.slane %v4055, 7
  %v4352 = vsel %vm715, %v4349, %v4351
  %v4353 = vrot.slane %v4056, 7
  %v4354 = vsel %vm715, %v4351, %v4353
  %v4355 = vrot.slane %v4057, 7
  %v4356 = vsel %vm715, %v4353, %v4355
  %v4357 = vrot.slane %v4058, 7
  %v4358 = vsel %vm715, %v4355, %v4357
  %v4359 = vrot.slane %v4059, 7
  %v4360 = vsel %vm715, %v4357, %v4359
  %v4361 = vrot.slane %v4060, 7
  %v4362 = vsel %vm715, %v4359, %v4361
  %v4363 = vrot.slane %v4061, 7
  %v4364 = vsel %vm715, %v4361, %v4363
  %v4365 = vrot.slane %v4062, 7
  %v4366 = vsel %vm715, %v4363, %v4365
  %v4367 = vrot.slane %v4063, 7
  %v4368 = vsel %vm715, %v4365, %v4367
  %v4369 = vrot.slane %v4064, 7
  %v4370 = vsel %vm715, %v4367, %v4369
  %v4371 = vrot.slane %v4065, 7
  %v4372 = vsel %vm715, %v4369, %v4371
  %v4373 = vrot.slane %v4066, 7
  %v4374 = vsel %vm715, %v4371, %v4373
  %v4375 = vrot.slane %v4067, 7
  %v4376 = vsel %vm715, %v4373, %v4375
  %v4377 = vrot.slane %v4068, 7
  %v4378 = vsel %vm715, %v4375, %v4377
  %v4379 = vrot.slane %v4069, 7
  %v4380 = vsel %vm715, %v4377, %v4379
  %v4381 = vrot.slane %v4070, 7
  %v4382 = vsel %vm715, %v4379, %v4381
  %v4383 = vrot.slane %v4071, 7
  %v4384 = vsel %vm715, %v4381, %v4383
  %v4385 = vrot.slane %v4072, 7
  %v4386 = vsel %vm715, %v4383, %v4385
  %v4387 = vsel %vm715, %v4385, %v4268
  %v4389 = vsel %vm715, %v4268, %v4270
  %4391 = vrot.lane.b32.xlu0 %v4148, 16
  %v4392 = vpop.permute.xlu0 %4391
  %4393 = vrot.lane.b32.xlu0 %v4150, 16
  %v4394 = vpop.permute.xlu0 %4393
  %4395 = vrot.lane.b32.xlu0 %v4152, 16
  %v4396 = vpop.permute.xlu0 %4395
  %4397 = vrot.lane.b32.xlu0 %v4154, 16
  %v4398 = vpop.permute.xlu0 %4397
  %4399 = vrot.lane.b32.xlu0 %v4156, 16
  %v4400 = vpop.permute.xlu0 %4399
  %4401 = vrot.lane.b32.xlu0 %v4158, 16
  %v4402 = vpop.permute.xlu0 %4401
  %4403 = vrot.lane.b32.xlu0 %v4160, 16
  %v4404 = vpop.permute.xlu0 %4403
  %4405 = vrot.lane.b32.xlu0 %v4162, 16
  %v4406 = vpop.permute.xlu0 %4405
  %4407 = vrot.lane.b32.xlu0 %v4164, 16
  %v4408 = vpop.permute.xlu0 %4407
  %4409 = vrot.lane.b32.xlu0 %v4166, 16
  %v4410 = vpop.permute.xlu0 %4409
  %4411 = vrot.lane.b32.xlu0 %v4168, 16
  %v4412 = vpop.permute.xlu0 %4411
  %4413 = vrot.lane.b32.xlu0 %v4170, 16
  %v4414 = vpop.permute.xlu0 %4413
  %4415 = vrot.lane.b32.xlu0 %v4172, 16
  %v4416 = vpop.permute.xlu0 %4415
  %4417 = vrot.lane.b32.xlu0 %v4174, 16
  %v4418 = vpop.permute.xlu0 %4417
  %4419 = vrot.lane.b32.xlu0 %v4176, 16
  %v4420 = vpop.permute.xlu0 %4419
  %4421 = vrot.lane.b32.xlu0 %v4178, 16
  %v4422 = vpop.permute.xlu0 %4421
  %4423 = vrot.lane.b32.xlu0 %v4180, 16
  %v4424 = vpop.permute.xlu0 %4423
  %4425 = vrot.lane.b32.xlu0 %v4182, 16
  %v4426 = vpop.permute.xlu0 %4425
  %4427 = vrot.lane.b32.xlu0 %v4184, 16
  %v4428 = vpop.permute.xlu0 %4427
  %4429 = vrot.lane.b32.xlu0 %v4186, 16
  %v4430 = vpop.permute.xlu0 %4429
  %4431 = vrot.lane.b32.xlu0 %v4188, 16
  %v4432 = vpop.permute.xlu0 %4431
  %4433 = vrot.lane.b32.xlu0 %v4190, 16
  %v4434 = vpop.permute.xlu0 %4433
  %4435 = vrot.lane.b32.xlu0 %v4192, 16
  %v4436 = vpop.permute.xlu0 %4435
  %4437 = vrot.lane.b32.xlu0 %v4194, 16
  %v4438 = vpop.permute.xlu0 %4437
  %4439 = vrot.lane.b32.xlu0 %v4196, 16
  %v4440 = vpop.permute.xlu0 %4439
  %4441 = vrot.lane.b32.xlu0 %v4198, 16
  %v4442 = vpop.permute.xlu0 %4441
  %4443 = vrot.lane.b32.xlu0 %v4200, 16
  %v4444 = vpop.permute.xlu0 %4443
  %4445 = vrot.lane.b32.xlu0 %v4202, 16
  %v4446 = vpop.permute.xlu0 %4445
  %4447 = vrot.lane.b32.xlu0 %v4204, 16
  %v4448 = vpop.permute.xlu0 %4447
  %4449 = vrot.lane.b32.xlu0 %v4206, 16
  %v4450 = vpop.permute.xlu0 %4449
  %4451 = vrot.lane.b32.xlu0 %v4208, 16
  %v4452 = vpop.permute.xlu0 %4451
  %4453 = vrot.lane.b32.xlu0 %v4210, 16
  %v4454 = vpop.permute.xlu0 %4453
  %4455 = vrot.lane.b32.xlu0 %v4212, 16
  %v4456 = vpop.permute.xlu0 %4455
  %4457 = vrot.lane.b32.xlu0 %v4214, 16
  %v4458 = vpop.permute.xlu0 %4457
  %4459 = vrot.lane.b32.xlu0 %v4216, 16
  %v4460 = vpop.permute.xlu0 %4459
  %4461 = vrot.lane.b32.xlu0 %v4218, 16
  %v4462 = vpop.permute.xlu0 %4461
  %4463 = vrot.lane.b32.xlu0 %v4220, 16
  %v4464 = vpop.permute.xlu0 %4463
  %4465 = vrot.lane.b32.xlu0 %v4222, 16
  %v4466 = vpop.permute.xlu0 %4465
  %4467 = vrot.lane.b32.xlu0 %v4224, 16
  %v4468 = vpop.permute.xlu0 %4467
  %4469 = vrot.lane.b32.xlu0 %v4226, 16
  %v4470 = vpop.permute.xlu0 %4469
  %4471 = vrot.lane.b32.xlu0 %v4228, 16
  %v4472 = vpop.permute.xlu0 %4471
  %4473 = vrot.lane.b32.xlu0 %v4230, 16
  %v4474 = vpop.permute.xlu0 %4473
  %4475 = vrot.lane.b32.xlu0 %v4232, 16
  %v4476 = vpop.permute.xlu0 %4475
  %4477 = vrot.lane.b32.xlu0 %v4234, 16
  %v4478 = vpop.permute.xlu0 %4477
  %4479 = vrot.lane.b32.xlu0 %v4236, 16
  %v4480 = vpop.permute.xlu0 %4479
  %4481 = vrot.lane.b32.xlu0 %v4238, 16
  %v4482 = vpop.permute.xlu0 %4481
  %4483 = vrot.lane.b32.xlu0 %v4240, 16
  %v4484 = vpop.permute.xlu0 %4483
  %4485 = vrot.lane.b32.xlu0 %v4242, 16
  %v4486 = vpop.permute.xlu0 %4485
  %4487 = vrot.lane.b32.xlu0 %v4244, 16
  %v4488 = vpop.permute.xlu0 %4487
  %4489 = vrot.lane.b32.xlu0 %v4246, 16
  %v4490 = vpop.permute.xlu0 %4489
  %4491 = vrot.lane.b32.xlu0 %v4248, 16
  %v4492 = vpop.permute.xlu0 %4491
  %4493 = vrot.lane.b32.xlu0 %v4250, 16
  %v4494 = vpop.permute.xlu0 %4493
  %4495 = vrot.lane.b32.xlu0 %v4252, 16
  %v4496 = vpop.permute.xlu0 %4495
  %4497 = vrot.lane.b32.xlu0 %v4254, 16
  %v4498 = vpop.permute.xlu0 %4497
  %4499 = vrot.lane.b32.xlu0 %v4256, 16
  %v4500 = vpop.permute.xlu0 %4499
  %4501 = vrot.lane.b32.xlu0 %v4258, 16
  %v4502 = vpop.permute.xlu0 %4501
  %4503 = vrot.lane.b32.xlu0 %v4260, 16
  %v4504 = vpop.permute.xlu0 %4503
  %4505 = vrot.lane.b32.xlu0 %v4262, 16
  %v4506 = vpop.permute.xlu0 %4505
  %4507 = vrot.lane.b32.xlu0 %v4264, 16
  %v4508 = vpop.permute.xlu0 %4507
  %4509 = vrot.lane.b32.xlu0 %v4267, 16
  %v4510 = vpop.permute.xlu0 %4509
  %4572 = vrot.lane.b32.xlu0 %v4389, 32
  %v4573 = vpop.permute.xlu0 %4572
  %4574 = vrot.lane.b32.xlu0 %v4272, 32
  %v4575 = vpop.permute.xlu0 %4574
  %4576 = vrot.lane.b32.xlu0 %v4274, 32
  %v4577 = vpop.permute.xlu0 %4576
  %4578 = vrot.lane.b32.xlu0 %v4276, 32
  %v4579 = vpop.permute.xlu0 %4578
  %4580 = vrot.lane.b32.xlu0 %v4278, 32
  %v4581 = vpop.permute.xlu0 %4580
  %4582 = vrot.lane.b32.xlu0 %v4280, 32
  %v4583 = vpop.permute.xlu0 %4582
  %4584 = vrot.lane.b32.xlu0 %v4282, 32
  %v4585 = vpop.permute.xlu0 %4584
  %4586 = vrot.lane.b32.xlu0 %v4284, 32
  %v4587 = vpop.permute.xlu0 %4586
  %4588 = vrot.lane.b32.xlu0 %v4286, 32
  %v4589 = vpop.permute.xlu0 %4588
  %4590 = vrot.lane.b32.xlu0 %v4288, 32
  %v4591 = vpop.permute.xlu0 %4590
  %4592 = vrot.lane.b32.xlu0 %v4290, 32
  %v4593 = vpop.permute.xlu0 %4592
  %4594 = vrot.lane.b32.xlu0 %v4292, 32
  %v4595 = vpop.permute.xlu0 %4594
  %4596 = vrot.lane.b32.xlu0 %v4294, 32
  %v4597 = vpop.permute.xlu0 %4596
  %4598 = vrot.lane.b32.xlu0 %v4296, 32
  %v4599 = vpop.permute.xlu0 %4598
  %4600 = vrot.lane.b32.xlu0 %v4298, 32
  %v4601 = vpop.permute.xlu0 %4600
  %4602 = vrot.lane.b32.xlu0 %v4300, 32
  %v4603 = vpop.permute.xlu0 %4602
  %4604 = vrot.lane.b32.xlu0 %v4302, 32
  %v4605 = vpop.permute.xlu0 %4604
  %4606 = vrot.lane.b32.xlu0 %v4304, 32
  %v4607 = vpop.permute.xlu0 %4606
  %4608 = vrot.lane.b32.xlu0 %v4306, 32
  %v4609 = vpop.permute.xlu0 %4608
  %4610 = vrot.lane.b32.xlu0 %v4308, 32
  %v4611 = vpop.permute.xlu0 %4610
  %4612 = vrot.lane.b32.xlu0 %v4310, 32
  %v4613 = vpop.permute.xlu0 %4612
  %4614 = vrot.lane.b32.xlu0 %v4312, 32
  %v4615 = vpop.permute.xlu0 %4614
  %4616 = vrot.lane.b32.xlu0 %v4314, 32
  %v4617 = vpop.permute.xlu0 %4616
  %4618 = vrot.lane.b32.xlu0 %v4316, 32
  %v4619 = vpop.permute.xlu0 %4618
  %4620 = vrot.lane.b32.xlu0 %v4318, 32
  %v4621 = vpop.permute.xlu0 %4620
  %4622 = vrot.lane.b32.xlu0 %v4320, 32
  %v4623 = vpop.permute.xlu0 %4622
  %4624 = vrot.lane.b32.xlu0 %v4322, 32
  %v4625 = vpop.permute.xlu0 %4624
  %4626 = vrot.lane.b32.xlu0 %v4324, 32
  %v4627 = vpop.permute.xlu0 %4626
  %4628 = vrot.lane.b32.xlu0 %v4326, 32
  %v4629 = vpop.permute.xlu0 %4628
  %4630 = vrot.lane.b32.xlu0 %v4328, 32
  %v4631 = vpop.permute.xlu0 %4630
  %4632 = vrot.lane.b32.xlu0 %v4330, 32
  %v4633 = vpop.permute.xlu0 %4632
  %4634 = vrot.lane.b32.xlu0 %v4332, 32
  %v4635 = vpop.permute.xlu0 %4634
  %4636 = vrot.lane.b32.xlu0 %v4334, 32
  %v4637 = vpop.permute.xlu0 %4636
  %4638 = vrot.lane.b32.xlu0 %v4336, 32
  %v4639 = vpop.permute.xlu0 %4638
  %4640 = vrot.lane.b32.xlu0 %v4338, 32
  %v4641 = vpop.permute.xlu0 %4640
  %4642 = vrot.lane.b32.xlu0 %v4340, 32
  %v4643 = vpop.permute.xlu0 %4642
  %4644 = vrot.lane.b32.xlu0 %v4342, 32
  %v4645 = vpop.permute.xlu0 %4644
  %4646 = vrot.lane.b32.xlu0 %v4344, 32
  %v4647 = vpop.permute.xlu0 %4646
  %4648 = vrot.lane.b32.xlu0 %v4346, 32
  %v4649 = vpop.permute.xlu0 %4648
  %4650 = vrot.lane.b32.xlu0 %v4348, 32
  %v4651 = vpop.permute.xlu0 %4650
  %4652 = vrot.lane.b32.xlu0 %v4350, 32
  %v4653 = vpop.permute.xlu0 %4652
  %4654 = vrot.lane.b32.xlu0 %v4352, 32
  %v4655 = vpop.permute.xlu0 %4654
  %4656 = vrot.lane.b32.xlu0 %v4354, 32
  %v4657 = vpop.permute.xlu0 %4656
  %4658 = vrot.lane.b32.xlu0 %v4356, 32
  %v4659 = vpop.permute.xlu0 %4658
  %4660 = vrot.lane.b32.xlu0 %v4358, 32
  %v4661 = vpop.permute.xlu0 %4660
  %4662 = vrot.lane.b32.xlu0 %v4360, 32
  %v4663 = vpop.permute.xlu0 %4662
  %4664 = vrot.lane.b32.xlu0 %v4362, 32
  %v4665 = vpop.permute.xlu0 %4664
  %4666 = vrot.lane.b32.xlu0 %v4364, 32
  %v4667 = vpop.permute.xlu0 %4666
  %4668 = vrot.lane.b32.xlu0 %v4366, 32
  %v4669 = vpop.permute.xlu0 %4668
  %4670 = vrot.lane.b32.xlu0 %v4368, 32
  %v4671 = vpop.permute.xlu0 %4670
  %4672 = vrot.lane.b32.xlu0 %v4370, 32
  %v4673 = vpop.permute.xlu0 %4672
  %4674 = vrot.lane.b32.xlu0 %v4372, 32
  %v4675 = vpop.permute.xlu0 %4674
  %4676 = vrot.lane.b32.xlu0 %v4374, 32
  %v4677 = vpop.permute.xlu0 %4676
  %4678 = vrot.lane.b32.xlu0 %v4376, 32
  %v4679 = vpop.permute.xlu0 %4678
  %4680 = vrot.lane.b32.xlu0 %v4378, 32
  %v4681 = vpop.permute.xlu0 %4680
  %4682 = vrot.lane.b32.xlu0 %v4380, 32
  %v4683 = vpop.permute.xlu0 %4682
  %4684 = vrot.lane.b32.xlu0 %v4382, 32
  %v4685 = vpop.permute.xlu0 %4684
  %4686 = vrot.lane.b32.xlu0 %v4384, 32
  %v4687 = vpop.permute.xlu0 %4686
  %4688 = vrot.lane.b32.xlu0 %v4386, 32
  %v4689 = vpop.permute.xlu0 %4688
  %4690 = vrot.lane.b32.xlu0 %v4387, 32
  %v4691 = vpop.permute.xlu0 %4690
  %v4752 = vsel %vm156, %v4014, %v4392
  %v4753 = vsel %vm156, %v4015, %v4394
  %v4754 = vsel %vm156, %v4016, %v4396
  %v4755 = vsel %vm156, %v4017, %v4398
  %v4756 = vsel %vm156, %v4018, %v4400
  %v4757 = vsel %vm156, %v4019, %v4402
  %v4758 = vsel %vm156, %v4020, %v4404
  %v4759 = vsel %vm156, %v4021, %v4406
  %v4760 = vsel %vm156, %v4022, %v4408
  %v4761 = vsel %vm156, %v4023, %v4410
  %v4762 = vsel %vm156, %v4024, %v4412
  %v4763 = vsel %vm156, %v4025, %v4414
  %v4764 = vsel %vm156, %v4026, %v4416
  %v4765 = vsel %vm156, %v4027, %v4418
  %v4766 = vsel %vm156, %v4028, %v4420
  %v4767 = vsel %vm156, %v4029, %v4422
  %v4768 = vsel %vm156, %v4030, %v4424
  %v4769 = vsel %vm156, %v4031, %v4426
  %v4770 = vsel %vm156, %v4032, %v4428
  %v4771 = vsel %vm156, %v4033, %v4430
  %v4772 = vsel %vm156, %v4034, %v4432
  %v4773 = vsel %vm156, %v4035, %v4434
  %v4774 = vsel %vm156, %v4036, %v4436
  %v4775 = vsel %vm156, %v4037, %v4438
  %v4776 = vsel %vm156, %v4038, %v4440
  %v4777 = vsel %vm156, %v4039, %v4442
  %v4778 = vsel %vm156, %v4040, %v4444
  %v4779 = vsel %vm156, %v4041, %v4446
  %v4780 = vsel %vm156, %v4042, %v4448
  %v4781 = vsel %vm156, %v4043, %v4450
  %v4782 = vsel %vm156, %v4044, %v4452
  %v4783 = vsel %vm156, %v4045, %v4454
  %v4784 = vsel %vm156, %v4046, %v4456
  %v4785 = vsel %vm156, %v4047, %v4458
  %v4786 = vsel %vm156, %v4048, %v4460
  %v4787 = vsel %vm156, %v4049, %v4462
  %v4788 = vsel %vm156, %v4050, %v4464
  %v4789 = vsel %vm156, %v4051, %v4466
  %v4790 = vsel %vm156, %v4052, %v4468
  %v4791 = vsel %vm156, %v4053, %v4470
  %v4792 = vsel %vm156, %v4054, %v4472
  %v4793 = vsel %vm156, %v4055, %v4474
  %v4794 = vsel %vm156, %v4056, %v4476
  %v4795 = vsel %vm156, %v4057, %v4478
  %v4796 = vsel %vm156, %v4058, %v4480
  %v4797 = vsel %vm156, %v4059, %v4482
  %v4798 = vsel %vm156, %v4060, %v4484
  %v4799 = vsel %vm156, %v4061, %v4486
  %v4800 = vsel %vm156, %v4062, %v4488
  %v4801 = vsel %vm156, %v4063, %v4490
  %v4802 = vsel %vm156, %v4064, %v4492
  %v4803 = vsel %vm156, %v4065, %v4494
  %v4804 = vsel %vm156, %v4066, %v4496
  %v4805 = vsel %vm156, %v4067, %v4498
  %v4806 = vsel %vm156, %v4068, %v4500
  %v4807 = vsel %vm156, %v4069, %v4502
  %v4808 = vsel %vm156, %v4070, %v4504
  %v4809 = vsel %vm156, %v4071, %v4506
  %v4810 = vsel %vm156, %v4072, %v4508
  %v4811 = vsel %vm156, %v4073, %v4510
  %v4812 = vsel %vm66, %v4752, %v4573
  %v4813 = vsel %vm66, %v4753, %v4575
  %v4814 = vsel %vm66, %v4754, %v4577
  %v4815 = vsel %vm66, %v4755, %v4579
  %v4816 = vsel %vm66, %v4756, %v4581
  %v4817 = vsel %vm66, %v4757, %v4583
  %v4818 = vsel %vm66, %v4758, %v4585
  %v4819 = vsel %vm66, %v4759, %v4587
  %v4820 = vsel %vm66, %v4760, %v4589
  %v4821 = vsel %vm66, %v4761, %v4591
  %v4822 = vsel %vm66, %v4762, %v4593
  %v4823 = vsel %vm66, %v4763, %v4595
  %v4824 = vsel %vm66, %v4764, %v4597
  %v4825 = vsel %vm66, %v4765, %v4599
  %v4826 = vsel %vm66, %v4766, %v4601
  %v4827 = vsel %vm66, %v4767, %v4603
  %v4828 = vsel %vm66, %v4768, %v4605
  %v4829 = vsel %vm66, %v4769, %v4607
  %v4830 = vsel %vm66, %v4770, %v4609
  %v4831 = vsel %vm66, %v4771, %v4611
  %v4832 = vsel %vm66, %v4772, %v4613
  %v4833 = vsel %vm66, %v4773, %v4615
  %v4834 = vsel %vm66, %v4774, %v4617
  %v4835 = vsel %vm66, %v4775, %v4619
  %v4836 = vsel %vm66, %v4776, %v4621
  %v4837 = vsel %vm66, %v4777, %v4623
  %v4838 = vsel %vm66, %v4778, %v4625
  %v4839 = vsel %vm66, %v4779, %v4627
  %v4840 = vsel %vm66, %v4780, %v4629
  %v4841 = vsel %vm66, %v4781, %v4631
  %v4842 = vsel %vm66, %v4782, %v4633
  %v4843 = vsel %vm66, %v4783, %v4635
  %v4844 = vsel %vm66, %v4784, %v4637
  %v4845 = vsel %vm66, %v4785, %v4639
  %v4846 = vsel %vm66, %v4786, %v4641
  %v4847 = vsel %vm66, %v4787, %v4643
  %v4848 = vsel %vm66, %v4788, %v4645
  %v4849 = vsel %vm66, %v4789, %v4647
  %v4850 = vsel %vm66, %v4790, %v4649
  %v4851 = vsel %vm66, %v4791, %v4651
  %v4852 = vsel %vm66, %v4792, %v4653
  %v4853 = vsel %vm66, %v4793, %v4655
  %v4854 = vsel %vm66, %v4794, %v4657
  %v4855 = vsel %vm66, %v4795, %v4659
  %v4856 = vsel %vm66, %v4796, %v4661
  %v4857 = vsel %vm66, %v4797, %v4663
  %v4858 = vsel %vm66, %v4798, %v4665
  %v4859 = vsel %vm66, %v4799, %v4667
  %v4860 = vsel %vm66, %v4800, %v4669
  %v4861 = vsel %vm66, %v4801, %v4671
  %v4862 = vsel %vm66, %v4802, %v4673
  %v4863 = vsel %vm66, %v4803, %v4675
  %v4864 = vsel %vm66, %v4804, %v4677
  %v4865 = vsel %vm66, %v4805, %v4679
  %v4866 = vsel %vm66, %v4806, %v4681
  %v4867 = vsel %vm66, %v4807, %v4683
  %v4868 = vsel %vm66, %v4808, %v4685
  %v4869 = vsel %vm66, %v4809, %v4687
  %v4870 = vsel %vm66, %v4810, %v4689
  %v4871 = vsel %vm66, %v4811, %v4691
  %v4872 = vmul.f32 %v4812, %v4074
  %v4873 = vmul.f32 %v4813, %v4075
  %v4874 = vmul.f32 %v4814, %v4076
  %v4875 = vmul.f32 %v4815, %v4077
  %v4876 = vmul.f32 %v4816, %v4078
  %v4877 = vmul.f32 %v4817, %v4079
  %v4878 = vmul.f32 %v4818, %v4080
  %v4879 = vmul.f32 %v4819, %v4081
  %v4880 = vmul.f32 %v4820, %v4082
  %v4881 = vmul.f32 %v4821, %v4083
  %v4882 = vmul.f32 %v4822, %v4084
  %v4883 = vmul.f32 %v4823, %v4085
  %v4884 = vmul.f32 %v4824, %v4074
  %v4885 = vmul.f32 %v4825, %v4075
  %v4886 = vmul.f32 %v4826, %v4076
  %v4887 = vmul.f32 %v4827, %v4077
  %v4888 = vmul.f32 %v4828, %v4078
  %v4889 = vmul.f32 %v4829, %v4079
  %v4890 = vmul.f32 %v4830, %v4080
  %v4891 = vmul.f32 %v4831, %v4081
  %v4892 = vmul.f32 %v4832, %v4082
  %v4893 = vmul.f32 %v4833, %v4083
  %v4894 = vmul.f32 %v4834, %v4084
  %v4895 = vmul.f32 %v4835, %v4085
  %v4896 = vmul.f32 %v4836, %v4074
  %v4897 = vmul.f32 %v4837, %v4075
  %v4898 = vmul.f32 %v4838, %v4076
  %v4899 = vmul.f32 %v4839, %v4077
  %v4900 = vmul.f32 %v4840, %v4078
  %v4901 = vmul.f32 %v4841, %v4079
  %v4902 = vmul.f32 %v4842, %v4080
  %v4903 = vmul.f32 %v4843, %v4081
  %v4904 = vmul.f32 %v4844, %v4082
  %v4905 = vmul.f32 %v4845, %v4083
  %v4906 = vmul.f32 %v4846, %v4084
  %v4907 = vmul.f32 %v4847, %v4085
  %v4908 = vmul.f32 %v4848, %v4074
  %v4909 = vmul.f32 %v4849, %v4075
  %v4910 = vmul.f32 %v4850, %v4076
  %v4911 = vmul.f32 %v4851, %v4077
  %v4912 = vmul.f32 %v4852, %v4078
  %v4913 = vmul.f32 %v4853, %v4079
  %v4914 = vmul.f32 %v4854, %v4080
  %v4915 = vmul.f32 %v4855, %v4081
  %v4916 = vmul.f32 %v4856, %v4082
  %v4917 = vmul.f32 %v4857, %v4083
  %v4918 = vmul.f32 %v4858, %v4084
  %v4919 = vmul.f32 %v4859, %v4085
  %v4920 = vmul.f32 %v4860, %v4074
  %v4921 = vmul.f32 %v4861, %v4075
  %v4922 = vmul.f32 %v4862, %v4076
  %v4923 = vmul.f32 %v4863, %v4077
  %v4924 = vmul.f32 %v4864, %v4078
  %v4925 = vmul.f32 %v4865, %v4079
  %v4926 = vmul.f32 %v4866, %v4080
  %v4927 = vmul.f32 %v4867, %v4081
  %v4928 = vmul.f32 %v4868, %v4082
  %v4929 = vmul.f32 %v4869, %v4083
  %v4930 = vmul.f32 %v4870, %v4084
  %v4931 = vmul.f32 %v4871, %v4085
  %v4932 = vld [vmem:[%s8] sm:$0xff]
  %v4933 = vld [vmem:[%s8 + $0x8] sm:$0xff]
  %v4934 = vld [vmem:[%s8 + $0x10] sm:$0xff]
  %v4935 = vld [vmem:[%s8 + $0x18] sm:$0xff]
  %v4936 = vld [vmem:[%s8 + $0x20] sm:$0xff]
  %v4937 = vld [vmem:[%s8 + $0x28] sm:$0xff]
  %s4938 = scalar_lea.vmem %s8, 48
  %v4939 = vld [vmem:[%s4938] sm:$0xff]
  %v4940 = vld [vmem:[%s4938 + $0x8] sm:$0xff]
  %v4941 = vld [vmem:[%s4938 + $0x10] sm:$0xff]
  %v4942 = vld [vmem:[%s4938 + $0x18] sm:$0xff]
  %v4943 = vld [vmem:[%s4938 + $0x20] sm:$0xff]
  %v4944 = vld [vmem:[%s4938 + $0x28] sm:$0xff]
  %vm4945 = vcmask 392192
  %v4947 = vsel %vm4945, %v4872, 0
  %v4950 = vsel %vm4945, %v4873, 0
  %v4953 = vsel %vm4945, %v4874, 0
  %v4956 = vsel %vm4945, %v4875, 0
  %v4959 = vsel %vm4945, %v4876, 0
  %v4962 = vsel %vm4945, %v4877, 0
  %v4965 = vsel %vm4945, %v4878, 0
  %v4968 = vsel %vm4945, %v4879, 0
  %v4971 = vsel %vm4945, %v4880, 0
  %v4974 = vsel %vm4945, %v4881, 0
  %v4977 = vsel %vm4945, %v4882, 0
  %v4980 = vsel %vm4945, %v4883, 0
  %v4983 = vsel %vm4945, %v4884, 0
  %v4986 = vsel %vm4945, %v4885, 0
  %v4989 = vsel %vm4945, %v4886, 0
  %v4992 = vsel %vm4945, %v4887, 0
  %v4995 = vsel %vm4945, %v4888, 0
  %v4998 = vsel %vm4945, %v4889, 0
  %v5001 = vsel %vm4945, %v4890, 0
  %v5004 = vsel %vm4945, %v4891, 0
  %v5007 = vsel %vm4945, %v4892, 0
  %v5010 = vsel %vm4945, %v4893, 0
  %v5013 = vsel %vm4945, %v4894, 0
  %v5016 = vsel %vm4945, %v4895, 0
  %v5019 = vsel %vm4945, %v4896, 0
  %v5022 = vsel %vm4945, %v4897, 0
  %v5025 = vsel %vm4945, %v4898, 0
  %v5028 = vsel %vm4945, %v4899, 0
  %v5031 = vsel %vm4945, %v4900, 0
  %v5034 = vsel %vm4945, %v4901, 0
  %v5037 = vsel %vm4945, %v4902, 0
  %v5040 = vsel %vm4945, %v4903, 0
  %v5043 = vsel %vm4945, %v4904, 0
  %v5046 = vsel %vm4945, %v4905, 0
  %v5049 = vsel %vm4945, %v4906, 0
  %v5052 = vsel %vm4945, %v4907, 0
  %v5055 = vsel %vm4945, %v4908, 0
  %v5058 = vsel %vm4945, %v4909, 0
  %v5061 = vsel %vm4945, %v4910, 0
  %v5064 = vsel %vm4945, %v4911, 0
  %v5067 = vsel %vm4945, %v4912, 0
  %v5070 = vsel %vm4945, %v4913, 0
  %v5073 = vsel %vm4945, %v4914, 0
  %v5076 = vsel %vm4945, %v4915, 0
  %v5079 = vsel %vm4945, %v4916, 0
  %v5082 = vsel %vm4945, %v4917, 0
  %v5085 = vsel %vm4945, %v4918, 0
  %v5088 = vsel %vm4945, %v4919, 0
  %v5091 = vsel %vm4945, %v4920, 0
  %v5094 = vsel %vm4945, %v4921, 0
  %v5097 = vsel %vm4945, %v4922, 0
  %v5100 = vsel %vm4945, %v4923, 0
  %v5103 = vsel %vm4945, %v4924, 0
  %v5106 = vsel %vm4945, %v4925, 0
  %v5109 = vsel %vm4945, %v4926, 0
  %v5112 = vsel %vm4945, %v4927, 0
  %v5115 = vsel %vm4945, %v4928, 0
  %v5118 = vsel %vm4945, %v4929, 0
  %v5121 = vsel %vm4945, %v4930, 0
  %v5124 = vsel %vm4945, %v4931, 0
  %5126 = vmatpush.msra.mxu0 0.0
  %5127 = vmatpush.msra.mxu0 0.0
  %5128 = vmatpush.msra.mxu0 0.0
  %5129 = vmatpush.msra.mxu0 0.0
  %5130 = vmatpush.msra.mxu0 0.0
  %5131 = vmatpush.msra.mxu0 0.0
  %5132 = vmatpush.msra.mxu0 0.0
  %5133 = vmatpush.msra.mxu0 0.0
  %5134 = vmatpush.msra.mxu0 0.0
  %5135 = vmatpush.msra.mxu0 0.0
  %5136 = vmatpush.msra.mxu0 %v4944
  %5137 = vmatpush.msra.mxu0 %v4943
  %5138 = vmatpush.msra.mxu0 %v4942
  %5139 = vmatpush.msra.mxu0 %v4941
  %5140 = vmatpush.msra.mxu0 %v4940
  %5141 = vmatpush.msra.mxu0 %v4939
  %5142 = vmatmul.f32.gmra.mxu0 %v4947
  %v5143 = vpop.f32.mrf.mxu0
  %v5144 = vadd.f32 0.0, %v5143
  %5145 = vmatmul.f32.gmra.mxu0 %v4950
  %v5146 = vpop.f32.mrf.mxu0
  %v5147 = vadd.f32 0.0, %v5146
  %5148 = vmatmul.f32.gmra.mxu0 %v4953
  %v5149 = vpop.f32.mrf.mxu0
  %v5150 = vadd.f32 0.0, %v5149
  %5151 = vmatmul.f32.gmra.mxu0 %v4956
  %v5152 = vpop.f32.mrf.mxu0
  %v5153 = vadd.f32 0.0, %v5152
  %5154 = vmatmul.f32.gmra.mxu0 %v4959
  %v5155 = vpop.f32.mrf.mxu0
  %v5156 = vadd.f32 0.0, %v5155
  %5157 = vmatmul.f32.gmra.mxu0 %v4962
  %v5158 = vpop.f32.mrf.mxu0
  %v5159 = vadd.f32 0.0, %v5158
  %5160 = vmatmul.f32.gmra.mxu0 %v4965
  %v5161 = vpop.f32.mrf.mxu0
  %v5162 = vadd.f32 0.0, %v5161
  %5163 = vmatmul.f32.gmra.mxu0 %v4968
  %v5164 = vpop.f32.mrf.mxu0
  %v5165 = vadd.f32 0.0, %v5164
  %5166 = vmatmul.f32.gmra.mxu0 %v4971
  %v5167 = vpop.f32.mrf.mxu0
  %v5168 = vadd.f32 0.0, %v5167
  %5169 = vmatmul.f32.gmra.mxu0 %v4974
  %v5170 = vpop.f32.mrf.mxu0
  %v5171 = vadd.f32 0.0, %v5170
  %5172 = vmatmul.f32.gmra.mxu0 %v4977
  %v5173 = vpop.f32.mrf.mxu0
  %v5174 = vadd.f32 0.0, %v5173
  %5175 = vmatmul.f32.gmra.mxu0 %v4980
  %v5176 = vpop.f32.mrf.mxu0
  %v5177 = vadd.f32 0.0, %v5176
  %5178 = vmatmul.f32.gmra.mxu0 %v4983
  %v5179 = vpop.f32.mrf.mxu0
  %v5180 = vadd.f32 0.0, %v5179
  %5181 = vmatmul.f32.gmra.mxu0 %v4986
  %v5182 = vpop.f32.mrf.mxu0
  %v5183 = vadd.f32 0.0, %v5182
  %5184 = vmatmul.f32.gmra.mxu0 %v4989
  %v5185 = vpop.f32.mrf.mxu0
  %v5186 = vadd.f32 0.0, %v5185
  %5187 = vmatmul.f32.gmra.mxu0 %v4992
  %v5188 = vpop.f32.mrf.mxu0
  %v5189 = vadd.f32 0.0, %v5188
  %5190 = vmatmul.f32.gmra.mxu0 %v4995
  %v5191 = vpop.f32.mrf.mxu0
  %v5192 = vadd.f32 0.0, %v5191
  %5193 = vmatmul.f32.gmra.mxu0 %v4998
  %v5194 = vpop.f32.mrf.mxu0
  %v5195 = vadd.f32 0.0, %v5194
  %5196 = vmatmul.f32.gmra.mxu0 %v5001
  %v5197 = vpop.f32.mrf.mxu0
  %v5198 = vadd.f32 0.0, %v5197
  %5199 = vmatmul.f32.gmra.mxu0 %v5004
  %v5200 = vpop.f32.mrf.mxu0
  %v5201 = vadd.f32 0.0, %v5200
  %5202 = vmatmul.f32.gmra.mxu0 %v5007
  %v5203 = vpop.f32.mrf.mxu0
  %v5204 = vadd.f32 0.0, %v5203
  %5205 = vmatmul.f32.gmra.mxu0 %v5010
  %v5206 = vpop.f32.mrf.mxu0
  %v5207 = vadd.f32 0.0, %v5206
  %5208 = vmatmul.f32.gmra.mxu0 %v5013
  %v5209 = vpop.f32.mrf.mxu0
  %v5210 = vadd.f32 0.0, %v5209
  %5211 = vmatmul.f32.gmra.mxu0 %v5016
  %v5212 = vpop.f32.mrf.mxu0
  %v5213 = vadd.f32 0.0, %v5212
  %5214 = vmatmul.f32.gmra.mxu0 %v5019
  %v5215 = vpop.f32.mrf.mxu0
  %v5216 = vadd.f32 0.0, %v5215
  %5217 = vmatmul.f32.gmra.mxu0 %v5022
  %v5218 = vpop.f32.mrf.mxu0
  %v5219 = vadd.f32 0.0, %v5218
  %5220 = vmatmul.f32.gmra.mxu0 %v5025
  %v5221 = vpop.f32.mrf.mxu0
  %v5222 = vadd.f32 0.0, %v5221
  %5223 = vmatmul.f32.gmra.mxu0 %v5028
  %v5224 = vpop.f32.mrf.mxu0
  %v5225 = vadd.f32 0.0, %v5224
  %5226 = vmatmul.f32.gmra.mxu0 %v5031
  %v5227 = vpop.f32.mrf.mxu0
  %v5228 = vadd.f32 0.0, %v5227
  %5229 = vmatmul.f32.gmra.mxu0 %v5034
  %v5230 = vpop.f32.mrf.mxu0
  %v5231 = vadd.f32 0.0, %v5230
  %5232 = vmatmul.f32.gmra.mxu0 %v5037
  %v5233 = vpop.f32.mrf.mxu0
  %v5234 = vadd.f32 0.0, %v5233
  %5235 = vmatmul.f32.gmra.mxu0 %v5040
  %v5236 = vpop.f32.mrf.mxu0
  %v5237 = vadd.f32 0.0, %v5236
  %5238 = vmatmul.f32.gmra.mxu0 %v5043
  %v5239 = vpop.f32.mrf.mxu0
  %v5240 = vadd.f32 0.0, %v5239
  %5241 = vmatmul.f32.gmra.mxu0 %v5046
  %v5242 = vpop.f32.mrf.mxu0
  %v5243 = vadd.f32 0.0, %v5242
  %5244 = vmatmul.f32.gmra.mxu0 %v5049
  %v5245 = vpop.f32.mrf.mxu0
  %v5246 = vadd.f32 0.0, %v5245
  %5247 = vmatmul.f32.gmra.mxu0 %v5052
  %v5248 = vpop.f32.mrf.mxu0
  %v5249 = vadd.f32 0.0, %v5248
  %5250 = vmatmul.f32.gmra.mxu0 %v5055
  %v5251 = vpop.f32.mrf.mxu0
  %v5252 = vadd.f32 0.0, %v5251
  %5253 = vmatmul.f32.gmra.mxu0 %v5058
  %v5254 = vpop.f32.mrf.mxu0
  %v5255 = vadd.f32 0.0, %v5254
  %5256 = vmatmul.f32.gmra.mxu0 %v5061
  %v5257 = vpop.f32.mrf.mxu0
  %v5258 = vadd.f32 0.0, %v5257
  %5259 = vmatmul.f32.gmra.mxu0 %v5064
  %v5260 = vpop.f32.mrf.mxu0
  %v5261 = vadd.f32 0.0, %v5260
  %5262 = vmatmul.f32.gmra.mxu0 %v5067
  %v5263 = vpop.f32.mrf.mxu0
  %v5264 = vadd.f32 0.0, %v5263
  %5265 = vmatmul.f32.gmra.mxu0 %v5070
  %v5266 = vpop.f32.mrf.mxu0
  %v5267 = vadd.f32 0.0, %v5266
  %5268 = vmatmul.f32.gmra.mxu0 %v5073
  %v5269 = vpop.f32.mrf.mxu0
  %v5270 = vadd.f32 0.0, %v5269
  %5271 = vmatmul.f32.gmra.mxu0 %v5076
  %v5272 = vpop.f32.mrf.mxu0
  %v5273 = vadd.f32 0.0, %v5272
  %5274 = vmatmul.f32.gmra.mxu0 %v5079
  %v5275 = vpop.f32.mrf.mxu0
  %v5276 = vadd.f32 0.0, %v5275
  %5277 = vmatmul.f32.gmra.mxu0 %v5082
  %v5278 = vpop.f32.mrf.mxu0
  %v5279 = vadd.f32 0.0, %v5278
  %5280 = vmatmul.f32.gmra.mxu0 %v5085
  %v5281 = vpop.f32.mrf.mxu0
  %v5282 = vadd.f32 0.0, %v5281
  %5283 = vmatmul.f32.gmra.mxu0 %v5088
  %v5284 = vpop.f32.mrf.mxu0
  %v5285 = vadd.f32 0.0, %v5284
  %5286 = vmatmul.f32.gmra.mxu0 %v5091
  %v5287 = vpop.f32.mrf.mxu0
  %v5288 = vadd.f32 0.0, %v5287
  %5289 = vmatmul.f32.gmra.mxu0 %v5094
  %v5290 = vpop.f32.mrf.mxu0
  %v5291 = vadd.f32 0.0, %v5290
  %5292 = vmatmul.f32.gmra.mxu0 %v5097
  %v5293 = vpop.f32.mrf.mxu0
  %v5294 = vadd.f32 0.0, %v5293
  %5295 = vmatmul.f32.gmra.mxu0 %v5100
  %v5296 = vpop.f32.mrf.mxu0
  %v5297 = vadd.f32 0.0, %v5296
  %5298 = vmatmul.f32.gmra.mxu0 %v5103
  %v5299 = vpop.f32.mrf.mxu0
  %v5300 = vadd.f32 0.0, %v5299
  %5301 = vmatmul.f32.gmra.mxu0 %v5106
  %v5302 = vpop.f32.mrf.mxu0
  %v5303 = vadd.f32 0.0, %v5302
  %5304 = vmatmul.f32.gmra.mxu0 %v5109
  %v5305 = vpop.f32.mrf.mxu0
  %v5306 = vadd.f32 0.0, %v5305
  %5307 = vmatmul.f32.gmra.mxu0 %v5112
  %v5308 = vpop.f32.mrf.mxu0
  %v5309 = vadd.f32 0.0, %v5308
  %5310 = vmatmul.f32.gmra.mxu0 %v5115
  %v5311 = vpop.f32.mrf.mxu0
  %v5312 = vadd.f32 0.0, %v5311
  %5313 = vmatmul.f32.gmra.mxu0 %v5118
  %v5314 = vpop.f32.mrf.mxu0
  %v5315 = vadd.f32 0.0, %v5314
  %5316 = vmatmul.f32.gmra.mxu0 %v5121
  %v5317 = vpop.f32.mrf.mxu0
  %v5318 = vadd.f32 0.0, %v5317
  %5319 = vmatmul.f32.gmra.mxu0 %v5124
  %v5320 = vpop.f32.mrf.mxu0
  %v5321 = vadd.f32 0.0, %v5320
  %5322 = vdwg.mxu0
  %5323 = vmatpush.msra.mxu0 0.0
  %5324 = vmatpush.msra.mxu0 0.0
  %5325 = vmatpush.msra.mxu0 0.0
  %5326 = vmatpush.msra.mxu0 0.0
  %5327 = vmatpush.msra.mxu0 0.0
  %5328 = vmatpush.msra.mxu0 0.0
  %5329 = vmatpush.msra.mxu0 0.0
  %5330 = vmatpush.msra.mxu0 0.0
  %5331 = vmatpush.msra.mxu0 0.0
  %5332 = vmatpush.msra.mxu0 0.0
  %5333 = vmatpush.msra.mxu0 %v4937
  %5334 = vmatpush.msra.mxu0 %v4936
  %5335 = vmatpush.msra.mxu0 %v4935
  %5336 = vmatpush.msra.mxu0 %v4934
  %5337 = vmatpush.msra.mxu0 %v4933
  %5338 = vmatpush.msra.mxu0 %v4932
  %5339 = vmatmul.f32.gmra.mxu0 %v4947
  %v5340 = vpop.f32.mrf.mxu0
  %v5341 = vadd.f32 %v5147, %v5340
  %5342 = vmatmul.f32.gmra.mxu0 %v4950
  %v5343 = vpop.f32.mrf.mxu0
  %v5344 = vadd.f32 %v5150, %v5343
  %5345 = vmatmul.f32.gmra.mxu0 %v4953
  %v5346 = vpop.f32.mrf.mxu0
  %v5347 = vadd.f32 %v5153, %v5346
  %5348 = vmatmul.f32.gmra.mxu0 %v4956
  %v5349 = vpop.f32.mrf.mxu0
  %v5350 = vadd.f32 %v5156, %v5349
  %5351 = vmatmul.f32.gmra.mxu0 %v4959
  %v5352 = vpop.f32.mrf.mxu0
  %v5353 = vadd.f32 %v5159, %v5352
  %5354 = vmatmul.f32.gmra.mxu0 %v4962
  %v5355 = vpop.f32.mrf.mxu0
  %v5356 = vadd.f32 %v5162, %v5355
  %5357 = vmatmul.f32.gmra.mxu0 %v4965
  %v5358 = vpop.f32.mrf.mxu0
  %v5359 = vadd.f32 %v5165, %v5358
  %5360 = vmatmul.f32.gmra.mxu0 %v4968
  %v5361 = vpop.f32.mrf.mxu0
  %v5362 = vadd.f32 %v5168, %v5361
  %5363 = vmatmul.f32.gmra.mxu0 %v4971
  %v5364 = vpop.f32.mrf.mxu0
  %v5365 = vadd.f32 %v5171, %v5364
  %5366 = vmatmul.f32.gmra.mxu0 %v4974
  %v5367 = vpop.f32.mrf.mxu0
  %v5368 = vadd.f32 %v5174, %v5367
  %5369 = vmatmul.f32.gmra.mxu0 %v4977
  %v5370 = vpop.f32.mrf.mxu0
  %v5371 = vadd.f32 %v5177, %v5370
  %5372 = vmatmul.f32.gmra.mxu0 %v4980
  %v5373 = vpop.f32.mrf.mxu0
  %v5374 = vadd.f32 %v5180, %v5373
  %5375 = vmatmul.f32.gmra.mxu0 %v4983
  %v5376 = vpop.f32.mrf.mxu0
  %v5377 = vadd.f32 %v5183, %v5376
  %5378 = vmatmul.f32.gmra.mxu0 %v4986
  %v5379 = vpop.f32.mrf.mxu0
  %v5380 = vadd.f32 %v5186, %v5379
  %5381 = vmatmul.f32.gmra.mxu0 %v4989
  %v5382 = vpop.f32.mrf.mxu0
  %v5383 = vadd.f32 %v5189, %v5382
  %5384 = vmatmul.f32.gmra.mxu0 %v4992
  %v5385 = vpop.f32.mrf.mxu0
  %v5386 = vadd.f32 %v5192, %v5385
  %5387 = vmatmul.f32.gmra.mxu0 %v4995
  %v5388 = vpop.f32.mrf.mxu0
  %v5389 = vadd.f32 %v5195, %v5388
  %5390 = vmatmul.f32.gmra.mxu0 %v4998
  %v5391 = vpop.f32.mrf.mxu0
  %v5392 = vadd.f32 %v5198, %v5391
  %5393 = vmatmul.f32.gmra.mxu0 %v5001
  %v5394 = vpop.f32.mrf.mxu0
  %v5395 = vadd.f32 %v5201, %v5394
  %5396 = vmatmul.f32.gmra.mxu0 %v5004
  %v5397 = vpop.f32.mrf.mxu0
  %v5398 = vadd.f32 %v5204, %v5397
  %5399 = vmatmul.f32.gmra.mxu0 %v5007
  %v5400 = vpop.f32.mrf.mxu0
  %v5401 = vadd.f32 %v5207, %v5400
  %5402 = vmatmul.f32.gmra.mxu0 %v5010
  %v5403 = vpop.f32.mrf.mxu0
  %v5404 = vadd.f32 %v5210, %v5403
  %5405 = vmatmul.f32.gmra.mxu0 %v5013
  %v5406 = vpop.f32.mrf.mxu0
  %v5407 = vadd.f32 %v5213, %v5406
  %5408 = vmatmul.f32.gmra.mxu0 %v5016
  %v5409 = vpop.f32.mrf.mxu0
  %v5410 = vadd.f32 %v5216, %v5409
  %5411 = vmatmul.f32.gmra.mxu0 %v5019
  %v5412 = vpop.f32.mrf.mxu0
  %v5413 = vadd.f32 %v5219, %v5412
  %5414 = vmatmul.f32.gmra.mxu0 %v5022
  %v5415 = vpop.f32.mrf.mxu0
  %v5416 = vadd.f32 %v5222, %v5415
  %5417 = vmatmul.f32.gmra.mxu0 %v5025
  %v5418 = vpop.f32.mrf.mxu0
  %v5419 = vadd.f32 %v5225, %v5418
  %5420 = vmatmul.f32.gmra.mxu0 %v5028
  %v5421 = vpop.f32.mrf.mxu0
  %v5422 = vadd.f32 %v5228, %v5421
  %5423 = vmatmul.f32.gmra.mxu0 %v5031
  %v5424 = vpop.f32.mrf.mxu0
  %v5425 = vadd.f32 %v5231, %v5424
  %5426 = vmatmul.f32.gmra.mxu0 %v5034
  %v5427 = vpop.f32.mrf.mxu0
  %v5428 = vadd.f32 %v5234, %v5427
  %5429 = vmatmul.f32.gmra.mxu0 %v5037
  %v5430 = vpop.f32.mrf.mxu0
  %v5431 = vadd.f32 %v5237, %v5430
  %5432 = vmatmul.f32.gmra.mxu0 %v5040
  %v5433 = vpop.f32.mrf.mxu0
  %v5434 = vadd.f32 %v5240, %v5433
  %5435 = vmatmul.f32.gmra.mxu0 %v5043
  %v5436 = vpop.f32.mrf.mxu0
  %v5437 = vadd.f32 %v5243, %v5436
  %5438 = vmatmul.f32.gmra.mxu0 %v5046
  %v5439 = vpop.f32.mrf.mxu0
  %v5440 = vadd.f32 %v5246, %v5439
  %5441 = vmatmul.f32.gmra.mxu0 %v5049
  %v5442 = vpop.f32.mrf.mxu0
  %v5443 = vadd.f32 %v5249, %v5442
  %5444 = vmatmul.f32.gmra.mxu0 %v5052
  %v5445 = vpop.f32.mrf.mxu0
  %v5446 = vadd.f32 %v5252, %v5445
  %5447 = vmatmul.f32.gmra.mxu0 %v5055
  %v5448 = vpop.f32.mrf.mxu0
  %v5449 = vadd.f32 %v5255, %v5448
  %5450 = vmatmul.f32.gmra.mxu0 %v5058
  %v5451 = vpop.f32.mrf.mxu0
  %v5452 = vadd.f32 %v5258, %v5451
  %5453 = vmatmul.f32.gmra.mxu0 %v5061
  %v5454 = vpop.f32.mrf.mxu0
  %v5455 = vadd.f32 %v5261, %v5454
  %5456 = vmatmul.f32.gmra.mxu0 %v5064
  %v5457 = vpop.f32.mrf.mxu0
  %v5458 = vadd.f32 %v5264, %v5457
  %5459 = vmatmul.f32.gmra.mxu0 %v5067
  %v5460 = vpop.f32.mrf.mxu0
  %v5461 = vadd.f32 %v5267, %v5460
  %5462 = vmatmul.f32.gmra.mxu0 %v5070
  %v5463 = vpop.f32.mrf.mxu0
  %v5464 = vadd.f32 %v5270, %v5463
  %5465 = vmatmul.f32.gmra.mxu0 %v5073
  %v5466 = vpop.f32.mrf.mxu0
  %v5467 = vadd.f32 %v5273, %v5466
  %5468 = vmatmul.f32.gmra.mxu0 %v5076
  %v5469 = vpop.f32.mrf.mxu0
  %v5470 = vadd.f32 %v5276, %v5469
  %5471 = vmatmul.f32.gmra.mxu0 %v5079
  %v5472 = vpop.f32.mrf.mxu0
  %v5473 = vadd.f32 %v5279, %v5472
  %5474 = vmatmul.f32.gmra.mxu0 %v5082
  %v5475 = vpop.f32.mrf.mxu0
  %v5476 = vadd.f32 %v5282, %v5475
  %5477 = vmatmul.f32.gmra.mxu0 %v5085
  %v5478 = vpop.f32.mrf.mxu0
  %v5479 = vadd.f32 %v5285, %v5478
  %5480 = vmatmul.f32.gmra.mxu0 %v5088
  %v5481 = vpop.f32.mrf.mxu0
  %v5482 = vadd.f32 %v5288, %v5481
  %5483 = vmatmul.f32.gmra.mxu0 %v5091
  %v5484 = vpop.f32.mrf.mxu0
  %v5485 = vadd.f32 %v5291, %v5484
  %5486 = vmatmul.f32.gmra.mxu0 %v5094
  %v5487 = vpop.f32.mrf.mxu0
  %v5488 = vadd.f32 %v5294, %v5487
  %5489 = vmatmul.f32.gmra.mxu0 %v5097
  %v5490 = vpop.f32.mrf.mxu0
  %v5491 = vadd.f32 %v5297, %v5490
  %5492 = vmatmul.f32.gmra.mxu0 %v5100
  %v5493 = vpop.f32.mrf.mxu0
  %v5494 = vadd.f32 %v5300, %v5493
  %5495 = vmatmul.f32.gmra.mxu0 %v5103
  %v5496 = vpop.f32.mrf.mxu0
  %v5497 = vadd.f32 %v5303, %v5496
  %5498 = vmatmul.f32.gmra.mxu0 %v5106
  %v5499 = vpop.f32.mrf.mxu0
  %v5500 = vadd.f32 %v5306, %v5499
  %5501 = vmatmul.f32.gmra.mxu0 %v5109
  %v5502 = vpop.f32.mrf.mxu0
  %v5503 = vadd.f32 %v5309, %v5502
  %5504 = vmatmul.f32.gmra.mxu0 %v5112
  %v5505 = vpop.f32.mrf.mxu0
  %v5506 = vadd.f32 %v5312, %v5505
  %5507 = vmatmul.f32.gmra.mxu0 %v5115
  %v5508 = vpop.f32.mrf.mxu0
  %v5509 = vadd.f32 %v5315, %v5508
  %5510 = vmatmul.f32.gmra.mxu0 %v5118
  %v5511 = vpop.f32.mrf.mxu0
  %v5512 = vadd.f32 %v5318, %v5511
  %5513 = vmatmul.f32.gmra.mxu0 %v5121
  %v5514 = vpop.f32.mrf.mxu0
  %v5515 = vadd.f32 %v5321, %v5514
  %5516 = vmatmul.f32.gmra.mxu0 %v5124
  %v5517 = vpop.f32.mrf.mxu0
  %v5518 = vadd.f32 %v5144, %v5517
  %5519 = vdwg.mxu0
  %s5520 = scalar_lea.vmem %s8, 96
  %v5521 = vld [vmem:[%s5520] sm:$0xff]
  %v5522 = vld [vmem:[%s5520 + $0x8] sm:$0xff]
  %v5523 = vld [vmem:[%s5520 + $0x10] sm:$0xff]
  %v5524 = vld [vmem:[%s5520 + $0x18] sm:$0xff]
  %v5525 = vld [vmem:[%s5520 + $0x20] sm:$0xff]
  %v5526 = vld [vmem:[%s5520 + $0x28] sm:$0xff]
  %5527 = vmatpush.msra.mxu0 0.0
  %5528 = vmatpush.msra.mxu0 0.0
  %5529 = vmatpush.msra.mxu0 0.0
  %5530 = vmatpush.msra.mxu0 0.0
  %5531 = vmatpush.msra.mxu0 0.0
  %5532 = vmatpush.msra.mxu0 0.0
  %5533 = vmatpush.msra.mxu0 0.0
  %5534 = vmatpush.msra.mxu0 0.0
  %5535 = vmatpush.msra.mxu0 0.0
  %5536 = vmatpush.msra.mxu0 0.0
  %5537 = vmatpush.msra.mxu0 %v5526
  %5538 = vmatpush.msra.mxu0 %v5525
  %5539 = vmatpush.msra.mxu0 %v5524
  %5540 = vmatpush.msra.mxu0 %v5523
  %5541 = vmatpush.msra.mxu0 %v5522
  %5542 = vmatpush.msra.mxu0 %v5521
  %5543 = vmatmul.f32.gmra.mxu0 %v4947
  %v5544 = vpop.f32.mrf.mxu0
  %v5545 = vadd.f32 0.0, %v5544
  %5546 = vmatmul.f32.gmra.mxu0 %v4950
  %v5547 = vpop.f32.mrf.mxu0
  %v5548 = vadd.f32 0.0, %v5547
  %5549 = vmatmul.f32.gmra.mxu0 %v4953
  %v5550 = vpop.f32.mrf.mxu0
  %v5551 = vadd.f32 0.0, %v5550
  %5552 = vmatmul.f32.gmra.mxu0 %v4956
  %v5553 = vpop.f32.mrf.mxu0
  %v5554 = vadd.f32 0.0, %v5553
  %5555 = vmatmul.f32.gmra.mxu0 %v4959
  %v5556 = vpop.f32.mrf.mxu0
  %v5557 = vadd.f32 0.0, %v5556
  %5558 = vmatmul.f32.gmra.mxu0 %v4962
  %v5559 = vpop.f32.mrf.mxu0
  %v5560 = vadd.f32 0.0, %v5559
  %5561 = vmatmul.f32.gmra.mxu0 %v4965
  %v5562 = vpop.f32.mrf.mxu0
  %v5563 = vadd.f32 0.0, %v5562
  %5564 = vmatmul.f32.gmra.mxu0 %v4968
  %v5565 = vpop.f32.mrf.mxu0
  %v5566 = vadd.f32 0.0, %v5565
  %5567 = vmatmul.f32.gmra.mxu0 %v4971
  %v5568 = vpop.f32.mrf.mxu0
  %v5569 = vadd.f32 0.0, %v5568
  %5570 = vmatmul.f32.gmra.mxu0 %v4974
  %v5571 = vpop.f32.mrf.mxu0
  %v5572 = vadd.f32 0.0, %v5571
  %5573 = vmatmul.f32.gmra.mxu0 %v4977
  %v5574 = vpop.f32.mrf.mxu0
  %v5575 = vadd.f32 0.0, %v5574
  %5576 = vmatmul.f32.gmra.mxu0 %v4980
  %v5577 = vpop.f32.mrf.mxu0
  %v5578 = vadd.f32 0.0, %v5577
  %5579 = vmatmul.f32.gmra.mxu0 %v4983
  %v5580 = vpop.f32.mrf.mxu0
  %v5581 = vadd.f32 0.0, %v5580
  %5582 = vmatmul.f32.gmra.mxu0 %v4986
  %v5583 = vpop.f32.mrf.mxu0
  %v5584 = vadd.f32 0.0, %v5583
  %5585 = vmatmul.f32.gmra.mxu0 %v4989
  %v5586 = vpop.f32.mrf.mxu0
  %v5587 = vadd.f32 0.0, %v5586
  %5588 = vmatmul.f32.gmra.mxu0 %v4992
  %v5589 = vpop.f32.mrf.mxu0
  %v5590 = vadd.f32 0.0, %v5589
  %5591 = vmatmul.f32.gmra.mxu0 %v4995
  %v5592 = vpop.f32.mrf.mxu0
  %v5593 = vadd.f32 0.0, %v5592
  %5594 = vmatmul.f32.gmra.mxu0 %v4998
  %v5595 = vpop.f32.mrf.mxu0
  %v5596 = vadd.f32 0.0, %v5595
  %5597 = vmatmul.f32.gmra.mxu0 %v5001
  %v5598 = vpop.f32.mrf.mxu0
  %v5599 = vadd.f32 0.0, %v5598
  %5600 = vmatmul.f32.gmra.mxu0 %v5004
  %v5601 = vpop.f32.mrf.mxu0
  %v5602 = vadd.f32 0.0, %v5601
  %5603 = vmatmul.f32.gmra.mxu0 %v5007
  %v5604 = vpop.f32.mrf.mxu0
  %v5605 = vadd.f32 0.0, %v5604
  %5606 = vmatmul.f32.gmra.mxu0 %v5010
  %v5607 = vpop.f32.mrf.mxu0
  %v5608 = vadd.f32 0.0, %v5607
  %5609 = vmatmul.f32.gmra.mxu0 %v5013
  %v5610 = vpop.f32.mrf.mxu0
  %v5611 = vadd.f32 0.0, %v5610
  %5612 = vmatmul.f32.gmra.mxu0 %v5016
  %v5613 = vpop.f32.mrf.mxu0
  %v5614 = vadd.f32 0.0, %v5613
  %5615 = vmatmul.f32.gmra.mxu0 %v5019
  %v5616 = vpop.f32.mrf.mxu0
  %v5617 = vadd.f32 0.0, %v5616
  %5618 = vmatmul.f32.gmra.mxu0 %v5022
  %v5619 = vpop.f32.mrf.mxu0
  %v5620 = vadd.f32 0.0, %v5619
  %5621 = vmatmul.f32.gmra.mxu0 %v5025
  %v5622 = vpop.f32.mrf.mxu0
  %v5623 = vadd.f32 0.0, %v5622
  %5624 = vmatmul.f32.gmra.mxu0 %v5028
  %v5625 = vpop.f32.mrf.mxu0
  %v5626 = vadd.f32 0.0, %v5625
  %5627 = vmatmul.f32.gmra.mxu0 %v5031
  %v5628 = vpop.f32.mrf.mxu0
  %v5629 = vadd.f32 0.0, %v5628
  %5630 = vmatmul.f32.gmra.mxu0 %v5034
  %v5631 = vpop.f32.mrf.mxu0
  %v5632 = vadd.f32 0.0, %v5631
  %5633 = vmatmul.f32.gmra.mxu0 %v5037
  %v5634 = vpop.f32.mrf.mxu0
  %v5635 = vadd.f32 0.0, %v5634
  %5636 = vmatmul.f32.gmra.mxu0 %v5040
  %v5637 = vpop.f32.mrf.mxu0
  %v5638 = vadd.f32 0.0, %v5637
  %5639 = vmatmul.f32.gmra.mxu0 %v5043
  %v5640 = vpop.f32.mrf.mxu0
  %v5641 = vadd.f32 0.0, %v5640
  %5642 = vmatmul.f32.gmra.mxu0 %v5046
  %v5643 = vpop.f32.mrf.mxu0
  %v5644 = vadd.f32 0.0, %v5643
  %5645 = vmatmul.f32.gmra.mxu0 %v5049
  %v5646 = vpop.f32.mrf.mxu0
  %v5647 = vadd.f32 0.0, %v5646
  %5648 = vmatmul.f32.gmra.mxu0 %v5052
  %v5649 = vpop.f32.mrf.mxu0
  %v5650 = vadd.f32 0.0, %v5649
  %5651 = vmatmul.f32.gmra.mxu0 %v5055
  %v5652 = vpop.f32.mrf.mxu0
  %v5653 = vadd.f32 0.0, %v5652
  %5654 = vmatmul.f32.gmra.mxu0 %v5058
  %v5655 = vpop.f32.mrf.mxu0
  %v5656 = vadd.f32 0.0, %v5655
  %5657 = vmatmul.f32.gmra.mxu0 %v5061
  %v5658 = vpop.f32.mrf.mxu0
  %v5659 = vadd.f32 0.0, %v5658
  %5660 = vmatmul.f32.gmra.mxu0 %v5064
  %v5661 = vpop.f32.mrf.mxu0
  %v5662 = vadd.f32 0.0, %v5661
  %5663 = vmatmul.f32.gmra.mxu0 %v5067
  %v5664 = vpop.f32.mrf.mxu0
  %v5665 = vadd.f32 0.0, %v5664
  %5666 = vmatmul.f32.gmra.mxu0 %v5070
  %v5667 = vpop.f32.mrf.mxu0
  %v5668 = vadd.f32 0.0, %v5667
  %5669 = vmatmul.f32.gmra.mxu0 %v5073
  %v5670 = vpop.f32.mrf.mxu0
  %v5671 = vadd.f32 0.0, %v5670
  %5672 = vmatmul.f32.gmra.mxu0 %v5076
  %v5673 = vpop.f32.mrf.mxu0
  %v5674 = vadd.f32 0.0, %v5673
  %5675 = vmatmul.f32.gmra.mxu0 %v5079
  %v5676 = vpop.f32.mrf.mxu0
  %v5677 = vadd.f32 0.0, %v5676
  %5678 = vmatmul.f32.gmra.mxu0 %v5082
  %v5679 = vpop.f32.mrf.mxu0
  %v5680 = vadd.f32 0.0, %v5679
  %5681 = vmatmul.f32.gmra.mxu0 %v5085
  %v5682 = vpop.f32.mrf.mxu0
  %v5683 = vadd.f32 0.0, %v5682
  %5684 = vmatmul.f32.gmra.mxu0 %v5088
  %v5685 = vpop.f32.mrf.mxu0
  %v5686 = vadd.f32 0.0, %v5685
  %5687 = vmatmul.f32.gmra.mxu0 %v5091
  %v5688 = vpop.f32.mrf.mxu0
  %v5689 = vadd.f32 0.0, %v5688
  %5690 = vmatmul.f32.gmra.mxu0 %v5094
  %v5691 = vpop.f32.mrf.mxu0
  %v5692 = vadd.f32 0.0, %v5691
  %5693 = vmatmul.f32.gmra.mxu0 %v5097
  %v5694 = vpop.f32.mrf.mxu0
  %v5695 = vadd.f32 0.0, %v5694
  %5696 = vmatmul.f32.gmra.mxu0 %v5100
  %v5697 = vpop.f32.mrf.mxu0
  %v5698 = vadd.f32 0.0, %v5697
  %5699 = vmatmul.f32.gmra.mxu0 %v5103
  %v5700 = vpop.f32.mrf.mxu0
  %v5701 = vadd.f32 0.0, %v5700
  %5702 = vmatmul.f32.gmra.mxu0 %v5106
  %v5703 = vpop.f32.mrf.mxu0
  %v5704 = vadd.f32 0.0, %v5703
  %5705 = vmatmul.f32.gmra.mxu0 %v5109
  %v5706 = vpop.f32.mrf.mxu0
  %v5707 = vadd.f32 0.0, %v5706
  %5708 = vmatmul.f32.gmra.mxu0 %v5112
  %v5709 = vpop.f32.mrf.mxu0
  %v5710 = vadd.f32 0.0, %v5709
  %5711 = vmatmul.f32.gmra.mxu0 %v5115
  %v5712 = vpop.f32.mrf.mxu0
  %v5713 = vadd.f32 0.0, %v5712
  %5714 = vmatmul.f32.gmra.mxu0 %v5118
  %v5715 = vpop.f32.mrf.mxu0
  %v5716 = vadd.f32 0.0, %v5715
  %5717 = vmatmul.f32.gmra.mxu0 %v5121
  %v5718 = vpop.f32.mrf.mxu0
  %v5719 = vadd.f32 0.0, %v5718
  %5720 = vmatmul.f32.gmra.mxu0 %v5124
  %v5721 = vpop.f32.mrf.mxu0
  %v5722 = vadd.f32 0.0, %v5721
  %5723 = vdwg.mxu0
  %v5724 = vadd.f32 %v5341, %v5722
  %v5725 = vadd.f32 %v5344, %v5545
  %v5726 = vadd.f32 %v5347, %v5548
  %v5727 = vadd.f32 %v5350, %v5551
  %v5728 = vadd.f32 %v5353, %v5554
  %v5729 = vadd.f32 %v5356, %v5557
  %v5730 = vadd.f32 %v5359, %v5560
  %v5731 = vadd.f32 %v5362, %v5563
  %v5732 = vadd.f32 %v5365, %v5566
  %v5733 = vadd.f32 %v5368, %v5569
  %v5734 = vadd.f32 %v5371, %v5572
  %v5735 = vadd.f32 %v5374, %v5575
  %v5736 = vadd.f32 %v5377, %v5578
  %v5737 = vadd.f32 %v5380, %v5581
  %v5738 = vadd.f32 %v5383, %v5584
  %v5739 = vadd.f32 %v5386, %v5587
  %v5740 = vadd.f32 %v5389, %v5590
  %v5741 = vadd.f32 %v5392, %v5593
  %v5742 = vadd.f32 %v5395, %v5596
  %v5743 = vadd.f32 %v5398, %v5599
  %v5744 = vadd.f32 %v5401, %v5602
  %v5745 = vadd.f32 %v5404, %v5605
  %v5746 = vadd.f32 %v5407, %v5608
  %v5747 = vadd.f32 %v5410, %v5611
  %v5748 = vadd.f32 %v5413, %v5614
  %v5749 = vadd.f32 %v5416, %v5617
  %v5750 = vadd.f32 %v5419, %v5620
  %v5751 = vadd.f32 %v5422, %v5623
  %v5752 = vadd.f32 %v5425, %v5626
  %v5753 = vadd.f32 %v5428, %v5629
  %v5754 = vadd.f32 %v5431, %v5632
  %v5755 = vadd.f32 %v5434, %v5635
  %v5756 = vadd.f32 %v5437, %v5638
  %v5757 = vadd.f32 %v5440, %v5641
  %v5758 = vadd.f32 %v5443, %v5644
  %v5759 = vadd.f32 %v5446, %v5647
  %v5760 = vadd.f32 %v5449, %v5650
  %v5761 = vadd.f32 %v5452, %v5653
  %v5762 = vadd.f32 %v5455, %v5656
  %v5763 = vadd.f32 %v5458, %v5659
  %v5764 = vadd.f32 %v5461, %v5662
  %v5765 = vadd.f32 %v5464, %v5665
  %v5766 = vadd.f32 %v5467, %v5668
  %v5767 = vadd.f32 %v5470, %v5671
  %v5768 = vadd.f32 %v5473, %v5674
  %v5769 = vadd.f32 %v5476, %v5677
  %v5770 = vadd.f32 %v5479, %v5680
  %v5771 = vadd.f32 %v5482, %v5683
  %v5772 = vadd.f32 %v5485, %v5686
  %v5773 = vadd.f32 %v5488, %v5689
  %v5774 = vadd.f32 %v5491, %v5692
  %v5775 = vadd.f32 %v5494, %v5695
  %v5776 = vadd.f32 %v5497, %v5698
  %v5777 = vadd.f32 %v5500, %v5701
  %v5778 = vadd.f32 %v5503, %v5704
  %v5779 = vadd.f32 %v5506, %v5707
  %v5780 = vadd.f32 %v5509, %v5710
  %v5781 = vadd.f32 %v5512, %v5713
  %v5782 = vadd.f32 %v5515, %v5716
  %v5783 = vadd.f32 %v5518, %v5719
  %v5784 = vld [vmem:[%s10] sm:$0x1]
  %v5786 = vperm.slane %v5784, 0
  %v5788 = vadd.f32 %v5724, %v5786
  %v5789 = vadd.f32 %v5725, %v5786
  %v5790 = vadd.f32 %v5726, %v5786
  %v5791 = vadd.f32 %v5727, %v5786
  %v5792 = vadd.f32 %v5728, %v5786
  %v5793 = vadd.f32 %v5729, %v5786
  %v5794 = vadd.f32 %v5730, %v5786
  %v5795 = vadd.f32 %v5731, %v5786
  %v5796 = vadd.f32 %v5732, %v5786
  %v5797 = vadd.f32 %v5733, %v5786
  %v5798 = vadd.f32 %v5734, %v5786
  %v5799 = vadd.f32 %v5735, %v5786
  %v5800 = vadd.f32 %v5736, %v5786
  %v5801 = vadd.f32 %v5737, %v5786
  %v5802 = vadd.f32 %v5738, %v5786
  %v5803 = vadd.f32 %v5739, %v5786
  %v5804 = vadd.f32 %v5740, %v5786
  %v5805 = vadd.f32 %v5741, %v5786
  %v5806 = vadd.f32 %v5742, %v5786
  %v5807 = vadd.f32 %v5743, %v5786
  %v5808 = vadd.f32 %v5744, %v5786
  %v5809 = vadd.f32 %v5745, %v5786
  %v5810 = vadd.f32 %v5746, %v5786
  %v5811 = vadd.f32 %v5747, %v5786
  %v5812 = vadd.f32 %v5748, %v5786
  %v5813 = vadd.f32 %v5749, %v5786
  %v5814 = vadd.f32 %v5750, %v5786
  %v5815 = vadd.f32 %v5751, %v5786
  %v5816 = vadd.f32 %v5752, %v5786
  %v5817 = vadd.f32 %v5753, %v5786
  %v5818 = vadd.f32 %v5754, %v5786
  %v5819 = vadd.f32 %v5755, %v5786
  %v5820 = vadd.f32 %v5756, %v5786
  %v5821 = vadd.f32 %v5757, %v5786
  %v5822 = vadd.f32 %v5758, %v5786
  %v5823 = vadd.f32 %v5759, %v5786
  %v5824 = vadd.f32 %v5760, %v5786
  %v5825 = vadd.f32 %v5761, %v5786
  %v5826 = vadd.f32 %v5762, %v5786
  %v5827 = vadd.f32 %v5763, %v5786
  %v5828 = vadd.f32 %v5764, %v5786
  %v5829 = vadd.f32 %v5765, %v5786
  %v5830 = vadd.f32 %v5766, %v5786
  %v5831 = vadd.f32 %v5767, %v5786
  %v5832 = vadd.f32 %v5768, %v5786
  %v5833 = vadd.f32 %v5769, %v5786
  %v5834 = vadd.f32 %v5770, %v5786
  %v5835 = vadd.f32 %v5771, %v5786
  %v5836 = vadd.f32 %v5772, %v5786
  %v5837 = vadd.f32 %v5773, %v5786
  %v5838 = vadd.f32 %v5774, %v5786
  %v5839 = vadd.f32 %v5775, %v5786
  %v5840 = vadd.f32 %v5776, %v5786
  %v5841 = vadd.f32 %v5777, %v5786
  %v5842 = vadd.f32 %v5778, %v5786
  %v5843 = vadd.f32 %v5779, %v5786
  %v5844 = vadd.f32 %v5780, %v5786
  %v5845 = vadd.f32 %v5781, %v5786
  %v5846 = vadd.f32 %v5782, %v5786
  %v5847 = vadd.f32 %v5783, %v5786
  %v5848 = vmax.f32 %v5788, 0.0
  %v5849 = vmax.f32 %v5789, 0.0
  %v5850 = vmax.f32 %v5790, 0.0
  %v5851 = vmax.f32 %v5791, 0.0
  %v5852 = vmax.f32 %v5792, 0.0
  %v5853 = vmax.f32 %v5793, 0.0
  %v5854 = vmax.f32 %v5794, 0.0
  %v5855 = vmax.f32 %v5795, 0.0
  %v5856 = vmax.f32 %v5796, 0.0
  %v5857 = vmax.f32 %v5797, 0.0
  %v5858 = vmax.f32 %v5798, 0.0
  %v5859 = vmax.f32 %v5799, 0.0
  %v5860 = vmax.f32 %v5800, 0.0
  %v5861 = vmax.f32 %v5801, 0.0
  %v5862 = vmax.f32 %v5802, 0.0
  %v5863 = vmax.f32 %v5803, 0.0
  %v5864 = vmax.f32 %v5804, 0.0
  %v5865 = vmax.f32 %v5805, 0.0
  %v5866 = vmax.f32 %v5806, 0.0
  %v5867 = vmax.f32 %v5807, 0.0
  %v5868 = vmax.f32 %v5808, 0.0
  %v5869 = vmax.f32 %v5809, 0.0
  %v5870 = vmax.f32 %v5810, 0.0
  %v5871 = vmax.f32 %v5811, 0.0
  %v5872 = vmax.f32 %v5812, 0.0
  %v5873 = vmax.f32 %v5813, 0.0
  %v5874 = vmax.f32 %v5814, 0.0
  %v5875 = vmax.f32 %v5815, 0.0
  %v5876 = vmax.f32 %v5816, 0.0
  %v5877 = vmax.f32 %v5817, 0.0
  %v5878 = vmax.f32 %v5818, 0.0
  %v5879 = vmax.f32 %v5819, 0.0
  %v5880 = vmax.f32 %v5820, 0.0
  %v5881 = vmax.f32 %v5821, 0.0
  %v5882 = vmax.f32 %v5822, 0.0
  %v5883 = vmax.f32 %v5823, 0.0
  %v5884 = vmax.f32 %v5824, 0.0
  %v5885 = vmax.f32 %v5825, 0.0
  %v5886 = vmax.f32 %v5826, 0.0
  %v5887 = vmax.f32 %v5827, 0.0
  %v5888 = vmax.f32 %v5828, 0.0
  %v5889 = vmax.f32 %v5829, 0.0
  %v5890 = vmax.f32 %v5830, 0.0
  %v5891 = vmax.f32 %v5831, 0.0
  %v5892 = vmax.f32 %v5832, 0.0
  %v5893 = vmax.f32 %v5833, 0.0
  %v5894 = vmax.f32 %v5834, 0.0
  %v5895 = vmax.f32 %v5835, 0.0
  %v5896 = vmax.f32 %v5836, 0.0
  %v5897 = vmax.f32 %v5837, 0.0
  %v5898 = vmax.f32 %v5838, 0.0
  %v5899 = vmax.f32 %v5839, 0.0
  %v5900 = vmax.f32 %v5840, 0.0
  %v5901 = vmax.f32 %v5841, 0.0
  %v5902 = vmax.f32 %v5842, 0.0
  %v5903 = vmax.f32 %v5843, 0.0
  %v5904 = vmax.f32 %v5844, 0.0
  %v5905 = vmax.f32 %v5845, 0.0
  %v5906 = vmax.f32 %v5846, 0.0
  %v5907 = vmax.f32 %v5847, 0.0
  %v5908 = vld [vmem:[#allocation2] sm:$0x1]
  %v5909 = vmin.f32 %v5788, 0.0
  %v5910 = vmin.f32 %v5789, 0.0
  %v5911 = vmin.f32 %v5790, 0.0
  %v5912 = vmin.f32 %v5791, 0.0
  %v5913 = vmin.f32 %v5792, 0.0
  %v5914 = vmin.f32 %v5793, 0.0
  %v5915 = vmin.f32 %v5794, 0.0
  %v5916 = vmin.f32 %v5795, 0.0
  %v5917 = vmin.f32 %v5796, 0.0
  %v5918 = vmin.f32 %v5797, 0.0
  %v5919 = vmin.f32 %v5798, 0.0
  %v5920 = vmin.f32 %v5799, 0.0
  %v5921 = vmin.f32 %v5800, 0.0
  %v5922 = vmin.f32 %v5801, 0.0
  %v5923 = vmin.f32 %v5802, 0.0
  %v5924 = vmin.f32 %v5803, 0.0
  %v5925 = vmin.f32 %v5804, 0.0
  %v5926 = vmin.f32 %v5805, 0.0
  %v5927 = vmin.f32 %v5806, 0.0
  %v5928 = vmin.f32 %v5807, 0.0
  %v5929 = vmin.f32 %v5808, 0.0
  %v5930 = vmin.f32 %v5809, 0.0
  %v5931 = vmin.f32 %v5810, 0.0
  %v5932 = vmin.f32 %v5811, 0.0
  %v5933 = vmin.f32 %v5812, 0.0
  %v5934 = vmin.f32 %v5813, 0.0
  %v5935 = vmin.f32 %v5814, 0.0
  %v5936 = vmin.f32 %v5815, 0.0
  %v5937 = vmin.f32 %v5816, 0.0
  %v5938 = vmin.f32 %v5817, 0.0
  %v5939 = vmin.f32 %v5818, 0.0
  %v5940 = vmin.f32 %v5819, 0.0
  %v5941 = vmin.f32 %v5820, 0.0
  %v5942 = vmin.f32 %v5821, 0.0
  %v5943 = vmin.f32 %v5822, 0.0
  %v5944 = vmin.f32 %v5823, 0.0
  %v5945 = vmin.f32 %v5824, 0.0
  %v5946 = vmin.f32 %v5825, 0.0
  %v5947 = vmin.f32 %v5826, 0.0
  %v5948 = vmin.f32 %v5827, 0.0
  %v5949 = vmin.f32 %v5828, 0.0
  %v5950 = vmin.f32 %v5829, 0.0
  %v5951 = vmin.f32 %v5830, 0.0
  %v5952 = vmin.f32 %v5831, 0.0
  %v5953 = vmin.f32 %v5832, 0.0
  %v5954 = vmin.f32 %v5833, 0.0
  %v5955 = vmin.f32 %v5834, 0.0
  %v5956 = vmin.f32 %v5835, 0.0
  %v5957 = vmin.f32 %v5836, 0.0
  %v5958 = vmin.f32 %v5837, 0.0
  %v5959 = vmin.f32 %v5838, 0.0
  %v5960 = vmin.f32 %v5839, 0.0
  %v5961 = vmin.f32 %v5840, 0.0
  %v5962 = vmin.f32 %v5841, 0.0
  %v5963 = vmin.f32 %v5842, 0.0
  %v5964 = vmin.f32 %v5843, 0.0
  %v5965 = vmin.f32 %v5844, 0.0
  %v5966 = vmin.f32 %v5845, 0.0
  %v5967 = vmin.f32 %v5846, 0.0
  %v5968 = vmin.f32 %v5847, 0.0
  %v5970 = vperm.slane %v5908, 0
  %5971 = vset.pattern.permute.xlu0 0
  %5972 = vperm.xlu0 %5971, %v5970
  %v5973 = vpop.permute.xlu0 %5972
  %v5975 = vmul.f32 %v5973, %v5909
  %v5976 = vmul.f32 %v5973, %v5910
  %v5977 = vmul.f32 %v5973, %v5911
  %v5978 = vmul.f32 %v5973, %v5912
  %v5979 = vmul.f32 %v5973, %v5913
  %v5980 = vmul.f32 %v5973, %v5914
  %v5981 = vmul.f32 %v5973, %v5915
  %v5982 = vmul.f32 %v5973, %v5916
  %v5983 = vmul.f32 %v5973, %v5917
  %v5984 = vmul.f32 %v5973, %v5918
  %v5985 = vmul.f32 %v5973, %v5919
  %v5986 = vmul.f32 %v5973, %v5920
  %v5987 = vmul.f32 %v5973, %v5921
  %v5988 = vmul.f32 %v5973, %v5922
  %v5989 = vmul.f32 %v5973, %v5923
  %v5990 = vmul.f32 %v5973, %v5924
  %v5991 = vmul.f32 %v5973, %v5925
  %v5992 = vmul.f32 %v5973, %v5926
  %v5993 = vmul.f32 %v5973, %v5927
  %v5994 = vmul.f32 %v5973, %v5928
  %v5995 = vmul.f32 %v5973, %v5929
  %v5996 = vmul.f32 %v5973, %v5930
  %v5997 = vmul.f32 %v5973, %v5931
  %v5998 = vmul.f32 %v5973, %v5932
  %v5999 = vmul.f32 %v5973, %v5933
  %v6000 = vmul.f32 %v5973, %v5934
  %v6001 = vmul.f32 %v5973, %v5935
  %v6002 = vmul.f32 %v5973, %v5936
  %v6003 = vmul.f32 %v5973, %v5937
  %v6004 = vmul.f32 %v5973, %v5938
  %v6005 = vmul.f32 %v5973, %v5939
  %v6006 = vmul.f32 %v5973, %v5940
  %v6007 = vmul.f32 %v5973, %v5941
  %v6008 = vmul.f32 %v5973, %v5942
  %v6009 = vmul.f32 %v5973, %v5943
  %v6010 = vmul.f32 %v5973, %v5944
  %v6011 = vmul.f32 %v5973, %v5945
  %v6012 = vmul.f32 %v5973, %v5946
  %v6013 = vmul.f32 %v5973, %v5947
  %v6014 = vmul.f32 %v5973, %v5948
  %v6015 = vmul.f32 %v5973, %v5949
  %v6016 = vmul.f32 %v5973, %v5950
  %v6017 = vmul.f32 %v5973, %v5951
  %v6018 = vmul.f32 %v5973, %v5952
  %v6019 = vmul.f32 %v5973, %v5953
  %v6020 = vmul.f32 %v5973, %v5954
  %v6021 = vmul.f32 %v5973, %v5955
  %v6022 = vmul.f32 %v5973, %v5956
  %v6023 = vmul.f32 %v5973, %v5957
  %v6024 = vmul.f32 %v5973, %v5958
  %v6025 = vmul.f32 %v5973, %v5959
  %v6026 = vmul.f32 %v5973, %v5960
  %v6027 = vmul.f32 %v5973, %v5961
  %v6028 = vmul.f32 %v5973, %v5962
  %v6029 = vmul.f32 %v5973, %v5963
  %v6030 = vmul.f32 %v5973, %v5964
  %v6031 = vmul.f32 %v5973, %v5965
  %v6032 = vmul.f32 %v5973, %v5966
  %v6033 = vmul.f32 %v5973, %v5967
  %v6034 = vmul.f32 %v5973, %v5968
  %v6035 = vadd.f32 %v5848, %v5975
  %v6036 = vadd.f32 %v5849, %v5976
  %v6037 = vadd.f32 %v5850, %v5977
  %v6038 = vadd.f32 %v5851, %v5978
  %v6039 = vadd.f32 %v5852, %v5979
  %v6040 = vadd.f32 %v5853, %v5980
  %v6041 = vadd.f32 %v5854, %v5981
  %v6042 = vadd.f32 %v5855, %v5982
  %v6043 = vadd.f32 %v5856, %v5983
  %v6044 = vadd.f32 %v5857, %v5984
  %v6045 = vadd.f32 %v5858, %v5985
  %v6046 = vadd.f32 %v5859, %v5986
  %v6047 = vadd.f32 %v5860, %v5987
  %v6048 = vadd.f32 %v5861, %v5988
  %v6049 = vadd.f32 %v5862, %v5989
  %v6050 = vadd.f32 %v5863, %v5990
  %v6051 = vadd.f32 %v5864, %v5991
  %v6052 = vadd.f32 %v5865, %v5992
  %v6053 = vadd.f32 %v5866, %v5993
  %v6054 = vadd.f32 %v5867, %v5994
  %v6055 = vadd.f32 %v5868, %v5995
  %v6056 = vadd.f32 %v5869, %v5996
  %v6057 = vadd.f32 %v5870, %v5997
  %v6058 = vadd.f32 %v5871, %v5998
  %v6059 = vadd.f32 %v5872, %v5999
  %v6060 = vadd.f32 %v5873, %v6000
  %v6061 = vadd.f32 %v5874, %v6001
  %v6062 = vadd.f32 %v5875, %v6002
  %v6063 = vadd.f32 %v5876, %v6003
  %v6064 = vadd.f32 %v5877, %v6004
  %v6065 = vadd.f32 %v5878, %v6005
  %v6066 = vadd.f32 %v5879, %v6006
  %v6067 = vadd.f32 %v5880, %v6007
  %v6068 = vadd.f32 %v5881, %v6008
  %v6069 = vadd.f32 %v5882, %v6009
  %v6070 = vadd.f32 %v5883, %v6010
  %v6071 = vadd.f32 %v5884, %v6011
  %v6072 = vadd.f32 %v5885, %v6012
  %v6073 = vadd.f32 %v5886, %v6013
  %v6074 = vadd.f32 %v5887, %v6014
  %v6075 = vadd.f32 %v5888, %v6015
  %v6076 = vadd.f32 %v5889, %v6016
  %v6077 = vadd.f32 %v5890, %v6017
  %v6078 = vadd.f32 %v5891, %v6018
  %v6079 = vadd.f32 %v5892, %v6019
  %v6080 = vadd.f32 %v5893, %v6020
  %v6081 = vadd.f32 %v5894, %v6021
  %v6082 = vadd.f32 %v5895, %v6022
  %v6083 = vadd.f32 %v5896, %v6023
  %v6084 = vadd.f32 %v5897, %v6024
  %v6085 = vadd.f32 %v5898, %v6025
  %v6086 = vadd.f32 %v5899, %v6026
  %v6087 = vadd.f32 %v5900, %v6027
  %v6088 = vadd.f32 %v5901, %v6028
  %v6089 = vadd.f32 %v5902, %v6029
  %v6090 = vadd.f32 %v5903, %v6030
  %v6091 = vadd.f32 %v5904, %v6031
  %v6092 = vadd.f32 %v5905, %v6032
  %v6093 = vadd.f32 %v5906, %v6033
  %v6094 = vadd.f32 %v5907, %v6034
  %v6095 = vld [vmem:[%s13] sm:$0xff]
  %v6096 = vld [vmem:[%s13 + $0x8] sm:$0xff]
  %v6097 = vld [vmem:[%s13 + $0x10] sm:$0xff]
  %v6098 = vld [vmem:[%s13 + $0x18] sm:$0xff]
  %v6099 = vld [vmem:[%s13 + $0x20] sm:$0xff]
  %v6100 = vld [vmem:[%s13 + $0x28] sm:$0xff]
  %v6101 = vld [vmem:[%s13 + $0x30] sm:$0xff]
  %v6102 = vld [vmem:[%s13 + $0x38] sm:$0xff]
  %v6103 = vld [vmem:[%s13 + $0x40] sm:$0xff]
  %v6104 = vld [vmem:[%s13 + $0x48] sm:$0xff]
  %v6105 = vld [vmem:[%s13 + $0x50] sm:$0xff]
  %v6106 = vld [vmem:[%s13 + $0x58] sm:$0xff]
  %v6107 = vld [vmem:[%s12] sm:$0xff]
  %v6108 = vld [vmem:[%s12 + $0x8] sm:$0xff]
  %v6110 = vsel %vm156, %v6035, 0
  %v6113 = vsel %vm156, %v6036, 0
  %v6116 = vsel %vm156, %v6037, 0
  %v6119 = vsel %vm156, %v6038, 0
  %v6122 = vsel %vm156, %v6039, 0
  %v6125 = vsel %vm156, %v6040, 0
  %v6128 = vsel %vm156, %v6041, 0
  %v6131 = vsel %vm156, %v6042, 0
  %v6134 = vsel %vm156, %v6043, 0
  %v6137 = vsel %vm156, %v6044, 0
  %v6140 = vsel %vm156, %v6045, 0
  %v6143 = vsel %vm156, %v6046, 0
  %v6146 = vsel %vm156, %v6047, 0
  %v6149 = vsel %vm156, %v6048, 0
  %v6152 = vsel %vm156, %v6049, 0
  %v6155 = vsel %vm156, %v6050, 0
  %v6158 = vsel %vm156, %v6051, 0
  %v6161 = vsel %vm156, %v6052, 0
  %v6164 = vsel %vm156, %v6053, 0
  %v6167 = vsel %vm156, %v6054, 0
  %v6170 = vsel %vm156, %v6055, 0
  %v6173 = vsel %vm156, %v6056, 0
  %v6176 = vsel %vm156, %v6057, 0
  %v6179 = vsel %vm156, %v6058, 0
  %v6182 = vsel %vm156, %v6059, 0
  %v6185 = vsel %vm156, %v6060, 0
  %v6188 = vsel %vm156, %v6061, 0
  %v6191 = vsel %vm156, %v6062, 0
  %v6194 = vsel %vm156, %v6063, 0
  %v6197 = vsel %vm156, %v6064, 0
  %v6200 = vsel %vm156, %v6065, 0
  %v6203 = vsel %vm156, %v6066, 0
  %v6206 = vsel %vm156, %v6067, 0
  %v6209 = vsel %vm156, %v6068, 0
  %v6212 = vsel %vm156, %v6069, 0
  %v6215 = vsel %vm156, %v6070, 0
  %v6218 = vsel %vm156, %v6071, 0
  %v6221 = vsel %vm156, %v6072, 0
  %v6224 = vsel %vm156, %v6073, 0
  %v6227 = vsel %vm156, %v6074, 0
  %v6230 = vsel %vm156, %v6075, 0
  %v6233 = vsel %vm156, %v6076, 0
  %v6236 = vsel %vm156, %v6077, 0
  %v6239 = vsel %vm156, %v6078, 0
  %v6242 = vsel %vm156, %v6079, 0
  %v6245 = vsel %vm156, %v6080, 0
  %v6248 = vsel %vm156, %v6081, 0
  %v6251 = vsel %vm156, %v6082, 0
  %v6254 = vsel %vm156, %v6083, 0
  %v6257 = vsel %vm156, %v6084, 0
  %v6260 = vsel %vm156, %v6085, 0
  %v6263 = vsel %vm156, %v6086, 0
  %v6266 = vsel %vm156, %v6087, 0
  %v6269 = vsel %vm156, %v6088, 0
  %v6272 = vsel %vm156, %v6089, 0
  %v6275 = vsel %vm156, %v6090, 0
  %v6278 = vsel %vm156, %v6091, 0
  %v6281 = vsel %vm156, %v6092, 0
  %v6284 = vsel %vm156, %v6093, 0
  %v6287 = vsel %vm156, %v6094, 0
  %6289 = vmatpush.msra.mxu0 0.0
  %6290 = vmatpush.msra.mxu0 0.0
  %6291 = vmatpush.msra.mxu0 0.0
  %6292 = vmatpush.msra.mxu0 0.0
  %6293 = vmatpush.msra.mxu0 0.0
  %6294 = vmatpush.msra.mxu0 0.0
  %6295 = vmatpush.msra.mxu0 0.0
  %6296 = vmatpush.msra.mxu0 0.0
  %6297 = vmatpush.msra.mxu0 0.0
  %6298 = vmatpush.msra.mxu0 0.0
  %6299 = vmatpush.msra.mxu0 0.0
  %6300 = vmatpush.msra.mxu0 0.0
  %6301 = vmatpush.msra.mxu0 0.0
  %6302 = vmatpush.msra.mxu0 0.0
  %6303 = vmatpush.msra.mxu0 %v6108
  %6304 = vmatpush.msra.mxu0 %v6107
  %6305 = vmatmul.f32.gmra.mxu0 %v6110
  %v6306 = vpop.f32.mrf.mxu0
  %v6307 = vadd.f32 0.0, %v6306
  %6308 = vmatmul.f32.gmra.mxu0 %v6113
  %v6309 = vpop.f32.mrf.mxu0
  %v6310 = vadd.f32 0.0, %v6309
  %6311 = vmatmul.f32.gmra.mxu0 %v6116
  %v6312 = vpop.f32.mrf.mxu0
  %v6313 = vadd.f32 0.0, %v6312
  %6314 = vmatmul.f32.gmra.mxu0 %v6119
  %v6315 = vpop.f32.mrf.mxu0
  %v6316 = vadd.f32 0.0, %v6315
  %6317 = vmatmul.f32.gmra.mxu0 %v6122
  %v6318 = vpop.f32.mrf.mxu0
  %v6319 = vadd.f32 0.0, %v6318
  %6320 = vmatmul.f32.gmra.mxu0 %v6125
  %v6321 = vpop.f32.mrf.mxu0
  %v6322 = vadd.f32 0.0, %v6321
  %6323 = vmatmul.f32.gmra.mxu0 %v6128
  %v6324 = vpop.f32.mrf.mxu0
  %v6325 = vadd.f32 0.0, %v6324
  %6326 = vmatmul.f32.gmra.mxu0 %v6131
  %v6327 = vpop.f32.mrf.mxu0
  %v6328 = vadd.f32 0.0, %v6327
  %6329 = vmatmul.f32.gmra.mxu0 %v6134
  %v6330 = vpop.f32.mrf.mxu0
  %v6331 = vadd.f32 0.0, %v6330
  %6332 = vmatmul.f32.gmra.mxu0 %v6137
  %v6333 = vpop.f32.mrf.mxu0
  %v6334 = vadd.f32 0.0, %v6333
  %6335 = vmatmul.f32.gmra.mxu0 %v6140
  %v6336 = vpop.f32.mrf.mxu0
  %v6337 = vadd.f32 0.0, %v6336
  %6338 = vmatmul.f32.gmra.mxu0 %v6143
  %v6339 = vpop.f32.mrf.mxu0
  %v6340 = vadd.f32 0.0, %v6339
  %6341 = vmatmul.f32.gmra.mxu0 %v6146
  %v6342 = vpop.f32.mrf.mxu0
  %v6343 = vadd.f32 0.0, %v6342
  %6344 = vmatmul.f32.gmra.mxu0 %v6149
  %v6345 = vpop.f32.mrf.mxu0
  %v6346 = vadd.f32 0.0, %v6345
  %6347 = vmatmul.f32.gmra.mxu0 %v6152
  %v6348 = vpop.f32.mrf.mxu0
  %v6349 = vadd.f32 0.0, %v6348
  %6350 = vmatmul.f32.gmra.mxu0 %v6155
  %v6351 = vpop.f32.mrf.mxu0
  %v6352 = vadd.f32 0.0, %v6351
  %6353 = vmatmul.f32.gmra.mxu0 %v6158
  %v6354 = vpop.f32.mrf.mxu0
  %v6355 = vadd.f32 0.0, %v6354
  %6356 = vmatmul.f32.gmra.mxu0 %v6161
  %v6357 = vpop.f32.mrf.mxu0
  %v6358 = vadd.f32 0.0, %v6357
  %6359 = vmatmul.f32.gmra.mxu0 %v6164
  %v6360 = vpop.f32.mrf.mxu0
  %v6361 = vadd.f32 0.0, %v6360
  %6362 = vmatmul.f32.gmra.mxu0 %v6167
  %v6363 = vpop.f32.mrf.mxu0
  %v6364 = vadd.f32 0.0, %v6363
  %6365 = vmatmul.f32.gmra.mxu0 %v6170
  %v6366 = vpop.f32.mrf.mxu0
  %v6367 = vadd.f32 0.0, %v6366
  %6368 = vmatmul.f32.gmra.mxu0 %v6173
  %v6369 = vpop.f32.mrf.mxu0
  %v6370 = vadd.f32 0.0, %v6369
  %6371 = vmatmul.f32.gmra.mxu0 %v6176
  %v6372 = vpop.f32.mrf.mxu0
  %v6373 = vadd.f32 0.0, %v6372
  %6374 = vmatmul.f32.gmra.mxu0 %v6179
  %v6375 = vpop.f32.mrf.mxu0
  %v6376 = vadd.f32 0.0, %v6375
  %6377 = vmatmul.f32.gmra.mxu0 %v6182
  %v6378 = vpop.f32.mrf.mxu0
  %v6379 = vadd.f32 0.0, %v6378
  %6380 = vmatmul.f32.gmra.mxu0 %v6185
  %v6381 = vpop.f32.mrf.mxu0
  %v6382 = vadd.f32 0.0, %v6381
  %6383 = vmatmul.f32.gmra.mxu0 %v6188
  %v6384 = vpop.f32.mrf.mxu0
  %v6385 = vadd.f32 0.0, %v6384
  %6386 = vmatmul.f32.gmra.mxu0 %v6191
  %v6387 = vpop.f32.mrf.mxu0
  %v6388 = vadd.f32 0.0, %v6387
  %6389 = vmatmul.f32.gmra.mxu0 %v6194
  %v6390 = vpop.f32.mrf.mxu0
  %v6391 = vadd.f32 0.0, %v6390
  %6392 = vmatmul.f32.gmra.mxu0 %v6197
  %v6393 = vpop.f32.mrf.mxu0
  %v6394 = vadd.f32 0.0, %v6393
  %6395 = vmatmul.f32.gmra.mxu0 %v6200
  %v6396 = vpop.f32.mrf.mxu0
  %v6397 = vadd.f32 0.0, %v6396
  %6398 = vmatmul.f32.gmra.mxu0 %v6203
  %v6399 = vpop.f32.mrf.mxu0
  %v6400 = vadd.f32 0.0, %v6399
  %6401 = vmatmul.f32.gmra.mxu0 %v6206
  %v6402 = vpop.f32.mrf.mxu0
  %v6403 = vadd.f32 0.0, %v6402
  %6404 = vmatmul.f32.gmra.mxu0 %v6209
  %v6405 = vpop.f32.mrf.mxu0
  %v6406 = vadd.f32 0.0, %v6405
  %6407 = vmatmul.f32.gmra.mxu0 %v6212
  %v6408 = vpop.f32.mrf.mxu0
  %v6409 = vadd.f32 0.0, %v6408
  %6410 = vmatmul.f32.gmra.mxu0 %v6215
  %v6411 = vpop.f32.mrf.mxu0
  %v6412 = vadd.f32 0.0, %v6411
  %6413 = vmatmul.f32.gmra.mxu0 %v6218
  %v6414 = vpop.f32.mrf.mxu0
  %v6415 = vadd.f32 0.0, %v6414
  %6416 = vmatmul.f32.gmra.mxu0 %v6221
  %v6417 = vpop.f32.mrf.mxu0
  %v6418 = vadd.f32 0.0, %v6417
  %6419 = vmatmul.f32.gmra.mxu0 %v6224
  %v6420 = vpop.f32.mrf.mxu0
  %v6421 = vadd.f32 0.0, %v6420
  %6422 = vmatmul.f32.gmra.mxu0 %v6227
  %v6423 = vpop.f32.mrf.mxu0
  %v6424 = vadd.f32 0.0, %v6423
  %6425 = vmatmul.f32.gmra.mxu0 %v6230
  %v6426 = vpop.f32.mrf.mxu0
  %v6427 = vadd.f32 0.0, %v6426
  %6428 = vmatmul.f32.gmra.mxu0 %v6233
  %v6429 = vpop.f32.mrf.mxu0
  %v6430 = vadd.f32 0.0, %v6429
  %6431 = vmatmul.f32.gmra.mxu0 %v6236
  %v6432 = vpop.f32.mrf.mxu0
  %v6433 = vadd.f32 0.0, %v6432
  %6434 = vmatmul.f32.gmra.mxu0 %v6239
  %v6435 = vpop.f32.mrf.mxu0
  %v6436 = vadd.f32 0.0, %v6435
  %6437 = vmatmul.f32.gmra.mxu0 %v6242
  %v6438 = vpop.f32.mrf.mxu0
  %v6439 = vadd.f32 0.0, %v6438
  %6440 = vmatmul.f32.gmra.mxu0 %v6245
  %v6441 = vpop.f32.mrf.mxu0
  %v6442 = vadd.f32 0.0, %v6441
  %6443 = vmatmul.f32.gmra.mxu0 %v6248
  %v6444 = vpop.f32.mrf.mxu0
  %v6445 = vadd.f32 0.0, %v6444
  %6446 = vmatmul.f32.gmra.mxu0 %v6251
  %v6447 = vpop.f32.mrf.mxu0
  %v6448 = vadd.f32 0.0, %v6447
  %6449 = vmatmul.f32.gmra.mxu0 %v6254
  %v6450 = vpop.f32.mrf.mxu0
  %v6451 = vadd.f32 0.0, %v6450
  %6452 = vmatmul.f32.gmra.mxu0 %v6257
  %v6453 = vpop.f32.mrf.mxu0
  %v6454 = vadd.f32 0.0, %v6453
  %6455 = vmatmul.f32.gmra.mxu0 %v6260
  %v6456 = vpop.f32.mrf.mxu0
  %v6457 = vadd.f32 0.0, %v6456
  %6458 = vmatmul.f32.gmra.mxu0 %v6263
  %v6459 = vpop.f32.mrf.mxu0
  %v6460 = vadd.f32 0.0, %v6459
  %6461 = vmatmul.f32.gmra.mxu0 %v6266
  %v6462 = vpop.f32.mrf.mxu0
  %v6463 = vadd.f32 0.0, %v6462
  %6464 = vmatmul.f32.gmra.mxu0 %v6269
  %v6465 = vpop.f32.mrf.mxu0
  %v6466 = vadd.f32 0.0, %v6465
  %6467 = vmatmul.f32.gmra.mxu0 %v6272
  %v6468 = vpop.f32.mrf.mxu0
  %v6469 = vadd.f32 0.0, %v6468
  %6470 = vmatmul.f32.gmra.mxu0 %v6275
  %v6471 = vpop.f32.mrf.mxu0
  %v6472 = vadd.f32 0.0, %v6471
  %6473 = vmatmul.f32.gmra.mxu0 %v6278
  %v6474 = vpop.f32.mrf.mxu0
  %v6475 = vadd.f32 0.0, %v6474
  %6476 = vmatmul.f32.gmra.mxu0 %v6281
  %v6477 = vpop.f32.mrf.mxu0
  %v6478 = vadd.f32 0.0, %v6477
  %6479 = vmatmul.f32.gmra.mxu0 %v6284
  %v6480 = vpop.f32.mrf.mxu0
  %v6481 = vadd.f32 0.0, %v6480
  %6482 = vmatmul.f32.gmra.mxu0 %v6287
  %v6483 = vpop.f32.mrf.mxu0
  %v6484 = vadd.f32 0.0, %v6483
  %6485 = vdwg.mxu0
  %v6486 = vmul.f32 %v6307, %v6095
  %v6487 = vmul.f32 %v6310, %v6096
  %v6488 = vmul.f32 %v6313, %v6097
  %v6489 = vmul.f32 %v6316, %v6098
  %v6490 = vmul.f32 %v6319, %v6099
  %v6491 = vmul.f32 %v6322, %v6100
  %v6492 = vmul.f32 %v6325, %v6101
  %v6493 = vmul.f32 %v6328, %v6102
  %v6494 = vmul.f32 %v6331, %v6103
  %v6495 = vmul.f32 %v6334, %v6104
  %v6496 = vmul.f32 %v6337, %v6105
  %v6497 = vmul.f32 %v6340, %v6106
  %v6498 = vmul.f32 %v6343, %v6095
  %v6499 = vmul.f32 %v6346, %v6096
  %v6500 = vmul.f32 %v6349, %v6097
  %v6501 = vmul.f32 %v6352, %v6098
  %v6502 = vmul.f32 %v6355, %v6099
  %v6503 = vmul.f32 %v6358, %v6100
  %v6504 = vmul.f32 %v6361, %v6101
  %v6505 = vmul.f32 %v6364, %v6102
  %v6506 = vmul.f32 %v6367, %v6103
  %v6507 = vmul.f32 %v6370, %v6104
  %v6508 = vmul.f32 %v6373, %v6105
  %v6509 = vmul.f32 %v6376, %v6106
  %v6510 = vmul.f32 %v6379, %v6095
  %v6511 = vmul.f32 %v6382, %v6096
  %v6512 = vmul.f32 %v6385, %v6097
  %v6513 = vmul.f32 %v6388, %v6098
  %v6514 = vmul.f32 %v6391, %v6099
  %v6515 = vmul.f32 %v6394, %v6100
  %v6516 = vmul.f32 %v6397, %v6101
  %v6517 = vmul.f32 %v6400, %v6102
  %v6518 = vmul.f32 %v6403, %v6103
  %v6519 = vmul.f32 %v6406, %v6104
  %v6520 = vmul.f32 %v6409, %v6105
  %v6521 = vmul.f32 %v6412, %v6106
  %v6522 = vmul.f32 %v6415, %v6095
  %v6523 = vmul.f32 %v6418, %v6096
  %v6524 = vmul.f32 %v6421, %v6097
  %v6525 = vmul.f32 %v6424, %v6098
  %v6526 = vmul.f32 %v6427, %v6099
  %v6527 = vmul.f32 %v6430, %v6100
  %v6528 = vmul.f32 %v6433, %v6101
  %v6529 = vmul.f32 %v6436, %v6102
  %v6530 = vmul.f32 %v6439, %v6103
  %v6531 = vmul.f32 %v6442, %v6104
  %v6532 = vmul.f32 %v6445, %v6105
  %v6533 = vmul.f32 %v6448, %v6106
  %v6534 = vmul.f32 %v6451, %v6095
  %v6535 = vmul.f32 %v6454, %v6096
  %v6536 = vmul.f32 %v6457, %v6097
  %v6537 = vmul.f32 %v6460, %v6098
  %v6538 = vmul.f32 %v6463, %v6099
  %v6539 = vmul.f32 %v6466, %v6100
  %v6540 = vmul.f32 %v6469, %v6101
  %v6541 = vmul.f32 %v6472, %v6102
  %v6542 = vmul.f32 %v6475, %v6103
  %v6543 = vmul.f32 %v6478, %v6104
  %v6544 = vmul.f32 %v6481, %v6105
  %v6545 = vmul.f32 %v6484, %v6106
  %v6546 = vld [vmem:[%s14] sm:$0xff]
  %v6547 = vld [vmem:[%s14 + $0x8] sm:$0xff]
  %v6548 = vld [vmem:[%s14 + $0x10] sm:$0xff]
  %v6549 = vld [vmem:[%s14 + $0x18] sm:$0xff]
  %v6550 = vld [vmem:[%s14 + $0x20] sm:$0xff]
  %v6551 = vld [vmem:[%s14 + $0x28] sm:$0xff]
  %v6552 = vld [vmem:[%s14 + $0x30] sm:$0xff]
  %v6553 = vld [vmem:[%s14 + $0x38] sm:$0xff]
  %vm6554 = vcmask 785408
  %v6556 = vsel %vm6554, %v6546, 0
  %v6559 = vsel %vm6554, %v6547, 0
  %v6562 = vsel %vm6554, %v6548, 0
  %v6565 = vsel %vm6554, %v6549, 0
  %v6568 = vsel %vm6554, %v6550, 0
  %v6571 = vsel %vm6554, %v6551, 0
  %v6574 = vsel %vm6554, %v6552, 0
  %v6577 = vsel %vm6554, %v6553, 0
  %6579 = vmatpush.msra.mxu0 0.0
  %6580 = vmatpush.msra.mxu0 0.0
  %6581 = vmatpush.msra.mxu0 0.0
  %6582 = vmatpush.msra.mxu0 0.0
  %6583 = vmatpush.msra.mxu0 %v6497
  %6584 = vmatpush.msra.mxu0 %v6496
  %6585 = vmatpush.msra.mxu0 %v6495
  %6586 = vmatpush.msra.mxu0 %v6494
  %6587 = vmatpush.msra.mxu0 %v6493
  %6588 = vmatpush.msra.mxu0 %v6492
  %6589 = vmatpush.msra.mxu0 %v6491
  %6590 = vmatpush.msra.mxu0 %v6490
  %6591 = vmatpush.msra.mxu0 %v6489
  %6592 = vmatpush.msra.mxu0 %v6488
  %6593 = vmatpush.msra.mxu0 %v6487
  %6594 = vmatpush.msra.mxu0 %v6486
  %6595 = vmatmul.f32.gmra.mxu0 %v6556
  %v6596 = vpop.f32.mrf.mxu0
  %v6597 = vadd.f32 0.0, %v6596
  %6598 = vmatmul.f32.gmra.mxu0 %v6559
  %v6599 = vpop.f32.mrf.mxu0
  %v6600 = vadd.f32 0.0, %v6599
  %6601 = vmatmul.f32.gmra.mxu0 %v6562
  %v6602 = vpop.f32.mrf.mxu0
  %v6603 = vadd.f32 0.0, %v6602
  %6604 = vmatmul.f32.gmra.mxu0 %v6565
  %v6605 = vpop.f32.mrf.mxu0
  %v6606 = vadd.f32 0.0, %v6605
  %6607 = vmatmul.f32.gmra.mxu0 %v6568
  %v6608 = vpop.f32.mrf.mxu0
  %v6609 = vadd.f32 0.0, %v6608
  %6610 = vmatmul.f32.gmra.mxu0 %v6571
  %v6611 = vpop.f32.mrf.mxu0
  %v6612 = vadd.f32 0.0, %v6611
  %6613 = vmatmul.f32.gmra.mxu0 %v6574
  %v6614 = vpop.f32.mrf.mxu0
  %v6615 = vadd.f32 0.0, %v6614
  %6616 = vmatmul.f32.gmra.mxu0 %v6577
  %v6617 = vpop.f32.mrf.mxu0
  %v6618 = vadd.f32 0.0, %v6617
  %6619 = vdwg.mxu0
  %vm6620 = vcmask 523264
  %6621 = vst.msk [vmem:[%s15] sm:$0xff] %vm6620, %v6597
  %6622 = vst.msk [vmem:[%s15 + $0x8] sm:$0xff] %vm6620, %v6600
  %6623 = vst.msk [vmem:[%s15 + $0x10] sm:$0xff] %vm6620, %v6603
  %6624 = vst.msk [vmem:[%s15 + $0x18] sm:$0xff] %vm6620, %v6606
  %6629 = vrot.lane.b32.xlu0 %v6609, 64
  %v6630 = vpop.permute.xlu0 %6629
  %6631 = vrot.lane.b32.xlu0 %v6612, 64
  %v6632 = vpop.permute.xlu0 %6631
  %6633 = vrot.lane.b32.xlu0 %v6615, 64
  %v6634 = vpop.permute.xlu0 %6633
  %6635 = vrot.lane.b32.xlu0 %v6618, 64
  %v6636 = vpop.permute.xlu0 %6635
  %vm6641 = vcmask 1048064
  %6642 = vst.msk [vmem:[%s15] sm:$0xff] %vm6641, %v6630
  %6643 = vst.msk [vmem:[%s15 + $0x8] sm:$0xff] %vm6641, %v6632
  %6644 = vst.msk [vmem:[%s15 + $0x10] sm:$0xff] %vm6641, %v6634
  %6645 = vst.msk [vmem:[%s15 + $0x18] sm:$0xff] %vm6641, %v6636
  %6646 = vmatpush.msra.mxu0 0.0
  %6647 = vmatpush.msra.mxu0 0.0
  %6648 = vmatpush.msra.mxu0 0.0
  %6649 = vmatpush.msra.mxu0 0.0
  %6650 = vmatpush.msra.mxu0 %v6509
  %6651 = vmatpush.msra.mxu0 %v6508
  %6652 = vmatpush.msra.mxu0 %v6507
  %6653 = vmatpush.msra.mxu0 %v6506
  %6654 = vmatpush.msra.mxu0 %v6505
  %6655 = vmatpush.msra.mxu0 %v6504
  %6656 = vmatpush.msra.mxu0 %v6503
  %6657 = vmatpush.msra.mxu0 %v6502
  %6658 = vmatpush.msra.mxu0 %v6501
  %6659 = vmatpush.msra.mxu0 %v6500
  %6660 = vmatpush.msra.mxu0 %v6499
  %6661 = vmatpush.msra.mxu0 %v6498
  %6662 = vmatmul.f32.gmra.mxu0 %v6556
  %v6663 = vpop.f32.mrf.mxu0
  %v6664 = vadd.f32 0.0, %v6663
  %6665 = vmatmul.f32.gmra.mxu0 %v6559
  %v6666 = vpop.f32.mrf.mxu0
  %v6667 = vadd.f32 0.0, %v6666
  %6668 = vmatmul.f32.gmra.mxu0 %v6562
  %v6669 = vpop.f32.mrf.mxu0
  %v6670 = vadd.f32 0.0, %v6669
  %6671 = vmatmul.f32.gmra.mxu0 %v6565
  %v6672 = vpop.f32.mrf.mxu0
  %v6673 = vadd.f32 0.0, %v6672
  %6674 = vmatmul.f32.gmra.mxu0 %v6568
  %v6675 = vpop.f32.mrf.mxu0
  %v6676 = vadd.f32 0.0, %v6675
  %6677 = vmatmul.f32.gmra.mxu0 %v6571
  %v6678 = vpop.f32.mrf.mxu0
  %v6679 = vadd.f32 0.0, %v6678
  %6680 = vmatmul.f32.gmra.mxu0 %v6574
  %v6681 = vpop.f32.mrf.mxu0
  %v6682 = vadd.f32 0.0, %v6681
  %6683 = vmatmul.f32.gmra.mxu0 %v6577
  %v6684 = vpop.f32.mrf.mxu0
  %v6685 = vadd.f32 0.0, %v6684
  %6686 = vdwg.mxu0
  %6687 = vst.msk [vmem:[%s15 + $0x20] sm:$0xff] %vm6620, %v6664
  %6688 = vst.msk [vmem:[%s15 + $0x28] sm:$0xff] %vm6620, %v6667
  %6689 = vst.msk [vmem:[%s15 + $0x30] sm:$0xff] %vm6620, %v6670
  %6690 = vst.msk [vmem:[%s15 + $0x38] sm:$0xff] %vm6620, %v6673
  %6695 = vrot.lane.b32.xlu0 %v6676, 64
  %v6696 = vpop.permute.xlu0 %6695
  %6697 = vrot.lane.b32.xlu0 %v6679, 64
  %v6698 = vpop.permute.xlu0 %6697
  %6699 = vrot.lane.b32.xlu0 %v6682, 64
  %v6700 = vpop.permute.xlu0 %6699
  %6701 = vrot.lane.b32.xlu0 %v6685, 64
  %v6702 = vpop.permute.xlu0 %6701
  %6707 = vst.msk [vmem:[%s15 + $0x20] sm:$0xff] %vm6641, %v6696
  %6708 = vst.msk [vmem:[%s15 + $0x28] sm:$0xff] %vm6641, %v6698
  %6709 = vst.msk [vmem:[%s15 + $0x30] sm:$0xff] %vm6641, %v6700
  %6710 = vst.msk [vmem:[%s15 + $0x38] sm:$0xff] %vm6641, %v6702
  %6711 = vmatpush.msra.mxu0 0.0
  %6712 = vmatpush.msra.mxu0 0.0
  %6713 = vmatpush.msra.mxu0 0.0
  %6714 = vmatpush.msra.mxu0 0.0
  %6715 = vmatpush.msra.mxu0 %v6521
  %6716 = vmatpush.msra.mxu0 %v6520
  %6717 = vmatpush.msra.mxu0 %v6519
  %6718 = vmatpush.msra.mxu0 %v6518
  %6719 = vmatpush.msra.mxu0 %v6517
  %6720 = vmatpush.msra.mxu0 %v6516
  %6721 = vmatpush.msra.mxu0 %v6515
  %6722 = vmatpush.msra.mxu0 %v6514
  %6723 = vmatpush.msra.mxu0 %v6513
  %6724 = vmatpush.msra.mxu0 %v6512
  %6725 = vmatpush.msra.mxu0 %v6511
  %6726 = vmatpush.msra.mxu0 %v6510
  %6727 = vmatmul.f32.gmra.mxu0 %v6556
  %v6728 = vpop.f32.mrf.mxu0
  %v6729 = vadd.f32 0.0, %v6728
  %6730 = vmatmul.f32.gmra.mxu0 %v6559
  %v6731 = vpop.f32.mrf.mxu0
  %v6732 = vadd.f32 0.0, %v6731
  %6733 = vmatmul.f32.gmra.mxu0 %v6562
  %v6734 = vpop.f32.mrf.mxu0
  %v6735 = vadd.f32 0.0, %v6734
  %6736 = vmatmul.f32.gmra.mxu0 %v6565
  %v6737 = vpop.f32.mrf.mxu0
  %v6738 = vadd.f32 0.0, %v6737
  %6739 = vmatmul.f32.gmra.mxu0 %v6568
  %v6740 = vpop.f32.mrf.mxu0
  %v6741 = vadd.f32 0.0, %v6740
  %6742 = vmatmul.f32.gmra.mxu0 %v6571
  %v6743 = vpop.f32.mrf.mxu0
  %v6744 = vadd.f32 0.0, %v6743
  %6745 = vmatmul.f32.gmra.mxu0 %v6574
  %v6746 = vpop.f32.mrf.mxu0
  %v6747 = vadd.f32 0.0, %v6746
  %6748 = vmatmul.f32.gmra.mxu0 %v6577
  %v6749 = vpop.f32.mrf.mxu0
  %v6750 = vadd.f32 0.0, %v6749
  %6751 = vdwg.mxu0
  %6752 = vst.msk [vmem:[%s15 + $0x40] sm:$0xff] %vm6620, %v6729
  %6753 = vst.msk [vmem:[%s15 + $0x48] sm:$0xff] %vm6620, %v6732
  %6754 = vst.msk [vmem:[%s15 + $0x50] sm:$0xff] %vm6620, %v6735
  %6755 = vst.msk [vmem:[%s15 + $0x58] sm:$0xff] %vm6620, %v6738
  %6760 = vrot.lane.b32.xlu0 %v6741, 64
  %v6761 = vpop.permute.xlu0 %6760
  %6762 = vrot.lane.b32.xlu0 %v6744, 64
  %v6763 = vpop.permute.xlu0 %6762
  %6764 = vrot.lane.b32.xlu0 %v6747, 64
  %v6765 = vpop.permute.xlu0 %6764
  %6766 = vrot.lane.b32.xlu0 %v6750, 64
  %v6767 = vpop.permute.xlu0 %6766
  %6772 = vst.msk [vmem:[%s15 + $0x40] sm:$0xff] %vm6641, %v6761
  %6773 = vst.msk [vmem:[%s15 + $0x48] sm:$0xff] %vm6641, %v6763
  %6774 = vst.msk [vmem:[%s15 + $0x50] sm:$0xff] %vm6641, %v6765
  %6775 = vst.msk [vmem:[%s15 + $0x58] sm:$0xff] %vm6641, %v6767
  %6776 = vmatpush.msra.mxu0 0.0
  %6777 = vmatpush.msra.mxu0 0.0
  %6778 = vmatpush.msra.mxu0 0.0
  %6779 = vmatpush.msra.mxu0 0.0
  %6780 = vmatpush.msra.mxu0 %v6533
  %6781 = vmatpush.msra.mxu0 %v6532
  %6782 = vmatpush.msra.mxu0 %v6531
  %6783 = vmatpush.msra.mxu0 %v6530
  %6784 = vmatpush.msra.mxu0 %v6529
  %6785 = vmatpush.msra.mxu0 %v6528
  %6786 = vmatpush.msra.mxu0 %v6527
  %6787 = vmatpush.msra.mxu0 %v6526
  %6788 = vmatpush.msra.mxu0 %v6525
  %6789 = vmatpush.msra.mxu0 %v6524
  %6790 = vmatpush.msra.mxu0 %v6523
  %6791 = vmatpush.msra.mxu0 %v6522
  %6792 = vmatmul.f32.gmra.mxu0 %v6556
  %v6793 = vpop.f32.mrf.mxu0
  %v6794 = vadd.f32 0.0, %v6793
  %6795 = vmatmul.f32.gmra.mxu0 %v6559
  %v6796 = vpop.f32.mrf.mxu0
  %v6797 = vadd.f32 0.0, %v6796
  %6798 = vmatmul.f32.gmra.mxu0 %v6562
  %v6799 = vpop.f32.mrf.mxu0
  %v6800 = vadd.f32 0.0, %v6799
  %6801 = vmatmul.f32.gmra.mxu0 %v6565
  %v6802 = vpop.f32.mrf.mxu0
  %v6803 = vadd.f32 0.0, %v6802
  %6804 = vmatmul.f32.gmra.mxu0 %v6568
  %v6805 = vpop.f32.mrf.mxu0
  %v6806 = vadd.f32 0.0, %v6805
  %6807 = vmatmul.f32.gmra.mxu0 %v6571
  %v6808 = vpop.f32.mrf.mxu0
  %v6809 = vadd.f32 0.0, %v6808
  %6810 = vmatmul.f32.gmra.mxu0 %v6574
  %v6811 = vpop.f32.mrf.mxu0
  %v6812 = vadd.f32 0.0, %v6811
  %6813 = vmatmul.f32.gmra.mxu0 %v6577
  %v6814 = vpop.f32.mrf.mxu0
  %v6815 = vadd.f32 0.0, %v6814
  %6816 = vdwg.mxu0
  %6817 = vst.msk [vmem:[%s15 + $0x60] sm:$0xff] %vm6620, %v6794
  %6818 = vst.msk [vmem:[%s15 + $0x68] sm:$0xff] %vm6620, %v6797
  %6819 = vst.msk [vmem:[%s15 + $0x70] sm:$0xff] %vm6620, %v6800
  %6820 = vst.msk [vmem:[%s15 + $0x78] sm:$0xff] %vm6620, %v6803
  %6825 = vrot.lane.b32.xlu0 %v6806, 64
  %v6826 = vpop.permute.xlu0 %6825
  %6827 = vrot.lane.b32.xlu0 %v6809, 64
  %v6828 = vpop.permute.xlu0 %6827
  %6829 = vrot.lane.b32.xlu0 %v6812, 64
  %v6830 = vpop.permute.xlu0 %6829
  %6831 = vrot.lane.b32.xlu0 %v6815, 64
  %v6832 = vpop.permute.xlu0 %6831
  %6837 = vst.msk [vmem:[%s15 + $0x60] sm:$0xff] %vm6641, %v6826
  %6838 = vst.msk [vmem:[%s15 + $0x68] sm:$0xff] %vm6641, %v6828
  %6839 = vst.msk [vmem:[%s15 + $0x70] sm:$0xff] %vm6641, %v6830
  %6840 = vst.msk [vmem:[%s15 + $0x78] sm:$0xff] %vm6641, %v6832
  %6841 = vmatpush.msra.mxu0 0.0
  %6842 = vmatpush.msra.mxu0 0.0
  %6843 = vmatpush.msra.mxu0 0.0
  %6844 = vmatpush.msra.mxu0 0.0
  %6845 = vmatpush.msra.mxu0 %v6545
  %6846 = vmatpush.msra.mxu0 %v6544
  %6847 = vmatpush.msra.mxu0 %v6543
  %6848 = vmatpush.msra.mxu0 %v6542
  %6849 = vmatpush.msra.mxu0 %v6541
  %6850 = vmatpush.msra.mxu0 %v6540
  %6851 = vmatpush.msra.mxu0 %v6539
  %6852 = vmatpush.msra.mxu0 %v6538
  %6853 = vmatpush.msra.mxu0 %v6537
  %6854 = vmatpush.msra.mxu0 %v6536
  %6855 = vmatpush.msra.mxu0 %v6535
  %6856 = vmatpush.msra.mxu0 %v6534
  %6857 = vmatmul.f32.gmra.mxu0 %v6556
  %v6858 = vpop.f32.mrf.mxu0
  %v6859 = vadd.f32 0.0, %v6858
  %6860 = vmatmul.f32.gmra.mxu0 %v6559
  %v6861 = vpop.f32.mrf.mxu0
  %v6862 = vadd.f32 0.0, %v6861
  %6863 = vmatmul.f32.gmra.mxu0 %v6562
  %v6864 = vpop.f32.mrf.mxu0
  %v6865 = vadd.f32 0.0, %v6864
  %6866 = vmatmul.f32.gmra.mxu0 %v6565
  %v6867 = vpop.f32.mrf.mxu0
  %v6868 = vadd.f32 0.0, %v6867
  %6869 = vmatmul.f32.gmra.mxu0 %v6568
  %v6870 = vpop.f32.mrf.mxu0
  %v6871 = vadd.f32 0.0, %v6870
  %6872 = vmatmul.f32.gmra.mxu0 %v6571
  %v6873 = vpop.f32.mrf.mxu0
  %v6874 = vadd.f32 0.0, %v6873
  %6875 = vmatmul.f32.gmra.mxu0 %v6574
  %v6876 = vpop.f32.mrf.mxu0
  %v6877 = vadd.f32 0.0, %v6876
  %6878 = vmatmul.f32.gmra.mxu0 %v6577
  %v6879 = vpop.f32.mrf.mxu0
  %v6880 = vadd.f32 0.0, %v6879
  %6881 = vdwg.mxu0
  %6882 = vst.msk [vmem:[%s15 + $0x80] sm:$0xff] %vm6620, %v6859
  %6883 = vst.msk [vmem:[%s15 + $0x88] sm:$0xff] %vm6620, %v6862
  %6884 = vst.msk [vmem:[%s15 + $0x90] sm:$0xff] %vm6620, %v6865
  %6885 = vst.msk [vmem:[%s15 + $0x98] sm:$0xff] %vm6620, %v6868
  %6890 = vrot.lane.b32.xlu0 %v6871, 64
  %v6891 = vpop.permute.xlu0 %6890
  %6892 = vrot.lane.b32.xlu0 %v6874, 64
  %v6893 = vpop.permute.xlu0 %6892
  %6894 = vrot.lane.b32.xlu0 %v6877, 64
  %v6895 = vpop.permute.xlu0 %6894
  %6896 = vrot.lane.b32.xlu0 %v6880, 64
  %v6897 = vpop.permute.xlu0 %6896
  %6902 = vst.msk [vmem:[%s15 + $0x80] sm:$0xff] %vm6641, %v6891
  %6903 = vst.msk [vmem:[%s15 + $0x88] sm:$0xff] %vm6641, %v6893
  %6904 = vst.msk [vmem:[%s15 + $0x90] sm:$0xff] %vm6641, %v6895
  %6905 = vst.msk [vmem:[%s15 + $0x98] sm:$0xff] %vm6641, %v6897
  // Predicated region
  $region62: #{_lambda_.1} parent=0 // pred_check
    _
  $region63: #{_lambda_.1} parent=0 // pred_check_branch
    %6907 = sbr.rel (0) target = $region65
  $region64: #{_lambda_.1} parent=0 // pred_region
    _
  $region65: #{_lambda_.1} parent=0 // pred_fallthru
    _
  // Predicated region
  $region66: #{_lambda_.1} parent=0 // pred_check
    _
  $region67: #{_lambda_.1} parent=0 // pred_check_branch
    %6909 = sbr.rel (0) target = $region69
  $region68: #{_lambda_.1} parent=0 // pred_region
    _
  $region69: #{_lambda_.1} parent=0 // pred_fallthru
    _

</llo_original>
